<compile_context>
chip_gen: v7x
topology: tpu7x:2x2x1
jax: 0.10.0
libtpu: 0.0.40
codegen_flags: <defaults>
</compile_context>

<pallas_src>
import math
from functools import partial

import jax
import jax.numpy as jnp
from jax.experimental import pallas as pl

# ----------------------------- config ---------------------------------------
DIM = 32
DEPTH = 2
HEADS = 4
DIM_HEAD = 8
INNER = HEADS * DIM_HEAD          # 32
NUM_LANDMARKS = 4
PINV_ITERS = 6
RES_CONV_K = 3                    # residual_conv_kernel (odd)
LN_EPS = 1e-5
_INV_SQRT2 = 1.0 / math.sqrt(2.0)

# Abramowitz & Stegun 7.1.26 erf approximation (|error| < 1.5e-7)
_ERF_P = 0.3275911
_ERF_A1 = 0.254829592
_ERF_A2 = -0.284496736
_ERF_A3 = 1.421413741
_ERF_A4 = -1.453152027
_ERF_A5 = 1.061405429


# --------------------------- in-kernel helpers --------------------------------
def _shift_rows(mat, offset):
    """result[i] = mat[i + offset], zero outside [0, rows). Static offset."""
    if offset == 0:
        return mat
    z = jnp.zeros((abs(offset), mat.shape[1]), mat.dtype)
    if offset > 0:
        return jnp.concatenate([mat[offset:], z], axis=0)
    return jnp.concatenate([z, mat[:offset]], axis=0)


def _layernorm(v, g, b):
    mu = jnp.mean(v, axis=-1, keepdims=True)
    c = v - mu
    var = jnp.mean(c * c, axis=-1, keepdims=True)
    return c * jax.lax.rsqrt(var + LN_EPS) * g + b


def _softmax(s):
    s = s - jnp.max(s, axis=-1, keepdims=True)
    e = jnp.exp(s)
    return e / jnp.sum(e, axis=-1, keepdims=True)


def _mm(a, b):
    return jnp.dot(a, b, preferred_element_type=jnp.float32)


def _erf(x):
    sgn = jnp.where(x >= 0.0, 1.0, -1.0)
    ax = jnp.abs(x)
    t = 1.0 / (1.0 + _ERF_P * ax)
    poly = ((((_ERF_A5 * t + _ERF_A4) * t + _ERF_A3) * t + _ERF_A2) * t + _ERF_A1) * t
    return sgn * (1.0 - poly * jnp.exp(-ax * ax))


def _gelu(x):
    return 0.5 * x * (1.0 + _erf(x * _INV_SQRT2))


# ------------------------------ fused kernel ----------------------------------
def _nystromformer_kernel(x_ref, pool_ref, maska_ref, maskb_ref, gones_ref,
                          bdmask_ref, eye_ref,
                          ln1g_ref, ln1b_ref, wqkv_ref,
                          wout_ref, bout_ref, wrow_ref,
                          ln2g_ref, ln2b_ref,
                          wff1_ref, bff1_ref, wff2_ref, bff2_ref,
                          o_ref, *, batch, seq):
    n = seq
    m = NUM_LANDMARKS
    hm = HEADS * m
    bh = batch * HEADS
    pad = RES_CONV_K // 2
    scale = DIM_HEAD ** -0.5

    x = x_ref[...]                    # (batch*n, DIM)
    pool = pool_ref[...]              # (m, n)       landmark-mean pooling matrix
    mA = maska_ref[...]               # (INNER, hm)  block-diag head mask
    mB = maskb_ref[...]               # (hm, INNER)  block-diag head mask (mA^T)
    gones = gones_ref[...]            # (hm, hm)     block-diag of all-ones mxm blocks
    bdmask = bdmask_ref[...]          # (bh*m, bh*m) 0/1 block-diagonal mask
    eye = eye_ref[...]                # (bh*m, bh*m) identity

    for d in range(DEPTH):
        # ---------------- PreNorm + Nystrom attention ------------------------
        xn = _layernorm(x, ln1g_ref[d], ln1b_ref[d])
        qkv = _mm(xn, wqkv_ref[d])                 # (batch*n, 3*INNER)
        q = qkv[:, 0 * INNER:1 * INNER] * scale
        k = qkv[:, 1 * INNER:2 * INNER]
        v = qkv[:, 2 * INNER:3 * INNER]

        a1s, a3s, s2s = [], [], []
        for bi in range(batch):
            qb = q[bi * n:(bi + 1) * n]            # (n, INNER)
            kb = k[bi * n:(bi + 1) * n]
            ql = _mm(pool, qb)                     # (m, INNER) landmark means, all heads
            kl = _mm(pool, kb)
            klT = kl.T                             # (INNER, m)
            kbT = kb.T                             # (INNER, n)
            # block-diagonal landmark operands (tile + mask, built per batch)
            kl_bd = jnp.concatenate([klT] * HEADS, axis=1) * mA     # (INNER, hm)
            ql_bd = jnp.concatenate([ql] * HEADS, axis=0) * mB      # (hm, INNER)

            s1 = _mm(qb, kl_bd)                    # (n, hm)  cols h*m:(h+1)*m = q_h @ kl_h^T
            s3 = _mm(ql_bd, kbT)                   # (hm, n)  rows h*m:(h+1)*m = ql_h @ k_h^T
            s2 = _mm(ql_bd, klT)                   # (hm, m)  rows h*m:(h+1)*m = ql_h @ kl_h^T

            # attn1: softmax over each head's m-column group (row-max shift is
            # exact since softmax is shift invariant; group sums via one matmul)
            e1 = jnp.exp(s1 - jnp.max(s1, axis=-1, keepdims=True))
            a1 = e1 / _mm(e1, gones)               # (n, hm)
            a3 = _softmax(s3)                      # (hm, n)  softmax over n (correct axis)
            a1s.append(a1)
            a3s.append(a3)
            s2s.append(s2)

        # row-wise softmax over all stacked attn2 blocks at once
        a2_rows = _softmax(jnp.concatenate(s2s, axis=0))              # (bh*m, m)
        # one block-diagonal matrix holding every (batch, head) attn2 block
        a2_bd = jnp.concatenate([a2_rows] * bh, axis=1) * bdmask      # (bh*m, bh*m)

        # global Moore-Penrose seed (torch.max over everything), in-kernel
        colsum = jnp.sum(jnp.abs(a2_bd), axis=-1, keepdims=True)      # per-block row sums
        rowsum = jnp.sum(jnp.abs(a2_bd), axis=-2, keepdims=True)      # per-block col sums
        denom = jnp.max(colsum, keepdims=True) * jnp.max(rowsum, keepdims=True)
        z = a2_bd.T / denom

        # single batched pinv chain (block-diagonal structure is preserved)
        for _ in range(PINV_ITERS):
            xz = _mm(a2_bd, z)
            t = 7.0 * eye - xz
            t = 15.0 * eye - _mm(xz, t)
            t = 13.0 * eye - _mm(xz, t)
            z = 0.25 * _mm(z, t)

        wr = wrow_ref[d]                                              # (K, INNER)
        outs = []
        for bi in range(batch):
            vb = v[bi * n:(bi + 1) * n]                               # (n, INNER)
            # attn3 @ v for all heads in one push; mask keeps diagonal blocks
            w3 = _mm(a3s[bi], vb) * mB                                # (hm, INNER)
            zb = z[bi * hm:(bi + 1) * hm, bi * hm:(bi + 1) * hm]      # (hm, hm) block-diag
            attn_out = _mm(a1s[bi], _mm(zb, w3))                      # (n, INNER) lane-dense

            # depthwise residual conv along the sequence axis, all heads at once
            conv = jnp.zeros_like(vb)
            for tt in range(RES_CONV_K):
                conv = conv + wr[tt:tt + 1] * _shift_rows(vb, tt - pad)
            outs.append(attn_out + conv)

        attn_all = jnp.concatenate(outs, axis=0)                      # (batch*n, INNER)
        x = x + _mm(attn_all, wout_ref[d]) + bout_ref[d]

        # ---------------- PreNorm + FeedForward -------------------------------
        xn2 = _layernorm(x, ln2g_ref[d], ln2b_ref[d])
        h1 = _mm(xn2, wff1_ref[d]) + bff1_ref[d]
        h1 = _gelu(h1)                                                # exact GELU (erf poly)
        x = x + _mm(h1, wff2_ref[d]) + bff2_ref[d]

    o_ref[...] = x


# ------------------------------ model wrapper ---------------------------------
def _stack(params, name):
    return jnp.stack([p[name] for p in params], axis=0)


@jax.jit
def nystromformer_forward(x, params):
    b, n, dim = x.shape
    m = NUM_LANDMARKS
    # TODO(synk): front zero-padding path for n % num_landmarks != 0 not implemented.
    assert n % m == 0 and dim == DIM
    l = n // m
    bh = b * HEADS
    hm = HEADS * m

    # constant helper matrices (built once; hoisted out of the kernel entirely)
    pr = jnp.arange(m)[:, None]
    pc = jnp.arange(n)[None, :]
    pool = jnp.where((pc >= pr * l) & (pc < (pr + 1) * l), 1.0 / l, 0.0).astype(jnp.float32)

    h_of_dh = jnp.arange(INNER) // DIM_HEAD            # head index per inner column
    h_of_m = jnp.arange(hm) // m                       # head index per landmark row
    maska = (h_of_dh[:, None] == h_of_m[None, :]).astype(jnp.float32)   # (INNER, hm)
    maskb = maska.T                                                     # (hm, INNER)
    gones = (h_of_m[:, None] == h_of_m[None, :]).astype(jnp.float32)    # (hm, hm)

    rblk = jnp.arange(bh * m)[:, None] // m
    cblk = jnp.arange(bh * m)[None, :] // m
    bdmask = (rblk == cblk).astype(jnp.float32)
    eye = jnp.eye(bh * m, dtype=jnp.float32)

    # stack per-layer weights along a leading depth axis
    w_qkv = _stack(params, 'w_qkv')                              # (D, DIM, 3*INNER)
    w_conv = _stack(params, 'w_conv')                            # (D, HEADS, K)
    # per-lane conv weight rows: wrow[d, t, h*dh + c] = w_conv[d, h, t]
    wrow = jnp.repeat(jnp.transpose(w_conv, (0, 2, 1)), DIM_HEAD, axis=-1)

    args = (x.reshape(b * n, dim).astype(jnp.float32),
            pool, maska, maskb, gones, bdmask, eye,
            _stack(params, 'ln1_g'), _stack(params, 'ln1_b'),
            w_qkv,
            _stack(params, 'w_out'), _stack(params, 'b_out'), wrow,
            _stack(params, 'ln2_g'), _stack(params, 'ln2_b'),
            _stack(params, 'w_ff1'), _stack(params, 'b_ff1'),
            _stack(params, 'w_ff2'), _stack(params, 'b_ff2'))

    out2d = pl.pallas_call(
        partial(_nystromformer_kernel, batch=b, seq=n),
        out_shape=jax.ShapeDtypeStruct((b * n, dim), jnp.float32),
    )(*args)
    return out2d.reshape(b, n, dim)


# --------------------------- parameter init ----------------------------------
def init_params(key):
    params = []
    for _ in range(DEPTH):
        keys = jax.random.split(key, 9)
        key = keys[0]

        def rnd(k, shape, s=0.2):
            return jax.random.normal(k, shape, dtype=jnp.float32) * s

        params.append({
            'ln1_g': jnp.ones((1, DIM), jnp.float32),
            'ln1_b': jnp.zeros((1, DIM), jnp.float32),
            'w_qkv': rnd(keys[1], (DIM, 3 * INNER)),        # to_qkv has no bias
            'w_out': rnd(keys[2], (INNER, DIM)),
            'b_out': rnd(keys[3], (1, DIM), 0.05),
            'w_conv': rnd(keys[4], (HEADS, RES_CONV_K)),    # depthwise conv weights
            'ln2_g': jnp.ones((1, DIM), jnp.float32),
            'ln2_b': jnp.zeros((1, DIM), jnp.float32),
            'w_ff1': rnd(keys[5], (DIM, 4 * DIM)),
            'b_ff1': rnd(keys[6], (1, 4 * DIM), 0.05),
            'w_ff2': rnd(keys[7], (4 * DIM, DIM)),
            'b_ff2': rnd(keys[8], (1, DIM), 0.05),
        })
    return params


# --------------------------- pure-JAX reference -------------------------------
def _ref_layernorm(x, g, b):
    mu = x.mean(-1, keepdims=True)
    var = ((x - mu) ** 2).mean(-1, keepdims=True)
    return (x - mu) / jnp.sqrt(var + LN_EPS) * g + b


def _ref_attention(xn, prm):
    b, n, dim = xn.shape
    m = NUM_LANDMARKS
    rem = n % m
    if rem > 0:
        xn = jnp.pad(xn, ((0, 0), (m - rem, 0), (0, 0)))
    n_pad = xn.shape[1]
    l = math.ceil(n / m)
    qkv = xn @ prm['w_qkv']
    qkv = qkv.reshape(b, n_pad, 3, HEADS, DIM_HEAD)
    q, k, v = (jnp.transpose(qkv[:, :, i], (0, 2, 1, 3)) for i in range(3))
    q = q * (DIM_HEAD ** -0.5)
    q_l = q.reshape(b, HEADS, m, l, DIM_HEAD).sum(3) / l
    k_l = k.reshape(b, HEADS, m, l, DIM_HEAD).sum(3) / l
    sim1 = jnp.einsum('bhid,bhjd->bhij', q, k_l)
    sim2 = jnp.einsum('bhid,bhjd->bhij', q_l, k_l)
    sim3 = jnp.einsum('bhid,bhjd->bhij', q_l, k)
    a1, a2, a3 = (jax.nn.softmax(s, axis=-1) for s in (sim1, sim2, sim3))
    abs2 = jnp.abs(a2)
    denom = jnp.max(abs2.sum(-1)) * jnp.max(abs2.sum(-2))
    z = jnp.swapaxes(a2, -1, -2) / denom
    eye = jnp.eye(m, dtype=jnp.float32)
    for _ in range(PINV_ITERS):
        xz = a2 @ z
        z = 0.25 * z @ (13 * eye - xz @ (15 * eye - xz @ (7 * eye - xz)))
    out = a1 @ z @ (a3 @ v)
    pad = RES_CONV_K // 2
    vp = jnp.pad(v, ((0, 0), (0, 0), (pad, pad), (0, 0)))
    conv = jnp.zeros_like(v)
    for t in range(RES_CONV_K):
        conv = conv + prm['w_conv'][:, t][None, :, None, None] * vp[:, :, t:t + n_pad, :]
    out = out + conv
    out = jnp.transpose(out, (0, 2, 1, 3)).reshape(b, n_pad, INNER)
    out = out @ prm['w_out'] + prm['b_out']
    return out[:, -n:]


def reference_forward(x, params):
    for prm in params:
        xn = _ref_layernorm(x, prm['ln1_g'], prm['ln1_b'])
        x = x + _ref_attention(xn, prm)
        xn = _ref_layernorm(x, prm['ln2_g'], prm['ln2_b'])
        h = xn @ prm['w_ff1'] + prm['b_ff1']
        h = jax.nn.gelu(h, approximate=False)
        x = x + (h @ prm['w_ff2'] + prm['b_ff2'])
    return x


# ---------------------------------- main --------------------------------------
if __name__ == "__main__":
    key = jax.random.PRNGKey(0)
    kx, kp = jax.random.split(key)
    x = jax.random.normal(kx, (2, 16, DIM), dtype=jnp.float32)   # (batch, seq, dim)
    params = init_params(kp)

    out = nystromformer_forward(x, params)
    out = jax.block_until_ready(out)

    ref = reference_forward(x, params)
    assert out.shape == ref.shape == (2, 16, DIM)
    rel_err = float(jnp.max(jnp.abs(out - ref)) / (jnp.max(jnp.abs(ref)) + 1e-6))
    if not (rel_err < 5e-2) or not bool(jnp.all(jnp.isfinite(out))):
        raise AssertionError(f"kernel/reference mismatch, rel_err={rel_err}")
    print("KERNEL_OK")
</pallas_src>

<mosaic_0001>
module attributes {stable_mosaic.version = 11 : i64} {
  func.func @_nystromformer_kernel(%arg0: memref<32x32xf32, #tpu.memory_space<vmem>>, %arg1: memref<4x16xf32, #tpu.memory_space<vmem>>, %arg2: memref<32x16xf32, #tpu.memory_space<vmem>>, %arg3: memref<16x32xf32, #tpu.memory_space<vmem>>, %arg4: memref<16x16xf32, #tpu.memory_space<vmem>>, %arg5: memref<32x32xf32, #tpu.memory_space<vmem>>, %arg6: memref<32x32xf32, #tpu.memory_space<vmem>>, %arg7: memref<2x1x32xf32, #tpu.memory_space<vmem>>, %arg8: memref<2x1x32xf32, #tpu.memory_space<vmem>>, %arg9: memref<2x32x96xf32, #tpu.memory_space<vmem>>, %arg10: memref<2x32x32xf32, #tpu.memory_space<vmem>>, %arg11: memref<2x1x32xf32, #tpu.memory_space<vmem>>, %arg12: memref<2x3x32xf32, #tpu.memory_space<vmem>>, %arg13: memref<2x1x32xf32, #tpu.memory_space<vmem>>, %arg14: memref<2x1x32xf32, #tpu.memory_space<vmem>>, %arg15: memref<2x32x128xf32, #tpu.memory_space<vmem>>, %arg16: memref<2x1x128xf32, #tpu.memory_space<vmem>>, %arg17: memref<2x128x32xf32, #tpu.memory_space<vmem>>, %arg18: memref<2x1x32xf32, #tpu.memory_space<vmem>>, %arg19: memref<32x32xf32, #tpu.memory_space<vmem>>) attributes {dimension_semantics = [], scalar_prefetch = 0 : i64, scratch_operands = 0 : i64, tpu.core_type = #tpu.core_type<tc>} {
    %c0 = arith.constant 0 : index
    %c0_0 = arith.constant 0 : index
    %0 = vector.load %arg0[%c0, %c0_0] : memref<32x32xf32, #tpu.memory_space<vmem>>, vector<32x32xf32>
    %c0_1 = arith.constant 0 : index
    %c0_2 = arith.constant 0 : index
    %1 = vector.load %arg1[%c0_1, %c0_2] : memref<4x16xf32, #tpu.memory_space<vmem>>, vector<4x16xf32>
    %c0_3 = arith.constant 0 : index
    %c0_4 = arith.constant 0 : index
    %2 = vector.load %arg2[%c0_3, %c0_4] : memref<32x16xf32, #tpu.memory_space<vmem>>, vector<32x16xf32>
    %c0_5 = arith.constant 0 : index
    %c0_6 = arith.constant 0 : index
    %3 = vector.load %arg3[%c0_5, %c0_6] : memref<16x32xf32, #tpu.memory_space<vmem>>, vector<16x32xf32>
    %c0_7 = arith.constant 0 : index
    %c0_8 = arith.constant 0 : index
    %4 = vector.load %arg4[%c0_7, %c0_8] : memref<16x16xf32, #tpu.memory_space<vmem>>, vector<16x16xf32>
    %c0_9 = arith.constant 0 : index
    %c0_10 = arith.constant 0 : index
    %5 = vector.load %arg5[%c0_9, %c0_10] : memref<32x32xf32, #tpu.memory_space<vmem>>, vector<32x32xf32>
    %c0_11 = arith.constant 0 : index
    %c0_12 = arith.constant 0 : index
    %6 = vector.load %arg6[%c0_11, %c0_12] : memref<32x32xf32, #tpu.memory_space<vmem>>, vector<32x32xf32>
    %c0_13 = arith.constant 0 : index
    %c0_14 = arith.constant 0 : index
    %c0_15 = arith.constant 0 : index
    %7 = vector.load %arg7[%c0_13, %c0_14, %c0_15] : memref<2x1x32xf32, #tpu.memory_space<vmem>>, vector<1x1x32xf32>
    %8 = vector.shape_cast %7 : vector<1x1x32xf32> to vector<1x32xf32>
    %c0_16 = arith.constant 0 : index
    %c0_17 = arith.constant 0 : index
    %c0_18 = arith.constant 0 : index
    %9 = vector.load %arg8[%c0_16, %c0_17, %c0_18] : memref<2x1x32xf32, #tpu.memory_space<vmem>>, vector<1x1x32xf32>
    %10 = vector.shape_cast %9 : vector<1x1x32xf32> to vector<1x32xf32>
    %cst = arith.constant dense<0.000000e+00> : vector<32xf32>
    %11 = vector.multi_reduction <add>, %0, %cst [1] : vector<32x32xf32> to vector<32xf32>
    %12 = vector.shape_cast %11 : vector<32xf32> to vector<32x1xf32>
    %cst_19 = arith.constant 3.200000e+01 : f32
    %13 = vector.broadcast %cst_19 : f32 to vector<32x1xf32>
    %14 = arith.divf %12, %13 : vector<32x1xf32>
    %15 = vector.broadcast %14 : vector<32x1xf32> to vector<32x32xf32>
    %16 = arith.subf %0, %15 : vector<32x32xf32>
    %17 = arith.mulf %16, %16 : vector<32x32xf32>
    %cst_20 = arith.constant dense<0.000000e+00> : vector<32xf32>
    %18 = vector.multi_reduction <add>, %17, %cst_20 [1] : vector<32x32xf32> to vector<32xf32>
    %19 = vector.shape_cast %18 : vector<32xf32> to vector<32x1xf32>
    %cst_21 = arith.constant 3.200000e+01 : f32
    %20 = vector.broadcast %cst_21 : f32 to vector<32x1xf32>
    %21 = arith.divf %19, %20 : vector<32x1xf32>
    %cst_22 = arith.constant 9.99999974E-6 : f32
    %22 = vector.broadcast %cst_22 : f32 to vector<32x1xf32>
    %23 = arith.addf %21, %22 : vector<32x1xf32>
    %24 = math.rsqrt %23 : vector<32x1xf32>
    %25 = vector.broadcast %24 : vector<32x1xf32> to vector<32x32xf32>
    %26 = arith.mulf %16, %25 : vector<32x32xf32>
    %27 = vector.broadcast %8 : vector<1x32xf32> to vector<32x32xf32>
    %28 = arith.mulf %26, %27 : vector<32x32xf32>
    %29 = vector.broadcast %10 : vector<1x32xf32> to vector<32x32xf32>
    %30 = arith.addf %28, %29 : vector<32x32xf32>
    %c0_23 = arith.constant 0 : index
    %c0_24 = arith.constant 0 : index
    %c0_25 = arith.constant 0 : index
    %31 = vector.load %arg9[%c0_23, %c0_24, %c0_25] : memref<2x32x96xf32, #tpu.memory_space<vmem>>, vector<1x32x96xf32>
    %32 = vector.shape_cast %31 : vector<1x32x96xf32> to vector<32x96xf32>
    %cst_26 = arith.constant dense<0.000000e+00> : vector<32x96xf32>
    %33 = tpu.matmul %30, %32, %cst_26 {dimension_numbers = #tpu.dot_dimension_numbers<[1], [0], [0], [1], [0, 0, 1, 1], [], []>} : vector<32x32xf32>, vector<32x96xf32>, vector<32x96xf32> -> vector<32x96xf32>
    %34 = vector.extract_strided_slice %33 {offsets = [0, 0], sizes = [32, 32], strides = [1, 1]} : vector<32x96xf32> to vector<32x32xf32>
    %cst_27 = arith.constant 0.353553385 : f32
    %35 = vector.broadcast %cst_27 : f32 to vector<32x32xf32>
    %36 = arith.mulf %34, %35 : vector<32x32xf32>
    %37 = vector.extract_strided_slice %33 {offsets = [0, 32], sizes = [32, 32], strides = [1, 1]} : vector<32x96xf32> to vector<32x32xf32>
    %38 = vector.extract_strided_slice %33 {offsets = [0, 64], sizes = [32, 32], strides = [1, 1]} : vector<32x96xf32> to vector<32x32xf32>
    %39 = vector.extract_strided_slice %36 {offsets = [0, 0], sizes = [16, 32], strides = [1, 1]} : vector<32x32xf32> to vector<16x32xf32>
    %40 = vector.extract_strided_slice %37 {offsets = [0, 0], sizes = [16, 32], strides = [1, 1]} : vector<32x32xf32> to vector<16x32xf32>
    %cst_28 = arith.constant dense<0.000000e+00> : vector<4x32xf32>
    %41 = tpu.matmul %1, %39, %cst_28 {dimension_numbers = #tpu.dot_dimension_numbers<[1], [0], [0], [1], [0, 0, 1, 1], [], []>} : vector<4x16xf32>, vector<16x32xf32>, vector<4x32xf32> -> vector<4x32xf32>
    %cst_29 = arith.constant dense<0.000000e+00> : vector<4x32xf32>
    %42 = tpu.matmul %1, %40, %cst_29 {dimension_numbers = #tpu.dot_dimension_numbers<[1], [0], [0], [1], [0, 0, 1, 1], [], []>} : vector<4x16xf32>, vector<16x32xf32>, vector<4x32xf32> -> vector<4x32xf32>
    %43 = tpu.transpose %42, [1, 0] : vector<4x32xf32> -> vector<32x4xf32>
    %44 = tpu.transpose %40, [1, 0] : vector<16x32xf32> -> vector<32x16xf32>
    %45 = tpu.concatenate %43, %43, %43, %43 in 1 : vector<32x4xf32>, vector<32x4xf32>, vector<32x4xf32>, vector<32x4xf32> -> vector<32x16xf32>
    %46 = arith.mulf %45, %2 : vector<32x16xf32>
    %47 = tpu.concatenate %41, %41, %41, %41 in 0 : vector<4x32xf32>, vector<4x32xf32>, vector<4x32xf32>, vector<4x32xf32> -> vector<16x32xf32>
    %48 = arith.mulf %47, %3 : vector<16x32xf32>
    %cst_30 = arith.constant dense<0.000000e+00> : vector<16x16xf32>
    %49 = tpu.matmul %39, %46, %cst_30 {dimension_numbers = #tpu.dot_dimension_numbers<[1], [0], [0], [1], [0, 0, 1, 1], [], []>} : vector<16x32xf32>, vector<32x16xf32>, vector<16x16xf32> -> vector<16x16xf32>
    %cst_31 = arith.constant dense<0.000000e+00> : vector<16x16xf32>
    %50 = tpu.matmul %48, %44, %cst_31 {dimension_numbers = #tpu.dot_dimension_numbers<[1], [0], [0], [1], [0, 0, 1, 1], [], []>} : vector<16x32xf32>, vector<32x16xf32>, vector<16x16xf32> -> vector<16x16xf32>
    %cst_32 = arith.constant dense<0.000000e+00> : vector<16x4xf32>
    %51 = tpu.matmul %48, %43, %cst_32 {dimension_numbers = #tpu.dot_dimension_numbers<[1], [0], [0], [1], [0, 0, 1, 1], [], []>} : vector<16x32xf32>, vector<32x4xf32>, vector<16x4xf32> -> vector<16x4xf32>
    %cst_33 = arith.constant dense<0xFF800000> : vector<16xf32>
    %52 = vector.multi_reduction <maximumf>, %49, %cst_33 [1] : vector<16x16xf32> to vector<16xf32>
    %53 = vector.shape_cast %52 : vector<16xf32> to vector<16x1xf32>
    %54 = vector.broadcast %53 : vector<16x1xf32> to vector<16x16xf32>
    %55 = arith.subf %49, %54 : vector<16x16xf32>
    %56 = math.exp %55 : vector<16x16xf32>
    %cst_34 = arith.constant dense<0.000000e+00> : vector<16x16xf32>
    %57 = tpu.matmul %56, %4, %cst_34 {dimension_numbers = #tpu.dot_dimension_numbers<[1], [0], [0], [1], [0, 0, 1, 1], [], []>} : vector<16x16xf32>, vector<16x16xf32>, vector<16x16xf32> -> vector<16x16xf32>
    %58 = arith.divf %56, %57 : vector<16x16xf32>
    %cst_35 = arith.constant dense<0xFF800000> : vector<16xf32>
    %59 = vector.multi_reduction <maximumf>, %50, %cst_35 [1] : vector<16x16xf32> to vector<16xf32>
    %60 = vector.shape_cast %59 : vector<16xf32> to vector<16x1xf32>
    %61 = vector.broadcast %60 : vector<16x1xf32> to vector<16x16xf32>
    %62 = arith.subf %50, %61 : vector<16x16xf32>
    %63 = math.exp %62 : vector<16x16xf32>
    %cst_36 = arith.constant dense<0.000000e+00> : vector<16xf32>
    %64 = vector.multi_reduction <add>, %63, %cst_36 [1] : vector<16x16xf32> to vector<16xf32>
    %65 = vector.shape_cast %64 : vector<16xf32> to vector<16x1xf32>
    %66 = vector.broadcast %65 : vector<16x1xf32> to vector<16x16xf32>
    %67 = arith.divf %63, %66 : vector<16x16xf32>
    %68 = vector.extract_strided_slice %36 {offsets = [16, 0], sizes = [16, 32], strides = [1, 1]} : vector<32x32xf32> to vector<16x32xf32>
    %69 = vector.extract_strided_slice %37 {offsets = [16, 0], sizes = [16, 32], strides = [1, 1]} : vector<32x32xf32> to vector<16x32xf32>
    %cst_37 = arith.constant dense<0.000000e+00> : vector<4x32xf32>
    %70 = tpu.matmul %1, %68, %cst_37 {dimension_numbers = #tpu.dot_dimension_numbers<[1], [0], [0], [1], [0, 0, 1, 1], [], []>} : vector<4x16xf32>, vector<16x32xf32>, vector<4x32xf32> -> vector<4x32xf32>
    %cst_38 = arith.constant dense<0.000000e+00> : vector<4x32xf32>
    %71 = tpu.matmul %1, %69, %cst_38 {dimension_numbers = #tpu.dot_dimension_numbers<[1], [0], [0], [1], [0, 0, 1, 1], [], []>} : vector<4x16xf32>, vector<16x32xf32>, vector<4x32xf32> -> vector<4x32xf32>
    %72 = tpu.transpose %71, [1, 0] : vector<4x32xf32> -> vector<32x4xf32>
    %73 = tpu.transpose %69, [1, 0] : vector<16x32xf32> -> vector<32x16xf32>
    %74 = tpu.concatenate %72, %72, %72, %72 in 1 : vector<32x4xf32>, vector<32x4xf32>, vector<32x4xf32>, vector<32x4xf32> -> vector<32x16xf32>
    %75 = arith.mulf %74, %2 : vector<32x16xf32>
    %76 = tpu.concatenate %70, %70, %70, %70 in 0 : vector<4x32xf32>, vector<4x32xf32>, vector<4x32xf32>, vector<4x32xf32> -> vector<16x32xf32>
    %77 = arith.mulf %76, %3 : vector<16x32xf32>
    %cst_39 = arith.constant dense<0.000000e+00> : vector<16x16xf32>
    %78 = tpu.matmul %68, %75, %cst_39 {dimension_numbers = #tpu.dot_dimension_numbers<[1], [0], [0], [1], [0, 0, 1, 1], [], []>} : vector<16x32xf32>, vector<32x16xf32>, vector<16x16xf32> -> vector<16x16xf32>
    %cst_40 = arith.constant dense<0.000000e+00> : vector<16x16xf32>
    %79 = tpu.matmul %77, %73, %cst_40 {dimension_numbers = #tpu.dot_dimension_numbers<[1], [0], [0], [1], [0, 0, 1, 1], [], []>} : vector<16x32xf32>, vector<32x16xf32>, vector<16x16xf32> -> vector<16x16xf32>
    %cst_41 = arith.constant dense<0.000000e+00> : vector<16x4xf32>
    %80 = tpu.matmul %77, %72, %cst_41 {dimension_numbers = #tpu.dot_dimension_numbers<[1], [0], [0], [1], [0, 0, 1, 1], [], []>} : vector<16x32xf32>, vector<32x4xf32>, vector<16x4xf32> -> vector<16x4xf32>
    %cst_42 = arith.constant dense<0xFF800000> : vector<16xf32>
    %81 = vector.multi_reduction <maximumf>, %78, %cst_42 [1] : vector<16x16xf32> to vector<16xf32>
    %82 = vector.shape_cast %81 : vector<16xf32> to vector<16x1xf32>
    %83 = vector.broadcast %82 : vector<16x1xf32> to vector<16x16xf32>
    %84 = arith.subf %78, %83 : vector<16x16xf32>
    %85 = math.exp %84 : vector<16x16xf32>
    %cst_43 = arith.constant dense<0.000000e+00> : vector<16x16xf32>
    %86 = tpu.matmul %85, %4, %cst_43 {dimension_numbers = #tpu.dot_dimension_numbers<[1], [0], [0], [1], [0, 0, 1, 1], [], []>} : vector<16x16xf32>, vector<16x16xf32>, vector<16x16xf32> -> vector<16x16xf32>
    %87 = arith.divf %85, %86 : vector<16x16xf32>
    %cst_44 = arith.constant dense<0xFF800000> : vector<16xf32>
    %88 = vector.multi_reduction <maximumf>, %79, %cst_44 [1] : vector<16x16xf32> to vector<16xf32>
    %89 = vector.shape_cast %88 : vector<16xf32> to vector<16x1xf32>
    %90 = vector.broadcast %89 : vector<16x1xf32> to vector<16x16xf32>
    %91 = arith.subf %79, %90 : vector<16x16xf32>
    %92 = math.exp %91 : vector<16x16xf32>
    %cst_45 = arith.constant dense<0.000000e+00> : vector<16xf32>
    %93 = vector.multi_reduction <add>, %92, %cst_45 [1] : vector<16x16xf32> to vector<16xf32>
    %94 = vector.shape_cast %93 : vector<16xf32> to vector<16x1xf32>
    %95 = vector.broadcast %94 : vector<16x1xf32> to vector<16x16xf32>
    %96 = arith.divf %92, %95 : vector<16x16xf32>
    %97 = tpu.concatenate %51, %80 in 0 : vector<16x4xf32>, vector<16x4xf32> -> vector<32x4xf32>
    %cst_46 = arith.constant dense<0xFF800000> : vector<32xf32>
    %98 = vector.multi_reduction <maximumf>, %97, %cst_46 [1] : vector<32x4xf32> to vector<32xf32>
    %99 = vector.shape_cast %98 : vector<32xf32> to vector<32x1xf32>
    %100 = vector.broadcast %99 : vector<32x1xf32> to vector<32x4xf32>
    %101 = arith.subf %97, %100 : vector<32x4xf32>
    %102 = math.exp %101 : vector<32x4xf32>
    %cst_47 = arith.constant dense<0.000000e+00> : vector<32xf32>
    %103 = vector.multi_reduction <add>, %102, %cst_47 [1] : vector<32x4xf32> to vector<32xf32>
    %104 = vector.shape_cast %103 : vector<32xf32> to vector<32x1xf32>
    %105 = vector.broadcast %104 : vector<32x1xf32> to vector<32x4xf32>
    %106 = arith.divf %102, %105 : vector<32x4xf32>
    %107 = tpu.concatenate %106, %106, %106, %106, %106, %106, %106, %106 in 1 : vector<32x4xf32>, vector<32x4xf32>, vector<32x4xf32>, vector<32x4xf32>, vector<32x4xf32>, vector<32x4xf32>, vector<32x4xf32>, vector<32x4xf32> -> vector<32x32xf32>
    %108 = arith.mulf %107, %5 : vector<32x32xf32>
    %109 = math.absf %108 : vector<32x32xf32>
    %cst_48 = arith.constant dense<0.000000e+00> : vector<32xf32>
    %110 = vector.multi_reduction <add>, %109, %cst_48 [1] : vector<32x32xf32> to vector<32xf32>
    %111 = vector.shape_cast %110 : vector<32xf32> to vector<32x1xf32>
    %112 = math.absf %108 : vector<32x32xf32>
    %cst_49 = arith.constant dense<0.000000e+00> : vector<32xf32>
    %113 = vector.multi_reduction <add>, %112, %cst_49 [0] : vector<32x32xf32> to vector<32xf32>
    %114 = vector.shape_cast %113 : vector<32xf32> to vector<1x32xf32>
    %115 = vector.shape_cast %111 : vector<32x1xf32> to vector<1x32x1xf32>
    %cst_50 = arith.constant dense<0xFF800000> : vector<1xf32>
    %116 = vector.multi_reduction <maximumf>, %115, %cst_50 [1, 2] : vector<1x32x1xf32> to vector<1xf32>
    %117 = vector.shape_cast %116 : vector<1xf32> to vector<1x1x1xf32>
    %118 = vector.extract %117[0, 0, 0] : f32 from vector<1x1x1xf32>
    %119 = vector.broadcast %118 : f32 to vector<1x1xf32>
    %120 = vector.shape_cast %114 : vector<1x32xf32> to vector<1x1x32xf32>
    %cst_51 = arith.constant dense<0xFF800000> : vector<1xf32>
    %121 = vector.multi_reduction <maximumf>, %120, %cst_51 [1, 2] : vector<1x1x32xf32> to vector<1xf32>
    %122 = vector.shape_cast %121 : vector<1xf32> to vector<1x1x1xf32>
    %123 = vector.extract %122[0, 0, 0] : f32 from vector<1x1x1xf32>
    %124 = vector.broadcast %123 : f32 to vector<1x1xf32>
    %125 = arith.mulf %119, %124 : vector<1x1xf32>
    %126 = tpu.transpose %108, [1, 0] : vector<32x32xf32> -> vector<32x32xf32>
    %127 = vector.broadcast %125 : vector<1x1xf32> to vector<32x32xf32>
    %128 = arith.divf %126, %127 : vector<32x32xf32>
    %cst_52 = arith.constant dense<0.000000e+00> : vector<32x32xf32>
    %129 = tpu.matmul %108, %128, %cst_52 {dimension_numbers = #tpu.dot_dimension_numbers<[1], [0], [0], [1], [0, 0, 1, 1], [], []>} : vector<32x32xf32>, vector<32x32xf32>, vector<32x32xf32> -> vector<32x32xf32>
    %cst_53 = arith.constant 7.000000e+00 : f32
    %130 = vector.broadcast %cst_53 : f32 to vector<32x32xf32>
    %131 = arith.mulf %130, %6 : vector<32x32xf32>
    %132 = arith.subf %131, %129 : vector<32x32xf32>
    %cst_54 = arith.constant 1.500000e+01 : f32
    %133 = vector.broadcast %cst_54 : f32 to vector<32x32xf32>
    %134 = arith.mulf %133, %6 : vector<32x32xf32>
    %cst_55 = arith.constant dense<0.000000e+00> : vector<32x32xf32>
    %135 = tpu.matmul %129, %132, %cst_55 {dimension_numbers = #tpu.dot_dimension_numbers<[1], [0], [0], [1], [0, 0, 1, 1], [], []>} : vector<32x32xf32>, vector<32x32xf32>, vector<32x32xf32> -> vector<32x32xf32>
    %136 = arith.subf %134, %135 : vector<32x32xf32>
    %cst_56 = arith.constant 1.300000e+01 : f32
    %137 = vector.broadcast %cst_56 : f32 to vector<32x32xf32>
    %138 = arith.mulf %137, %6 : vector<32x32xf32>
    %cst_57 = arith.constant dense<0.000000e+00> : vector<32x32xf32>
    %139 = tpu.matmul %129, %136, %cst_57 {dimension_numbers = #tpu.dot_dimension_numbers<[1], [0], [0], [1], [0, 0, 1, 1], [], []>} : vector<32x32xf32>, vector<32x32xf32>, vector<32x32xf32> -> vector<32x32xf32>
    %140 = arith.subf %138, %139 : vector<32x32xf32>
    %cst_58 = arith.constant dense<0.000000e+00> : vector<32x32xf32>
    %141 = tpu.matmul %128, %140, %cst_58 {dimension_numbers = #tpu.dot_dimension_numbers<[1], [0], [0], [1], [0, 0, 1, 1], [], []>} : vector<32x32xf32>, vector<32x32xf32>, vector<32x32xf32> -> vector<32x32xf32>
    %cst_59 = arith.constant 2.500000e-01 : f32
    %142 = vector.broadcast %cst_59 : f32 to vector<32x32xf32>
    %143 = arith.mulf %142, %141 : vector<32x32xf32>
    %cst_60 = arith.constant dense<0.000000e+00> : vector<32x32xf32>
    %144 = tpu.matmul %108, %143, %cst_60 {dimension_numbers = #tpu.dot_dimension_numbers<[1], [0], [0], [1], [0, 0, 1, 1], [], []>} : vector<32x32xf32>, vector<32x32xf32>, vector<32x32xf32> -> vector<32x32xf32>
    %cst_61 = arith.constant 7.000000e+00 : f32
    %145 = vector.broadcast %cst_61 : f32 to vector<32x32xf32>
    %146 = arith.mulf %145, %6 : vector<32x32xf32>
    %147 = arith.subf %146, %144 : vector<32x32xf32>
    %cst_62 = arith.constant 1.500000e+01 : f32
    %148 = vector.broadcast %cst_62 : f32 to vector<32x32xf32>
    %149 = arith.mulf %148, %6 : vector<32x32xf32>
    %cst_63 = arith.constant dense<0.000000e+00> : vector<32x32xf32>
    %150 = tpu.matmul %144, %147, %cst_63 {dimension_numbers = #tpu.dot_dimension_numbers<[1], [0], [0], [1], [0, 0, 1, 1], [], []>} : vector<32x32xf32>, vector<32x32xf32>, vector<32x32xf32> -> vector<32x32xf32>
    %151 = arith.subf %149, %150 : vector<32x32xf32>
    %cst_64 = arith.constant 1.300000e+01 : f32
    %152 = vector.broadcast %cst_64 : f32 to vector<32x32xf32>
    %153 = arith.mulf %152, %6 : vector<32x32xf32>
    %cst_65 = arith.constant dense<0.000000e+00> : vector<32x32xf32>
    %154 = tpu.matmul %144, %151, %cst_65 {dimension_numbers = #tpu.dot_dimension_numbers<[1], [0], [0], [1], [0, 0, 1, 1], [], []>} : vector<32x32xf32>, vector<32x32xf32>, vector<32x32xf32> -> vector<32x32xf32>
    %155 = arith.subf %153, %154 : vector<32x32xf32>
    %cst_66 = arith.constant dense<0.000000e+00> : vector<32x32xf32>
    %156 = tpu.matmul %143, %155, %cst_66 {dimension_numbers = #tpu.dot_dimension_numbers<[1], [0], [0], [1], [0, 0, 1, 1], [], []>} : vector<32x32xf32>, vector<32x32xf32>, vector<32x32xf32> -> vector<32x32xf32>
    %cst_67 = arith.constant 2.500000e-01 : f32
    %157 = vector.broadcast %cst_67 : f32 to vector<32x32xf32>
    %158 = arith.mulf %157, %156 : vector<32x32xf32>
    %cst_68 = arith.constant dense<0.000000e+00> : vector<32x32xf32>
    %159 = tpu.matmul %108, %158, %cst_68 {dimension_numbers = #tpu.dot_dimension_numbers<[1], [0], [0], [1], [0, 0, 1, 1], [], []>} : vector<32x32xf32>, vector<32x32xf32>, vector<32x32xf32> -> vector<32x32xf32>
    %cst_69 = arith.constant 7.000000e+00 : f32
    %160 = vector.broadcast %cst_69 : f32 to vector<32x32xf32>
    %161 = arith.mulf %160, %6 : vector<32x32xf32>
    %162 = arith.subf %161, %159 : vector<32x32xf32>
    %cst_70 = arith.constant 1.500000e+01 : f32
    %163 = vector.broadcast %cst_70 : f32 to vector<32x32xf32>
    %164 = arith.mulf %163, %6 : vector<32x32xf32>
    %cst_71 = arith.constant dense<0.000000e+00> : vector<32x32xf32>
    %165 = tpu.matmul %159, %162, %cst_71 {dimension_numbers = #tpu.dot_dimension_numbers<[1], [0], [0], [1], [0, 0, 1, 1], [], []>} : vector<32x32xf32>, vector<32x32xf32>, vector<32x32xf32> -> vector<32x32xf32>
    %166 = arith.subf %164, %165 : vector<32x32xf32>
    %cst_72 = arith.constant 1.300000e+01 : f32
    %167 = vector.broadcast %cst_72 : f32 to vector<32x32xf32>
    %168 = arith.mulf %167, %6 : vector<32x32xf32>
    %cst_73 = arith.constant dense<0.000000e+00> : vector<32x32xf32>
    %169 = tpu.matmul %159, %166, %cst_73 {dimension_numbers = #tpu.dot_dimension_numbers<[1], [0], [0], [1], [0, 0, 1, 1], [], []>} : vector<32x32xf32>, vector<32x32xf32>, vector<32x32xf32> -> vector<32x32xf32>
    %170 = arith.subf %168, %169 : vector<32x32xf32>
    %cst_74 = arith.constant dense<0.000000e+00> : vector<32x32xf32>
    %171 = tpu.matmul %158, %170, %cst_74 {dimension_numbers = #tpu.dot_dimension_numbers<[1], [0], [0], [1], [0, 0, 1, 1], [], []>} : vector<32x32xf32>, vector<32x32xf32>, vector<32x32xf32> -> vector<32x32xf32>
    %cst_75 = arith.constant 2.500000e-01 : f32
    %172 = vector.broadcast %cst_75 : f32 to vector<32x32xf32>
    %173 = arith.mulf %172, %171 : vector<32x32xf32>
    %cst_76 = arith.constant dense<0.000000e+00> : vector<32x32xf32>
    %174 = tpu.matmul %108, %173, %cst_76 {dimension_numbers = #tpu.dot_dimension_numbers<[1], [0], [0], [1], [0, 0, 1, 1], [], []>} : vector<32x32xf32>, vector<32x32xf32>, vector<32x32xf32> -> vector<32x32xf32>
    %cst_77 = arith.constant 7.000000e+00 : f32
    %175 = vector.broadcast %cst_77 : f32 to vector<32x32xf32>
    %176 = arith.mulf %175, %6 : vector<32x32xf32>
    %177 = arith.subf %176, %174 : vector<32x32xf32>
    %cst_78 = arith.constant 1.500000e+01 : f32
    %178 = vector.broadcast %cst_78 : f32 to vector<32x32xf32>
    %179 = arith.mulf %178, %6 : vector<32x32xf32>
    %cst_79 = arith.constant dense<0.000000e+00> : vector<32x32xf32>
    %180 = tpu.matmul %174, %177, %cst_79 {dimension_numbers = #tpu.dot_dimension_numbers<[1], [0], [0], [1], [0, 0, 1, 1], [], []>} : vector<32x32xf32>, vector<32x32xf32>, vector<32x32xf32> -> vector<32x32xf32>
    %181 = arith.subf %179, %180 : vector<32x32xf32>
    %cst_80 = arith.constant 1.300000e+01 : f32
    %182 = vector.broadcast %cst_80 : f32 to vector<32x32xf32>
    %183 = arith.mulf %182, %6 : vector<32x32xf32>
    %cst_81 = arith.constant dense<0.000000e+00> : vector<32x32xf32>
    %184 = tpu.matmul %174, %181, %cst_81 {dimension_numbers = #tpu.dot_dimension_numbers<[1], [0], [0], [1], [0, 0, 1, 1], [], []>} : vector<32x32xf32>, vector<32x32xf32>, vector<32x32xf32> -> vector<32x32xf32>
    %185 = arith.subf %183, %184 : vector<32x32xf32>
    %cst_82 = arith.constant dense<0.000000e+00> : vector<32x32xf32>
    %186 = tpu.matmul %173, %185, %cst_82 {dimension_numbers = #tpu.dot_dimension_numbers<[1], [0], [0], [1], [0, 0, 1, 1], [], []>} : vector<32x32xf32>, vector<32x32xf32>, vector<32x32xf32> -> vector<32x32xf32>
    %cst_83 = arith.constant 2.500000e-01 : f32
    %187 = vector.broadcast %cst_83 : f32 to vector<32x32xf32>
    %188 = arith.mulf %187, %186 : vector<32x32xf32>
    %cst_84 = arith.constant dense<0.000000e+00> : vector<32x32xf32>
    %189 = tpu.matmul %108, %188, %cst_84 {dimension_numbers = #tpu.dot_dimension_numbers<[1], [0], [0], [1], [0, 0, 1, 1], [], []>} : vector<32x32xf32>, vector<32x32xf32>, vector<32x32xf32> -> vector<32x32xf32>
    %cst_85 = arith.constant 7.000000e+00 : f32
    %190 = vector.broadcast %cst_85 : f32 to vector<32x32xf32>
    %191 = arith.mulf %190, %6 : vector<32x32xf32>
    %192 = arith.subf %191, %189 : vector<32x32xf32>
    %cst_86 = arith.constant 1.500000e+01 : f32
    %193 = vector.broadcast %cst_86 : f32 to vector<32x32xf32>
    %194 = arith.mulf %193, %6 : vector<32x32xf32>
    %cst_87 = arith.constant dense<0.000000e+00> : vector<32x32xf32>
    %195 = tpu.matmul %189, %192, %cst_87 {dimension_numbers = #tpu.dot_dimension_numbers<[1], [0], [0], [1], [0, 0, 1, 1], [], []>} : vector<32x32xf32>, vector<32x32xf32>, vector<32x32xf32> -> vector<32x32xf32>
    %196 = arith.subf %194, %195 : vector<32x32xf32>
    %cst_88 = arith.constant 1.300000e+01 : f32
    %197 = vector.broadcast %cst_88 : f32 to vector<32x32xf32>
    %198 = arith.mulf %197, %6 : vector<32x32xf32>
    %cst_89 = arith.constant dense<0.000000e+00> : vector<32x32xf32>
    %199 = tpu.matmul %189, %196, %cst_89 {dimension_numbers = #tpu.dot_dimension_numbers<[1], [0], [0], [1], [0, 0, 1, 1], [], []>} : vector<32x32xf32>, vector<32x32xf32>, vector<32x32xf32> -> vector<32x32xf32>
    %200 = arith.subf %198, %199 : vector<32x32xf32>
    %cst_90 = arith.constant dense<0.000000e+00> : vector<32x32xf32>
    %201 = tpu.matmul %188, %200, %cst_90 {dimension_numbers = #tpu.dot_dimension_numbers<[1], [0], [0], [1], [0, 0, 1, 1], [], []>} : vector<32x32xf32>, vector<32x32xf32>, vector<32x32xf32> -> vector<32x32xf32>
    %cst_91 = arith.constant 2.500000e-01 : f32
    %202 = vector.broadcast %cst_91 : f32 to vector<32x32xf32>
    %203 = arith.mulf %202, %201 : vector<32x32xf32>
    %cst_92 = arith.constant dense<0.000000e+00> : vector<32x32xf32>
    %204 = tpu.matmul %108, %203, %cst_92 {dimension_numbers = #tpu.dot_dimension_numbers<[1], [0], [0], [1], [0, 0, 1, 1], [], []>} : vector<32x32xf32>, vector<32x32xf32>, vector<32x32xf32> -> vector<32x32xf32>
    %cst_93 = arith.constant 7.000000e+00 : f32
    %205 = vector.broadcast %cst_93 : f32 to vector<32x32xf32>
    %206 = arith.mulf %205, %6 : vector<32x32xf32>
    %207 = arith.subf %206, %204 : vector<32x32xf32>
    %cst_94 = arith.constant 1.500000e+01 : f32
    %208 = vector.broadcast %cst_94 : f32 to vector<32x32xf32>
    %209 = arith.mulf %208, %6 : vector<32x32xf32>
    %cst_95 = arith.constant dense<0.000000e+00> : vector<32x32xf32>
    %210 = tpu.matmul %204, %207, %cst_95 {dimension_numbers = #tpu.dot_dimension_numbers<[1], [0], [0], [1], [0, 0, 1, 1], [], []>} : vector<32x32xf32>, vector<32x32xf32>, vector<32x32xf32> -> vector<32x32xf32>
    %211 = arith.subf %209, %210 : vector<32x32xf32>
    %cst_96 = arith.constant 1.300000e+01 : f32
    %212 = vector.broadcast %cst_96 : f32 to vector<32x32xf32>
    %213 = arith.mulf %212, %6 : vector<32x32xf32>
    %cst_97 = arith.constant dense<0.000000e+00> : vector<32x32xf32>
    %214 = tpu.matmul %204, %211, %cst_97 {dimension_numbers = #tpu.dot_dimension_numbers<[1], [0], [0], [1], [0, 0, 1, 1], [], []>} : vector<32x32xf32>, vector<32x32xf32>, vector<32x32xf32> -> vector<32x32xf32>
    %215 = arith.subf %213, %214 : vector<32x32xf32>
    %cst_98 = arith.constant dense<0.000000e+00> : vector<32x32xf32>
    %216 = tpu.matmul %203, %215, %cst_98 {dimension_numbers = #tpu.dot_dimension_numbers<[1], [0], [0], [1], [0, 0, 1, 1], [], []>} : vector<32x32xf32>, vector<32x32xf32>, vector<32x32xf32> -> vector<32x32xf32>
    %cst_99 = arith.constant 2.500000e-01 : f32
    %217 = vector.broadcast %cst_99 : f32 to vector<32x32xf32>
    %218 = arith.mulf %217, %216 : vector<32x32xf32>
    %c0_100 = arith.constant 0 : index
    %c0_101 = arith.constant 0 : index
    %c0_102 = arith.constant 0 : index
    %219 = vector.load %arg12[%c0_100, %c0_101, %c0_102] : memref<2x3x32xf32, #tpu.memory_space<vmem>>, vector<1x3x32xf32>
    %220 = vector.shape_cast %219 : vector<1x3x32xf32> to vector<3x32xf32>
    %221 = vector.extract_strided_slice %38 {offsets = [0, 0], sizes = [16, 32], strides = [1, 1]} : vector<32x32xf32> to vector<16x32xf32>
    %cst_103 = arith.constant dense<0.000000e+00> : vector<16x32xf32>
    %222 = tpu.matmul %67, %221, %cst_103 {dimension_numbers = #tpu.dot_dimension_numbers<[1], [0], [0], [1], [0, 0, 1, 1], [], []>} : vector<16x16xf32>, vector<16x32xf32>, vector<16x32xf32> -> vector<16x32xf32>
    %223 = arith.mulf %222, %3 : vector<16x32xf32>
    %224 = vector.extract_strided_slice %218 {offsets = [0, 0], sizes = [16, 16], strides = [1, 1]} : vector<32x32xf32> to vector<16x16xf32>
    %cst_104 = arith.constant dense<0.000000e+00> : vector<16x32xf32>
    %225 = tpu.matmul %224, %223, %cst_104 {dimension_numbers = #tpu.dot_dimension_numbers<[1], [0], [0], [1], [0, 0, 1, 1], [], []>} : vector<16x16xf32>, vector<16x32xf32>, vector<16x32xf32> -> vector<16x32xf32>
    %cst_105 = arith.constant dense<0.000000e+00> : vector<16x32xf32>
    %226 = tpu.matmul %58, %225, %cst_105 {dimension_numbers = #tpu.dot_dimension_numbers<[1], [0], [0], [1], [0, 0, 1, 1], [], []>} : vector<16x16xf32>, vector<16x32xf32>, vector<16x32xf32> -> vector<16x32xf32>
    %cst_106 = arith.constant 0.000000e+00 : f32
    %227 = vector.broadcast %cst_106 : f32 to vector<16x32xf32>
    %228 = vector.extract_strided_slice %220 {offsets = [0, 0], sizes = [1, 32], strides = [1, 1]} : vector<3x32xf32> to vector<1x32xf32>
    %cst_107 = arith.constant 0.000000e+00 : f32
    %229 = vector.broadcast %cst_107 : f32 to vector<1x32xf32>
    %230 = vector.extract_strided_slice %221 {offsets = [0, 0], sizes = [15, 32], strides = [1, 1]} : vector<16x32xf32> to vector<15x32xf32>
    %231 = tpu.concatenate %229, %230 in 0 : vector<1x32xf32>, vector<15x32xf32> -> vector<16x32xf32>
    %232 = vector.broadcast %228 : vector<1x32xf32> to vector<16x32xf32>
    %233 = arith.mulf %232, %231 : vector<16x32xf32>
    %234 = arith.addf %227, %233 : vector<16x32xf32>
    %235 = vector.extract_strided_slice %220 {offsets = [1, 0], sizes = [1, 32], strides = [1, 1]} : vector<3x32xf32> to vector<1x32xf32>
    %236 = vector.broadcast %235 : vector<1x32xf32> to vector<16x32xf32>
    %237 = arith.mulf %236, %221 : vector<16x32xf32>
    %238 = arith.addf %234, %237 : vector<16x32xf32>
    %239 = vector.extract_strided_slice %220 {offsets = [2, 0], sizes = [1, 32], strides = [1, 1]} : vector<3x32xf32> to vector<1x32xf32>
    %cst_108 = arith.constant 0.000000e+00 : f32
    %240 = vector.broadcast %cst_108 : f32 to vector<1x32xf32>
    %241 = vector.extract_strided_slice %221 {offsets = [1, 0], sizes = [15, 32], strides = [1, 1]} : vector<16x32xf32> to vector<15x32xf32>
    %242 = tpu.concatenate %241, %240 in 0 : vector<15x32xf32>, vector<1x32xf32> -> vector<16x32xf32>
    %243 = vector.broadcast %239 : vector<1x32xf32> to vector<16x32xf32>
    %244 = arith.mulf %243, %242 : vector<16x32xf32>
    %245 = arith.addf %238, %244 : vector<16x32xf32>
    %246 = arith.addf %226, %245 : vector<16x32xf32>
    %247 = vector.extract_strided_slice %38 {offsets = [16, 0], sizes = [16, 32], strides = [1, 1]} : vector<32x32xf32> to vector<16x32xf32>
    %cst_109 = arith.constant dense<0.000000e+00> : vector<16x32xf32>
    %248 = tpu.matmul %96, %247, %cst_109 {dimension_numbers = #tpu.dot_dimension_numbers<[1], [0], [0], [1], [0, 0, 1, 1], [], []>} : vector<16x16xf32>, vector<16x32xf32>, vector<16x32xf32> -> vector<16x32xf32>
    %249 = arith.mulf %248, %3 : vector<16x32xf32>
    %250 = vector.extract_strided_slice %218 {offsets = [16, 16], sizes = [16, 16], strides = [1, 1]} : vector<32x32xf32> to vector<16x16xf32>
    %cst_110 = arith.constant dense<0.000000e+00> : vector<16x32xf32>
    %251 = tpu.matmul %250, %249, %cst_110 {dimension_numbers = #tpu.dot_dimension_numbers<[1], [0], [0], [1], [0, 0, 1, 1], [], []>} : vector<16x16xf32>, vector<16x32xf32>, vector<16x32xf32> -> vector<16x32xf32>
    %cst_111 = arith.constant dense<0.000000e+00> : vector<16x32xf32>
    %252 = tpu.matmul %87, %251, %cst_111 {dimension_numbers = #tpu.dot_dimension_numbers<[1], [0], [0], [1], [0, 0, 1, 1], [], []>} : vector<16x16xf32>, vector<16x32xf32>, vector<16x32xf32> -> vector<16x32xf32>
    %cst_112 = arith.constant 0.000000e+00 : f32
    %253 = vector.broadcast %cst_112 : f32 to vector<16x32xf32>
    %254 = vector.extract_strided_slice %220 {offsets = [0, 0], sizes = [1, 32], strides = [1, 1]} : vector<3x32xf32> to vector<1x32xf32>
    %cst_113 = arith.constant 0.000000e+00 : f32
    %255 = vector.broadcast %cst_113 : f32 to vector<1x32xf32>
    %256 = vector.extract_strided_slice %247 {offsets = [0, 0], sizes = [15, 32], strides = [1, 1]} : vector<16x32xf32> to vector<15x32xf32>
    %257 = tpu.concatenate %255, %256 in 0 : vector<1x32xf32>, vector<15x32xf32> -> vector<16x32xf32>
    %258 = vector.broadcast %254 : vector<1x32xf32> to vector<16x32xf32>
    %259 = arith.mulf %258, %257 : vector<16x32xf32>
    %260 = arith.addf %253, %259 : vector<16x32xf32>
    %261 = vector.extract_strided_slice %220 {offsets = [1, 0], sizes = [1, 32], strides = [1, 1]} : vector<3x32xf32> to vector<1x32xf32>
    %262 = vector.broadcast %261 : vector<1x32xf32> to vector<16x32xf32>
    %263 = arith.mulf %262, %247 : vector<16x32xf32>
    %264 = arith.addf %260, %263 : vector<16x32xf32>
    %265 = vector.extract_strided_slice %220 {offsets = [2, 0], sizes = [1, 32], strides = [1, 1]} : vector<3x32xf32> to vector<1x32xf32>
    %cst_114 = arith.constant 0.000000e+00 : f32
    %266 = vector.broadcast %cst_114 : f32 to vector<1x32xf32>
    %267 = vector.extract_strided_slice %247 {offsets = [1, 0], sizes = [15, 32], strides = [1, 1]} : vector<16x32xf32> to vector<15x32xf32>
    %268 = tpu.concatenate %267, %266 in 0 : vector<15x32xf32>, vector<1x32xf32> -> vector<16x32xf32>
    %269 = vector.broadcast %265 : vector<1x32xf32> to vector<16x32xf32>
    %270 = arith.mulf %269, %268 : vector<16x32xf32>
    %271 = arith.addf %264, %270 : vector<16x32xf32>
    %272 = arith.addf %252, %271 : vector<16x32xf32>
    %273 = tpu.concatenate %246, %272 in 0 : vector<16x32xf32>, vector<16x32xf32> -> vector<32x32xf32>
    %c0_115 = arith.constant 0 : index
    %c0_116 = arith.constant 0 : index
    %c0_117 = arith.constant 0 : index
    %274 = vector.load %arg10[%c0_115, %c0_116, %c0_117] : memref<2x32x32xf32, #tpu.memory_space<vmem>>, vector<1x32x32xf32>
    %275 = vector.shape_cast %274 : vector<1x32x32xf32> to vector<32x32xf32>
    %cst_118 = arith.constant dense<0.000000e+00> : vector<32x32xf32>
    %276 = tpu.matmul %273, %275, %cst_118 {dimension_numbers = #tpu.dot_dimension_numbers<[1], [0], [0], [1], [0, 0, 1, 1], [], []>} : vector<32x32xf32>, vector<32x32xf32>, vector<32x32xf32> -> vector<32x32xf32>
    %277 = arith.addf %0, %276 : vector<32x32xf32>
    %c0_119 = arith.constant 0 : index
    %c0_120 = arith.constant 0 : index
    %c0_121 = arith.constant 0 : index
    %278 = vector.load %arg11[%c0_119, %c0_120, %c0_121] : memref<2x1x32xf32, #tpu.memory_space<vmem>>, vector<1x1x32xf32>
    %279 = vector.shape_cast %278 : vector<1x1x32xf32> to vector<1x32xf32>
    %280 = vector.broadcast %279 : vector<1x32xf32> to vector<32x32xf32>
    %281 = arith.addf %277, %280 : vector<32x32xf32>
    %c0_122 = arith.constant 0 : index
    %c0_123 = arith.constant 0 : index
    %c0_124 = arith.constant 0 : index
    %282 = vector.load %arg13[%c0_122, %c0_123, %c0_124] : memref<2x1x32xf32, #tpu.memory_space<vmem>>, vector<1x1x32xf32>
    %283 = vector.shape_cast %282 : vector<1x1x32xf32> to vector<1x32xf32>
    %c0_125 = arith.constant 0 : index
    %c0_126 = arith.constant 0 : index
    %c0_127 = arith.constant 0 : index
    %284 = vector.load %arg14[%c0_125, %c0_126, %c0_127] : memref<2x1x32xf32, #tpu.memory_space<vmem>>, vector<1x1x32xf32>
    %285 = vector.shape_cast %284 : vector<1x1x32xf32> to vector<1x32xf32>
    %cst_128 = arith.constant dense<0.000000e+00> : vector<32xf32>
    %286 = vector.multi_reduction <add>, %281, %cst_128 [1] : vector<32x32xf32> to vector<32xf32>
    %287 = vector.shape_cast %286 : vector<32xf32> to vector<32x1xf32>
    %cst_129 = arith.constant 3.200000e+01 : f32
    %288 = vector.broadcast %cst_129 : f32 to vector<32x1xf32>
    %289 = arith.divf %287, %288 : vector<32x1xf32>
    %290 = vector.broadcast %289 : vector<32x1xf32> to vector<32x32xf32>
    %291 = arith.subf %281, %290 : vector<32x32xf32>
    %292 = arith.mulf %291, %291 : vector<32x32xf32>
    %cst_130 = arith.constant dense<0.000000e+00> : vector<32xf32>
    %293 = vector.multi_reduction <add>, %292, %cst_130 [1] : vector<32x32xf32> to vector<32xf32>
    %294 = vector.shape_cast %293 : vector<32xf32> to vector<32x1xf32>
    %cst_131 = arith.constant 3.200000e+01 : f32
    %295 = vector.broadcast %cst_131 : f32 to vector<32x1xf32>
    %296 = arith.divf %294, %295 : vector<32x1xf32>
    %cst_132 = arith.constant 9.99999974E-6 : f32
    %297 = vector.broadcast %cst_132 : f32 to vector<32x1xf32>
    %298 = arith.addf %296, %297 : vector<32x1xf32>
    %299 = math.rsqrt %298 : vector<32x1xf32>
    %300 = vector.broadcast %299 : vector<32x1xf32> to vector<32x32xf32>
    %301 = arith.mulf %291, %300 : vector<32x32xf32>
    %302 = vector.broadcast %283 : vector<1x32xf32> to vector<32x32xf32>
    %303 = arith.mulf %301, %302 : vector<32x32xf32>
    %304 = vector.broadcast %285 : vector<1x32xf32> to vector<32x32xf32>
    %305 = arith.addf %303, %304 : vector<32x32xf32>
    %c0_133 = arith.constant 0 : index
    %c0_134 = arith.constant 0 : index
    %c0_135 = arith.constant 0 : index
    %306 = vector.load %arg15[%c0_133, %c0_134, %c0_135] : memref<2x32x128xf32, #tpu.memory_space<vmem>>, vector<1x32x128xf32>
    %307 = vector.shape_cast %306 : vector<1x32x128xf32> to vector<32x128xf32>
    %cst_136 = arith.constant dense<0.000000e+00> : vector<32x128xf32>
    %308 = tpu.matmul %305, %307, %cst_136 {dimension_numbers = #tpu.dot_dimension_numbers<[1], [0], [0], [1], [0, 0, 1, 1], [], []>} : vector<32x32xf32>, vector<32x128xf32>, vector<32x128xf32> -> vector<32x128xf32>
    %c0_137 = arith.constant 0 : index
    %c0_138 = arith.constant 0 : index
    %c0_139 = arith.constant 0 : index
    %309 = vector.load %arg16[%c0_137, %c0_138, %c0_139] : memref<2x1x128xf32, #tpu.memory_space<vmem>>, vector<1x1x128xf32>
    %310 = vector.shape_cast %309 : vector<1x1x128xf32> to vector<1x128xf32>
    %311 = vector.broadcast %310 : vector<1x128xf32> to vector<32x128xf32>
    %312 = arith.addf %308, %311 : vector<32x128xf32>
    %cst_140 = arith.constant 5.000000e-01 : f32
    %313 = vector.broadcast %cst_140 : f32 to vector<32x128xf32>
    %314 = arith.mulf %313, %312 : vector<32x128xf32>
    %cst_141 = arith.constant 0.707106769 : f32
    %315 = vector.broadcast %cst_141 : f32 to vector<32x128xf32>
    %316 = arith.mulf %312, %315 : vector<32x128xf32>
    %cst_142 = arith.constant 0.000000e+00 : f32
    %317 = vector.broadcast %cst_142 : f32 to vector<32x128xf32>
    %318 = arith.cmpf oge, %316, %317 : vector<32x128xf32>
    %cst_143 = arith.constant 1.000000e+00 : f32
    %cst_144 = arith.constant -1.000000e+00 : f32
    %319 = vector.broadcast %cst_143 : f32 to vector<32x128xf32>
    %320 = vector.broadcast %cst_144 : f32 to vector<32x128xf32>
    %321 = arith.select %318, %319, %320 : vector<32x128xi1>, vector<32x128xf32>
    %322 = math.absf %316 : vector<32x128xf32>
    %cst_145 = arith.constant 0.327591091 : f32
    %323 = vector.broadcast %cst_145 : f32 to vector<32x128xf32>
    %324 = arith.mulf %323, %322 : vector<32x128xf32>
    %cst_146 = arith.constant 1.000000e+00 : f32
    %325 = vector.broadcast %cst_146 : f32 to vector<32x128xf32>
    %326 = arith.addf %325, %324 : vector<32x128xf32>
    %cst_147 = arith.constant 1.000000e+00 : f32
    %327 = vector.broadcast %cst_147 : f32 to vector<32x128xf32>
    %328 = arith.divf %327, %326 : vector<32x128xf32>
    %cst_148 = arith.constant 1.06140542 : f32
    %329 = vector.broadcast %cst_148 : f32 to vector<32x128xf32>
    %330 = arith.mulf %329, %328 : vector<32x128xf32>
    %cst_149 = arith.constant -1.45315206 : f32
    %331 = vector.broadcast %cst_149 : f32 to vector<32x128xf32>
    %332 = arith.addf %330, %331 : vector<32x128xf32>
    %333 = arith.mulf %332, %328 : vector<32x128xf32>
    %cst_150 = arith.constant 1.42141378 : f32
    %334 = vector.broadcast %cst_150 : f32 to vector<32x128xf32>
    %335 = arith.addf %333, %334 : vector<32x128xf32>
    %336 = arith.mulf %335, %328 : vector<32x128xf32>
    %cst_151 = arith.constant -0.284496725 : f32
    %337 = vector.broadcast %cst_151 : f32 to vector<32x128xf32>
    %338 = arith.addf %336, %337 : vector<32x128xf32>
    %339 = arith.mulf %338, %328 : vector<32x128xf32>
    %cst_152 = arith.constant 0.254829586 : f32
    %340 = vector.broadcast %cst_152 : f32 to vector<32x128xf32>
    %341 = arith.addf %339, %340 : vector<32x128xf32>
    %342 = arith.mulf %341, %328 : vector<32x128xf32>
    %cst_153 = arith.constant 0.000000e+00 : f32
    %343 = vector.broadcast %cst_153 : f32 to vector<32x128xf32>
    %344 = arith.subf %343, %322 : vector<32x128xf32>
    %345 = arith.mulf %344, %322 : vector<32x128xf32>
    %346 = math.exp %345 : vector<32x128xf32>
    %347 = arith.mulf %342, %346 : vector<32x128xf32>
    %cst_154 = arith.constant 1.000000e+00 : f32
    %348 = vector.broadcast %cst_154 : f32 to vector<32x128xf32>
    %349 = arith.subf %348, %347 : vector<32x128xf32>
    %350 = arith.mulf %321, %349 : vector<32x128xf32>
    %cst_155 = arith.constant 1.000000e+00 : f32
    %351 = vector.broadcast %cst_155 : f32 to vector<32x128xf32>
    %352 = arith.addf %351, %350 : vector<32x128xf32>
    %353 = arith.mulf %314, %352 : vector<32x128xf32>
    %c0_156 = arith.constant 0 : index
    %c0_157 = arith.constant 0 : index
    %c0_158 = arith.constant 0 : index
    %354 = vector.load %arg17[%c0_156, %c0_157, %c0_158] : memref<2x128x32xf32, #tpu.memory_space<vmem>>, vector<1x128x32xf32>
    %355 = vector.shape_cast %354 : vector<1x128x32xf32> to vector<128x32xf32>
    %cst_159 = arith.constant dense<0.000000e+00> : vector<32x32xf32>
    %356 = tpu.matmul %353, %355, %cst_159 {dimension_numbers = #tpu.dot_dimension_numbers<[1], [0], [0], [1], [0, 0, 1, 1], [], []>} : vector<32x128xf32>, vector<128x32xf32>, vector<32x32xf32> -> vector<32x32xf32>
    %357 = arith.addf %281, %356 : vector<32x32xf32>
    %c0_160 = arith.constant 0 : index
    %c0_161 = arith.constant 0 : index
    %c0_162 = arith.constant 0 : index
    %358 = vector.load %arg18[%c0_160, %c0_161, %c0_162] : memref<2x1x32xf32, #tpu.memory_space<vmem>>, vector<1x1x32xf32>
    %359 = vector.shape_cast %358 : vector<1x1x32xf32> to vector<1x32xf32>
    %360 = vector.broadcast %359 : vector<1x32xf32> to vector<32x32xf32>
    %361 = arith.addf %357, %360 : vector<32x32xf32>
    %c1 = arith.constant 1 : index
    %c0_163 = arith.constant 0 : index
    %c0_164 = arith.constant 0 : index
    %362 = vector.load %arg7[%c1, %c0_163, %c0_164] : memref<2x1x32xf32, #tpu.memory_space<vmem>>, vector<1x1x32xf32>
    %363 = vector.shape_cast %362 : vector<1x1x32xf32> to vector<1x32xf32>
    %c1_165 = arith.constant 1 : index
    %c0_166 = arith.constant 0 : index
    %c0_167 = arith.constant 0 : index
    %364 = vector.load %arg8[%c1_165, %c0_166, %c0_167] : memref<2x1x32xf32, #tpu.memory_space<vmem>>, vector<1x1x32xf32>
    %365 = vector.shape_cast %364 : vector<1x1x32xf32> to vector<1x32xf32>
    %cst_168 = arith.constant dense<0.000000e+00> : vector<32xf32>
    %366 = vector.multi_reduction <add>, %361, %cst_168 [1] : vector<32x32xf32> to vector<32xf32>
    %367 = vector.shape_cast %366 : vector<32xf32> to vector<32x1xf32>
    %cst_169 = arith.constant 3.200000e+01 : f32
    %368 = vector.broadcast %cst_169 : f32 to vector<32x1xf32>
    %369 = arith.divf %367, %368 : vector<32x1xf32>
    %370 = vector.broadcast %369 : vector<32x1xf32> to vector<32x32xf32>
    %371 = arith.subf %361, %370 : vector<32x32xf32>
    %372 = arith.mulf %371, %371 : vector<32x32xf32>
    %cst_170 = arith.constant dense<0.000000e+00> : vector<32xf32>
    %373 = vector.multi_reduction <add>, %372, %cst_170 [1] : vector<32x32xf32> to vector<32xf32>
    %374 = vector.shape_cast %373 : vector<32xf32> to vector<32x1xf32>
    %cst_171 = arith.constant 3.200000e+01 : f32
    %375 = vector.broadcast %cst_171 : f32 to vector<32x1xf32>
    %376 = arith.divf %374, %375 : vector<32x1xf32>
    %cst_172 = arith.constant 9.99999974E-6 : f32
    %377 = vector.broadcast %cst_172 : f32 to vector<32x1xf32>
    %378 = arith.addf %376, %377 : vector<32x1xf32>
    %379 = math.rsqrt %378 : vector<32x1xf32>
    %380 = vector.broadcast %379 : vector<32x1xf32> to vector<32x32xf32>
    %381 = arith.mulf %371, %380 : vector<32x32xf32>
    %382 = vector.broadcast %363 : vector<1x32xf32> to vector<32x32xf32>
    %383 = arith.mulf %381, %382 : vector<32x32xf32>
    %384 = vector.broadcast %365 : vector<1x32xf32> to vector<32x32xf32>
    %385 = arith.addf %383, %384 : vector<32x32xf32>
    %c1_173 = arith.constant 1 : index
    %c0_174 = arith.constant 0 : index
    %c0_175 = arith.constant 0 : index
    %386 = vector.load %arg9[%c1_173, %c0_174, %c0_175] : memref<2x32x96xf32, #tpu.memory_space<vmem>>, vector<1x32x96xf32>
    %387 = vector.shape_cast %386 : vector<1x32x96xf32> to vector<32x96xf32>
    %cst_176 = arith.constant dense<0.000000e+00> : vector<32x96xf32>
    %388 = tpu.matmul %385, %387, %cst_176 {dimension_numbers = #tpu.dot_dimension_numbers<[1], [0], [0], [1], [0, 0, 1, 1], [], []>} : vector<32x32xf32>, vector<32x96xf32>, vector<32x96xf32> -> vector<32x96xf32>
    %389 = vector.extract_strided_slice %388 {offsets = [0, 0], sizes = [32, 32], strides = [1, 1]} : vector<32x96xf32> to vector<32x32xf32>
    %cst_177 = arith.constant 0.353553385 : f32
    %390 = vector.broadcast %cst_177 : f32 to vector<32x32xf32>
    %391 = arith.mulf %389, %390 : vector<32x32xf32>
    %392 = vector.extract_strided_slice %388 {offsets = [0, 32], sizes = [32, 32], strides = [1, 1]} : vector<32x96xf32> to vector<32x32xf32>
    %393 = vector.extract_strided_slice %388 {offsets = [0, 64], sizes = [32, 32], strides = [1, 1]} : vector<32x96xf32> to vector<32x32xf32>
    %394 = vector.extract_strided_slice %391 {offsets = [0, 0], sizes = [16, 32], strides = [1, 1]} : vector<32x32xf32> to vector<16x32xf32>
    %395 = vector.extract_strided_slice %392 {offsets = [0, 0], sizes = [16, 32], strides = [1, 1]} : vector<32x32xf32> to vector<16x32xf32>
    %cst_178 = arith.constant dense<0.000000e+00> : vector<4x32xf32>
    %396 = tpu.matmul %1, %394, %cst_178 {dimension_numbers = #tpu.dot_dimension_numbers<[1], [0], [0], [1], [0, 0, 1, 1], [], []>} : vector<4x16xf32>, vector<16x32xf32>, vector<4x32xf32> -> vector<4x32xf32>
    %cst_179 = arith.constant dense<0.000000e+00> : vector<4x32xf32>
    %397 = tpu.matmul %1, %395, %cst_179 {dimension_numbers = #tpu.dot_dimension_numbers<[1], [0], [0], [1], [0, 0, 1, 1], [], []>} : vector<4x16xf32>, vector<16x32xf32>, vector<4x32xf32> -> vector<4x32xf32>
    %398 = tpu.transpose %397, [1, 0] : vector<4x32xf32> -> vector<32x4xf32>
    %399 = tpu.transpose %395, [1, 0] : vector<16x32xf32> -> vector<32x16xf32>
    %400 = tpu.concatenate %398, %398, %398, %398 in 1 : vector<32x4xf32>, vector<32x4xf32>, vector<32x4xf32>, vector<32x4xf32> -> vector<32x16xf32>
    %401 = arith.mulf %400, %2 : vector<32x16xf32>
    %402 = tpu.concatenate %396, %396, %396, %396 in 0 : vector<4x32xf32>, vector<4x32xf32>, vector<4x32xf32>, vector<4x32xf32> -> vector<16x32xf32>
    %403 = arith.mulf %402, %3 : vector<16x32xf32>
    %cst_180 = arith.constant dense<0.000000e+00> : vector<16x16xf32>
    %404 = tpu.matmul %394, %401, %cst_180 {dimension_numbers = #tpu.dot_dimension_numbers<[1], [0], [0], [1], [0, 0, 1, 1], [], []>} : vector<16x32xf32>, vector<32x16xf32>, vector<16x16xf32> -> vector<16x16xf32>
    %cst_181 = arith.constant dense<0.000000e+00> : vector<16x16xf32>
    %405 = tpu.matmul %403, %399, %cst_181 {dimension_numbers = #tpu.dot_dimension_numbers<[1], [0], [0], [1], [0, 0, 1, 1], [], []>} : vector<16x32xf32>, vector<32x16xf32>, vector<16x16xf32> -> vector<16x16xf32>
    %cst_182 = arith.constant dense<0.000000e+00> : vector<16x4xf32>
    %406 = tpu.matmul %403, %398, %cst_182 {dimension_numbers = #tpu.dot_dimension_numbers<[1], [0], [0], [1], [0, 0, 1, 1], [], []>} : vector<16x32xf32>, vector<32x4xf32>, vector<16x4xf32> -> vector<16x4xf32>
    %cst_183 = arith.constant dense<0xFF800000> : vector<16xf32>
    %407 = vector.multi_reduction <maximumf>, %404, %cst_183 [1] : vector<16x16xf32> to vector<16xf32>
    %408 = vector.shape_cast %407 : vector<16xf32> to vector<16x1xf32>
    %409 = vector.broadcast %408 : vector<16x1xf32> to vector<16x16xf32>
    %410 = arith.subf %404, %409 : vector<16x16xf32>
    %411 = math.exp %410 : vector<16x16xf32>
    %cst_184 = arith.constant dense<0.000000e+00> : vector<16x16xf32>
    %412 = tpu.matmul %411, %4, %cst_184 {dimension_numbers = #tpu.dot_dimension_numbers<[1], [0], [0], [1], [0, 0, 1, 1], [], []>} : vector<16x16xf32>, vector<16x16xf32>, vector<16x16xf32> -> vector<16x16xf32>
    %413 = arith.divf %411, %412 : vector<16x16xf32>
    %cst_185 = arith.constant dense<0xFF800000> : vector<16xf32>
    %414 = vector.multi_reduction <maximumf>, %405, %cst_185 [1] : vector<16x16xf32> to vector<16xf32>
    %415 = vector.shape_cast %414 : vector<16xf32> to vector<16x1xf32>
    %416 = vector.broadcast %415 : vector<16x1xf32> to vector<16x16xf32>
    %417 = arith.subf %405, %416 : vector<16x16xf32>
    %418 = math.exp %417 : vector<16x16xf32>
    %cst_186 = arith.constant dense<0.000000e+00> : vector<16xf32>
    %419 = vector.multi_reduction <add>, %418, %cst_186 [1] : vector<16x16xf32> to vector<16xf32>
    %420 = vector.shape_cast %419 : vector<16xf32> to vector<16x1xf32>
    %421 = vector.broadcast %420 : vector<16x1xf32> to vector<16x16xf32>
    %422 = arith.divf %418, %421 : vector<16x16xf32>
    %423 = vector.extract_strided_slice %391 {offsets = [16, 0], sizes = [16, 32], strides = [1, 1]} : vector<32x32xf32> to vector<16x32xf32>
    %424 = vector.extract_strided_slice %392 {offsets = [16, 0], sizes = [16, 32], strides = [1, 1]} : vector<32x32xf32> to vector<16x32xf32>
    %cst_187 = arith.constant dense<0.000000e+00> : vector<4x32xf32>
    %425 = tpu.matmul %1, %423, %cst_187 {dimension_numbers = #tpu.dot_dimension_numbers<[1], [0], [0], [1], [0, 0, 1, 1], [], []>} : vector<4x16xf32>, vector<16x32xf32>, vector<4x32xf32> -> vector<4x32xf32>
    %cst_188 = arith.constant dense<0.000000e+00> : vector<4x32xf32>
    %426 = tpu.matmul %1, %424, %cst_188 {dimension_numbers = #tpu.dot_dimension_numbers<[1], [0], [0], [1], [0, 0, 1, 1], [], []>} : vector<4x16xf32>, vector<16x32xf32>, vector<4x32xf32> -> vector<4x32xf32>
    %427 = tpu.transpose %426, [1, 0] : vector<4x32xf32> -> vector<32x4xf32>
    %428 = tpu.transpose %424, [1, 0] : vector<16x32xf32> -> vector<32x16xf32>
    %429 = tpu.concatenate %427, %427, %427, %427 in 1 : vector<32x4xf32>, vector<32x4xf32>, vector<32x4xf32>, vector<32x4xf32> -> vector<32x16xf32>
    %430 = arith.mulf %429, %2 : vector<32x16xf32>
    %431 = tpu.concatenate %425, %425, %425, %425 in 0 : vector<4x32xf32>, vector<4x32xf32>, vector<4x32xf32>, vector<4x32xf32> -> vector<16x32xf32>
    %432 = arith.mulf %431, %3 : vector<16x32xf32>
    %cst_189 = arith.constant dense<0.000000e+00> : vector<16x16xf32>
    %433 = tpu.matmul %423, %430, %cst_189 {dimension_numbers = #tpu.dot_dimension_numbers<[1], [0], [0], [1], [0, 0, 1, 1], [], []>} : vector<16x32xf32>, vector<32x16xf32>, vector<16x16xf32> -> vector<16x16xf32>
    %cst_190 = arith.constant dense<0.000000e+00> : vector<16x16xf32>
    %434 = tpu.matmul %432, %428, %cst_190 {dimension_numbers = #tpu.dot_dimension_numbers<[1], [0], [0], [1], [0, 0, 1, 1], [], []>} : vector<16x32xf32>, vector<32x16xf32>, vector<16x16xf32> -> vector<16x16xf32>
    %cst_191 = arith.constant dense<0.000000e+00> : vector<16x4xf32>
    %435 = tpu.matmul %432, %427, %cst_191 {dimension_numbers = #tpu.dot_dimension_numbers<[1], [0], [0], [1], [0, 0, 1, 1], [], []>} : vector<16x32xf32>, vector<32x4xf32>, vector<16x4xf32> -> vector<16x4xf32>
    %cst_192 = arith.constant dense<0xFF800000> : vector<16xf32>
    %436 = vector.multi_reduction <maximumf>, %433, %cst_192 [1] : vector<16x16xf32> to vector<16xf32>
    %437 = vector.shape_cast %436 : vector<16xf32> to vector<16x1xf32>
    %438 = vector.broadcast %437 : vector<16x1xf32> to vector<16x16xf32>
    %439 = arith.subf %433, %438 : vector<16x16xf32>
    %440 = math.exp %439 : vector<16x16xf32>
    %cst_193 = arith.constant dense<0.000000e+00> : vector<16x16xf32>
    %441 = tpu.matmul %440, %4, %cst_193 {dimension_numbers = #tpu.dot_dimension_numbers<[1], [0], [0], [1], [0, 0, 1, 1], [], []>} : vector<16x16xf32>, vector<16x16xf32>, vector<16x16xf32> -> vector<16x16xf32>
    %442 = arith.divf %440, %441 : vector<16x16xf32>
    %cst_194 = arith.constant dense<0xFF800000> : vector<16xf32>
    %443 = vector.multi_reduction <maximumf>, %434, %cst_194 [1] : vector<16x16xf32> to vector<16xf32>
    %444 = vector.shape_cast %443 : vector<16xf32> to vector<16x1xf32>
    %445 = vector.broadcast %444 : vector<16x1xf32> to vector<16x16xf32>
    %446 = arith.subf %434, %445 : vector<16x16xf32>
    %447 = math.exp %446 : vector<16x16xf32>
    %cst_195 = arith.constant dense<0.000000e+00> : vector<16xf32>
    %448 = vector.multi_reduction <add>, %447, %cst_195 [1] : vector<16x16xf32> to vector<16xf32>
    %449 = vector.shape_cast %448 : vector<16xf32> to vector<16x1xf32>
    %450 = vector.broadcast %449 : vector<16x1xf32> to vector<16x16xf32>
    %451 = arith.divf %447, %450 : vector<16x16xf32>
    %452 = tpu.concatenate %406, %435 in 0 : vector<16x4xf32>, vector<16x4xf32> -> vector<32x4xf32>
    %cst_196 = arith.constant dense<0xFF800000> : vector<32xf32>
    %453 = vector.multi_reduction <maximumf>, %452, %cst_196 [1] : vector<32x4xf32> to vector<32xf32>
    %454 = vector.shape_cast %453 : vector<32xf32> to vector<32x1xf32>
    %455 = vector.broadcast %454 : vector<32x1xf32> to vector<32x4xf32>
    %456 = arith.subf %452, %455 : vector<32x4xf32>
    %457 = math.exp %456 : vector<32x4xf32>
    %cst_197 = arith.constant dense<0.000000e+00> : vector<32xf32>
    %458 = vector.multi_reduction <add>, %457, %cst_197 [1] : vector<32x4xf32> to vector<32xf32>
    %459 = vector.shape_cast %458 : vector<32xf32> to vector<32x1xf32>
    %460 = vector.broadcast %459 : vector<32x1xf32> to vector<32x4xf32>
    %461 = arith.divf %457, %460 : vector<32x4xf32>
    %462 = tpu.concatenate %461, %461, %461, %461, %461, %461, %461, %461 in 1 : vector<32x4xf32>, vector<32x4xf32>, vector<32x4xf32>, vector<32x4xf32>, vector<32x4xf32>, vector<32x4xf32>, vector<32x4xf32>, vector<32x4xf32> -> vector<32x32xf32>
    %463 = arith.mulf %462, %5 : vector<32x32xf32>
    %464 = math.absf %463 : vector<32x32xf32>
    %cst_198 = arith.constant dense<0.000000e+00> : vector<32xf32>
    %465 = vector.multi_reduction <add>, %464, %cst_198 [1] : vector<32x32xf32> to vector<32xf32>
    %466 = vector.shape_cast %465 : vector<32xf32> to vector<32x1xf32>
    %467 = math.absf %463 : vector<32x32xf32>
    %cst_199 = arith.constant dense<0.000000e+00> : vector<32xf32>
    %468 = vector.multi_reduction <add>, %467, %cst_199 [0] : vector<32x32xf32> to vector<32xf32>
    %469 = vector.shape_cast %468 : vector<32xf32> to vector<1x32xf32>
    %470 = vector.shape_cast %466 : vector<32x1xf32> to vector<1x32x1xf32>
    %cst_200 = arith.constant dense<0xFF800000> : vector<1xf32>
    %471 = vector.multi_reduction <maximumf>, %470, %cst_200 [1, 2] : vector<1x32x1xf32> to vector<1xf32>
    %472 = vector.shape_cast %471 : vector<1xf32> to vector<1x1x1xf32>
    %473 = vector.extract %472[0, 0, 0] : f32 from vector<1x1x1xf32>
    %474 = vector.broadcast %473 : f32 to vector<1x1xf32>
    %475 = vector.shape_cast %469 : vector<1x32xf32> to vector<1x1x32xf32>
    %cst_201 = arith.constant dense<0xFF800000> : vector<1xf32>
    %476 = vector.multi_reduction <maximumf>, %475, %cst_201 [1, 2] : vector<1x1x32xf32> to vector<1xf32>
    %477 = vector.shape_cast %476 : vector<1xf32> to vector<1x1x1xf32>
    %478 = vector.extract %477[0, 0, 0] : f32 from vector<1x1x1xf32>
    %479 = vector.broadcast %478 : f32 to vector<1x1xf32>
    %480 = arith.mulf %474, %479 : vector<1x1xf32>
    %481 = tpu.transpose %463, [1, 0] : vector<32x32xf32> -> vector<32x32xf32>
    %482 = vector.broadcast %480 : vector<1x1xf32> to vector<32x32xf32>
    %483 = arith.divf %481, %482 : vector<32x32xf32>
    %cst_202 = arith.constant dense<0.000000e+00> : vector<32x32xf32>
    %484 = tpu.matmul %463, %483, %cst_202 {dimension_numbers = #tpu.dot_dimension_numbers<[1], [0], [0], [1], [0, 0, 1, 1], [], []>} : vector<32x32xf32>, vector<32x32xf32>, vector<32x32xf32> -> vector<32x32xf32>
    %cst_203 = arith.constant 7.000000e+00 : f32
    %485 = vector.broadcast %cst_203 : f32 to vector<32x32xf32>
    %486 = arith.mulf %485, %6 : vector<32x32xf32>
    %487 = arith.subf %486, %484 : vector<32x32xf32>
    %cst_204 = arith.constant 1.500000e+01 : f32
    %488 = vector.broadcast %cst_204 : f32 to vector<32x32xf32>
    %489 = arith.mulf %488, %6 : vector<32x32xf32>
    %cst_205 = arith.constant dense<0.000000e+00> : vector<32x32xf32>
    %490 = tpu.matmul %484, %487, %cst_205 {dimension_numbers = #tpu.dot_dimension_numbers<[1], [0], [0], [1], [0, 0, 1, 1], [], []>} : vector<32x32xf32>, vector<32x32xf32>, vector<32x32xf32> -> vector<32x32xf32>
    %491 = arith.subf %489, %490 : vector<32x32xf32>
    %cst_206 = arith.constant 1.300000e+01 : f32
    %492 = vector.broadcast %cst_206 : f32 to vector<32x32xf32>
    %493 = arith.mulf %492, %6 : vector<32x32xf32>
    %cst_207 = arith.constant dense<0.000000e+00> : vector<32x32xf32>
    %494 = tpu.matmul %484, %491, %cst_207 {dimension_numbers = #tpu.dot_dimension_numbers<[1], [0], [0], [1], [0, 0, 1, 1], [], []>} : vector<32x32xf32>, vector<32x32xf32>, vector<32x32xf32> -> vector<32x32xf32>
    %495 = arith.subf %493, %494 : vector<32x32xf32>
    %cst_208 = arith.constant dense<0.000000e+00> : vector<32x32xf32>
    %496 = tpu.matmul %483, %495, %cst_208 {dimension_numbers = #tpu.dot_dimension_numbers<[1], [0], [0], [1], [0, 0, 1, 1], [], []>} : vector<32x32xf32>, vector<32x32xf32>, vector<32x32xf32> -> vector<32x32xf32>
    %cst_209 = arith.constant 2.500000e-01 : f32
    %497 = vector.broadcast %cst_209 : f32 to vector<32x32xf32>
    %498 = arith.mulf %497, %496 : vector<32x32xf32>
    %cst_210 = arith.constant dense<0.000000e+00> : vector<32x32xf32>
    %499 = tpu.matmul %463, %498, %cst_210 {dimension_numbers = #tpu.dot_dimension_numbers<[1], [0], [0], [1], [0, 0, 1, 1], [], []>} : vector<32x32xf32>, vector<32x32xf32>, vector<32x32xf32> -> vector<32x32xf32>
    %cst_211 = arith.constant 7.000000e+00 : f32
    %500 = vector.broadcast %cst_211 : f32 to vector<32x32xf32>
    %501 = arith.mulf %500, %6 : vector<32x32xf32>
    %502 = arith.subf %501, %499 : vector<32x32xf32>
    %cst_212 = arith.constant 1.500000e+01 : f32
    %503 = vector.broadcast %cst_212 : f32 to vector<32x32xf32>
    %504 = arith.mulf %503, %6 : vector<32x32xf32>
    %cst_213 = arith.constant dense<0.000000e+00> : vector<32x32xf32>
    %505 = tpu.matmul %499, %502, %cst_213 {dimension_numbers = #tpu.dot_dimension_numbers<[1], [0], [0], [1], [0, 0, 1, 1], [], []>} : vector<32x32xf32>, vector<32x32xf32>, vector<32x32xf32> -> vector<32x32xf32>
    %506 = arith.subf %504, %505 : vector<32x32xf32>
    %cst_214 = arith.constant 1.300000e+01 : f32
    %507 = vector.broadcast %cst_214 : f32 to vector<32x32xf32>
    %508 = arith.mulf %507, %6 : vector<32x32xf32>
    %cst_215 = arith.constant dense<0.000000e+00> : vector<32x32xf32>
    %509 = tpu.matmul %499, %506, %cst_215 {dimension_numbers = #tpu.dot_dimension_numbers<[1], [0], [0], [1], [0, 0, 1, 1], [], []>} : vector<32x32xf32>, vector<32x32xf32>, vector<32x32xf32> -> vector<32x32xf32>
    %510 = arith.subf %508, %509 : vector<32x32xf32>
    %cst_216 = arith.constant dense<0.000000e+00> : vector<32x32xf32>
    %511 = tpu.matmul %498, %510, %cst_216 {dimension_numbers = #tpu.dot_dimension_numbers<[1], [0], [0], [1], [0, 0, 1, 1], [], []>} : vector<32x32xf32>, vector<32x32xf32>, vector<32x32xf32> -> vector<32x32xf32>
    %cst_217 = arith.constant 2.500000e-01 : f32
    %512 = vector.broadcast %cst_217 : f32 to vector<32x32xf32>
    %513 = arith.mulf %512, %511 : vector<32x32xf32>
    %cst_218 = arith.constant dense<0.000000e+00> : vector<32x32xf32>
    %514 = tpu.matmul %463, %513, %cst_218 {dimension_numbers = #tpu.dot_dimension_numbers<[1], [0], [0], [1], [0, 0, 1, 1], [], []>} : vector<32x32xf32>, vector<32x32xf32>, vector<32x32xf32> -> vector<32x32xf32>
    %cst_219 = arith.constant 7.000000e+00 : f32
    %515 = vector.broadcast %cst_219 : f32 to vector<32x32xf32>
    %516 = arith.mulf %515, %6 : vector<32x32xf32>
    %517 = arith.subf %516, %514 : vector<32x32xf32>
    %cst_220 = arith.constant 1.500000e+01 : f32
    %518 = vector.broadcast %cst_220 : f32 to vector<32x32xf32>
    %519 = arith.mulf %518, %6 : vector<32x32xf32>
    %cst_221 = arith.constant dense<0.000000e+00> : vector<32x32xf32>
    %520 = tpu.matmul %514, %517, %cst_221 {dimension_numbers = #tpu.dot_dimension_numbers<[1], [0], [0], [1], [0, 0, 1, 1], [], []>} : vector<32x32xf32>, vector<32x32xf32>, vector<32x32xf32> -> vector<32x32xf32>
    %521 = arith.subf %519, %520 : vector<32x32xf32>
    %cst_222 = arith.constant 1.300000e+01 : f32
    %522 = vector.broadcast %cst_222 : f32 to vector<32x32xf32>
    %523 = arith.mulf %522, %6 : vector<32x32xf32>
    %cst_223 = arith.constant dense<0.000000e+00> : vector<32x32xf32>
    %524 = tpu.matmul %514, %521, %cst_223 {dimension_numbers = #tpu.dot_dimension_numbers<[1], [0], [0], [1], [0, 0, 1, 1], [], []>} : vector<32x32xf32>, vector<32x32xf32>, vector<32x32xf32> -> vector<32x32xf32>
    %525 = arith.subf %523, %524 : vector<32x32xf32>
    %cst_224 = arith.constant dense<0.000000e+00> : vector<32x32xf32>
    %526 = tpu.matmul %513, %525, %cst_224 {dimension_numbers = #tpu.dot_dimension_numbers<[1], [0], [0], [1], [0, 0, 1, 1], [], []>} : vector<32x32xf32>, vector<32x32xf32>, vector<32x32xf32> -> vector<32x32xf32>
    %cst_225 = arith.constant 2.500000e-01 : f32
    %527 = vector.broadcast %cst_225 : f32 to vector<32x32xf32>
    %528 = arith.mulf %527, %526 : vector<32x32xf32>
    %cst_226 = arith.constant dense<0.000000e+00> : vector<32x32xf32>
    %529 = tpu.matmul %463, %528, %cst_226 {dimension_numbers = #tpu.dot_dimension_numbers<[1], [0], [0], [1], [0, 0, 1, 1], [], []>} : vector<32x32xf32>, vector<32x32xf32>, vector<32x32xf32> -> vector<32x32xf32>
    %cst_227 = arith.constant 7.000000e+00 : f32
    %530 = vector.broadcast %cst_227 : f32 to vector<32x32xf32>
    %531 = arith.mulf %530, %6 : vector<32x32xf32>
    %532 = arith.subf %531, %529 : vector<32x32xf32>
    %cst_228 = arith.constant 1.500000e+01 : f32
    %533 = vector.broadcast %cst_228 : f32 to vector<32x32xf32>
    %534 = arith.mulf %533, %6 : vector<32x32xf32>
    %cst_229 = arith.constant dense<0.000000e+00> : vector<32x32xf32>
    %535 = tpu.matmul %529, %532, %cst_229 {dimension_numbers = #tpu.dot_dimension_numbers<[1], [0], [0], [1], [0, 0, 1, 1], [], []>} : vector<32x32xf32>, vector<32x32xf32>, vector<32x32xf32> -> vector<32x32xf32>
    %536 = arith.subf %534, %535 : vector<32x32xf32>
    %cst_230 = arith.constant 1.300000e+01 : f32
    %537 = vector.broadcast %cst_230 : f32 to vector<32x32xf32>
    %538 = arith.mulf %537, %6 : vector<32x32xf32>
    %cst_231 = arith.constant dense<0.000000e+00> : vector<32x32xf32>
    %539 = tpu.matmul %529, %536, %cst_231 {dimension_numbers = #tpu.dot_dimension_numbers<[1], [0], [0], [1], [0, 0, 1, 1], [], []>} : vector<32x32xf32>, vector<32x32xf32>, vector<32x32xf32> -> vector<32x32xf32>
    %540 = arith.subf %538, %539 : vector<32x32xf32>
    %cst_232 = arith.constant dense<0.000000e+00> : vector<32x32xf32>
    %541 = tpu.matmul %528, %540, %cst_232 {dimension_numbers = #tpu.dot_dimension_numbers<[1], [0], [0], [1], [0, 0, 1, 1], [], []>} : vector<32x32xf32>, vector<32x32xf32>, vector<32x32xf32> -> vector<32x32xf32>
    %cst_233 = arith.constant 2.500000e-01 : f32
    %542 = vector.broadcast %cst_233 : f32 to vector<32x32xf32>
    %543 = arith.mulf %542, %541 : vector<32x32xf32>
    %cst_234 = arith.constant dense<0.000000e+00> : vector<32x32xf32>
    %544 = tpu.matmul %463, %543, %cst_234 {dimension_numbers = #tpu.dot_dimension_numbers<[1], [0], [0], [1], [0, 0, 1, 1], [], []>} : vector<32x32xf32>, vector<32x32xf32>, vector<32x32xf32> -> vector<32x32xf32>
    %cst_235 = arith.constant 7.000000e+00 : f32
    %545 = vector.broadcast %cst_235 : f32 to vector<32x32xf32>
    %546 = arith.mulf %545, %6 : vector<32x32xf32>
    %547 = arith.subf %546, %544 : vector<32x32xf32>
    %cst_236 = arith.constant 1.500000e+01 : f32
    %548 = vector.broadcast %cst_236 : f32 to vector<32x32xf32>
    %549 = arith.mulf %548, %6 : vector<32x32xf32>
    %cst_237 = arith.constant dense<0.000000e+00> : vector<32x32xf32>
    %550 = tpu.matmul %544, %547, %cst_237 {dimension_numbers = #tpu.dot_dimension_numbers<[1], [0], [0], [1], [0, 0, 1, 1], [], []>} : vector<32x32xf32>, vector<32x32xf32>, vector<32x32xf32> -> vector<32x32xf32>
    %551 = arith.subf %549, %550 : vector<32x32xf32>
    %cst_238 = arith.constant 1.300000e+01 : f32
    %552 = vector.broadcast %cst_238 : f32 to vector<32x32xf32>
    %553 = arith.mulf %552, %6 : vector<32x32xf32>
    %cst_239 = arith.constant dense<0.000000e+00> : vector<32x32xf32>
    %554 = tpu.matmul %544, %551, %cst_239 {dimension_numbers = #tpu.dot_dimension_numbers<[1], [0], [0], [1], [0, 0, 1, 1], [], []>} : vector<32x32xf32>, vector<32x32xf32>, vector<32x32xf32> -> vector<32x32xf32>
    %555 = arith.subf %553, %554 : vector<32x32xf32>
    %cst_240 = arith.constant dense<0.000000e+00> : vector<32x32xf32>
    %556 = tpu.matmul %543, %555, %cst_240 {dimension_numbers = #tpu.dot_dimension_numbers<[1], [0], [0], [1], [0, 0, 1, 1], [], []>} : vector<32x32xf32>, vector<32x32xf32>, vector<32x32xf32> -> vector<32x32xf32>
    %cst_241 = arith.constant 2.500000e-01 : f32
    %557 = vector.broadcast %cst_241 : f32 to vector<32x32xf32>
    %558 = arith.mulf %557, %556 : vector<32x32xf32>
    %cst_242 = arith.constant dense<0.000000e+00> : vector<32x32xf32>
    %559 = tpu.matmul %463, %558, %cst_242 {dimension_numbers = #tpu.dot_dimension_numbers<[1], [0], [0], [1], [0, 0, 1, 1], [], []>} : vector<32x32xf32>, vector<32x32xf32>, vector<32x32xf32> -> vector<32x32xf32>
    %cst_243 = arith.constant 7.000000e+00 : f32
    %560 = vector.broadcast %cst_243 : f32 to vector<32x32xf32>
    %561 = arith.mulf %560, %6 : vector<32x32xf32>
    %562 = arith.subf %561, %559 : vector<32x32xf32>
    %cst_244 = arith.constant 1.500000e+01 : f32
    %563 = vector.broadcast %cst_244 : f32 to vector<32x32xf32>
    %564 = arith.mulf %563, %6 : vector<32x32xf32>
    %cst_245 = arith.constant dense<0.000000e+00> : vector<32x32xf32>
    %565 = tpu.matmul %559, %562, %cst_245 {dimension_numbers = #tpu.dot_dimension_numbers<[1], [0], [0], [1], [0, 0, 1, 1], [], []>} : vector<32x32xf32>, vector<32x32xf32>, vector<32x32xf32> -> vector<32x32xf32>
    %566 = arith.subf %564, %565 : vector<32x32xf32>
    %cst_246 = arith.constant 1.300000e+01 : f32
    %567 = vector.broadcast %cst_246 : f32 to vector<32x32xf32>
    %568 = arith.mulf %567, %6 : vector<32x32xf32>
    %cst_247 = arith.constant dense<0.000000e+00> : vector<32x32xf32>
    %569 = tpu.matmul %559, %566, %cst_247 {dimension_numbers = #tpu.dot_dimension_numbers<[1], [0], [0], [1], [0, 0, 1, 1], [], []>} : vector<32x32xf32>, vector<32x32xf32>, vector<32x32xf32> -> vector<32x32xf32>
    %570 = arith.subf %568, %569 : vector<32x32xf32>
    %cst_248 = arith.constant dense<0.000000e+00> : vector<32x32xf32>
    %571 = tpu.matmul %558, %570, %cst_248 {dimension_numbers = #tpu.dot_dimension_numbers<[1], [0], [0], [1], [0, 0, 1, 1], [], []>} : vector<32x32xf32>, vector<32x32xf32>, vector<32x32xf32> -> vector<32x32xf32>
    %cst_249 = arith.constant 2.500000e-01 : f32
    %572 = vector.broadcast %cst_249 : f32 to vector<32x32xf32>
    %573 = arith.mulf %572, %571 : vector<32x32xf32>
    %c1_250 = arith.constant 1 : index
    %c0_251 = arith.constant 0 : index
    %c0_252 = arith.constant 0 : index
    %574 = vector.load %arg12[%c1_250, %c0_251, %c0_252] : memref<2x3x32xf32, #tpu.memory_space<vmem>>, vector<1x3x32xf32>
    %575 = vector.shape_cast %574 : vector<1x3x32xf32> to vector<3x32xf32>
    %576 = vector.extract_strided_slice %393 {offsets = [0, 0], sizes = [16, 32], strides = [1, 1]} : vector<32x32xf32> to vector<16x32xf32>
    %cst_253 = arith.constant dense<0.000000e+00> : vector<16x32xf32>
    %577 = tpu.matmul %422, %576, %cst_253 {dimension_numbers = #tpu.dot_dimension_numbers<[1], [0], [0], [1], [0, 0, 1, 1], [], []>} : vector<16x16xf32>, vector<16x32xf32>, vector<16x32xf32> -> vector<16x32xf32>
    %578 = arith.mulf %577, %3 : vector<16x32xf32>
    %579 = vector.extract_strided_slice %573 {offsets = [0, 0], sizes = [16, 16], strides = [1, 1]} : vector<32x32xf32> to vector<16x16xf32>
    %cst_254 = arith.constant dense<0.000000e+00> : vector<16x32xf32>
    %580 = tpu.matmul %579, %578, %cst_254 {dimension_numbers = #tpu.dot_dimension_numbers<[1], [0], [0], [1], [0, 0, 1, 1], [], []>} : vector<16x16xf32>, vector<16x32xf32>, vector<16x32xf32> -> vector<16x32xf32>
    %cst_255 = arith.constant dense<0.000000e+00> : vector<16x32xf32>
    %581 = tpu.matmul %413, %580, %cst_255 {dimension_numbers = #tpu.dot_dimension_numbers<[1], [0], [0], [1], [0, 0, 1, 1], [], []>} : vector<16x16xf32>, vector<16x32xf32>, vector<16x32xf32> -> vector<16x32xf32>
    %cst_256 = arith.constant 0.000000e+00 : f32
    %582 = vector.broadcast %cst_256 : f32 to vector<16x32xf32>
    %583 = vector.extract_strided_slice %575 {offsets = [0, 0], sizes = [1, 32], strides = [1, 1]} : vector<3x32xf32> to vector<1x32xf32>
    %cst_257 = arith.constant 0.000000e+00 : f32
    %584 = vector.broadcast %cst_257 : f32 to vector<1x32xf32>
    %585 = vector.extract_strided_slice %576 {offsets = [0, 0], sizes = [15, 32], strides = [1, 1]} : vector<16x32xf32> to vector<15x32xf32>
    %586 = tpu.concatenate %584, %585 in 0 : vector<1x32xf32>, vector<15x32xf32> -> vector<16x32xf32>
    %587 = vector.broadcast %583 : vector<1x32xf32> to vector<16x32xf32>
    %588 = arith.mulf %587, %586 : vector<16x32xf32>
    %589 = arith.addf %582, %588 : vector<16x32xf32>
    %590 = vector.extract_strided_slice %575 {offsets = [1, 0], sizes = [1, 32], strides = [1, 1]} : vector<3x32xf32> to vector<1x32xf32>
    %591 = vector.broadcast %590 : vector<1x32xf32> to vector<16x32xf32>
    %592 = arith.mulf %591, %576 : vector<16x32xf32>
    %593 = arith.addf %589, %592 : vector<16x32xf32>
    %594 = vector.extract_strided_slice %575 {offsets = [2, 0], sizes = [1, 32], strides = [1, 1]} : vector<3x32xf32> to vector<1x32xf32>
    %cst_258 = arith.constant 0.000000e+00 : f32
    %595 = vector.broadcast %cst_258 : f32 to vector<1x32xf32>
    %596 = vector.extract_strided_slice %576 {offsets = [1, 0], sizes = [15, 32], strides = [1, 1]} : vector<16x32xf32> to vector<15x32xf32>
    %597 = tpu.concatenate %596, %595 in 0 : vector<15x32xf32>, vector<1x32xf32> -> vector<16x32xf32>
    %598 = vector.broadcast %594 : vector<1x32xf32> to vector<16x32xf32>
    %599 = arith.mulf %598, %597 : vector<16x32xf32>
    %600 = arith.addf %593, %599 : vector<16x32xf32>
    %601 = arith.addf %581, %600 : vector<16x32xf32>
    %602 = vector.extract_strided_slice %393 {offsets = [16, 0], sizes = [16, 32], strides = [1, 1]} : vector<32x32xf32> to vector<16x32xf32>
    %cst_259 = arith.constant dense<0.000000e+00> : vector<16x32xf32>
    %603 = tpu.matmul %451, %602, %cst_259 {dimension_numbers = #tpu.dot_dimension_numbers<[1], [0], [0], [1], [0, 0, 1, 1], [], []>} : vector<16x16xf32>, vector<16x32xf32>, vector<16x32xf32> -> vector<16x32xf32>
    %604 = arith.mulf %603, %3 : vector<16x32xf32>
    %605 = vector.extract_strided_slice %573 {offsets = [16, 16], sizes = [16, 16], strides = [1, 1]} : vector<32x32xf32> to vector<16x16xf32>
    %cst_260 = arith.constant dense<0.000000e+00> : vector<16x32xf32>
    %606 = tpu.matmul %605, %604, %cst_260 {dimension_numbers = #tpu.dot_dimension_numbers<[1], [0], [0], [1], [0, 0, 1, 1], [], []>} : vector<16x16xf32>, vector<16x32xf32>, vector<16x32xf32> -> vector<16x32xf32>
    %cst_261 = arith.constant dense<0.000000e+00> : vector<16x32xf32>
    %607 = tpu.matmul %442, %606, %cst_261 {dimension_numbers = #tpu.dot_dimension_numbers<[1], [0], [0], [1], [0, 0, 1, 1], [], []>} : vector<16x16xf32>, vector<16x32xf32>, vector<16x32xf32> -> vector<16x32xf32>
    %cst_262 = arith.constant 0.000000e+00 : f32
    %608 = vector.broadcast %cst_262 : f32 to vector<16x32xf32>
    %609 = vector.extract_strided_slice %575 {offsets = [0, 0], sizes = [1, 32], strides = [1, 1]} : vector<3x32xf32> to vector<1x32xf32>
    %cst_263 = arith.constant 0.000000e+00 : f32
    %610 = vector.broadcast %cst_263 : f32 to vector<1x32xf32>
    %611 = vector.extract_strided_slice %602 {offsets = [0, 0], sizes = [15, 32], strides = [1, 1]} : vector<16x32xf32> to vector<15x32xf32>
    %612 = tpu.concatenate %610, %611 in 0 : vector<1x32xf32>, vector<15x32xf32> -> vector<16x32xf32>
    %613 = vector.broadcast %609 : vector<1x32xf32> to vector<16x32xf32>
    %614 = arith.mulf %613, %612 : vector<16x32xf32>
    %615 = arith.addf %608, %614 : vector<16x32xf32>
    %616 = vector.extract_strided_slice %575 {offsets = [1, 0], sizes = [1, 32], strides = [1, 1]} : vector<3x32xf32> to vector<1x32xf32>
    %617 = vector.broadcast %616 : vector<1x32xf32> to vector<16x32xf32>
    %618 = arith.mulf %617, %602 : vector<16x32xf32>
    %619 = arith.addf %615, %618 : vector<16x32xf32>
    %620 = vector.extract_strided_slice %575 {offsets = [2, 0], sizes = [1, 32], strides = [1, 1]} : vector<3x32xf32> to vector<1x32xf32>
    %cst_264 = arith.constant 0.000000e+00 : f32
    %621 = vector.broadcast %cst_264 : f32 to vector<1x32xf32>
    %622 = vector.extract_strided_slice %602 {offsets = [1, 0], sizes = [15, 32], strides = [1, 1]} : vector<16x32xf32> to vector<15x32xf32>
    %623 = tpu.concatenate %622, %621 in 0 : vector<15x32xf32>, vector<1x32xf32> -> vector<16x32xf32>
    %624 = vector.broadcast %620 : vector<1x32xf32> to vector<16x32xf32>
    %625 = arith.mulf %624, %623 : vector<16x32xf32>
    %626 = arith.addf %619, %625 : vector<16x32xf32>
    %627 = arith.addf %607, %626 : vector<16x32xf32>
    %628 = tpu.concatenate %601, %627 in 0 : vector<16x32xf32>, vector<16x32xf32> -> vector<32x32xf32>
    %c1_265 = arith.constant 1 : index
    %c0_266 = arith.constant 0 : index
    %c0_267 = arith.constant 0 : index
    %629 = vector.load %arg10[%c1_265, %c0_266, %c0_267] : memref<2x32x32xf32, #tpu.memory_space<vmem>>, vector<1x32x32xf32>
    %630 = vector.shape_cast %629 : vector<1x32x32xf32> to vector<32x32xf32>
    %cst_268 = arith.constant dense<0.000000e+00> : vector<32x32xf32>
    %631 = tpu.matmul %628, %630, %cst_268 {dimension_numbers = #tpu.dot_dimension_numbers<[1], [0], [0], [1], [0, 0, 1, 1], [], []>} : vector<32x32xf32>, vector<32x32xf32>, vector<32x32xf32> -> vector<32x32xf32>
    %632 = arith.addf %361, %631 : vector<32x32xf32>
    %c1_269 = arith.constant 1 : index
    %c0_270 = arith.constant 0 : index
    %c0_271 = arith.constant 0 : index
    %633 = vector.load %arg11[%c1_269, %c0_270, %c0_271] : memref<2x1x32xf32, #tpu.memory_space<vmem>>, vector<1x1x32xf32>
    %634 = vector.shape_cast %633 : vector<1x1x32xf32> to vector<1x32xf32>
    %635 = vector.broadcast %634 : vector<1x32xf32> to vector<32x32xf32>
    %636 = arith.addf %632, %635 : vector<32x32xf32>
    %c1_272 = arith.constant 1 : index
    %c0_273 = arith.constant 0 : index
    %c0_274 = arith.constant 0 : index
    %637 = vector.load %arg13[%c1_272, %c0_273, %c0_274] : memref<2x1x32xf32, #tpu.memory_space<vmem>>, vector<1x1x32xf32>
    %638 = vector.shape_cast %637 : vector<1x1x32xf32> to vector<1x32xf32>
    %c1_275 = arith.constant 1 : index
    %c0_276 = arith.constant 0 : index
    %c0_277 = arith.constant 0 : index
    %639 = vector.load %arg14[%c1_275, %c0_276, %c0_277] : memref<2x1x32xf32, #tpu.memory_space<vmem>>, vector<1x1x32xf32>
    %640 = vector.shape_cast %639 : vector<1x1x32xf32> to vector<1x32xf32>
    %cst_278 = arith.constant dense<0.000000e+00> : vector<32xf32>
    %641 = vector.multi_reduction <add>, %636, %cst_278 [1] : vector<32x32xf32> to vector<32xf32>
    %642 = vector.shape_cast %641 : vector<32xf32> to vector<32x1xf32>
    %cst_279 = arith.constant 3.200000e+01 : f32
    %643 = vector.broadcast %cst_279 : f32 to vector<32x1xf32>
    %644 = arith.divf %642, %643 : vector<32x1xf32>
    %645 = vector.broadcast %644 : vector<32x1xf32> to vector<32x32xf32>
    %646 = arith.subf %636, %645 : vector<32x32xf32>
    %647 = arith.mulf %646, %646 : vector<32x32xf32>
    %cst_280 = arith.constant dense<0.000000e+00> : vector<32xf32>
    %648 = vector.multi_reduction <add>, %647, %cst_280 [1] : vector<32x32xf32> to vector<32xf32>
    %649 = vector.shape_cast %648 : vector<32xf32> to vector<32x1xf32>
    %cst_281 = arith.constant 3.200000e+01 : f32
    %650 = vector.broadcast %cst_281 : f32 to vector<32x1xf32>
    %651 = arith.divf %649, %650 : vector<32x1xf32>
    %cst_282 = arith.constant 9.99999974E-6 : f32
    %652 = vector.broadcast %cst_282 : f32 to vector<32x1xf32>
    %653 = arith.addf %651, %652 : vector<32x1xf32>
    %654 = math.rsqrt %653 : vector<32x1xf32>
    %655 = vector.broadcast %654 : vector<32x1xf32> to vector<32x32xf32>
    %656 = arith.mulf %646, %655 : vector<32x32xf32>
    %657 = vector.broadcast %638 : vector<1x32xf32> to vector<32x32xf32>
    %658 = arith.mulf %656, %657 : vector<32x32xf32>
    %659 = vector.broadcast %640 : vector<1x32xf32> to vector<32x32xf32>
    %660 = arith.addf %658, %659 : vector<32x32xf32>
    %c1_283 = arith.constant 1 : index
    %c0_284 = arith.constant 0 : index
    %c0_285 = arith.constant 0 : index
    %661 = vector.load %arg15[%c1_283, %c0_284, %c0_285] : memref<2x32x128xf32, #tpu.memory_space<vmem>>, vector<1x32x128xf32>
    %662 = vector.shape_cast %661 : vector<1x32x128xf32> to vector<32x128xf32>
    %cst_286 = arith.constant dense<0.000000e+00> : vector<32x128xf32>
    %663 = tpu.matmul %660, %662, %cst_286 {dimension_numbers = #tpu.dot_dimension_numbers<[1], [0], [0], [1], [0, 0, 1, 1], [], []>} : vector<32x32xf32>, vector<32x128xf32>, vector<32x128xf32> -> vector<32x128xf32>
    %c1_287 = arith.constant 1 : index
    %c0_288 = arith.constant 0 : index
    %c0_289 = arith.constant 0 : index
    %664 = vector.load %arg16[%c1_287, %c0_288, %c0_289] : memref<2x1x128xf32, #tpu.memory_space<vmem>>, vector<1x1x128xf32>
    %665 = vector.shape_cast %664 : vector<1x1x128xf32> to vector<1x128xf32>
    %666 = vector.broadcast %665 : vector<1x128xf32> to vector<32x128xf32>
    %667 = arith.addf %663, %666 : vector<32x128xf32>
    %cst_290 = arith.constant 5.000000e-01 : f32
    %668 = vector.broadcast %cst_290 : f32 to vector<32x128xf32>
    %669 = arith.mulf %668, %667 : vector<32x128xf32>
    %cst_291 = arith.constant 0.707106769 : f32
    %670 = vector.broadcast %cst_291 : f32 to vector<32x128xf32>
    %671 = arith.mulf %667, %670 : vector<32x128xf32>
    %cst_292 = arith.constant 0.000000e+00 : f32
    %672 = vector.broadcast %cst_292 : f32 to vector<32x128xf32>
    %673 = arith.cmpf oge, %671, %672 : vector<32x128xf32>
    %cst_293 = arith.constant 1.000000e+00 : f32
    %cst_294 = arith.constant -1.000000e+00 : f32
    %674 = vector.broadcast %cst_293 : f32 to vector<32x128xf32>
    %675 = vector.broadcast %cst_294 : f32 to vector<32x128xf32>
    %676 = arith.select %673, %674, %675 : vector<32x128xi1>, vector<32x128xf32>
    %677 = math.absf %671 : vector<32x128xf32>
    %cst_295 = arith.constant 0.327591091 : f32
    %678 = vector.broadcast %cst_295 : f32 to vector<32x128xf32>
    %679 = arith.mulf %678, %677 : vector<32x128xf32>
    %cst_296 = arith.constant 1.000000e+00 : f32
    %680 = vector.broadcast %cst_296 : f32 to vector<32x128xf32>
    %681 = arith.addf %680, %679 : vector<32x128xf32>
    %cst_297 = arith.constant 1.000000e+00 : f32
    %682 = vector.broadcast %cst_297 : f32 to vector<32x128xf32>
    %683 = arith.divf %682, %681 : vector<32x128xf32>
    %cst_298 = arith.constant 1.06140542 : f32
    %684 = vector.broadcast %cst_298 : f32 to vector<32x128xf32>
    %685 = arith.mulf %684, %683 : vector<32x128xf32>
    %cst_299 = arith.constant -1.45315206 : f32
    %686 = vector.broadcast %cst_299 : f32 to vector<32x128xf32>
    %687 = arith.addf %685, %686 : vector<32x128xf32>
    %688 = arith.mulf %687, %683 : vector<32x128xf32>
    %cst_300 = arith.constant 1.42141378 : f32
    %689 = vector.broadcast %cst_300 : f32 to vector<32x128xf32>
    %690 = arith.addf %688, %689 : vector<32x128xf32>
    %691 = arith.mulf %690, %683 : vector<32x128xf32>
    %cst_301 = arith.constant -0.284496725 : f32
    %692 = vector.broadcast %cst_301 : f32 to vector<32x128xf32>
    %693 = arith.addf %691, %692 : vector<32x128xf32>
    %694 = arith.mulf %693, %683 : vector<32x128xf32>
    %cst_302 = arith.constant 0.254829586 : f32
    %695 = vector.broadcast %cst_302 : f32 to vector<32x128xf32>
    %696 = arith.addf %694, %695 : vector<32x128xf32>
    %697 = arith.mulf %696, %683 : vector<32x128xf32>
    %cst_303 = arith.constant 0.000000e+00 : f32
    %698 = vector.broadcast %cst_303 : f32 to vector<32x128xf32>
    %699 = arith.subf %698, %677 : vector<32x128xf32>
    %700 = arith.mulf %699, %677 : vector<32x128xf32>
    %701 = math.exp %700 : vector<32x128xf32>
    %702 = arith.mulf %697, %701 : vector<32x128xf32>
    %cst_304 = arith.constant 1.000000e+00 : f32
    %703 = vector.broadcast %cst_304 : f32 to vector<32x128xf32>
    %704 = arith.subf %703, %702 : vector<32x128xf32>
    %705 = arith.mulf %676, %704 : vector<32x128xf32>
    %cst_305 = arith.constant 1.000000e+00 : f32
    %706 = vector.broadcast %cst_305 : f32 to vector<32x128xf32>
    %707 = arith.addf %706, %705 : vector<32x128xf32>
    %708 = arith.mulf %669, %707 : vector<32x128xf32>
    %c1_306 = arith.constant 1 : index
    %c0_307 = arith.constant 0 : index
    %c0_308 = arith.constant 0 : index
    %709 = vector.load %arg17[%c1_306, %c0_307, %c0_308] : memref<2x128x32xf32, #tpu.memory_space<vmem>>, vector<1x128x32xf32>
    %710 = vector.shape_cast %709 : vector<1x128x32xf32> to vector<128x32xf32>
    %cst_309 = arith.constant dense<0.000000e+00> : vector<32x32xf32>
    %711 = tpu.matmul %708, %710, %cst_309 {dimension_numbers = #tpu.dot_dimension_numbers<[1], [0], [0], [1], [0, 0, 1, 1], [], []>} : vector<32x128xf32>, vector<128x32xf32>, vector<32x32xf32> -> vector<32x32xf32>
    %712 = arith.addf %636, %711 : vector<32x32xf32>
    %c1_310 = arith.constant 1 : index
    %c0_311 = arith.constant 0 : index
    %c0_312 = arith.constant 0 : index
    %713 = vector.load %arg18[%c1_310, %c0_311, %c0_312] : memref<2x1x32xf32, #tpu.memory_space<vmem>>, vector<1x1x32xf32>
    %714 = vector.shape_cast %713 : vector<1x1x32xf32> to vector<1x32xf32>
    %715 = vector.broadcast %714 : vector<1x32xf32> to vector<32x32xf32>
    %716 = arith.addf %712, %715 : vector<32x32xf32>
    %c0_313 = arith.constant 0 : index
    %c0_314 = arith.constant 0 : index
    %717 = vector.load %arg19[%c0_313, %c0_314] : memref<32x32xf32, #tpu.memory_space<vmem>>, vector<32x32xf32>
    tpu.vector_store %arg19[%c0_313, %c0_314], %716 {strides = array<i32>} : memref<32x32xf32, #tpu.memory_space<vmem>>, vector<32x32xf32>,
    return
  }
}

</mosaic_0001>

<llo_original>
// kernel: nystromformer_forward.1
$region0: #{nystromformer_forward.1}
  #allocation0 [shape = 'u32[]', space=smem, size = 0x4, offset = 0x4, fixed_abs, tag = 'smem constant byte address 0x4 - core index']
  #allocation1 [shape = 'u32[144,128]{1,0:T(1,128)}', space=vmem, size = 0x12000, scoped, tag = 'internal scratch']
  %s0 = inlined_call_operand.vmem [shape: f32[32,32], index: 0, kind: input, shape index: {}]
  %s1 = inlined_call_operand.vmem [shape: f32[4,16], index: 1, kind: input, shape index: {}]
  %s2 = inlined_call_operand.vmem [shape: f32[32,16], index: 2, kind: input, shape index: {}]
  %s3 = inlined_call_operand.vmem [shape: f32[16,32], index: 3, kind: input, shape index: {}]
  %s4 = inlined_call_operand.vmem [shape: f32[16,16], index: 4, kind: input, shape index: {}]
  %s5 = inlined_call_operand.vmem [shape: f32[32,32], index: 5, kind: input, shape index: {}]
  %s6 = inlined_call_operand.vmem [shape: f32[32,32], index: 6, kind: input, shape index: {}]
  %s7 = inlined_call_operand.vmem [shape: f32[2,1,32], index: 7, kind: input, shape index: {}]
  %s8 = inlined_call_operand.vmem [shape: f32[2,1,32], index: 8, kind: input, shape index: {}]
  %s9 = inlined_call_operand.vmem [shape: f32[2,32,96], index: 9, kind: input, shape index: {}]
  %s10 = inlined_call_operand.vmem [shape: f32[2,32,32], index: 10, kind: input, shape index: {}]
  %s11 = inlined_call_operand.vmem [shape: f32[2,1,32], index: 11, kind: input, shape index: {}]
  %s12 = inlined_call_operand.vmem [shape: f32[2,3,32], index: 12, kind: input, shape index: {}]
  %s13 = inlined_call_operand.vmem [shape: f32[2,1,32], index: 13, kind: input, shape index: {}]
  %s14 = inlined_call_operand.vmem [shape: f32[2,1,32], index: 14, kind: input, shape index: {}]
  %s15 = inlined_call_operand.vmem [shape: f32[2,32,128], index: 15, kind: input, shape index: {}]
  %s16 = inlined_call_operand.vmem [shape: f32[2,1,128], index: 16, kind: input, shape index: {}]
  %s17 = inlined_call_operand.vmem [shape: f32[2,128,32], index: 17, kind: input, shape index: {}]
  %s18 = inlined_call_operand.vmem [shape: f32[2,1,32], index: 18, kind: input, shape index: {}]
  %s19 = inlined_call_operand.hbm [shape: f32[32,32], index: 19, kind: output, shape index: {}]
  %s20 = sld [smem:[#allocation0]]
  $region86: #{nystromformer_forward.1} parent=0
    _
  %s22 = ssub.s32 1, %s20
  %s23 = scalar_select 0, %s22, %s20
  $region1: #{nystromformer_forward.1} parent=0
    #allocation2 [shape = 'u8[16384]{0}', space=vmem, size = 0x4000, scoped, tag = 'output window, operand 0, single buffered']
    #allocation3 [shape = 's32[1]{0}', space=sflag, size = 0x4, scoped, tag = 'scoped memory for nystromformer_forward.1']
    %24 = vsyncpa [#allocation3], 0
    // Predicated region
    $region2: #{nystromformer_forward.1} parent=1 // pred_check
      _
    $region3: #{nystromformer_forward.1} parent=1 // pred_check_branch
      %26 = sbr.rel (0) target = $region5
    $region4: #{nystromformer_forward.1} parent=1 // pred_region
      _
    $region5: #{nystromformer_forward.1} parent=1 // pred_fallthru
      _
    // Predicated region
    $region6: #{nystromformer_forward.1} parent=1 // pred_check
      _
    $region7: #{nystromformer_forward.1} parent=1 // pred_check_branch
      %28 = sbr.rel (0) target = $region9
    $region8: #{nystromformer_forward.1} parent=1 // pred_region
      _
    $region9: #{nystromformer_forward.1} parent=1 // pred_fallthru
      _
    // Predicated region
    $region10: #{nystromformer_forward.1} parent=1 // pred_check
      _
    $region11: #{nystromformer_forward.1} parent=1 // pred_check_branch
      %30 = sbr.rel (0) target = $region13
    $region12: #{nystromformer_forward.1} parent=1 // pred_region
      _
    $region13: #{nystromformer_forward.1} parent=1 // pred_fallthru
      _
    // Predicated region
    $region14: #{nystromformer_forward.1} parent=1 // pred_check
      _
    $region15: #{nystromformer_forward.1} parent=1 // pred_check_branch
      %32 = sbr.rel (0) target = $region17
    $region16: #{nystromformer_forward.1} parent=1 // pred_region
      _
    $region17: #{nystromformer_forward.1} parent=1 // pred_fallthru
      _
    // Predicated region
    $region18: #{nystromformer_forward.1} parent=1 // pred_check
      _
    $region19: #{nystromformer_forward.1} parent=1 // pred_check_branch
      %34 = sbr.rel (0) target = $region21
    $region20: #{nystromformer_forward.1} parent=1 // pred_region
      _
    $region21: #{nystromformer_forward.1} parent=1 // pred_fallthru
      _
    // Predicated region
    $region22: #{nystromformer_forward.1} parent=1 // pred_check
      _
    $region23: #{nystromformer_forward.1} parent=1 // pred_check_branch
      %36 = sbr.rel (0) target = $region25
    $region24: #{nystromformer_forward.1} parent=1 // pred_region
      _
    $region25: #{nystromformer_forward.1} parent=1 // pred_fallthru
      _
    // Predicated region
    $region26: #{nystromformer_forward.1} parent=1 // pred_check
      _
    $region27: #{nystromformer_forward.1} parent=1 // pred_check_branch
      %38 = sbr.rel (0) target = $region29
    $region28: #{nystromformer_forward.1} parent=1 // pred_region
      _
    $region29: #{nystromformer_forward.1} parent=1 // pred_fallthru
      _
    // Predicated region
    $region30: #{nystromformer_forward.1} parent=1 // pred_check
      _
    $region31: #{nystromformer_forward.1} parent=1 // pred_check_branch
      %40 = sbr.rel (0) target = $region33
    $region32: #{nystromformer_forward.1} parent=1 // pred_region
      _
    $region33: #{nystromformer_forward.1} parent=1 // pred_fallthru
      _
    // Predicated region
    $region34: #{nystromformer_forward.1} parent=1 // pred_check
      _
    $region35: #{nystromformer_forward.1} parent=1 // pred_check_branch
      %42 = sbr.rel (0) target = $region37
    $region36: #{nystromformer_forward.1} parent=1 // pred_region
      _
    $region37: #{nystromformer_forward.1} parent=1 // pred_fallthru
      _
    // Predicated region
    $region38: #{nystromformer_forward.1} parent=1 // pred_check
      _
    $region39: #{nystromformer_forward.1} parent=1 // pred_check_branch
      %44 = sbr.rel (0) target = $region41
    $region40: #{nystromformer_forward.1} parent=1 // pred_region
      _
    $region41: #{nystromformer_forward.1} parent=1 // pred_fallthru
      _
    // Predicated region
    $region42: #{nystromformer_forward.1} parent=1 // pred_check
      _
    $region43: #{nystromformer_forward.1} parent=1 // pred_check_branch
      %46 = sbr.rel (0) target = $region45
    $region44: #{nystromformer_forward.1} parent=1 // pred_region
      _
    $region45: #{nystromformer_forward.1} parent=1 // pred_fallthru
      _
    // Predicated region
    $region46: #{nystromformer_forward.1} parent=1 // pred_check
      _
    $region47: #{nystromformer_forward.1} parent=1 // pred_check_branch
      %48 = sbr.rel (0) target = $region49
    $region48: #{nystromformer_forward.1} parent=1 // pred_region
      _
    $region49: #{nystromformer_forward.1} parent=1 // pred_fallthru
      _
    // Predicated region
    $region50: #{nystromformer_forward.1} parent=1 // pred_check
      _
    $region51: #{nystromformer_forward.1} parent=1 // pred_check_branch
      %50 = sbr.rel (0) target = $region53
    $region52: #{nystromformer_forward.1} parent=1 // pred_region
      _
    $region53: #{nystromformer_forward.1} parent=1 // pred_fallthru
      _
    // Predicated region
    $region54: #{nystromformer_forward.1} parent=1 // pred_check
      _
    $region55: #{nystromformer_forward.1} parent=1 // pred_check_branch
      %52 = sbr.rel (0) target = $region57
    $region56: #{nystromformer_forward.1} parent=1 // pred_region
      _
    $region57: #{nystromformer_forward.1} parent=1 // pred_fallthru
      _
    // Predicated region
    $region58: #{nystromformer_forward.1} parent=1 // pred_check
      _
    $region59: #{nystromformer_forward.1} parent=1 // pred_check_branch
      %54 = sbr.rel (0) target = $region61
    $region60: #{nystromformer_forward.1} parent=1 // pred_region
      _
    $region61: #{nystromformer_forward.1} parent=1 // pred_fallthru
      _
    // Predicated region
    $region62: #{nystromformer_forward.1} parent=1 // pred_check
      _
    $region63: #{nystromformer_forward.1} parent=1 // pred_check_branch
      %56 = sbr.rel (0) target = $region65
    $region64: #{nystromformer_forward.1} parent=1 // pred_region
      _
    $region65: #{nystromformer_forward.1} parent=1 // pred_fallthru
      _
    // Predicated region
    $region66: #{nystromformer_forward.1} parent=1 // pred_check
      _
    $region67: #{nystromformer_forward.1} parent=1 // pred_check_branch
      %58 = sbr.rel (0) target = $region69
    $region68: #{nystromformer_forward.1} parent=1 // pred_region
      _
    $region69: #{nystromformer_forward.1} parent=1 // pred_fallthru
      _
    // Predicated region
    $region70: #{nystromformer_forward.1} parent=1 // pred_check
      _
    $region71: #{nystromformer_forward.1} parent=1 // pred_check_branch
      %60 = sbr.rel (0) target = $region73
    $region72: #{nystromformer_forward.1} parent=1 // pred_region
      _
    $region73: #{nystromformer_forward.1} parent=1 // pred_fallthru
      _
    // Predicated region
    $region74: #{nystromformer_forward.1} parent=1 // pred_check
      _
    $region75: #{nystromformer_forward.1} parent=1 // pred_check_branch
      %62 = sbr.rel (0) target = $region77
    $region76: #{nystromformer_forward.1} parent=1 // pred_region
      _
    $region77: #{nystromformer_forward.1} parent=1 // pred_fallthru
      _
    %v63 = vld [vmem:[%s0] sm:$0xff]
    %v64 = vld [vmem:[%s0 + $0x8] sm:$0xff]
    %v65 = vld [vmem:[%s0 + $0x10] sm:$0xff]
    %v66 = vld [vmem:[%s0 + $0x18] sm:$0xff]
    %v67 = vld [vmem:[%s1] sm:$0xf]
    %v68 = vld [vmem:[%s2] sm:$0xff]
    %v69 = vld [vmem:[%s2 + $0x8] sm:$0xff]
    %v70 = vld [vmem:[%s2 + $0x10] sm:$0xff]
    %v71 = vld [vmem:[%s2 + $0x18] sm:$0xff]
    %v72 = vld [vmem:[%s3] sm:$0xff]
    %v73 = vld [vmem:[%s3 + $0x8] sm:$0xff]
    %v74 = vld [vmem:[%s4] sm:$0xff]
    %v75 = vld [vmem:[%s4 + $0x8] sm:$0xff]
    %v76 = vld [vmem:[%s5] sm:$0xff]
    %v77 = vld [vmem:[%s5 + $0x8] sm:$0xff]
    %v78 = vld [vmem:[%s5 + $0x10] sm:$0xff]
    %v79 = vld [vmem:[%s5 + $0x18] sm:$0xff]
    %v80 = vld [vmem:[%s6] sm:$0xff]
    %v81 = vld [vmem:[%s6 + $0x8] sm:$0xff]
    %v82 = vld [vmem:[%s6 + $0x10] sm:$0xff]
    %v83 = vld [vmem:[%s6 + $0x18] sm:$0xff]
    %v84 = vld [vmem:[%s7] sm:$0x1]
    %v85 = vld [vmem:[%s8] sm:$0x1]
    %vm86 = vcmask 261120
    %v87 = vsel %vm86, %v63, 0.0
    %88 = vadd.xlane.f32.xlu0 %v87
    %v89 = vpop.xlane.xlu0 %88
    %v90 = vsel %vm86, %v64, 0.0
    %91 = vadd.xlane.f32.xlu0 %v90
    %v92 = vpop.xlane.xlu0 %91
    %v93 = vsel %vm86, %v65, 0.0
    %94 = vadd.xlane.f32.xlu0 %v93
    %v95 = vpop.xlane.xlu0 %94
    %v96 = vsel %vm86, %v66, 0.0
    %97 = vadd.xlane.f32.xlu0 %v96
    %v98 = vpop.xlane.xlu0 %97
    %v99 = vrcp.pop 32.0
    %v100 = vmul.f32 %v89, %v99
    %v101 = vmul.f32 %v92, %v99
    %v102 = vmul.f32 %v95, %v99
    %v103 = vmul.f32 %v98, %v99
    %v104 = vsub.f32 %v63, %v100
    %v105 = vsub.f32 %v64, %v101
    %v106 = vsub.f32 %v65, %v102
    %v107 = vsub.f32 %v66, %v103
    %v108 = vmul.f32 %v104, %v104
    %v109 = vmul.f32 %v105, %v105
    %v110 = vmul.f32 %v106, %v106
    %v111 = vmul.f32 %v107, %v107
    %v112 = vsel %vm86, %v108, 0.0
    %113 = vadd.xlane.f32.xlu0 %v112
    %v114 = vpop.xlane.xlu0 %113
    %v115 = vsel %vm86, %v109, 0.0
    %116 = vadd.xlane.f32.xlu0 %v115
    %v117 = vpop.xlane.xlu0 %116
    %v118 = vsel %vm86, %v110, 0.0
    %119 = vadd.xlane.f32.xlu0 %v118
    %v120 = vpop.xlane.xlu0 %119
    %v121 = vsel %vm86, %v111, 0.0
    %122 = vadd.xlane.f32.xlu0 %v121
    %v123 = vpop.xlane.xlu0 %122
    %v124 = vmul.f32 %v114, %v99
    %v125 = vmul.f32 %v117, %v99
    %v126 = vmul.f32 %v120, %v99
    %v127 = vmul.f32 %v123, %v99
    %v128 = vadd.f32 %v124, 1e-05
    %v129 = vadd.f32 %v125, 1e-05
    %v130 = vadd.f32 %v126, 1e-05
    %v131 = vadd.f32 %v127, 1e-05
    %v132 = vrsqrt.pop %v128
    %v133 = vrsqrt.pop %v129
    %v134 = vrsqrt.pop %v130
    %v135 = vrsqrt.pop %v131
    %v136 = vmul.f32 %v104, %v132
    %v137 = vmul.f32 %v105, %v133
    %v138 = vmul.f32 %v106, %v134
    %v139 = vmul.f32 %v107, %v135
    %v141 = vlaneseq
    %v142 = vshrl.u32 %v141, 7
    %v143 = vsub.s32 0, %v142
    %v144 = vrot.slane %v84, %v143
    %v146 = vmul.f32 %v136, %v144
    %v147 = vmul.f32 %v137, %v144
    %v148 = vmul.f32 %v138, %v144
    %v149 = vmul.f32 %v139, %v144
    %v151 = vlaneseq
    %v152 = vshrl.u32 %v151, 7
    %v153 = vsub.s32 0, %v152
    %v154 = vrot.slane %v85, %v153
    %v156 = vadd.f32 %v146, %v154
    %v157 = vadd.f32 %v147, %v154
    %v158 = vadd.f32 %v148, %v154
    %v159 = vadd.f32 %v149, %v154
    %v160 = vld [vmem:[%s9] sm:$0xff]
    %v161 = vld [vmem:[%s9 + $0x8] sm:$0xff]
    %v162 = vld [vmem:[%s9 + $0x10] sm:$0xff]
    %v163 = vld [vmem:[%s9 + $0x18] sm:$0xff]
    %v165 = vsel %vm86, %v156, 0
    %v168 = vsel %vm86, %v157, 0
    %v171 = vsel %vm86, %v158, 0
    %v174 = vsel %vm86, %v159, 0
    %176 = vmatprep.subr.mxu0 0.0
    %177 = vmatpush1.msra.mxu0 %v160
    %178 = vmatprep.subr.mxu0 0.0
    %179 = vmatpush1.msra.mxu0 %v161
    %180 = vmatprep.subr.mxu0 0.0
    %181 = vmatpush1.msra.mxu0 %v162
    %182 = vmatprep.subr.mxu0 0.0
    %183 = vmatpush1.msra.mxu0 %v163
    %184 = vmatprep.subr.mxu0 0.0
    %185 = vmatpush1.msra.mxu0 0.0
    %186 = vmatprep.subr.mxu0 0.0
    %187 = vmatpush1.msra.mxu0 0.0
    %188 = vmatprep.subr.mxu0 0.0
    %189 = vmatpush1.msra.mxu0 0.0
    %190 = vmatprep.subr.mxu0 0.0
    %191 = vmatpush1.msra.mxu0 0.0
    %192 = vmatprep.subr.mxu0 0.0
    %193 = vmatpush1.msra.mxu0 0.0
    %194 = vmatprep.subr.mxu0 0.0
    %195 = vmatpush1.msra.mxu0 0.0
    %196 = vmatprep.subr.mxu0 0.0
    %197 = vmatpush1.msra.mxu0 0.0
    %198 = vmatprep.subr.mxu0 0.0
    %199 = vmatpush1.msra.mxu0 0.0
    %200 = vmatprep.subr.mxu0 0.0
    %201 = vmatpush1.msra.mxu0 0.0
    %202 = vmatprep.subr.mxu0 0.0
    %203 = vmatpush1.msra.mxu0 0.0
    %204 = vmatprep.subr.mxu0 0.0
    %205 = vmatpush1.msra.mxu0 0.0
    %206 = vmatprep.subr.mxu0 0.0
    %207 = vmatpush1.msra.mxu0 0.0
    %208 = vmatprep.subr.mxu0 0.0
    %209 = vmatpush1.msra.mxu0 0.0
    %210 = vmatprep.subr.mxu0 0.0
    %211 = vmatpush1.msra.mxu0 0.0
    %212 = vmatprep.subr.mxu0 0.0
    %213 = vmatpush1.msra.mxu0 0.0
    %214 = vmatprep.subr.mxu0 0.0
    %215 = vmatpush1.msra.mxu0 0.0
    %216 = vmatprep.subr.mxu0 0.0
    %217 = vmatpush1.msra.mxu0 0.0
    %218 = vmatprep.subr.mxu0 0.0
    %219 = vmatpush1.msra.mxu0 0.0
    %220 = vmatprep.subr.mxu0 0.0
    %221 = vmatpush1.msra.mxu0 0.0
    %222 = vmatprep.subr.mxu0 0.0
    %223 = vmatpush1.msra.mxu0 0.0
    %224 = vmatprep.subr.mxu0 0.0
    %225 = vmatpush1.msra.mxu0 0.0
    %226 = vmatprep.subr.mxu0 0.0
    %227 = vmatpush1.msra.mxu0 0.0
    %228 = vmatprep.subr.mxu0 0.0
    %229 = vmatpush1.msra.mxu0 0.0
    %230 = vmatprep.subr.mxu0 0.0
    %231 = vmatpush1.msra.mxu0 0.0
    %232 = vmatprep.subr.mxu0 0.0
    %233 = vmatpush1.msra.mxu0 0.0
    %234 = vmatprep.subr.mxu0 0.0
    %235 = vmatpush1.msra.mxu0 0.0
    %236 = vmatprep.subr.mxu0 0.0
    %237 = vmatpush1.msra.mxu0 0.0
    %238 = vmatprep.subr.mxu0 0.0
    %239 = vmatpush1.msra.mxu0 0.0
    %240 = vmatprep.mubr.f32.mxu0 0.0
    %241 = vmatmul.mubr.f32.gmra.mrb[0].mxu0 %v165
    %v242 = vpop.f32.mrb[0].mxu0
    %v243 = vadd.f32 0.0, %v242
    %v244 = vpop.f32.mrb[0].mxu0
    %245 = vmatprep.mubr.f32.mxu0 0.0
    %246 = vmatmul.mubr.f32.gmra.mrb[0].mxu0 %v168
    %v247 = vpop.f32.mrb[0].mxu0
    %v248 = vadd.f32 0.0, %v247
    %v249 = vpop.f32.mrb[0].mxu0
    %250 = vmatprep.mubr.f32.mxu0 0.0
    %251 = vmatmul.mubr.f32.gmra.mrb[0].mxu0 %v171
    %v252 = vpop.f32.mrb[0].mxu0
    %v253 = vadd.f32 0.0, %v252
    %v254 = vpop.f32.mrb[0].mxu0
    %255 = vmatprep.mubr.f32.mxu0 0.0
    %256 = vmatmul.mubr.f32.gmra.mrb[0].mxu0 %v174
    %v257 = vpop.f32.mrb[0].mxu0
    %v258 = vadd.f32 0.0, %v257
    %v259 = vpop.f32.mrb[0].mxu0
    %260 = vdwg.mxu0
    %v261 = vmul.f32 %v243, 0.35355338
    %v262 = vmul.f32 %v248, 0.35355338
    %v263 = vmul.f32 %v253, 0.35355338
    %v264 = vmul.f32 %v258, 0.35355338
    %vm265 = vcmask 130048
    %v267 = vsel %vm265, %v67, 0
    %269 = vmatprep.subr.mxu0 0.0
    %270 = vmatpush1.msra.mxu0 %v261
    %271 = vmatprep.subr.mxu0 0.0
    %272 = vmatpush1.msra.mxu0 %v262
    %273 = vmatprep.subr.mxu0 0.0
    %274 = vmatpush1.msra.mxu0 0.0
    %275 = vmatprep.subr.mxu0 0.0
    %276 = vmatpush1.msra.mxu0 0.0
    %277 = vmatprep.subr.mxu0 0.0
    %278 = vmatpush1.msra.mxu0 0.0
    %279 = vmatprep.subr.mxu0 0.0
    %280 = vmatpush1.msra.mxu0 0.0
    %281 = vmatprep.subr.mxu0 0.0
    %282 = vmatpush1.msra.mxu0 0.0
    %283 = vmatprep.subr.mxu0 0.0
    %284 = vmatpush1.msra.mxu0 0.0
    %285 = vmatprep.subr.mxu0 0.0
    %286 = vmatpush1.msra.mxu0 0.0
    %287 = vmatprep.subr.mxu0 0.0
    %288 = vmatpush1.msra.mxu0 0.0
    %289 = vmatprep.subr.mxu0 0.0
    %290 = vmatpush1.msra.mxu0 0.0
    %291 = vmatprep.subr.mxu0 0.0
    %292 = vmatpush1.msra.mxu0 0.0
    %293 = vmatprep.subr.mxu0 0.0
    %294 = vmatpush1.msra.mxu0 0.0
    %295 = vmatprep.subr.mxu0 0.0
    %296 = vmatpush1.msra.mxu0 0.0
    %297 = vmatprep.subr.mxu0 0.0
    %298 = vmatpush1.msra.mxu0 0.0
    %299 = vmatprep.subr.mxu0 0.0
    %300 = vmatpush1.msra.mxu0 0.0
    %301 = vmatprep.subr.mxu0 0.0
    %302 = vmatpush1.msra.mxu0 0.0
    %303 = vmatprep.subr.mxu0 0.0
    %304 = vmatpush1.msra.mxu0 0.0
    %305 = vmatprep.subr.mxu0 0.0
    %306 = vmatpush1.msra.mxu0 0.0
    %307 = vmatprep.subr.mxu0 0.0
    %308 = vmatpush1.msra.mxu0 0.0
    %309 = vmatprep.subr.mxu0 0.0
    %310 = vmatpush1.msra.mxu0 0.0
    %311 = vmatprep.subr.mxu0 0.0
    %312 = vmatpush1.msra.mxu0 0.0
    %313 = vmatprep.subr.mxu0 0.0
    %314 = vmatpush1.msra.mxu0 0.0
    %315 = vmatprep.subr.mxu0 0.0
    %316 = vmatpush1.msra.mxu0 0.0
    %317 = vmatprep.subr.mxu0 0.0
    %318 = vmatpush1.msra.mxu0 0.0
    %319 = vmatprep.subr.mxu0 0.0
    %320 = vmatpush1.msra.mxu0 0.0
    %321 = vmatprep.subr.mxu0 0.0
    %322 = vmatpush1.msra.mxu0 0.0
    %323 = vmatprep.subr.mxu0 0.0
    %324 = vmatpush1.msra.mxu0 0.0
    %325 = vmatprep.subr.mxu0 0.0
    %326 = vmatpush1.msra.mxu0 0.0
    %327 = vmatprep.subr.mxu0 0.0
    %328 = vmatpush1.msra.mxu0 0.0
    %329 = vmatprep.subr.mxu0 0.0
    %330 = vmatpush1.msra.mxu0 0.0
    %331 = vmatprep.subr.mxu0 0.0
    %332 = vmatpush1.msra.mxu0 0.0
    %333 = vmatprep.mubr.f32.mxu0 0.0
    %334 = vmatmul.mubr.f32.gmra.mrb[0].mxu0 %v267
    %v335 = vpop.f32.mrb[0].mxu0
    %v336 = vadd.f32 0.0, %v335
    %v337 = vpop.f32.mrb[0].mxu0
    %338 = vdwg.mxu0
    %341 = vrot.lane.b32.xlu0 %v243, 96
    %v342 = vpop.permute.xlu0 %341
    %343 = vrot.lane.b32.xlu0 %v248, 96
    %v344 = vpop.permute.xlu0 %343
    %347 = vmatprep.subr.mxu0 0.0
    %348 = vmatpush1.msra.mxu0 %v342
    %349 = vmatprep.subr.mxu0 0.0
    %350 = vmatpush1.msra.mxu0 %v344
    %351 = vmatprep.subr.mxu0 0.0
    %352 = vmatpush1.msra.mxu0 0.0
    %353 = vmatprep.subr.mxu0 0.0
    %354 = vmatpush1.msra.mxu0 0.0
    %355 = vmatprep.subr.mxu0 0.0
    %356 = vmatpush1.msra.mxu0 0.0
    %357 = vmatprep.subr.mxu0 0.0
    %358 = vmatpush1.msra.mxu0 0.0
    %359 = vmatprep.subr.mxu0 0.0
    %360 = vmatpush1.msra.mxu0 0.0
    %361 = vmatprep.subr.mxu0 0.0
    %362 = vmatpush1.msra.mxu0 0.0
    %363 = vmatprep.subr.mxu0 0.0
    %364 = vmatpush1.msra.mxu0 0.0
    %365 = vmatprep.subr.mxu0 0.0
    %366 = vmatpush1.msra.mxu0 0.0
    %367 = vmatprep.subr.mxu0 0.0
    %368 = vmatpush1.msra.mxu0 0.0
    %369 = vmatprep.subr.mxu0 0.0
    %370 = vmatpush1.msra.mxu0 0.0
    %371 = vmatprep.subr.mxu0 0.0
    %372 = vmatpush1.msra.mxu0 0.0
    %373 = vmatprep.subr.mxu0 0.0
    %374 = vmatpush1.msra.mxu0 0.0
    %375 = vmatprep.subr.mxu0 0.0
    %376 = vmatpush1.msra.mxu0 0.0
    %377 = vmatprep.subr.mxu0 0.0
    %378 = vmatpush1.msra.mxu0 0.0
    %379 = vmatprep.subr.mxu0 0.0
    %380 = vmatpush1.msra.mxu0 0.0
    %381 = vmatprep.subr.mxu0 0.0
    %382 = vmatpush1.msra.mxu0 0.0
    %383 = vmatprep.subr.mxu0 0.0
    %384 = vmatpush1.msra.mxu0 0.0
    %385 = vmatprep.subr.mxu0 0.0
    %386 = vmatpush1.msra.mxu0 0.0
    %387 = vmatprep.subr.mxu0 0.0
    %388 = vmatpush1.msra.mxu0 0.0
    %389 = vmatprep.subr.mxu0 0.0
    %390 = vmatpush1.msra.mxu0 0.0
    %391 = vmatprep.subr.mxu0 0.0
    %392 = vmatpush1.msra.mxu0 0.0
    %393 = vmatprep.subr.mxu0 0.0
    %394 = vmatpush1.msra.mxu0 0.0
    %395 = vmatprep.subr.mxu0 0.0
    %396 = vmatpush1.msra.mxu0 0.0
    %397 = vmatprep.subr.mxu0 0.0
    %398 = vmatpush1.msra.mxu0 0.0
    %399 = vmatprep.subr.mxu0 0.0
    %400 = vmatpush1.msra.mxu0 0.0
    %401 = vmatprep.subr.mxu0 0.0
    %402 = vmatpush1.msra.mxu0 0.0
    %403 = vmatprep.subr.mxu0 0.0
    %404 = vmatpush1.msra.mxu0 0.0
    %405 = vmatprep.subr.mxu0 0.0
    %406 = vmatpush1.msra.mxu0 0.0
    %407 = vmatprep.subr.mxu0 0.0
    %408 = vmatpush1.msra.mxu0 0.0
    %409 = vmatprep.subr.mxu0 0.0
    %410 = vmatpush1.msra.mxu0 0.0
    %411 = vmatprep.mubr.f32.mxu0 0.0
    %412 = vmatmul.mubr.f32.gmra.mrb[0].mxu0 %v267
    %v413 = vpop.f32.mrb[0].mxu0
    %v414 = vadd.f32 0.0, %v413
    %v415 = vpop.f32.mrb[0].mxu0
    %416 = vdwg.mxu0
    %417 = vxpose.xlu0.b32.start [1/16] %v414, 128
    %418 = vxpose.xlu0.b32.cont [2/16] 0.0, 128
    %419 = vxpose.xlu0.b32.cont [3/16] 0.0, 128
    %420 = vxpose.xlu0.b32.cont [4/16] 0.0, 128
    %421 = vxpose.xlu0.b32.cont [5/16] 0.0, 128
    %422 = vxpose.xlu0.b32.cont [6/16] 0.0, 128
    %423 = vxpose.xlu0.b32.cont [7/16] 0.0, 128
    %424 = vxpose.xlu0.b32.cont [8/16] 0.0, 128
    %425 = vxpose.xlu0.b32.cont [9/16] 0.0, 128
    %426 = vxpose.xlu0.b32.cont [10/16] 0.0, 128
    %427 = vxpose.xlu0.b32.cont [11/16] 0.0, 128
    %428 = vxpose.xlu0.b32.cont [12/16] 0.0, 128
    %429 = vxpose.xlu0.b32.cont [13/16] 0.0, 128
    %430 = vxpose.xlu0.b32.cont [14/16] 0.0, 128
    %431 = vxpose.xlu0.b32.cont [15/16] 0.0, 128
    %432 = vxpose.xlu0.b32.end [16/16] 0.0, 128
    %v433 = vpop.trf.xlu0
    %v434 = vpop.trf.xlu0
    %v435 = vpop.trf.xlu0
    %v436 = vpop.trf.xlu0
    %v437 = vpop.trf.xlu0
    %v438 = vpop.trf.xlu0
    %v439 = vpop.trf.xlu0
    %v440 = vpop.trf.xlu0
    %v441 = vpop.trf.xlu0
    %v442 = vpop.trf.xlu0
    %v443 = vpop.trf.xlu0
    %v444 = vpop.trf.xlu0
    %v445 = vpop.trf.xlu0
    %v446 = vpop.trf.xlu0
    %v447 = vpop.trf.xlu0
    %v448 = vpop.trf.xlu0
    %453 = vrot.lane.b32.xlu0 %v433, 4
    %v454 = vpop.permute.xlu0 %453
    %455 = vrot.lane.b32.xlu0 %v434, 4
    %v456 = vpop.permute.xlu0 %455
    %457 = vrot.lane.b32.xlu0 %v435, 4
    %v458 = vpop.permute.xlu0 %457
    %459 = vrot.lane.b32.xlu0 %v436, 4
    %v460 = vpop.permute.xlu0 %459
    %465 = vrot.lane.b32.xlu0 %v433, 8
    %v466 = vpop.permute.xlu0 %465
    %467 = vrot.lane.b32.xlu0 %v434, 8
    %v468 = vpop.permute.xlu0 %467
    %469 = vrot.lane.b32.xlu0 %v435, 8
    %v470 = vpop.permute.xlu0 %469
    %471 = vrot.lane.b32.xlu0 %v436, 8
    %v472 = vpop.permute.xlu0 %471
    %477 = vrot.lane.b32.xlu0 %v433, 12
    %v478 = vpop.permute.xlu0 %477
    %479 = vrot.lane.b32.xlu0 %v434, 12
    %v480 = vpop.permute.xlu0 %479
    %481 = vrot.lane.b32.xlu0 %v435, 12
    %v482 = vpop.permute.xlu0 %481
    %483 = vrot.lane.b32.xlu0 %v436, 12
    %v484 = vpop.permute.xlu0 %483
    %vm489 = vcmask 31744
    %v490 = vsel %vm489, %v433, %v454
    %v491 = vsel %vm489, %v434, %v456
    %v492 = vsel %vm489, %v435, %v458
    %v493 = vsel %vm489, %v436, %v460
    %vm494 = vcmask 64512
    %v495 = vsel %vm494, %v490, %v466
    %v496 = vsel %vm494, %v491, %v468
    %v497 = vsel %vm494, %v492, %v470
    %v498 = vsel %vm494, %v493, %v472
    %vm499 = vcmask 97280
    %v500 = vsel %vm499, %v495, %v478
    %v501 = vsel %vm499, %v496, %v480
    %v502 = vsel %vm499, %v497, %v482
    %v503 = vsel %vm499, %v498, %v484
    %v504 = vmul.f32 %v500, %v68
    %v505 = vmul.f32 %v501, %v69
    %v506 = vmul.f32 %v502, %v70
    %v507 = vmul.f32 %v503, %v71
    %v509 = vrot.slane %v336, 4
    %vm511 = vcmask 1043456
    %v512 = vsel %vm511, %v336, %v509
    %v513 = vmul.f32 %v512, %v72
    %v514 = vmul.f32 %v512, %v73
    %v516 = vsel %vm86, %v261, 0
    %v519 = vsel %vm86, %v262, 0
    %521 = vmatprep.subr.mxu0 0.0
    %522 = vmatpush1.msra.mxu0 %v504
    %523 = vmatprep.subr.mxu0 0.0
    %524 = vmatpush1.msra.mxu0 %v505
    %525 = vmatprep.subr.mxu0 0.0
    %526 = vmatpush1.msra.mxu0 %v506
    %527 = vmatprep.subr.mxu0 0.0
    %528 = vmatpush1.msra.mxu0 %v507
    %529 = vmatprep.subr.mxu0 0.0
    %530 = vmatpush1.msra.mxu0 0.0
    %531 = vmatprep.subr.mxu0 0.0
    %532 = vmatpush1.msra.mxu0 0.0
    %533 = vmatprep.subr.mxu0 0.0
    %534 = vmatpush1.msra.mxu0 0.0
    %535 = vmatprep.subr.mxu0 0.0
    %536 = vmatpush1.msra.mxu0 0.0
    %537 = vmatprep.subr.mxu0 0.0
    %538 = vmatpush1.msra.mxu0 0.0
    %539 = vmatprep.subr.mxu0 0.0
    %540 = vmatpush1.msra.mxu0 0.0
    %541 = vmatprep.subr.mxu0 0.0
    %542 = vmatpush1.msra.mxu0 0.0
    %543 = vmatprep.subr.mxu0 0.0
    %544 = vmatpush1.msra.mxu0 0.0
    %545 = vmatprep.subr.mxu0 0.0
    %546 = vmatpush1.msra.mxu0 0.0
    %547 = vmatprep.subr.mxu0 0.0
    %548 = vmatpush1.msra.mxu0 0.0
    %549 = vmatprep.subr.mxu0 0.0
    %550 = vmatpush1.msra.mxu0 0.0
    %551 = vmatprep.subr.mxu0 0.0
    %552 = vmatpush1.msra.mxu0 0.0
    %553 = vmatprep.subr.mxu0 0.0
    %554 = vmatpush1.msra.mxu0 0.0
    %555 = vmatprep.subr.mxu0 0.0
    %556 = vmatpush1.msra.mxu0 0.0
    %557 = vmatprep.subr.mxu0 0.0
    %558 = vmatpush1.msra.mxu0 0.0
    %559 = vmatprep.subr.mxu0 0.0
    %560 = vmatpush1.msra.mxu0 0.0
    %561 = vmatprep.subr.mxu0 0.0
    %562 = vmatpush1.msra.mxu0 0.0
    %563 = vmatprep.subr.mxu0 0.0
    %564 = vmatpush1.msra.mxu0 0.0
    %565 = vmatprep.subr.mxu0 0.0
    %566 = vmatpush1.msra.mxu0 0.0
    %567 = vmatprep.subr.mxu0 0.0
    %568 = vmatpush1.msra.mxu0 0.0
    %569 = vmatprep.subr.mxu0 0.0
    %570 = vmatpush1.msra.mxu0 0.0
    %571 = vmatprep.subr.mxu0 0.0
    %572 = vmatpush1.msra.mxu0 0.0
    %573 = vmatprep.subr.mxu0 0.0
    %574 = vmatpush1.msra.mxu0 0.0
    %575 = vmatprep.subr.mxu0 0.0
    %576 = vmatpush1.msra.mxu0 0.0
    %577 = vmatprep.subr.mxu0 0.0
    %578 = vmatpush1.msra.mxu0 0.0
    %579 = vmatprep.subr.mxu0 0.0
    %580 = vmatpush1.msra.mxu0 0.0
    %581 = vmatprep.subr.mxu0 0.0
    %582 = vmatpush1.msra.mxu0 0.0
    %583 = vmatprep.subr.mxu0 0.0
    %584 = vmatpush1.msra.mxu0 0.0
    %585 = vmatprep.mubr.f32.mxu0 0.0
    %586 = vmatmul.mubr.f32.gmra.mrb[0].mxu0 %v516
    %v587 = vpop.f32.mrb[0].mxu0
    %v588 = vadd.f32 0.0, %v587
    %v589 = vpop.f32.mrb[0].mxu0
    %590 = vmatprep.mubr.f32.mxu0 0.0
    %591 = vmatmul.mubr.f32.gmra.mrb[0].mxu0 %v519
    %v592 = vpop.f32.mrb[0].mxu0
    %v593 = vadd.f32 0.0, %v592
    %v594 = vpop.f32.mrb[0].mxu0
    %595 = vdwg.mxu0
    %v597 = vsel %vm86, %v513, 0
    %v600 = vsel %vm86, %v514, 0
    %v602 = vsel %vm86, %v342, 0
    %v604 = vsel %vm86, %v344, 0
    %606 = vmatprep.subr.mxu0 0.0
    %607 = vmatpush1.xpose.msra.mxu0 %v602
    %608 = vmatprep.subr.mxu0 0.0
    %609 = vmatpush1.xpose.msra.mxu0 %v604
    %610 = vmatprep.subr.mxu0 0.0
    %611 = vmatpush1.xpose.msra.mxu0 0.0
    %612 = vmatprep.subr.mxu0 0.0
    %613 = vmatpush1.xpose.msra.mxu0 0.0
    %614 = vmatprep.subr.mxu0 0.0
    %615 = vmatpush1.xpose.msra.mxu0 0.0
    %616 = vmatprep.subr.mxu0 0.0
    %617 = vmatpush1.xpose.msra.mxu0 0.0
    %618 = vmatprep.subr.mxu0 0.0
    %619 = vmatpush1.xpose.msra.mxu0 0.0
    %620 = vmatprep.subr.mxu0 0.0
    %621 = vmatpush1.xpose.msra.mxu0 0.0
    %622 = vmatprep.subr.mxu0 0.0
    %623 = vmatpush1.xpose.msra.mxu0 0.0
    %624 = vmatprep.subr.mxu0 0.0
    %625 = vmatpush1.xpose.msra.mxu0 0.0
    %626 = vmatprep.subr.mxu0 0.0
    %627 = vmatpush1.xpose.msra.mxu0 0.0
    %628 = vmatprep.subr.mxu0 0.0
    %629 = vmatpush1.xpose.msra.mxu0 0.0
    %630 = vmatprep.subr.mxu0 0.0
    %631 = vmatpush1.xpose.msra.mxu0 0.0
    %632 = vmatprep.subr.mxu0 0.0
    %633 = vmatpush1.xpose.msra.mxu0 0.0
    %634 = vmatprep.subr.mxu0 0.0
    %635 = vmatpush1.xpose.msra.mxu0 0.0
    %636 = vmatprep.subr.mxu0 0.0
    %637 = vmatpush1.xpose.msra.mxu0 0.0
    %638 = vmatprep.subr.mxu0 0.0
    %639 = vmatpush1.xpose.msra.mxu0 0.0
    %640 = vmatprep.subr.mxu0 0.0
    %641 = vmatpush1.xpose.msra.mxu0 0.0
    %642 = vmatprep.subr.mxu0 0.0
    %643 = vmatpush1.xpose.msra.mxu0 0.0
    %644 = vmatprep.subr.mxu0 0.0
    %645 = vmatpush1.xpose.msra.mxu0 0.0
    %646 = vmatprep.subr.mxu0 0.0
    %647 = vmatpush1.xpose.msra.mxu0 0.0
    %648 = vmatprep.subr.mxu0 0.0
    %649 = vmatpush1.xpose.msra.mxu0 0.0
    %650 = vmatprep.subr.mxu0 0.0
    %651 = vmatpush1.xpose.msra.mxu0 0.0
    %652 = vmatprep.subr.mxu0 0.0
    %653 = vmatpush1.xpose.msra.mxu0 0.0
    %654 = vmatprep.subr.mxu0 0.0
    %655 = vmatpush1.xpose.msra.mxu0 0.0
    %656 = vmatprep.subr.mxu0 0.0
    %657 = vmatpush1.xpose.msra.mxu0 0.0
    %658 = vmatprep.subr.mxu0 0.0
    %659 = vmatpush1.xpose.msra.mxu0 0.0
    %660 = vmatprep.subr.mxu0 0.0
    %661 = vmatpush1.xpose.msra.mxu0 0.0
    %662 = vmatprep.subr.mxu0 0.0
    %663 = vmatpush1.xpose.msra.mxu0 0.0
    %664 = vmatprep.subr.mxu0 0.0
    %665 = vmatpush1.xpose.msra.mxu0 0.0
    %666 = vmatprep.subr.mxu0 0.0
    %667 = vmatpush1.xpose.msra.mxu0 0.0
    %668 = vmatprep.subr.mxu0 0.0
    %669 = vmatpush1.xpose.msra.mxu0 0.0
    %670 = vmatprep.mubr.f32.mxu0 0.0
    %671 = vmatmul.mubr.f32.gmra.mrb[0].mxu0 %v597
    %v672 = vpop.f32.mrb[0].mxu0
    %v673 = vadd.f32 0.0, %v672
    %v674 = vpop.f32.mrb[0].mxu0
    %675 = vmatprep.mubr.f32.mxu0 0.0
    %676 = vmatmul.mubr.f32.gmra.mrb[0].mxu0 %v600
    %v677 = vpop.f32.mrb[0].mxu0
    %v678 = vadd.f32 0.0, %v677
    %v679 = vpop.f32.mrb[0].mxu0
    %680 = vdwg.mxu0
    %681 = vmatprep.subr.mxu0 0.0
    %682 = vmatpush1.msra.mxu0 %v433
    %683 = vmatprep.subr.mxu0 0.0
    %684 = vmatpush1.msra.mxu0 %v434
    %685 = vmatprep.subr.mxu0 0.0
    %686 = vmatpush1.msra.mxu0 %v435
    %687 = vmatprep.subr.mxu0 0.0
    %688 = vmatpush1.msra.mxu0 %v436
    %689 = vmatprep.subr.mxu0 0.0
    %690 = vmatpush1.msra.mxu0 0.0
    %691 = vmatprep.subr.mxu0 0.0
    %692 = vmatpush1.msra.mxu0 0.0
    %693 = vmatprep.subr.mxu0 0.0
    %694 = vmatpush1.msra.mxu0 0.0
    %695 = vmatprep.subr.mxu0 0.0
    %696 = vmatpush1.msra.mxu0 0.0
    %697 = vmatprep.subr.mxu0 0.0
    %698 = vmatpush1.msra.mxu0 0.0
    %699 = vmatprep.subr.mxu0 0.0
    %700 = vmatpush1.msra.mxu0 0.0
    %701 = vmatprep.subr.mxu0 0.0
    %702 = vmatpush1.msra.mxu0 0.0
    %703 = vmatprep.subr.mxu0 0.0
    %704 = vmatpush1.msra.mxu0 0.0
    %705 = vmatprep.subr.mxu0 0.0
    %706 = vmatpush1.msra.mxu0 0.0
    %707 = vmatprep.subr.mxu0 0.0
    %708 = vmatpush1.msra.mxu0 0.0
    %709 = vmatprep.subr.mxu0 0.0
    %710 = vmatpush1.msra.mxu0 0.0
    %711 = vmatprep.subr.mxu0 0.0
    %712 = vmatpush1.msra.mxu0 0.0
    %713 = vmatprep.subr.mxu0 0.0
    %714 = vmatpush1.msra.mxu0 0.0
    %715 = vmatprep.subr.mxu0 0.0
    %716 = vmatpush1.msra.mxu0 0.0
    %717 = vmatprep.subr.mxu0 0.0
    %718 = vmatpush1.msra.mxu0 0.0
    %719 = vmatprep.subr.mxu0 0.0
    %720 = vmatpush1.msra.mxu0 0.0
    %721 = vmatprep.subr.mxu0 0.0
    %722 = vmatpush1.msra.mxu0 0.0
    %723 = vmatprep.subr.mxu0 0.0
    %724 = vmatpush1.msra.mxu0 0.0
    %725 = vmatprep.subr.mxu0 0.0
    %726 = vmatpush1.msra.mxu0 0.0
    %727 = vmatprep.subr.mxu0 0.0
    %728 = vmatpush1.msra.mxu0 0.0
    %729 = vmatprep.subr.mxu0 0.0
    %730 = vmatpush1.msra.mxu0 0.0
    %731 = vmatprep.subr.mxu0 0.0
    %732 = vmatpush1.msra.mxu0 0.0
    %733 = vmatprep.subr.mxu0 0.0
    %734 = vmatpush1.msra.mxu0 0.0
    %735 = vmatprep.subr.mxu0 0.0
    %736 = vmatpush1.msra.mxu0 0.0
    %737 = vmatprep.subr.mxu0 0.0
    %738 = vmatpush1.msra.mxu0 0.0
    %739 = vmatprep.subr.mxu0 0.0
    %740 = vmatpush1.msra.mxu0 0.0
    %741 = vmatprep.subr.mxu0 0.0
    %742 = vmatpush1.msra.mxu0 0.0
    %743 = vmatprep.subr.mxu0 0.0
    %744 = vmatpush1.msra.mxu0 0.0
    %745 = vmatprep.mubr.f32.mxu0 0.0
    %746 = vmatmul.mubr.f32.gmra.mrb[0].mxu0 %v597
    %v747 = vpop.f32.mrb[0].mxu0
    %v748 = vadd.f32 0.0, %v747
    %v749 = vpop.f32.mrb[0].mxu0
    %750 = vmatprep.mubr.f32.mxu0 0.0
    %751 = vmatmul.mubr.f32.gmra.mrb[0].mxu0 %v600
    %v752 = vpop.f32.mrb[0].mxu0
    %v753 = vadd.f32 0.0, %v752
    %v754 = vpop.f32.mrb[0].mxu0
    %755 = vdwg.mxu0
    %v756 = vsel %vm265, %v588, -inf
    %757 = vmax.xlane.f32.xlu0 %v756
    %v758 = vpop.xlane.xlu0 %757
    %v759 = vsel %vm265, %v593, -inf
    %760 = vmax.xlane.f32.xlu0 %v759
    %v761 = vpop.xlane.xlu0 %760
    %v762 = vsub.f32 %v588, %v758
    %v763 = vsub.f32 %v593, %v761
    %v764 = vmul.f32 %v762, 1.442695
    %v765 = vpow.pop %v764
    %v766 = vmul.f32 %v763, 1.442695
    %v767 = vpow.pop %v766
    %v769 = vsel %vm265, %v765, 0
    %v772 = vsel %vm265, %v767, 0
    %774 = vmatprep.subr.mxu0 0.0
    %775 = vmatpush1.msra.mxu0 %v74
    %776 = vmatprep.subr.mxu0 0.0
    %777 = vmatpush1.msra.mxu0 %v75
    %778 = vmatprep.subr.mxu0 0.0
    %779 = vmatpush1.msra.mxu0 0.0
    %780 = vmatprep.subr.mxu0 0.0
    %781 = vmatpush1.msra.mxu0 0.0
    %782 = vmatprep.subr.mxu0 0.0
    %783 = vmatpush1.msra.mxu0 0.0
    %784 = vmatprep.subr.mxu0 0.0
    %785 = vmatpush1.msra.mxu0 0.0
    %786 = vmatprep.subr.mxu0 0.0
    %787 = vmatpush1.msra.mxu0 0.0
    %788 = vmatprep.subr.mxu0 0.0
    %789 = vmatpush1.msra.mxu0 0.0
    %790 = vmatprep.subr.mxu0 0.0
    %791 = vmatpush1.msra.mxu0 0.0
    %792 = vmatprep.subr.mxu0 0.0
    %793 = vmatpush1.msra.mxu0 0.0
    %794 = vmatprep.subr.mxu0 0.0
    %795 = vmatpush1.msra.mxu0 0.0
    %796 = vmatprep.subr.mxu0 0.0
    %797 = vmatpush1.msra.mxu0 0.0
    %798 = vmatprep.subr.mxu0 0.0
    %799 = vmatpush1.msra.mxu0 0.0
    %800 = vmatprep.subr.mxu0 0.0
    %801 = vmatpush1.msra.mxu0 0.0
    %802 = vmatprep.subr.mxu0 0.0
    %803 = vmatpush1.msra.mxu0 0.0
    %804 = vmatprep.subr.mxu0 0.0
    %805 = vmatpush1.msra.mxu0 0.0
    %806 = vmatprep.subr.mxu0 0.0
    %807 = vmatpush1.msra.mxu0 0.0
    %808 = vmatprep.subr.mxu0 0.0
    %809 = vmatpush1.msra.mxu0 0.0
    %810 = vmatprep.subr.mxu0 0.0
    %811 = vmatpush1.msra.mxu0 0.0
    %812 = vmatprep.subr.mxu0 0.0
    %813 = vmatpush1.msra.mxu0 0.0
    %814 = vmatprep.subr.mxu0 0.0
    %815 = vmatpush1.msra.mxu0 0.0
    %816 = vmatprep.subr.mxu0 0.0
    %817 = vmatpush1.msra.mxu0 0.0
    %818 = vmatprep.subr.mxu0 0.0
    %819 = vmatpush1.msra.mxu0 0.0
    %820 = vmatprep.subr.mxu0 0.0
    %821 = vmatpush1.msra.mxu0 0.0
    %822 = vmatprep.subr.mxu0 0.0
    %823 = vmatpush1.msra.mxu0 0.0
    %824 = vmatprep.subr.mxu0 0.0
    %825 = vmatpush1.msra.mxu0 0.0
    %826 = vmatprep.subr.mxu0 0.0
    %827 = vmatpush1.msra.mxu0 0.0
    %828 = vmatprep.subr.mxu0 0.0
    %829 = vmatpush1.msra.mxu0 0.0
    %830 = vmatprep.subr.mxu0 0.0
    %831 = vmatpush1.msra.mxu0 0.0
    %832 = vmatprep.subr.mxu0 0.0
    %833 = vmatpush1.msra.mxu0 0.0
    %834 = vmatprep.subr.mxu0 0.0
    %835 = vmatpush1.msra.mxu0 0.0
    %836 = vmatprep.subr.mxu0 0.0
    %837 = vmatpush1.msra.mxu0 0.0
    %838 = vmatprep.mubr.f32.mxu0 0.0
    %839 = vmatmul.mubr.f32.gmra.mrb[0].mxu0 %v769
    %v840 = vpop.f32.mrb[0].mxu0
    %v841 = vadd.f32 0.0, %v840
    %v842 = vpop.f32.mrb[0].mxu0
    %843 = vmatprep.mubr.f32.mxu0 0.0
    %844 = vmatmul.mubr.f32.gmra.mrb[0].mxu0 %v772
    %v845 = vpop.f32.mrb[0].mxu0
    %v846 = vadd.f32 0.0, %v845
    %v847 = vpop.f32.mrb[0].mxu0
    %848 = vdwg.mxu0
    %v849 = vrcp.pop %v841
    %v850 = vmul.f32 %v765, %v849
    %v851 = vrcp.pop %v846
    %v852 = vmul.f32 %v767, %v851
    %v853 = vsel %vm265, %v673, -inf
    %854 = vmax.xlane.f32.xlu0 %v853
    %v855 = vpop.xlane.xlu0 %854
    %v856 = vsel %vm265, %v678, -inf
    %857 = vmax.xlane.f32.xlu0 %v856
    %v858 = vpop.xlane.xlu0 %857
    %v859 = vsub.f32 %v673, %v855
    %v860 = vsub.f32 %v678, %v858
    %v861 = vmul.f32 %v859, 1.442695
    %v862 = vpow.pop %v861
    %v863 = vmul.f32 %v860, 1.442695
    %v864 = vpow.pop %v863
    %v865 = vsel %vm265, %v862, 0.0
    %866 = vadd.xlane.f32.xlu0 %v865
    %v867 = vpop.xlane.xlu0 %866
    %v868 = vsel %vm265, %v864, 0.0
    %869 = vadd.xlane.f32.xlu0 %v868
    %v870 = vpop.xlane.xlu0 %869
    %v871 = vrcp.pop %v867
    %v872 = vmul.f32 %v862, %v871
    %v873 = vrcp.pop %v870
    %v874 = vmul.f32 %v864, %v873
    %875 = vmatprep.subr.mxu0 0.0
    %876 = vmatpush1.msra.mxu0 %v263
    %877 = vmatprep.subr.mxu0 0.0
    %878 = vmatpush1.msra.mxu0 %v264
    %879 = vmatprep.subr.mxu0 0.0
    %880 = vmatpush1.msra.mxu0 0.0
    %881 = vmatprep.subr.mxu0 0.0
    %882 = vmatpush1.msra.mxu0 0.0
    %883 = vmatprep.subr.mxu0 0.0
    %884 = vmatpush1.msra.mxu0 0.0
    %885 = vmatprep.subr.mxu0 0.0
    %886 = vmatpush1.msra.mxu0 0.0
    %887 = vmatprep.subr.mxu0 0.0
    %888 = vmatpush1.msra.mxu0 0.0
    %889 = vmatprep.subr.mxu0 0.0
    %890 = vmatpush1.msra.mxu0 0.0
    %891 = vmatprep.subr.mxu0 0.0
    %892 = vmatpush1.msra.mxu0 0.0
    %893 = vmatprep.subr.mxu0 0.0
    %894 = vmatpush1.msra.mxu0 0.0
    %895 = vmatprep.subr.mxu0 0.0
    %896 = vmatpush1.msra.mxu0 0.0
    %897 = vmatprep.subr.mxu0 0.0
    %898 = vmatpush1.msra.mxu0 0.0
    %899 = vmatprep.subr.mxu0 0.0
    %900 = vmatpush1.msra.mxu0 0.0
    %901 = vmatprep.subr.mxu0 0.0
    %902 = vmatpush1.msra.mxu0 0.0
    %903 = vmatprep.subr.mxu0 0.0
    %904 = vmatpush1.msra.mxu0 0.0
    %905 = vmatprep.subr.mxu0 0.0
    %906 = vmatpush1.msra.mxu0 0.0
    %907 = vmatprep.subr.mxu0 0.0
    %908 = vmatpush1.msra.mxu0 0.0
    %909 = vmatprep.subr.mxu0 0.0
    %910 = vmatpush1.msra.mxu0 0.0
    %911 = vmatprep.subr.mxu0 0.0
    %912 = vmatpush1.msra.mxu0 0.0
    %913 = vmatprep.subr.mxu0 0.0
    %914 = vmatpush1.msra.mxu0 0.0
    %915 = vmatprep.subr.mxu0 0.0
    %916 = vmatpush1.msra.mxu0 0.0
    %917 = vmatprep.subr.mxu0 0.0
    %918 = vmatpush1.msra.mxu0 0.0
    %919 = vmatprep.subr.mxu0 0.0
    %920 = vmatpush1.msra.mxu0 0.0
    %921 = vmatprep.subr.mxu0 0.0
    %922 = vmatpush1.msra.mxu0 0.0
    %923 = vmatprep.subr.mxu0 0.0
    %924 = vmatpush1.msra.mxu0 0.0
    %925 = vmatprep.subr.mxu0 0.0
    %926 = vmatpush1.msra.mxu0 0.0
    %927 = vmatprep.subr.mxu0 0.0
    %928 = vmatpush1.msra.mxu0 0.0
    %929 = vmatprep.subr.mxu0 0.0
    %930 = vmatpush1.msra.mxu0 0.0
    %931 = vmatprep.subr.mxu0 0.0
    %932 = vmatpush1.msra.mxu0 0.0
    %933 = vmatprep.subr.mxu0 0.0
    %934 = vmatpush1.msra.mxu0 0.0
    %935 = vmatprep.subr.mxu0 0.0
    %936 = vmatpush1.msra.mxu0 0.0
    %937 = vmatprep.subr.mxu0 0.0
    %938 = vmatpush1.msra.mxu0 0.0
    %939 = vmatprep.mubr.f32.mxu0 0.0
    %940 = vmatmul.mubr.f32.gmra.mrb[0].mxu0 %v267
    %v941 = vpop.f32.mrb[0].mxu0
    %v942 = vadd.f32 0.0, %v941
    %v943 = vpop.f32.mrb[0].mxu0
    %944 = vdwg.mxu0
    %947 = vrot.lane.b32.xlu0 %v253, 96
    %v948 = vpop.permute.xlu0 %947
    %949 = vrot.lane.b32.xlu0 %v258, 96
    %v950 = vpop.permute.xlu0 %949
    %953 = vmatprep.subr.mxu0 0.0
    %954 = vmatpush1.msra.mxu0 %v948
    %955 = vmatprep.subr.mxu0 0.0
    %956 = vmatpush1.msra.mxu0 %v950
    %957 = vmatprep.subr.mxu0 0.0
    %958 = vmatpush1.msra.mxu0 0.0
    %959 = vmatprep.subr.mxu0 0.0
    %960 = vmatpush1.msra.mxu0 0.0
    %961 = vmatprep.subr.mxu0 0.0
    %962 = vmatpush1.msra.mxu0 0.0
    %963 = vmatprep.subr.mxu0 0.0
    %964 = vmatpush1.msra.mxu0 0.0
    %965 = vmatprep.subr.mxu0 0.0
    %966 = vmatpush1.msra.mxu0 0.0
    %967 = vmatprep.subr.mxu0 0.0
    %968 = vmatpush1.msra.mxu0 0.0
    %969 = vmatprep.subr.mxu0 0.0
    %970 = vmatpush1.msra.mxu0 0.0
    %971 = vmatprep.subr.mxu0 0.0
    %972 = vmatpush1.msra.mxu0 0.0
    %973 = vmatprep.subr.mxu0 0.0
    %974 = vmatpush1.msra.mxu0 0.0
    %975 = vmatprep.subr.mxu0 0.0
    %976 = vmatpush1.msra.mxu0 0.0
    %977 = vmatprep.subr.mxu0 0.0
    %978 = vmatpush1.msra.mxu0 0.0
    %979 = vmatprep.subr.mxu0 0.0
    %980 = vmatpush1.msra.mxu0 0.0
    %981 = vmatprep.subr.mxu0 0.0
    %982 = vmatpush1.msra.mxu0 0.0
    %983 = vmatprep.subr.mxu0 0.0
    %984 = vmatpush1.msra.mxu0 0.0
    %985 = vmatprep.subr.mxu0 0.0
    %986 = vmatpush1.msra.mxu0 0.0
    %987 = vmatprep.subr.mxu0 0.0
    %988 = vmatpush1.msra.mxu0 0.0
    %989 = vmatprep.subr.mxu0 0.0
    %990 = vmatpush1.msra.mxu0 0.0
    %991 = vmatprep.subr.mxu0 0.0
    %992 = vmatpush1.msra.mxu0 0.0
    %993 = vmatprep.subr.mxu0 0.0
    %994 = vmatpush1.msra.mxu0 0.0
    %995 = vmatprep.subr.mxu0 0.0
    %996 = vmatpush1.msra.mxu0 0.0
    %997 = vmatprep.subr.mxu0 0.0
    %998 = vmatpush1.msra.mxu0 0.0
    %999 = vmatprep.subr.mxu0 0.0
    %1000 = vmatpush1.msra.mxu0 0.0
    %1001 = vmatprep.subr.mxu0 0.0
    %1002 = vmatpush1.msra.mxu0 0.0
    %1003 = vmatprep.subr.mxu0 0.0
    %1004 = vmatpush1.msra.mxu0 0.0
    %1005 = vmatprep.subr.mxu0 0.0
    %1006 = vmatpush1.msra.mxu0 0.0
    %1007 = vmatprep.subr.mxu0 0.0
    %1008 = vmatpush1.msra.mxu0 0.0
    %1009 = vmatprep.subr.mxu0 0.0
    %1010 = vmatpush1.msra.mxu0 0.0
    %1011 = vmatprep.subr.mxu0 0.0
    %1012 = vmatpush1.msra.mxu0 0.0
    %1013 = vmatprep.subr.mxu0 0.0
    %1014 = vmatpush1.msra.mxu0 0.0
    %1015 = vmatprep.subr.mxu0 0.0
    %1016 = vmatpush1.msra.mxu0 0.0
    %1017 = vmatprep.mubr.f32.mxu0 0.0
    %1018 = vmatmul.mubr.f32.gmra.mrb[0].mxu0 %v267
    %v1019 = vpop.f32.mrb[0].mxu0
    %v1020 = vadd.f32 0.0, %v1019
    %v1021 = vpop.f32.mrb[0].mxu0
    %1022 = vdwg.mxu0
    %1023 = vxpose.xlu0.b32.start [1/16] %v1020, 128
    %1024 = vxpose.xlu0.b32.cont [2/16] 0.0, 128
    %1025 = vxpose.xlu0.b32.cont [3/16] 0.0, 128
    %1026 = vxpose.xlu0.b32.cont [4/16] 0.0, 128
    %1027 = vxpose.xlu0.b32.cont [5/16] 0.0, 128
    %1028 = vxpose.xlu0.b32.cont [6/16] 0.0, 128
    %1029 = vxpose.xlu0.b32.cont [7/16] 0.0, 128
    %1030 = vxpose.xlu0.b32.cont [8/16] 0.0, 128
    %1031 = vxpose.xlu0.b32.cont [9/16] 0.0, 128
    %1032 = vxpose.xlu0.b32.cont [10/16] 0.0, 128
    %1033 = vxpose.xlu0.b32.cont [11/16] 0.0, 128
    %1034 = vxpose.xlu0.b32.cont [12/16] 0.0, 128
    %1035 = vxpose.xlu0.b32.cont [13/16] 0.0, 128
    %1036 = vxpose.xlu0.b32.cont [14/16] 0.0, 128
    %1037 = vxpose.xlu0.b32.cont [15/16] 0.0, 128
    %1038 = vxpose.xlu0.b32.end [16/16] 0.0, 128
    %v1039 = vpop.trf.xlu0
    %v1040 = vpop.trf.xlu0
    %v1041 = vpop.trf.xlu0
    %v1042 = vpop.trf.xlu0
    %v1043 = vpop.trf.xlu0
    %v1044 = vpop.trf.xlu0
    %v1045 = vpop.trf.xlu0
    %v1046 = vpop.trf.xlu0
    %v1047 = vpop.trf.xlu0
    %v1048 = vpop.trf.xlu0
    %v1049 = vpop.trf.xlu0
    %v1050 = vpop.trf.xlu0
    %v1051 = vpop.trf.xlu0
    %v1052 = vpop.trf.xlu0
    %v1053 = vpop.trf.xlu0
    %v1054 = vpop.trf.xlu0
    %1059 = vrot.lane.b32.xlu0 %v1039, 4
    %v1060 = vpop.permute.xlu0 %1059
    %1061 = vrot.lane.b32.xlu0 %v1040, 4
    %v1062 = vpop.permute.xlu0 %1061
    %1063 = vrot.lane.b32.xlu0 %v1041, 4
    %v1064 = vpop.permute.xlu0 %1063
    %1065 = vrot.lane.b32.xlu0 %v1042, 4
    %v1066 = vpop.permute.xlu0 %1065
    %1071 = vrot.lane.b32.xlu0 %v1039, 8
    %v1072 = vpop.permute.xlu0 %1071
    %1073 = vrot.lane.b32.xlu0 %v1040, 8
    %v1074 = vpop.permute.xlu0 %1073
    %1075 = vrot.lane.b32.xlu0 %v1041, 8
    %v1076 = vpop.permute.xlu0 %1075
    %1077 = vrot.lane.b32.xlu0 %v1042, 8
    %v1078 = vpop.permute.xlu0 %1077
    %1083 = vrot.lane.b32.xlu0 %v1039, 12
    %v1084 = vpop.permute.xlu0 %1083
    %1085 = vrot.lane.b32.xlu0 %v1040, 12
    %v1086 = vpop.permute.xlu0 %1085
    %1087 = vrot.lane.b32.xlu0 %v1041, 12
    %v1088 = vpop.permute.xlu0 %1087
    %1089 = vrot.lane.b32.xlu0 %v1042, 12
    %v1090 = vpop.permute.xlu0 %1089
    %v1095 = vsel %vm489, %v1039, %v1060
    %v1096 = vsel %vm489, %v1040, %v1062
    %v1097 = vsel %vm489, %v1041, %v1064
    %v1098 = vsel %vm489, %v1042, %v1066
    %v1099 = vsel %vm494, %v1095, %v1072
    %v1100 = vsel %vm494, %v1096, %v1074
    %v1101 = vsel %vm494, %v1097, %v1076
    %v1102 = vsel %vm494, %v1098, %v1078
    %v1103 = vsel %vm499, %v1099, %v1084
    %v1104 = vsel %vm499, %v1100, %v1086
    %v1105 = vsel %vm499, %v1101, %v1088
    %v1106 = vsel %vm499, %v1102, %v1090
    %v1107 = vmul.f32 %v1103, %v68
    %v1108 = vmul.f32 %v1104, %v69
    %v1109 = vmul.f32 %v1105, %v70
    %v1110 = vmul.f32 %v1106, %v71
    %v1112 = vrot.slane %v942, 4
    %v1114 = vsel %vm511, %v942, %v1112
    %v1115 = vmul.f32 %v1114, %v72
    %v1116 = vmul.f32 %v1114, %v73
    %v1118 = vsel %vm86, %v263, 0
    %v1121 = vsel %vm86, %v264, 0
    %1123 = vmatprep.subr.mxu0 0.0
    %1124 = vmatpush1.msra.mxu0 %v1107
    %1125 = vmatprep.subr.mxu0 0.0
    %1126 = vmatpush1.msra.mxu0 %v1108
    %1127 = vmatprep.subr.mxu0 0.0
    %1128 = vmatpush1.msra.mxu0 %v1109
    %1129 = vmatprep.subr.mxu0 0.0
    %1130 = vmatpush1.msra.mxu0 %v1110
    %1131 = vmatprep.subr.mxu0 0.0
    %1132 = vmatpush1.msra.mxu0 0.0
    %1133 = vmatprep.subr.mxu0 0.0
    %1134 = vmatpush1.msra.mxu0 0.0
    %1135 = vmatprep.subr.mxu0 0.0
    %1136 = vmatpush1.msra.mxu0 0.0
    %1137 = vmatprep.subr.mxu0 0.0
    %1138 = vmatpush1.msra.mxu0 0.0
    %1139 = vmatprep.subr.mxu0 0.0
    %1140 = vmatpush1.msra.mxu0 0.0
    %1141 = vmatprep.subr.mxu0 0.0
    %1142 = vmatpush1.msra.mxu0 0.0
    %1143 = vmatprep.subr.mxu0 0.0
    %1144 = vmatpush1.msra.mxu0 0.0
    %1145 = vmatprep.subr.mxu0 0.0
    %1146 = vmatpush1.msra.mxu0 0.0
    %1147 = vmatprep.subr.mxu0 0.0
    %1148 = vmatpush1.msra.mxu0 0.0
    %1149 = vmatprep.subr.mxu0 0.0
    %1150 = vmatpush1.msra.mxu0 0.0
    %1151 = vmatprep.subr.mxu0 0.0
    %1152 = vmatpush1.msra.mxu0 0.0
    %1153 = vmatprep.subr.mxu0 0.0
    %1154 = vmatpush1.msra.mxu0 0.0
    %1155 = vmatprep.subr.mxu0 0.0
    %1156 = vmatpush1.msra.mxu0 0.0
    %1157 = vmatprep.subr.mxu0 0.0
    %1158 = vmatpush1.msra.mxu0 0.0
    %1159 = vmatprep.subr.mxu0 0.0
    %1160 = vmatpush1.msra.mxu0 0.0
    %1161 = vmatprep.subr.mxu0 0.0
    %1162 = vmatpush1.msra.mxu0 0.0
    %1163 = vmatprep.subr.mxu0 0.0
    %1164 = vmatpush1.msra.mxu0 0.0
    %1165 = vmatprep.subr.mxu0 0.0
    %1166 = vmatpush1.msra.mxu0 0.0
    %1167 = vmatprep.subr.mxu0 0.0
    %1168 = vmatpush1.msra.mxu0 0.0
    %1169 = vmatprep.subr.mxu0 0.0
    %1170 = vmatpush1.msra.mxu0 0.0
    %1171 = vmatprep.subr.mxu0 0.0
    %1172 = vmatpush1.msra.mxu0 0.0
    %1173 = vmatprep.subr.mxu0 0.0
    %1174 = vmatpush1.msra.mxu0 0.0
    %1175 = vmatprep.subr.mxu0 0.0
    %1176 = vmatpush1.msra.mxu0 0.0
    %1177 = vmatprep.subr.mxu0 0.0
    %1178 = vmatpush1.msra.mxu0 0.0
    %1179 = vmatprep.subr.mxu0 0.0
    %1180 = vmatpush1.msra.mxu0 0.0
    %1181 = vmatprep.subr.mxu0 0.0
    %1182 = vmatpush1.msra.mxu0 0.0
    %1183 = vmatprep.subr.mxu0 0.0
    %1184 = vmatpush1.msra.mxu0 0.0
    %1185 = vmatprep.subr.mxu0 0.0
    %1186 = vmatpush1.msra.mxu0 0.0
    %1187 = vmatprep.mubr.f32.mxu0 0.0
    %1188 = vmatmul.mubr.f32.gmra.mrb[0].mxu0 %v1118
    %v1189 = vpop.f32.mrb[0].mxu0
    %v1190 = vadd.f32 0.0, %v1189
    %v1191 = vpop.f32.mrb[0].mxu0
    %1192 = vmatprep.mubr.f32.mxu0 0.0
    %1193 = vmatmul.mubr.f32.gmra.mrb[0].mxu0 %v1121
    %v1194 = vpop.f32.mrb[0].mxu0
    %v1195 = vadd.f32 0.0, %v1194
    %v1196 = vpop.f32.mrb[0].mxu0
    %1197 = vdwg.mxu0
    %v1199 = vsel %vm86, %v1115, 0
    %v1202 = vsel %vm86, %v1116, 0
    %v1204 = vsel %vm86, %v948, 0
    %v1206 = vsel %vm86, %v950, 0
    %1208 = vmatprep.subr.mxu0 0.0
    %1209 = vmatpush1.xpose.msra.mxu0 %v1204
    %1210 = vmatprep.subr.mxu0 0.0
    %1211 = vmatpush1.xpose.msra.mxu0 %v1206
    %1212 = vmatprep.subr.mxu0 0.0
    %1213 = vmatpush1.xpose.msra.mxu0 0.0
    %1214 = vmatprep.subr.mxu0 0.0
    %1215 = vmatpush1.xpose.msra.mxu0 0.0
    %1216 = vmatprep.subr.mxu0 0.0
    %1217 = vmatpush1.xpose.msra.mxu0 0.0
    %1218 = vmatprep.subr.mxu0 0.0
    %1219 = vmatpush1.xpose.msra.mxu0 0.0
    %1220 = vmatprep.subr.mxu0 0.0
    %1221 = vmatpush1.xpose.msra.mxu0 0.0
    %1222 = vmatprep.subr.mxu0 0.0
    %1223 = vmatpush1.xpose.msra.mxu0 0.0
    %1224 = vmatprep.subr.mxu0 0.0
    %1225 = vmatpush1.xpose.msra.mxu0 0.0
    %1226 = vmatprep.subr.mxu0 0.0
    %1227 = vmatpush1.xpose.msra.mxu0 0.0
    %1228 = vmatprep.subr.mxu0 0.0
    %1229 = vmatpush1.xpose.msra.mxu0 0.0
    %1230 = vmatprep.subr.mxu0 0.0
    %1231 = vmatpush1.xpose.msra.mxu0 0.0
    %1232 = vmatprep.subr.mxu0 0.0
    %1233 = vmatpush1.xpose.msra.mxu0 0.0
    %1234 = vmatprep.subr.mxu0 0.0
    %1235 = vmatpush1.xpose.msra.mxu0 0.0
    %1236 = vmatprep.subr.mxu0 0.0
    %1237 = vmatpush1.xpose.msra.mxu0 0.0
    %1238 = vmatprep.subr.mxu0 0.0
    %1239 = vmatpush1.xpose.msra.mxu0 0.0
    %1240 = vmatprep.subr.mxu0 0.0
    %1241 = vmatpush1.xpose.msra.mxu0 0.0
    %1242 = vmatprep.subr.mxu0 0.0
    %1243 = vmatpush1.xpose.msra.mxu0 0.0
    %1244 = vmatprep.subr.mxu0 0.0
    %1245 = vmatpush1.xpose.msra.mxu0 0.0
    %1246 = vmatprep.subr.mxu0 0.0
    %1247 = vmatpush1.xpose.msra.mxu0 0.0
    %1248 = vmatprep.subr.mxu0 0.0
    %1249 = vmatpush1.xpose.msra.mxu0 0.0
    %1250 = vmatprep.subr.mxu0 0.0
    %1251 = vmatpush1.xpose.msra.mxu0 0.0
    %1252 = vmatprep.subr.mxu0 0.0
    %1253 = vmatpush1.xpose.msra.mxu0 0.0
    %1254 = vmatprep.subr.mxu0 0.0
    %1255 = vmatpush1.xpose.msra.mxu0 0.0
    %1256 = vmatprep.subr.mxu0 0.0
    %1257 = vmatpush1.xpose.msra.mxu0 0.0
    %1258 = vmatprep.subr.mxu0 0.0
    %1259 = vmatpush1.xpose.msra.mxu0 0.0
    %1260 = vmatprep.subr.mxu0 0.0
    %1261 = vmatpush1.xpose.msra.mxu0 0.0
    %1262 = vmatprep.subr.mxu0 0.0
    %1263 = vmatpush1.xpose.msra.mxu0 0.0
    %1264 = vmatprep.subr.mxu0 0.0
    %1265 = vmatpush1.xpose.msra.mxu0 0.0
    %1266 = vmatprep.subr.mxu0 0.0
    %1267 = vmatpush1.xpose.msra.mxu0 0.0
    %1268 = vmatprep.subr.mxu0 0.0
    %1269 = vmatpush1.xpose.msra.mxu0 0.0
    %1270 = vmatprep.subr.mxu0 0.0
    %1271 = vmatpush1.xpose.msra.mxu0 0.0
    %1272 = vmatprep.mubr.f32.mxu0 0.0
    %1273 = vmatmul.mubr.f32.gmra.mrb[0].mxu0 %v1199
    %v1274 = vpop.f32.mrb[0].mxu0
    %v1275 = vadd.f32 0.0, %v1274
    %v1276 = vpop.f32.mrb[0].mxu0
    %1277 = vmatprep.mubr.f32.mxu0 0.0
    %1278 = vmatmul.mubr.f32.gmra.mrb[0].mxu0 %v1202
    %v1279 = vpop.f32.mrb[0].mxu0
    %v1280 = vadd.f32 0.0, %v1279
    %v1281 = vpop.f32.mrb[0].mxu0
    %1282 = vdwg.mxu0
    %1283 = vmatprep.subr.mxu0 0.0
    %1284 = vmatpush1.msra.mxu0 %v1039
    %1285 = vmatprep.subr.mxu0 0.0
    %1286 = vmatpush1.msra.mxu0 %v1040
    %1287 = vmatprep.subr.mxu0 0.0
    %1288 = vmatpush1.msra.mxu0 %v1041
    %1289 = vmatprep.subr.mxu0 0.0
    %1290 = vmatpush1.msra.mxu0 %v1042
    %1291 = vmatprep.subr.mxu0 0.0
    %1292 = vmatpush1.msra.mxu0 0.0
    %1293 = vmatprep.subr.mxu0 0.0
    %1294 = vmatpush1.msra.mxu0 0.0
    %1295 = vmatprep.subr.mxu0 0.0
    %1296 = vmatpush1.msra.mxu0 0.0
    %1297 = vmatprep.subr.mxu0 0.0
    %1298 = vmatpush1.msra.mxu0 0.0
    %1299 = vmatprep.subr.mxu0 0.0
    %1300 = vmatpush1.msra.mxu0 0.0
    %1301 = vmatprep.subr.mxu0 0.0
    %1302 = vmatpush1.msra.mxu0 0.0
    %1303 = vmatprep.subr.mxu0 0.0
    %1304 = vmatpush1.msra.mxu0 0.0
    %1305 = vmatprep.subr.mxu0 0.0
    %1306 = vmatpush1.msra.mxu0 0.0
    %1307 = vmatprep.subr.mxu0 0.0
    %1308 = vmatpush1.msra.mxu0 0.0
    %1309 = vmatprep.subr.mxu0 0.0
    %1310 = vmatpush1.msra.mxu0 0.0
    %1311 = vmatprep.subr.mxu0 0.0
    %1312 = vmatpush1.msra.mxu0 0.0
    %1313 = vmatprep.subr.mxu0 0.0
    %1314 = vmatpush1.msra.mxu0 0.0
    %1315 = vmatprep.subr.mxu0 0.0
    %1316 = vmatpush1.msra.mxu0 0.0
    %1317 = vmatprep.subr.mxu0 0.0
    %1318 = vmatpush1.msra.mxu0 0.0
    %1319 = vmatprep.subr.mxu0 0.0
    %1320 = vmatpush1.msra.mxu0 0.0
    %1321 = vmatprep.subr.mxu0 0.0
    %1322 = vmatpush1.msra.mxu0 0.0
    %1323 = vmatprep.subr.mxu0 0.0
    %1324 = vmatpush1.msra.mxu0 0.0
    %1325 = vmatprep.subr.mxu0 0.0
    %1326 = vmatpush1.msra.mxu0 0.0
    %1327 = vmatprep.subr.mxu0 0.0
    %1328 = vmatpush1.msra.mxu0 0.0
    %1329 = vmatprep.subr.mxu0 0.0
    %1330 = vmatpush1.msra.mxu0 0.0
    %1331 = vmatprep.subr.mxu0 0.0
    %1332 = vmatpush1.msra.mxu0 0.0
    %1333 = vmatprep.subr.mxu0 0.0
    %1334 = vmatpush1.msra.mxu0 0.0
    %1335 = vmatprep.subr.mxu0 0.0
    %1336 = vmatpush1.msra.mxu0 0.0
    %1337 = vmatprep.subr.mxu0 0.0
    %1338 = vmatpush1.msra.mxu0 0.0
    %1339 = vmatprep.subr.mxu0 0.0
    %1340 = vmatpush1.msra.mxu0 0.0
    %1341 = vmatprep.subr.mxu0 0.0
    %1342 = vmatpush1.msra.mxu0 0.0
    %1343 = vmatprep.subr.mxu0 0.0
    %1344 = vmatpush1.msra.mxu0 0.0
    %1345 = vmatprep.subr.mxu0 0.0
    %1346 = vmatpush1.msra.mxu0 0.0
    %1347 = vmatprep.mubr.f32.mxu0 0.0
    %1348 = vmatmul.mubr.f32.gmra.mrb[0].mxu0 %v1199
    %v1349 = vpop.f32.mrb[0].mxu0
    %v1350 = vadd.f32 0.0, %v1349
    %v1351 = vpop.f32.mrb[0].mxu0
    %1352 = vmatprep.mubr.f32.mxu0 0.0
    %1353 = vmatmul.mubr.f32.gmra.mrb[0].mxu0 %v1202
    %v1354 = vpop.f32.mrb[0].mxu0
    %v1355 = vadd.f32 0.0, %v1354
    %v1356 = vpop.f32.mrb[0].mxu0
    %1357 = vdwg.mxu0
    %v1358 = vsel %vm265, %v1190, -inf
    %1359 = vmax.xlane.f32.xlu0 %v1358
    %v1360 = vpop.xlane.xlu0 %1359
    %v1361 = vsel %vm265, %v1195, -inf
    %1362 = vmax.xlane.f32.xlu0 %v1361
    %v1363 = vpop.xlane.xlu0 %1362
    %v1364 = vsub.f32 %v1190, %v1360
    %v1365 = vsub.f32 %v1195, %v1363
    %v1366 = vmul.f32 %v1364, 1.442695
    %v1367 = vpow.pop %v1366
    %v1368 = vmul.f32 %v1365, 1.442695
    %v1369 = vpow.pop %v1368
    %v1371 = vsel %vm265, %v1367, 0
    %v1374 = vsel %vm265, %v1369, 0
    %1376 = vmatprep.subr.mxu0 0.0
    %1377 = vmatpush1.msra.mxu0 %v74
    %1378 = vmatprep.subr.mxu0 0.0
    %1379 = vmatpush1.msra.mxu0 %v75
    %1380 = vmatprep.subr.mxu0 0.0
    %1381 = vmatpush1.msra.mxu0 0.0
    %1382 = vmatprep.subr.mxu0 0.0
    %1383 = vmatpush1.msra.mxu0 0.0
    %1384 = vmatprep.subr.mxu0 0.0
    %1385 = vmatpush1.msra.mxu0 0.0
    %1386 = vmatprep.subr.mxu0 0.0
    %1387 = vmatpush1.msra.mxu0 0.0
    %1388 = vmatprep.subr.mxu0 0.0
    %1389 = vmatpush1.msra.mxu0 0.0
    %1390 = vmatprep.subr.mxu0 0.0
    %1391 = vmatpush1.msra.mxu0 0.0
    %1392 = vmatprep.subr.mxu0 0.0
    %1393 = vmatpush1.msra.mxu0 0.0
    %1394 = vmatprep.subr.mxu0 0.0
    %1395 = vmatpush1.msra.mxu0 0.0
    %1396 = vmatprep.subr.mxu0 0.0
    %1397 = vmatpush1.msra.mxu0 0.0
    %1398 = vmatprep.subr.mxu0 0.0
    %1399 = vmatpush1.msra.mxu0 0.0
    %1400 = vmatprep.subr.mxu0 0.0
    %1401 = vmatpush1.msra.mxu0 0.0
    %1402 = vmatprep.subr.mxu0 0.0
    %1403 = vmatpush1.msra.mxu0 0.0
    %1404 = vmatprep.subr.mxu0 0.0
    %1405 = vmatpush1.msra.mxu0 0.0
    %1406 = vmatprep.subr.mxu0 0.0
    %1407 = vmatpush1.msra.mxu0 0.0
    %1408 = vmatprep.subr.mxu0 0.0
    %1409 = vmatpush1.msra.mxu0 0.0
    %1410 = vmatprep.subr.mxu0 0.0
    %1411 = vmatpush1.msra.mxu0 0.0
    %1412 = vmatprep.subr.mxu0 0.0
    %1413 = vmatpush1.msra.mxu0 0.0
    %1414 = vmatprep.subr.mxu0 0.0
    %1415 = vmatpush1.msra.mxu0 0.0
    %1416 = vmatprep.subr.mxu0 0.0
    %1417 = vmatpush1.msra.mxu0 0.0
    %1418 = vmatprep.subr.mxu0 0.0
    %1419 = vmatpush1.msra.mxu0 0.0
    %1420 = vmatprep.subr.mxu0 0.0
    %1421 = vmatpush1.msra.mxu0 0.0
    %1422 = vmatprep.subr.mxu0 0.0
    %1423 = vmatpush1.msra.mxu0 0.0
    %1424 = vmatprep.subr.mxu0 0.0
    %1425 = vmatpush1.msra.mxu0 0.0
    %1426 = vmatprep.subr.mxu0 0.0
    %1427 = vmatpush1.msra.mxu0 0.0
    %1428 = vmatprep.subr.mxu0 0.0
    %1429 = vmatpush1.msra.mxu0 0.0
    %1430 = vmatprep.subr.mxu0 0.0
    %1431 = vmatpush1.msra.mxu0 0.0
    %1432 = vmatprep.subr.mxu0 0.0
    %1433 = vmatpush1.msra.mxu0 0.0
    %1434 = vmatprep.subr.mxu0 0.0
    %1435 = vmatpush1.msra.mxu0 0.0
    %1436 = vmatprep.subr.mxu0 0.0
    %1437 = vmatpush1.msra.mxu0 0.0
    %1438 = vmatprep.subr.mxu0 0.0
    %1439 = vmatpush1.msra.mxu0 0.0
    %1440 = vmatprep.mubr.f32.mxu0 0.0
    %1441 = vmatmul.mubr.f32.gmra.mrb[0].mxu0 %v1371
    %v1442 = vpop.f32.mrb[0].mxu0
    %v1443 = vadd.f32 0.0, %v1442
    %v1444 = vpop.f32.mrb[0].mxu0
    %1445 = vmatprep.mubr.f32.mxu0 0.0
    %1446 = vmatmul.mubr.f32.gmra.mrb[0].mxu0 %v1374
    %v1447 = vpop.f32.mrb[0].mxu0
    %v1448 = vadd.f32 0.0, %v1447
    %v1449 = vpop.f32.mrb[0].mxu0
    %1450 = vdwg.mxu0
    %v1451 = vrcp.pop %v1443
    %v1452 = vmul.f32 %v1367, %v1451
    %v1453 = vrcp.pop %v1448
    %v1454 = vmul.f32 %v1369, %v1453
    %v1455 = vsel %vm265, %v1275, -inf
    %1456 = vmax.xlane.f32.xlu0 %v1455
    %v1457 = vpop.xlane.xlu0 %1456
    %v1458 = vsel %vm265, %v1280, -inf
    %1459 = vmax.xlane.f32.xlu0 %v1458
    %v1460 = vpop.xlane.xlu0 %1459
    %v1461 = vsub.f32 %v1275, %v1457
    %v1462 = vsub.f32 %v1280, %v1460
    %v1463 = vmul.f32 %v1461, 1.442695
    %v1464 = vpow.pop %v1463
    %v1465 = vmul.f32 %v1462, 1.442695
    %v1466 = vpow.pop %v1465
    %v1467 = vsel %vm265, %v1464, 0.0
    %1468 = vadd.xlane.f32.xlu0 %v1467
    %v1469 = vpop.xlane.xlu0 %1468
    %v1470 = vsel %vm265, %v1466, 0.0
    %1471 = vadd.xlane.f32.xlu0 %v1470
    %v1472 = vpop.xlane.xlu0 %1471
    %v1473 = vrcp.pop %v1469
    %v1474 = vmul.f32 %v1464, %v1473
    %v1475 = vrcp.pop %v1472
    %v1476 = vmul.f32 %v1466, %v1475
    %v1477 = vsel %vm489, %v748, -inf
    %1478 = vmax.xlane.f32.xlu0 %v1477
    %v1479 = vpop.xlane.xlu0 %1478
    %v1480 = vsel %vm489, %v753, -inf
    %1481 = vmax.xlane.f32.xlu0 %v1480
    %v1482 = vpop.xlane.xlu0 %1481
    %v1483 = vsel %vm489, %v1350, -inf
    %1484 = vmax.xlane.f32.xlu0 %v1483
    %v1485 = vpop.xlane.xlu0 %1484
    %v1486 = vsel %vm489, %v1355, -inf
    %1487 = vmax.xlane.f32.xlu0 %v1486
    %v1488 = vpop.xlane.xlu0 %1487
    %v1489 = vsub.f32 %v748, %v1479
    %v1490 = vsub.f32 %v753, %v1482
    %v1491 = vsub.f32 %v1350, %v1485
    %v1492 = vsub.f32 %v1355, %v1488
    %v1493 = vmul.f32 %v1489, 1.442695
    %v1494 = vpow.pop %v1493
    %v1495 = vmul.f32 %v1490, 1.442695
    %v1496 = vpow.pop %v1495
    %v1497 = vmul.f32 %v1491, 1.442695
    %v1498 = vpow.pop %v1497
    %v1499 = vmul.f32 %v1492, 1.442695
    %v1500 = vpow.pop %v1499
    %v1501 = vsel %vm489, %v1494, 0.0
    %1502 = vadd.xlane.f32.xlu0 %v1501
    %v1503 = vpop.xlane.xlu0 %1502
    %v1504 = vsel %vm489, %v1496, 0.0
    %1505 = vadd.xlane.f32.xlu0 %v1504
    %v1506 = vpop.xlane.xlu0 %1505
    %v1507 = vsel %vm489, %v1498, 0.0
    %1508 = vadd.xlane.f32.xlu0 %v1507
    %v1509 = vpop.xlane.xlu0 %1508
    %v1510 = vsel %vm489, %v1500, 0.0
    %1511 = vadd.xlane.f32.xlu0 %v1510
    %v1512 = vpop.xlane.xlu0 %1511
    %v1513 = vrcp.pop %v1503
    %v1514 = vmul.f32 %v1494, %v1513
    %v1515 = vrcp.pop %v1506
    %v1516 = vmul.f32 %v1496, %v1515
    %v1517 = vrcp.pop %v1509
    %v1518 = vmul.f32 %v1498, %v1517
    %v1519 = vrcp.pop %v1512
    %v1520 = vmul.f32 %v1500, %v1519
    %1525 = vrot.lane.b32.xlu0 %v1514, 4
    %v1526 = vpop.permute.xlu0 %1525
    %1527 = vrot.lane.b32.xlu0 %v1516, 4
    %v1528 = vpop.permute.xlu0 %1527
    %1529 = vrot.lane.b32.xlu0 %v1518, 4
    %v1530 = vpop.permute.xlu0 %1529
    %1531 = vrot.lane.b32.xlu0 %v1520, 4
    %v1532 = vpop.permute.xlu0 %1531
    %1537 = vrot.lane.b32.xlu0 %v1514, 8
    %v1538 = vpop.permute.xlu0 %1537
    %1539 = vrot.lane.b32.xlu0 %v1516, 8
    %v1540 = vpop.permute.xlu0 %1539
    %1541 = vrot.lane.b32.xlu0 %v1518, 8
    %v1542 = vpop.permute.xlu0 %1541
    %1543 = vrot.lane.b32.xlu0 %v1520, 8
    %v1544 = vpop.permute.xlu0 %1543
    %1549 = vrot.lane.b32.xlu0 %v1514, 12
    %v1550 = vpop.permute.xlu0 %1549
    %1551 = vrot.lane.b32.xlu0 %v1516, 12
    %v1552 = vpop.permute.xlu0 %1551
    %1553 = vrot.lane.b32.xlu0 %v1518, 12
    %v1554 = vpop.permute.xlu0 %1553
    %1555 = vrot.lane.b32.xlu0 %v1520, 12
    %v1556 = vpop.permute.xlu0 %1555
    %1561 = vrot.lane.b32.xlu0 %v1514, 16
    %v1562 = vpop.permute.xlu0 %1561
    %1563 = vrot.lane.b32.xlu0 %v1516, 16
    %v1564 = vpop.permute.xlu0 %1563
    %1565 = vrot.lane.b32.xlu0 %v1518, 16
    %v1566 = vpop.permute.xlu0 %1565
    %1567 = vrot.lane.b32.xlu0 %v1520, 16
    %v1568 = vpop.permute.xlu0 %1567
    %1573 = vrot.lane.b32.xlu0 %v1514, 20
    %v1574 = vpop.permute.xlu0 %1573
    %1575 = vrot.lane.b32.xlu0 %v1516, 20
    %v1576 = vpop.permute.xlu0 %1575
    %1577 = vrot.lane.b32.xlu0 %v1518, 20
    %v1578 = vpop.permute.xlu0 %1577
    %1579 = vrot.lane.b32.xlu0 %v1520, 20
    %v1580 = vpop.permute.xlu0 %1579
    %1585 = vrot.lane.b32.xlu0 %v1514, 24
    %v1586 = vpop.permute.xlu0 %1585
    %1587 = vrot.lane.b32.xlu0 %v1516, 24
    %v1588 = vpop.permute.xlu0 %1587
    %1589 = vrot.lane.b32.xlu0 %v1518, 24
    %v1590 = vpop.permute.xlu0 %1589
    %1591 = vrot.lane.b32.xlu0 %v1520, 24
    %v1592 = vpop.permute.xlu0 %1591
    %1597 = vrot.lane.b32.xlu0 %v1514, 28
    %v1598 = vpop.permute.xlu0 %1597
    %1599 = vrot.lane.b32.xlu0 %v1516, 28
    %v1600 = vpop.permute.xlu0 %1599
    %1601 = vrot.lane.b32.xlu0 %v1518, 28
    %v1602 = vpop.permute.xlu0 %1601
    %1603 = vrot.lane.b32.xlu0 %v1520, 28
    %v1604 = vpop.permute.xlu0 %1603
    %v1609 = vsel %vm489, %v1514, %v1526
    %v1610 = vsel %vm489, %v1516, %v1528
    %v1611 = vsel %vm489, %v1518, %v1530
    %v1612 = vsel %vm489, %v1520, %v1532
    %v1613 = vsel %vm494, %v1609, %v1538
    %v1614 = vsel %vm494, %v1610, %v1540
    %v1615 = vsel %vm494, %v1611, %v1542
    %v1616 = vsel %vm494, %v1612, %v1544
    %v1617 = vsel %vm499, %v1613, %v1550
    %v1618 = vsel %vm499, %v1614, %v1552
    %v1619 = vsel %vm499, %v1615, %v1554
    %v1620 = vsel %vm499, %v1616, %v1556
    %v1621 = vsel %vm265, %v1617, %v1562
    %v1622 = vsel %vm265, %v1618, %v1564
    %v1623 = vsel %vm265, %v1619, %v1566
    %v1624 = vsel %vm265, %v1620, %v1568
    %vm1625 = vcmask 162816
    %v1626 = vsel %vm1625, %v1621, %v1574
    %v1627 = vsel %vm1625, %v1622, %v1576
    %v1628 = vsel %vm1625, %v1623, %v1578
    %v1629 = vsel %vm1625, %v1624, %v1580
    %vm1630 = vcmask 195584
    %v1631 = vsel %vm1630, %v1626, %v1586
    %v1632 = vsel %vm1630, %v1627, %v1588
    %v1633 = vsel %vm1630, %v1628, %v1590
    %v1634 = vsel %vm1630, %v1629, %v1592
    %vm1635 = vcmask 228352
    %v1636 = vsel %vm1635, %v1631, %v1598
    %v1637 = vsel %vm1635, %v1632, %v1600
    %v1638 = vsel %vm1635, %v1633, %v1602
    %v1639 = vsel %vm1635, %v1634, %v1604
    %v1640 = vmul.f32 %v1636, %v76
    %v1641 = vmul.f32 %v1637, %v77
    %v1642 = vmul.f32 %v1638, %v78
    %v1643 = vmul.f32 %v1639, %v79
    %v1644 = vand.u32 2147483647, %v1640
    %v1645 = vand.u32 2147483647, %v1641
    %v1646 = vand.u32 2147483647, %v1642
    %v1647 = vand.u32 2147483647, %v1643
    %v1648 = vsel %vm86, %v1644, 0.0
    %1649 = vadd.xlane.f32.xlu0 %v1648
    %v1650 = vpop.xlane.xlu0 %1649
    %v1651 = vsel %vm86, %v1645, 0.0
    %1652 = vadd.xlane.f32.xlu0 %v1651
    %v1653 = vpop.xlane.xlu0 %1652
    %v1654 = vsel %vm86, %v1646, 0.0
    %1655 = vadd.xlane.f32.xlu0 %v1654
    %v1656 = vpop.xlane.xlu0 %1655
    %v1657 = vsel %vm86, %v1647, 0.0
    %1658 = vadd.xlane.f32.xlu0 %v1657
    %v1659 = vpop.xlane.xlu0 %1658
    %v1660 = vadd.f32 %v1648, %v1651
    %v1661 = vadd.f32 %v1660, %v1654
    %v1662 = vadd.f32 %v1661, %v1657
    %v1663 = vrot.slane %v1662, 4
    %v1664 = vadd.f32 %v1662, %v1663
    %v1665 = vrot.slane %v1664, 2
    %v1666 = vadd.f32 %v1664, %v1665
    %v1667 = vrot.slane %v1666, 1
    %v1668 = vadd.f32 %v1666, %v1667
    %v1669 = vmax.f32 %v1650, %v1653
    %v1670 = vmax.f32 %v1656, %v1659
    %v1671 = vmax.f32 %v1669, %v1670
    %v1672 = vrot.slane %v1671, 4
    %v1673 = vmax.f32 %v1671, %v1672
    %v1674 = vrot.slane %v1673, 2
    %v1675 = vmax.f32 %v1673, %v1674
    %v1676 = vrot.slane %v1675, 1
    %v1677 = vmax.f32 %v1675, %v1676
    %s1678 = vtos %v1677
    %v1679 = vstv %s1678
    %v1680 = vsel %vm86, %v1668, -inf
    %1681 = vmax.xlane.f32.xlu0 %v1680
    %v1682 = vpop.xlane.xlu0 %1681
    %s1683 = vtos %v1682
    %v1684 = vstv %s1683
    %v1685 = vmul.f32 %v1679, %v1684
    %1686 = vxpose.xlu0.b32.start [1/16] %v1640, 128
    %1687 = vxpose.xlu0.b32.cont [2/16] %v1641, 128
    %1688 = vxpose.xlu0.b32.cont [3/16] %v1642, 128
    %1689 = vxpose.xlu0.b32.cont [4/16] %v1643, 128
    %1690 = vxpose.xlu0.b32.cont [5/16] 0.0, 128
    %1691 = vxpose.xlu0.b32.cont [6/16] 0.0, 128
    %1692 = vxpose.xlu0.b32.cont [7/16] 0.0, 128
    %1693 = vxpose.xlu0.b32.cont [8/16] 0.0, 128
    %1694 = vxpose.xlu0.b32.cont [9/16] 0.0, 128
    %1695 = vxpose.xlu0.b32.cont [10/16] 0.0, 128
    %1696 = vxpose.xlu0.b32.cont [11/16] 0.0, 128
    %1697 = vxpose.xlu0.b32.cont [12/16] 0.0, 128
    %1698 = vxpose.xlu0.b32.cont [13/16] 0.0, 128
    %1699 = vxpose.xlu0.b32.cont [14/16] 0.0, 128
    %1700 = vxpose.xlu0.b32.cont [15/16] 0.0, 128
    %1701 = vxpose.xlu0.b32.end [16/16] 0.0, 128
    %v1702 = vpop.trf.xlu0
    %v1703 = vpop.trf.xlu0
    %v1704 = vpop.trf.xlu0
    %v1705 = vpop.trf.xlu0
    %v1706 = vpop.trf.xlu0
    %v1707 = vpop.trf.xlu0
    %v1708 = vpop.trf.xlu0
    %v1709 = vpop.trf.xlu0
    %v1710 = vpop.trf.xlu0
    %v1711 = vpop.trf.xlu0
    %v1712 = vpop.trf.xlu0
    %v1713 = vpop.trf.xlu0
    %v1714 = vpop.trf.xlu0
    %v1715 = vpop.trf.xlu0
    %v1716 = vpop.trf.xlu0
    %v1717 = vpop.trf.xlu0
    %v1718 = vrcp.pop %v1685
    %v1719 = vmul.f32 %v1702, %v1718
    %v1720 = vmul.f32 %v1703, %v1718
    %v1721 = vmul.f32 %v1704, %v1718
    %v1722 = vmul.f32 %v1705, %v1718
    %v1724 = vsel %vm86, %v1640, 0
    %v1727 = vsel %vm86, %v1641, 0
    %v1730 = vsel %vm86, %v1642, 0
    %v1733 = vsel %vm86, %v1643, 0
    %1735 = vmatprep.subr.mxu0 0.0
    %1736 = vmatpush1.msra.mxu0 %v1719
    %1737 = vmatprep.subr.mxu0 0.0
    %1738 = vmatpush1.msra.mxu0 %v1720
    %1739 = vmatprep.subr.mxu0 0.0
    %1740 = vmatpush1.msra.mxu0 %v1721
    %1741 = vmatprep.subr.mxu0 0.0
    %1742 = vmatpush1.msra.mxu0 %v1722
    %1743 = vmatprep.subr.mxu0 0.0
    %1744 = vmatpush1.msra.mxu0 0.0
    %1745 = vmatprep.subr.mxu0 0.0
    %1746 = vmatpush1.msra.mxu0 0.0
    %1747 = vmatprep.subr.mxu0 0.0
    %1748 = vmatpush1.msra.mxu0 0.0
    %1749 = vmatprep.subr.mxu0 0.0
    %1750 = vmatpush1.msra.mxu0 0.0
    %1751 = vmatprep.subr.mxu0 0.0
    %1752 = vmatpush1.msra.mxu0 0.0
    %1753 = vmatprep.subr.mxu0 0.0
    %1754 = vmatpush1.msra.mxu0 0.0
    %1755 = vmatprep.subr.mxu0 0.0
    %1756 = vmatpush1.msra.mxu0 0.0
    %1757 = vmatprep.subr.mxu0 0.0
    %1758 = vmatpush1.msra.mxu0 0.0
    %1759 = vmatprep.subr.mxu0 0.0
    %1760 = vmatpush1.msra.mxu0 0.0
    %1761 = vmatprep.subr.mxu0 0.0
    %1762 = vmatpush1.msra.mxu0 0.0
    %1763 = vmatprep.subr.mxu0 0.0
    %1764 = vmatpush1.msra.mxu0 0.0
    %1765 = vmatprep.subr.mxu0 0.0
    %1766 = vmatpush1.msra.mxu0 0.0
    %1767 = vmatprep.subr.mxu0 0.0
    %1768 = vmatpush1.msra.mxu0 0.0
    %1769 = vmatprep.subr.mxu0 0.0
    %1770 = vmatpush1.msra.mxu0 0.0
    %1771 = vmatprep.subr.mxu0 0.0
    %1772 = vmatpush1.msra.mxu0 0.0
    %1773 = vmatprep.subr.mxu0 0.0
    %1774 = vmatpush1.msra.mxu0 0.0
    %1775 = vmatprep.subr.mxu0 0.0
    %1776 = vmatpush1.msra.mxu0 0.0
    %1777 = vmatprep.subr.mxu0 0.0
    %1778 = vmatpush1.msra.mxu0 0.0
    %1779 = vmatprep.subr.mxu0 0.0
    %1780 = vmatpush1.msra.mxu0 0.0
    %1781 = vmatprep.subr.mxu0 0.0
    %1782 = vmatpush1.msra.mxu0 0.0
    %1783 = vmatprep.subr.mxu0 0.0
    %1784 = vmatpush1.msra.mxu0 0.0
    %1785 = vmatprep.subr.mxu0 0.0
    %1786 = vmatpush1.msra.mxu0 0.0
    %1787 = vmatprep.subr.mxu0 0.0
    %1788 = vmatpush1.msra.mxu0 0.0
    %1789 = vmatprep.subr.mxu0 0.0
    %1790 = vmatpush1.msra.mxu0 0.0
    %1791 = vmatprep.subr.mxu0 0.0
    %1792 = vmatpush1.msra.mxu0 0.0
    %1793 = vmatprep.subr.mxu0 0.0
    %1794 = vmatpush1.msra.mxu0 0.0
    %1795 = vmatprep.subr.mxu0 0.0
    %1796 = vmatpush1.msra.mxu0 0.0
    %1797 = vmatprep.subr.mxu0 0.0
    %1798 = vmatpush1.msra.mxu0 0.0
    %1799 = vmatprep.mubr.f32.mxu0 0.0
    %1800 = vmatmul.mubr.f32.gmra.mrb[0].mxu0 %v1724
    %v1801 = vpop.f32.mrb[0].mxu0
    %v1802 = vadd.f32 0.0, %v1801
    %v1803 = vpop.f32.mrb[0].mxu0
    %1804 = vmatprep.mubr.f32.mxu0 0.0
    %1805 = vmatmul.mubr.f32.gmra.mrb[0].mxu0 %v1727
    %v1806 = vpop.f32.mrb[0].mxu0
    %v1807 = vadd.f32 0.0, %v1806
    %v1808 = vpop.f32.mrb[0].mxu0
    %1809 = vmatprep.mubr.f32.mxu0 0.0
    %1810 = vmatmul.mubr.f32.gmra.mrb[0].mxu0 %v1730
    %v1811 = vpop.f32.mrb[0].mxu0
    %v1812 = vadd.f32 0.0, %v1811
    %v1813 = vpop.f32.mrb[0].mxu0
    %1814 = vmatprep.mubr.f32.mxu0 0.0
    %1815 = vmatmul.mubr.f32.gmra.mrb[0].mxu0 %v1733
    %v1816 = vpop.f32.mrb[0].mxu0
    %v1817 = vadd.f32 0.0, %v1816
    %v1818 = vpop.f32.mrb[0].mxu0
    %1819 = vdwg.mxu0
    %v1820 = vmul.f32 %v80, 7.0
    %v1821 = vmul.f32 %v81, 7.0
    %v1822 = vmul.f32 %v82, 7.0
    %v1823 = vmul.f32 %v83, 7.0
    %v1824 = vsub.f32 %v1820, %v1802
    %v1825 = vsub.f32 %v1821, %v1807
    %v1826 = vsub.f32 %v1822, %v1812
    %v1827 = vsub.f32 %v1823, %v1817
    %v1828 = vmul.f32 %v80, 15.0
    %v1829 = vmul.f32 %v81, 15.0
    %v1830 = vmul.f32 %v82, 15.0
    %v1831 = vmul.f32 %v83, 15.0
    %v1833 = vsel %vm86, %v1802, 0
    %v1836 = vsel %vm86, %v1807, 0
    %v1839 = vsel %vm86, %v1812, 0
    %v1842 = vsel %vm86, %v1817, 0
    %1844 = vmatprep.subr.mxu0 0.0
    %1845 = vmatpush1.msra.mxu0 %v1824
    %1846 = vmatprep.subr.mxu0 0.0
    %1847 = vmatpush1.msra.mxu0 %v1825
    %1848 = vmatprep.subr.mxu0 0.0
    %1849 = vmatpush1.msra.mxu0 %v1826
    %1850 = vmatprep.subr.mxu0 0.0
    %1851 = vmatpush1.msra.mxu0 %v1827
    %1852 = vmatprep.subr.mxu0 0.0
    %1853 = vmatpush1.msra.mxu0 0.0
    %1854 = vmatprep.subr.mxu0 0.0
    %1855 = vmatpush1.msra.mxu0 0.0
    %1856 = vmatprep.subr.mxu0 0.0
    %1857 = vmatpush1.msra.mxu0 0.0
    %1858 = vmatprep.subr.mxu0 0.0
    %1859 = vmatpush1.msra.mxu0 0.0
    %1860 = vmatprep.subr.mxu0 0.0
    %1861 = vmatpush1.msra.mxu0 0.0
    %1862 = vmatprep.subr.mxu0 0.0
    %1863 = vmatpush1.msra.mxu0 0.0
    %1864 = vmatprep.subr.mxu0 0.0
    %1865 = vmatpush1.msra.mxu0 0.0
    %1866 = vmatprep.subr.mxu0 0.0
    %1867 = vmatpush1.msra.mxu0 0.0
    %1868 = vmatprep.subr.mxu0 0.0
    %1869 = vmatpush1.msra.mxu0 0.0
    %1870 = vmatprep.subr.mxu0 0.0
    %1871 = vmatpush1.msra.mxu0 0.0
    %1872 = vmatprep.subr.mxu0 0.0
    %1873 = vmatpush1.msra.mxu0 0.0
    %1874 = vmatprep.subr.mxu0 0.0
    %1875 = vmatpush1.msra.mxu0 0.0
    %1876 = vmatprep.subr.mxu0 0.0
    %1877 = vmatpush1.msra.mxu0 0.0
    %1878 = vmatprep.subr.mxu0 0.0
    %1879 = vmatpush1.msra.mxu0 0.0
    %1880 = vmatprep.subr.mxu0 0.0
    %1881 = vmatpush1.msra.mxu0 0.0
    %1882 = vmatprep.subr.mxu0 0.0
    %1883 = vmatpush1.msra.mxu0 0.0
    %1884 = vmatprep.subr.mxu0 0.0
    %1885 = vmatpush1.msra.mxu0 0.0
    %1886 = vmatprep.subr.mxu0 0.0
    %1887 = vmatpush1.msra.mxu0 0.0
    %1888 = vmatprep.subr.mxu0 0.0
    %1889 = vmatpush1.msra.mxu0 0.0
    %1890 = vmatprep.subr.mxu0 0.0
    %1891 = vmatpush1.msra.mxu0 0.0
    %1892 = vmatprep.subr.mxu0 0.0
    %1893 = vmatpush1.msra.mxu0 0.0
    %1894 = vmatprep.subr.mxu0 0.0
    %1895 = vmatpush1.msra.mxu0 0.0
    %1896 = vmatprep.subr.mxu0 0.0
    %1897 = vmatpush1.msra.mxu0 0.0
    %1898 = vmatprep.subr.mxu0 0.0
    %1899 = vmatpush1.msra.mxu0 0.0
    %1900 = vmatprep.subr.mxu0 0.0
    %1901 = vmatpush1.msra.mxu0 0.0
    %1902 = vmatprep.subr.mxu0 0.0
    %1903 = vmatpush1.msra.mxu0 0.0
    %1904 = vmatprep.subr.mxu0 0.0
    %1905 = vmatpush1.msra.mxu0 0.0
    %1906 = vmatprep.subr.mxu0 0.0
    %1907 = vmatpush1.msra.mxu0 0.0
    %1908 = vmatprep.mubr.f32.mxu0 0.0
    %1909 = vmatmul.mubr.f32.gmra.mrb[0].mxu0 %v1833
    %v1910 = vpop.f32.mrb[0].mxu0
    %v1911 = vadd.f32 0.0, %v1910
    %v1912 = vpop.f32.mrb[0].mxu0
    %1913 = vmatprep.mubr.f32.mxu0 0.0
    %1914 = vmatmul.mubr.f32.gmra.mrb[0].mxu0 %v1836
    %v1915 = vpop.f32.mrb[0].mxu0
    %v1916 = vadd.f32 0.0, %v1915
    %v1917 = vpop.f32.mrb[0].mxu0
    %1918 = vmatprep.mubr.f32.mxu0 0.0
    %1919 = vmatmul.mubr.f32.gmra.mrb[0].mxu0 %v1839
    %v1920 = vpop.f32.mrb[0].mxu0
    %v1921 = vadd.f32 0.0, %v1920
    %v1922 = vpop.f32.mrb[0].mxu0
    %1923 = vmatprep.mubr.f32.mxu0 0.0
    %1924 = vmatmul.mubr.f32.gmra.mrb[0].mxu0 %v1842
    %v1925 = vpop.f32.mrb[0].mxu0
    %v1926 = vadd.f32 0.0, %v1925
    %v1927 = vpop.f32.mrb[0].mxu0
    %1928 = vdwg.mxu0
    %v1929 = vsub.f32 %v1828, %v1911
    %v1930 = vsub.f32 %v1829, %v1916
    %v1931 = vsub.f32 %v1830, %v1921
    %v1932 = vsub.f32 %v1831, %v1926
    %v1933 = vmul.f32 %v80, 13.0
    %v1934 = vmul.f32 %v81, 13.0
    %v1935 = vmul.f32 %v82, 13.0
    %v1936 = vmul.f32 %v83, 13.0
    %1937 = vmatprep.subr.mxu0 0.0
    %1938 = vmatpush1.msra.mxu0 %v1929
    %1939 = vmatprep.subr.mxu0 0.0
    %1940 = vmatpush1.msra.mxu0 %v1930
    %1941 = vmatprep.subr.mxu0 0.0
    %1942 = vmatpush1.msra.mxu0 %v1931
    %1943 = vmatprep.subr.mxu0 0.0
    %1944 = vmatpush1.msra.mxu0 %v1932
    %1945 = vmatprep.subr.mxu0 0.0
    %1946 = vmatpush1.msra.mxu0 0.0
    %1947 = vmatprep.subr.mxu0 0.0
    %1948 = vmatpush1.msra.mxu0 0.0
    %1949 = vmatprep.subr.mxu0 0.0
    %1950 = vmatpush1.msra.mxu0 0.0
    %1951 = vmatprep.subr.mxu0 0.0
    %1952 = vmatpush1.msra.mxu0 0.0
    %1953 = vmatprep.subr.mxu0 0.0
    %1954 = vmatpush1.msra.mxu0 0.0
    %1955 = vmatprep.subr.mxu0 0.0
    %1956 = vmatpush1.msra.mxu0 0.0
    %1957 = vmatprep.subr.mxu0 0.0
    %1958 = vmatpush1.msra.mxu0 0.0
    %1959 = vmatprep.subr.mxu0 0.0
    %1960 = vmatpush1.msra.mxu0 0.0
    %1961 = vmatprep.subr.mxu0 0.0
    %1962 = vmatpush1.msra.mxu0 0.0
    %1963 = vmatprep.subr.mxu0 0.0
    %1964 = vmatpush1.msra.mxu0 0.0
    %1965 = vmatprep.subr.mxu0 0.0
    %1966 = vmatpush1.msra.mxu0 0.0
    %1967 = vmatprep.subr.mxu0 0.0
    %1968 = vmatpush1.msra.mxu0 0.0
    %1969 = vmatprep.subr.mxu0 0.0
    %1970 = vmatpush1.msra.mxu0 0.0
    %1971 = vmatprep.subr.mxu0 0.0
    %1972 = vmatpush1.msra.mxu0 0.0
    %1973 = vmatprep.subr.mxu0 0.0
    %1974 = vmatpush1.msra.mxu0 0.0
    %1975 = vmatprep.subr.mxu0 0.0
    %1976 = vmatpush1.msra.mxu0 0.0
    %1977 = vmatprep.subr.mxu0 0.0
    %1978 = vmatpush1.msra.mxu0 0.0
    %1979 = vmatprep.subr.mxu0 0.0
    %1980 = vmatpush1.msra.mxu0 0.0
    %1981 = vmatprep.subr.mxu0 0.0
    %1982 = vmatpush1.msra.mxu0 0.0
    %1983 = vmatprep.subr.mxu0 0.0
    %1984 = vmatpush1.msra.mxu0 0.0
    %1985 = vmatprep.subr.mxu0 0.0
    %1986 = vmatpush1.msra.mxu0 0.0
    %1987 = vmatprep.subr.mxu0 0.0
    %1988 = vmatpush1.msra.mxu0 0.0
    %1989 = vmatprep.subr.mxu0 0.0
    %1990 = vmatpush1.msra.mxu0 0.0
    %1991 = vmatprep.subr.mxu0 0.0
    %1992 = vmatpush1.msra.mxu0 0.0
    %1993 = vmatprep.subr.mxu0 0.0
    %1994 = vmatpush1.msra.mxu0 0.0
    %1995 = vmatprep.subr.mxu0 0.0
    %1996 = vmatpush1.msra.mxu0 0.0
    %1997 = vmatprep.subr.mxu0 0.0
    %1998 = vmatpush1.msra.mxu0 0.0
    %1999 = vmatprep.subr.mxu0 0.0
    %2000 = vmatpush1.msra.mxu0 0.0
    %2001 = vmatprep.mubr.f32.mxu0 0.0
    %2002 = vmatmul.mubr.f32.gmra.mrb[0].mxu0 %v1833
    %v2003 = vpop.f32.mrb[0].mxu0
    %v2004 = vadd.f32 0.0, %v2003
    %v2005 = vpop.f32.mrb[0].mxu0
    %2006 = vmatprep.mubr.f32.mxu0 0.0
    %2007 = vmatmul.mubr.f32.gmra.mrb[0].mxu0 %v1836
    %v2008 = vpop.f32.mrb[0].mxu0
    %v2009 = vadd.f32 0.0, %v2008
    %v2010 = vpop.f32.mrb[0].mxu0
    %2011 = vmatprep.mubr.f32.mxu0 0.0
    %2012 = vmatmul.mubr.f32.gmra.mrb[0].mxu0 %v1839
    %v2013 = vpop.f32.mrb[0].mxu0
    %v2014 = vadd.f32 0.0, %v2013
    %v2015 = vpop.f32.mrb[0].mxu0
    %2016 = vmatprep.mubr.f32.mxu0 0.0
    %2017 = vmatmul.mubr.f32.gmra.mrb[0].mxu0 %v1842
    %v2018 = vpop.f32.mrb[0].mxu0
    %v2019 = vadd.f32 0.0, %v2018
    %v2020 = vpop.f32.mrb[0].mxu0
    %2021 = vdwg.mxu0
    %v2022 = vsub.f32 %v1933, %v2004
    %v2023 = vsub.f32 %v1934, %v2009
    %v2024 = vsub.f32 %v1935, %v2014
    %v2025 = vsub.f32 %v1936, %v2019
    %v2027 = vsel %vm86, %v1719, 0
    %v2030 = vsel %vm86, %v1720, 0
    %v2033 = vsel %vm86, %v1721, 0
    %v2036 = vsel %vm86, %v1722, 0
    %2038 = vmatprep.subr.mxu0 0.0
    %2039 = vmatpush1.msra.mxu0 %v2022
    %2040 = vmatprep.subr.mxu0 0.0
    %2041 = vmatpush1.msra.mxu0 %v2023
    %2042 = vmatprep.subr.mxu0 0.0
    %2043 = vmatpush1.msra.mxu0 %v2024
    %2044 = vmatprep.subr.mxu0 0.0
    %2045 = vmatpush1.msra.mxu0 %v2025
    %2046 = vmatprep.subr.mxu0 0.0
    %2047 = vmatpush1.msra.mxu0 0.0
    %2048 = vmatprep.subr.mxu0 0.0
    %2049 = vmatpush1.msra.mxu0 0.0
    %2050 = vmatprep.subr.mxu0 0.0
    %2051 = vmatpush1.msra.mxu0 0.0
    %2052 = vmatprep.subr.mxu0 0.0
    %2053 = vmatpush1.msra.mxu0 0.0
    %2054 = vmatprep.subr.mxu0 0.0
    %2055 = vmatpush1.msra.mxu0 0.0
    %2056 = vmatprep.subr.mxu0 0.0
    %2057 = vmatpush1.msra.mxu0 0.0
    %2058 = vmatprep.subr.mxu0 0.0
    %2059 = vmatpush1.msra.mxu0 0.0
    %2060 = vmatprep.subr.mxu0 0.0
    %2061 = vmatpush1.msra.mxu0 0.0
    %2062 = vmatprep.subr.mxu0 0.0
    %2063 = vmatpush1.msra.mxu0 0.0
    %2064 = vmatprep.subr.mxu0 0.0
    %2065 = vmatpush1.msra.mxu0 0.0
    %2066 = vmatprep.subr.mxu0 0.0
    %2067 = vmatpush1.msra.mxu0 0.0
    %2068 = vmatprep.subr.mxu0 0.0
    %2069 = vmatpush1.msra.mxu0 0.0
    %2070 = vmatprep.subr.mxu0 0.0
    %2071 = vmatpush1.msra.mxu0 0.0
    %2072 = vmatprep.subr.mxu0 0.0
    %2073 = vmatpush1.msra.mxu0 0.0
    %2074 = vmatprep.subr.mxu0 0.0
    %2075 = vmatpush1.msra.mxu0 0.0
    %2076 = vmatprep.subr.mxu0 0.0
    %2077 = vmatpush1.msra.mxu0 0.0
    %2078 = vmatprep.subr.mxu0 0.0
    %2079 = vmatpush1.msra.mxu0 0.0
    %2080 = vmatprep.subr.mxu0 0.0
    %2081 = vmatpush1.msra.mxu0 0.0
    %2082 = vmatprep.subr.mxu0 0.0
    %2083 = vmatpush1.msra.mxu0 0.0
    %2084 = vmatprep.subr.mxu0 0.0
    %2085 = vmatpush1.msra.mxu0 0.0
    %2086 = vmatprep.subr.mxu0 0.0
    %2087 = vmatpush1.msra.mxu0 0.0
    %2088 = vmatprep.subr.mxu0 0.0
    %2089 = vmatpush1.msra.mxu0 0.0
    %2090 = vmatprep.subr.mxu0 0.0
    %2091 = vmatpush1.msra.mxu0 0.0
    %2092 = vmatprep.subr.mxu0 0.0
    %2093 = vmatpush1.msra.mxu0 0.0
    %2094 = vmatprep.subr.mxu0 0.0
    %2095 = vmatpush1.msra.mxu0 0.0
    %2096 = vmatprep.subr.mxu0 0.0
    %2097 = vmatpush1.msra.mxu0 0.0
    %2098 = vmatprep.subr.mxu0 0.0
    %2099 = vmatpush1.msra.mxu0 0.0
    %2100 = vmatprep.subr.mxu0 0.0
    %2101 = vmatpush1.msra.mxu0 0.0
    %2102 = vmatprep.mubr.f32.mxu0 0.0
    %2103 = vmatmul.mubr.f32.gmra.mrb[0].mxu0 %v2027
    %v2104 = vpop.f32.mrb[0].mxu0
    %v2105 = vadd.f32 0.0, %v2104
    %v2106 = vpop.f32.mrb[0].mxu0
    %2107 = vmatprep.mubr.f32.mxu0 0.0
    %2108 = vmatmul.mubr.f32.gmra.mrb[0].mxu0 %v2030
    %v2109 = vpop.f32.mrb[0].mxu0
    %v2110 = vadd.f32 0.0, %v2109
    %v2111 = vpop.f32.mrb[0].mxu0
    %2112 = vmatprep.mubr.f32.mxu0 0.0
    %2113 = vmatmul.mubr.f32.gmra.mrb[0].mxu0 %v2033
    %v2114 = vpop.f32.mrb[0].mxu0
    %v2115 = vadd.f32 0.0, %v2114
    %v2116 = vpop.f32.mrb[0].mxu0
    %2117 = vmatprep.mubr.f32.mxu0 0.0
    %2118 = vmatmul.mubr.f32.gmra.mrb[0].mxu0 %v2036
    %v2119 = vpop.f32.mrb[0].mxu0
    %v2120 = vadd.f32 0.0, %v2119
    %v2121 = vpop.f32.mrb[0].mxu0
    %2122 = vdwg.mxu0
    %v2123 = vmul.f32 %v2105, 0.25
    %v2124 = vmul.f32 %v2110, 0.25
    %v2125 = vmul.f32 %v2115, 0.25
    %v2126 = vmul.f32 %v2120, 0.25
    %2127 = vmatprep.subr.mxu0 0.0
    %2128 = vmatpush1.msra.mxu0 %v2123
    %2129 = vmatprep.subr.mxu0 0.0
    %2130 = vmatpush1.msra.mxu0 %v2124
    %2131 = vmatprep.subr.mxu0 0.0
    %2132 = vmatpush1.msra.mxu0 %v2125
    %2133 = vmatprep.subr.mxu0 0.0
    %2134 = vmatpush1.msra.mxu0 %v2126
    %2135 = vmatprep.subr.mxu0 0.0
    %2136 = vmatpush1.msra.mxu0 0.0
    %2137 = vmatprep.subr.mxu0 0.0
    %2138 = vmatpush1.msra.mxu0 0.0
    %2139 = vmatprep.subr.mxu0 0.0
    %2140 = vmatpush1.msra.mxu0 0.0
    %2141 = vmatprep.subr.mxu0 0.0
    %2142 = vmatpush1.msra.mxu0 0.0
    %2143 = vmatprep.subr.mxu0 0.0
    %2144 = vmatpush1.msra.mxu0 0.0
    %2145 = vmatprep.subr.mxu0 0.0
    %2146 = vmatpush1.msra.mxu0 0.0
    %2147 = vmatprep.subr.mxu0 0.0
    %2148 = vmatpush1.msra.mxu0 0.0
    %2149 = vmatprep.subr.mxu0 0.0
    %2150 = vmatpush1.msra.mxu0 0.0
    %2151 = vmatprep.subr.mxu0 0.0
    %2152 = vmatpush1.msra.mxu0 0.0
    %2153 = vmatprep.subr.mxu0 0.0
    %2154 = vmatpush1.msra.mxu0 0.0
    %2155 = vmatprep.subr.mxu0 0.0
    %2156 = vmatpush1.msra.mxu0 0.0
    %2157 = vmatprep.subr.mxu0 0.0
    %2158 = vmatpush1.msra.mxu0 0.0
    %2159 = vmatprep.subr.mxu0 0.0
    %2160 = vmatpush1.msra.mxu0 0.0
    %2161 = vmatprep.subr.mxu0 0.0
    %2162 = vmatpush1.msra.mxu0 0.0
    %2163 = vmatprep.subr.mxu0 0.0
    %2164 = vmatpush1.msra.mxu0 0.0
    %2165 = vmatprep.subr.mxu0 0.0
    %2166 = vmatpush1.msra.mxu0 0.0
    %2167 = vmatprep.subr.mxu0 0.0
    %2168 = vmatpush1.msra.mxu0 0.0
    %2169 = vmatprep.subr.mxu0 0.0
    %2170 = vmatpush1.msra.mxu0 0.0
    %2171 = vmatprep.subr.mxu0 0.0
    %2172 = vmatpush1.msra.mxu0 0.0
    %2173 = vmatprep.subr.mxu0 0.0
    %2174 = vmatpush1.msra.mxu0 0.0
    %2175 = vmatprep.subr.mxu0 0.0
    %2176 = vmatpush1.msra.mxu0 0.0
    %2177 = vmatprep.subr.mxu0 0.0
    %2178 = vmatpush1.msra.mxu0 0.0
    %2179 = vmatprep.subr.mxu0 0.0
    %2180 = vmatpush1.msra.mxu0 0.0
    %2181 = vmatprep.subr.mxu0 0.0
    %2182 = vmatpush1.msra.mxu0 0.0
    %2183 = vmatprep.subr.mxu0 0.0
    %2184 = vmatpush1.msra.mxu0 0.0
    %2185 = vmatprep.subr.mxu0 0.0
    %2186 = vmatpush1.msra.mxu0 0.0
    %2187 = vmatprep.subr.mxu0 0.0
    %2188 = vmatpush1.msra.mxu0 0.0
    %2189 = vmatprep.subr.mxu0 0.0
    %2190 = vmatpush1.msra.mxu0 0.0
    %2191 = vmatprep.mubr.f32.mxu0 0.0
    %2192 = vmatmul.mubr.f32.gmra.mrb[0].mxu0 %v1724
    %v2193 = vpop.f32.mrb[0].mxu0
    %v2194 = vadd.f32 0.0, %v2193
    %v2195 = vpop.f32.mrb[0].mxu0
    %2196 = vmatprep.mubr.f32.mxu0 0.0
    %2197 = vmatmul.mubr.f32.gmra.mrb[0].mxu0 %v1727
    %v2198 = vpop.f32.mrb[0].mxu0
    %v2199 = vadd.f32 0.0, %v2198
    %v2200 = vpop.f32.mrb[0].mxu0
    %2201 = vmatprep.mubr.f32.mxu0 0.0
    %2202 = vmatmul.mubr.f32.gmra.mrb[0].mxu0 %v1730
    %v2203 = vpop.f32.mrb[0].mxu0
    %v2204 = vadd.f32 0.0, %v2203
    %v2205 = vpop.f32.mrb[0].mxu0
    %2206 = vmatprep.mubr.f32.mxu0 0.0
    %2207 = vmatmul.mubr.f32.gmra.mrb[0].mxu0 %v1733
    %v2208 = vpop.f32.mrb[0].mxu0
    %v2209 = vadd.f32 0.0, %v2208
    %v2210 = vpop.f32.mrb[0].mxu0
    %2211 = vdwg.mxu0
    %v2212 = vsub.f32 %v1820, %v2194
    %v2213 = vsub.f32 %v1821, %v2199
    %v2214 = vsub.f32 %v1822, %v2204
    %v2215 = vsub.f32 %v1823, %v2209
    %v2217 = vsel %vm86, %v2194, 0
    %v2220 = vsel %vm86, %v2199, 0
    %v2223 = vsel %vm86, %v2204, 0
    %v2226 = vsel %vm86, %v2209, 0
    %2228 = vmatprep.subr.mxu0 0.0
    %2229 = vmatpush1.msra.mxu0 %v2212
    %2230 = vmatprep.subr.mxu0 0.0
    %2231 = vmatpush1.msra.mxu0 %v2213
    %2232 = vmatprep.subr.mxu0 0.0
    %2233 = vmatpush1.msra.mxu0 %v2214
    %2234 = vmatprep.subr.mxu0 0.0
    %2235 = vmatpush1.msra.mxu0 %v2215
    %2236 = vmatprep.subr.mxu0 0.0
    %2237 = vmatpush1.msra.mxu0 0.0
    %2238 = vmatprep.subr.mxu0 0.0
    %2239 = vmatpush1.msra.mxu0 0.0
    %2240 = vmatprep.subr.mxu0 0.0
    %2241 = vmatpush1.msra.mxu0 0.0
    %2242 = vmatprep.subr.mxu0 0.0
    %2243 = vmatpush1.msra.mxu0 0.0
    %2244 = vmatprep.subr.mxu0 0.0
    %2245 = vmatpush1.msra.mxu0 0.0
    %2246 = vmatprep.subr.mxu0 0.0
    %2247 = vmatpush1.msra.mxu0 0.0
    %2248 = vmatprep.subr.mxu0 0.0
    %2249 = vmatpush1.msra.mxu0 0.0
    %2250 = vmatprep.subr.mxu0 0.0
    %2251 = vmatpush1.msra.mxu0 0.0
    %2252 = vmatprep.subr.mxu0 0.0
    %2253 = vmatpush1.msra.mxu0 0.0
    %2254 = vmatprep.subr.mxu0 0.0
    %2255 = vmatpush1.msra.mxu0 0.0
    %2256 = vmatprep.subr.mxu0 0.0
    %2257 = vmatpush1.msra.mxu0 0.0
    %2258 = vmatprep.subr.mxu0 0.0
    %2259 = vmatpush1.msra.mxu0 0.0
    %2260 = vmatprep.subr.mxu0 0.0
    %2261 = vmatpush1.msra.mxu0 0.0
    %2262 = vmatprep.subr.mxu0 0.0
    %2263 = vmatpush1.msra.mxu0 0.0
    %2264 = vmatprep.subr.mxu0 0.0
    %2265 = vmatpush1.msra.mxu0 0.0
    %2266 = vmatprep.subr.mxu0 0.0
    %2267 = vmatpush1.msra.mxu0 0.0
    %2268 = vmatprep.subr.mxu0 0.0
    %2269 = vmatpush1.msra.mxu0 0.0
    %2270 = vmatprep.subr.mxu0 0.0
    %2271 = vmatpush1.msra.mxu0 0.0
    %2272 = vmatprep.subr.mxu0 0.0
    %2273 = vmatpush1.msra.mxu0 0.0
    %2274 = vmatprep.subr.mxu0 0.0
    %2275 = vmatpush1.msra.mxu0 0.0
    %2276 = vmatprep.subr.mxu0 0.0
    %2277 = vmatpush1.msra.mxu0 0.0
    %2278 = vmatprep.subr.mxu0 0.0
    %2279 = vmatpush1.msra.mxu0 0.0
    %2280 = vmatprep.subr.mxu0 0.0
    %2281 = vmatpush1.msra.mxu0 0.0
    %2282 = vmatprep.subr.mxu0 0.0
    %2283 = vmatpush1.msra.mxu0 0.0
    %2284 = vmatprep.subr.mxu0 0.0
    %2285 = vmatpush1.msra.mxu0 0.0
    %2286 = vmatprep.subr.mxu0 0.0
    %2287 = vmatpush1.msra.mxu0 0.0
    %2288 = vmatprep.subr.mxu0 0.0
    %2289 = vmatpush1.msra.mxu0 0.0
    %2290 = vmatprep.subr.mxu0 0.0
    %2291 = vmatpush1.msra.mxu0 0.0
    %2292 = vmatprep.mubr.f32.mxu0 0.0
    %2293 = vmatmul.mubr.f32.gmra.mrb[0].mxu0 %v2217
    %v2294 = vpop.f32.mrb[0].mxu0
    %v2295 = vadd.f32 0.0, %v2294
    %v2296 = vpop.f32.mrb[0].mxu0
    %2297 = vmatprep.mubr.f32.mxu0 0.0
    %2298 = vmatmul.mubr.f32.gmra.mrb[0].mxu0 %v2220
    %v2299 = vpop.f32.mrb[0].mxu0
    %v2300 = vadd.f32 0.0, %v2299
    %v2301 = vpop.f32.mrb[0].mxu0
    %2302 = vmatprep.mubr.f32.mxu0 0.0
    %2303 = vmatmul.mubr.f32.gmra.mrb[0].mxu0 %v2223
    %v2304 = vpop.f32.mrb[0].mxu0
    %v2305 = vadd.f32 0.0, %v2304
    %v2306 = vpop.f32.mrb[0].mxu0
    %2307 = vmatprep.mubr.f32.mxu0 0.0
    %2308 = vmatmul.mubr.f32.gmra.mrb[0].mxu0 %v2226
    %v2309 = vpop.f32.mrb[0].mxu0
    %v2310 = vadd.f32 0.0, %v2309
    %v2311 = vpop.f32.mrb[0].mxu0
    %2312 = vdwg.mxu0
    %v2313 = vsub.f32 %v1828, %v2295
    %v2314 = vsub.f32 %v1829, %v2300
    %v2315 = vsub.f32 %v1830, %v2305
    %v2316 = vsub.f32 %v1831, %v2310
    %2317 = vmatprep.subr.mxu0 0.0
    %2318 = vmatpush1.msra.mxu0 %v2313
    %2319 = vmatprep.subr.mxu0 0.0
    %2320 = vmatpush1.msra.mxu0 %v2314
    %2321 = vmatprep.subr.mxu0 0.0
    %2322 = vmatpush1.msra.mxu0 %v2315
    %2323 = vmatprep.subr.mxu0 0.0
    %2324 = vmatpush1.msra.mxu0 %v2316
    %2325 = vmatprep.subr.mxu0 0.0
    %2326 = vmatpush1.msra.mxu0 0.0
    %2327 = vmatprep.subr.mxu0 0.0
    %2328 = vmatpush1.msra.mxu0 0.0
    %2329 = vmatprep.subr.mxu0 0.0
    %2330 = vmatpush1.msra.mxu0 0.0
    %2331 = vmatprep.subr.mxu0 0.0
    %2332 = vmatpush1.msra.mxu0 0.0
    %2333 = vmatprep.subr.mxu0 0.0
    %2334 = vmatpush1.msra.mxu0 0.0
    %2335 = vmatprep.subr.mxu0 0.0
    %2336 = vmatpush1.msra.mxu0 0.0
    %2337 = vmatprep.subr.mxu0 0.0
    %2338 = vmatpush1.msra.mxu0 0.0
    %2339 = vmatprep.subr.mxu0 0.0
    %2340 = vmatpush1.msra.mxu0 0.0
    %2341 = vmatprep.subr.mxu0 0.0
    %2342 = vmatpush1.msra.mxu0 0.0
    %2343 = vmatprep.subr.mxu0 0.0
    %2344 = vmatpush1.msra.mxu0 0.0
    %2345 = vmatprep.subr.mxu0 0.0
    %2346 = vmatpush1.msra.mxu0 0.0
    %2347 = vmatprep.subr.mxu0 0.0
    %2348 = vmatpush1.msra.mxu0 0.0
    %2349 = vmatprep.subr.mxu0 0.0
    %2350 = vmatpush1.msra.mxu0 0.0
    %2351 = vmatprep.subr.mxu0 0.0
    %2352 = vmatpush1.msra.mxu0 0.0
    %2353 = vmatprep.subr.mxu0 0.0
    %2354 = vmatpush1.msra.mxu0 0.0
    %2355 = vmatprep.subr.mxu0 0.0
    %2356 = vmatpush1.msra.mxu0 0.0
    %2357 = vmatprep.subr.mxu0 0.0
    %2358 = vmatpush1.msra.mxu0 0.0
    %2359 = vmatprep.subr.mxu0 0.0
    %2360 = vmatpush1.msra.mxu0 0.0
    %2361 = vmatprep.subr.mxu0 0.0
    %2362 = vmatpush1.msra.mxu0 0.0
    %2363 = vmatprep.subr.mxu0 0.0
    %2364 = vmatpush1.msra.mxu0 0.0
    %2365 = vmatprep.subr.mxu0 0.0
    %2366 = vmatpush1.msra.mxu0 0.0
    %2367 = vmatprep.subr.mxu0 0.0
    %2368 = vmatpush1.msra.mxu0 0.0
    %2369 = vmatprep.subr.mxu0 0.0
    %2370 = vmatpush1.msra.mxu0 0.0
    %2371 = vmatprep.subr.mxu0 0.0
    %2372 = vmatpush1.msra.mxu0 0.0
    %2373 = vmatprep.subr.mxu0 0.0
    %2374 = vmatpush1.msra.mxu0 0.0
    %2375 = vmatprep.subr.mxu0 0.0
    %2376 = vmatpush1.msra.mxu0 0.0
    %2377 = vmatprep.subr.mxu0 0.0
    %2378 = vmatpush1.msra.mxu0 0.0
    %2379 = vmatprep.subr.mxu0 0.0
    %2380 = vmatpush1.msra.mxu0 0.0
    %2381 = vmatprep.mubr.f32.mxu0 0.0
    %2382 = vmatmul.mubr.f32.gmra.mrb[0].mxu0 %v2217
    %v2383 = vpop.f32.mrb[0].mxu0
    %v2384 = vadd.f32 0.0, %v2383
    %v2385 = vpop.f32.mrb[0].mxu0
    %2386 = vmatprep.mubr.f32.mxu0 0.0
    %2387 = vmatmul.mubr.f32.gmra.mrb[0].mxu0 %v2220
    %v2388 = vpop.f32.mrb[0].mxu0
    %v2389 = vadd.f32 0.0, %v2388
    %v2390 = vpop.f32.mrb[0].mxu0
    %2391 = vmatprep.mubr.f32.mxu0 0.0
    %2392 = vmatmul.mubr.f32.gmra.mrb[0].mxu0 %v2223
    %v2393 = vpop.f32.mrb[0].mxu0
    %v2394 = vadd.f32 0.0, %v2393
    %v2395 = vpop.f32.mrb[0].mxu0
    %2396 = vmatprep.mubr.f32.mxu0 0.0
    %2397 = vmatmul.mubr.f32.gmra.mrb[0].mxu0 %v2226
    %v2398 = vpop.f32.mrb[0].mxu0
    %v2399 = vadd.f32 0.0, %v2398
    %v2400 = vpop.f32.mrb[0].mxu0
    %2401 = vdwg.mxu0
    %v2402 = vsub.f32 %v1933, %v2384
    %v2403 = vsub.f32 %v1934, %v2389
    %v2404 = vsub.f32 %v1935, %v2394
    %v2405 = vsub.f32 %v1936, %v2399
    %v2407 = vsel %vm86, %v2123, 0
    %v2410 = vsel %vm86, %v2124, 0
    %v2413 = vsel %vm86, %v2125, 0
    %v2416 = vsel %vm86, %v2126, 0
    %2418 = vmatprep.subr.mxu0 0.0
    %2419 = vmatpush1.msra.mxu0 %v2402
    %2420 = vmatprep.subr.mxu0 0.0
    %2421 = vmatpush1.msra.mxu0 %v2403
    %2422 = vmatprep.subr.mxu0 0.0
    %2423 = vmatpush1.msra.mxu0 %v2404
    %2424 = vmatprep.subr.mxu0 0.0
    %2425 = vmatpush1.msra.mxu0 %v2405
    %2426 = vmatprep.subr.mxu0 0.0
    %2427 = vmatpush1.msra.mxu0 0.0
    %2428 = vmatprep.subr.mxu0 0.0
    %2429 = vmatpush1.msra.mxu0 0.0
    %2430 = vmatprep.subr.mxu0 0.0
    %2431 = vmatpush1.msra.mxu0 0.0
    %2432 = vmatprep.subr.mxu0 0.0
    %2433 = vmatpush1.msra.mxu0 0.0
    %2434 = vmatprep.subr.mxu0 0.0
    %2435 = vmatpush1.msra.mxu0 0.0
    %2436 = vmatprep.subr.mxu0 0.0
    %2437 = vmatpush1.msra.mxu0 0.0
    %2438 = vmatprep.subr.mxu0 0.0
    %2439 = vmatpush1.msra.mxu0 0.0
    %2440 = vmatprep.subr.mxu0 0.0
    %2441 = vmatpush1.msra.mxu0 0.0
    %2442 = vmatprep.subr.mxu0 0.0
    %2443 = vmatpush1.msra.mxu0 0.0
    %2444 = vmatprep.subr.mxu0 0.0
    %2445 = vmatpush1.msra.mxu0 0.0
    %2446 = vmatprep.subr.mxu0 0.0
    %2447 = vmatpush1.msra.mxu0 0.0
    %2448 = vmatprep.subr.mxu0 0.0
    %2449 = vmatpush1.msra.mxu0 0.0
    %2450 = vmatprep.subr.mxu0 0.0
    %2451 = vmatpush1.msra.mxu0 0.0
    %2452 = vmatprep.subr.mxu0 0.0
    %2453 = vmatpush1.msra.mxu0 0.0
    %2454 = vmatprep.subr.mxu0 0.0
    %2455 = vmatpush1.msra.mxu0 0.0
    %2456 = vmatprep.subr.mxu0 0.0
    %2457 = vmatpush1.msra.mxu0 0.0
    %2458 = vmatprep.subr.mxu0 0.0
    %2459 = vmatpush1.msra.mxu0 0.0
    %2460 = vmatprep.subr.mxu0 0.0
    %2461 = vmatpush1.msra.mxu0 0.0
    %2462 = vmatprep.subr.mxu0 0.0
    %2463 = vmatpush1.msra.mxu0 0.0
    %2464 = vmatprep.subr.mxu0 0.0
    %2465 = vmatpush1.msra.mxu0 0.0
    %2466 = vmatprep.subr.mxu0 0.0
    %2467 = vmatpush1.msra.mxu0 0.0
    %2468 = vmatprep.subr.mxu0 0.0
    %2469 = vmatpush1.msra.mxu0 0.0
    %2470 = vmatprep.subr.mxu0 0.0
    %2471 = vmatpush1.msra.mxu0 0.0
    %2472 = vmatprep.subr.mxu0 0.0
    %2473 = vmatpush1.msra.mxu0 0.0
    %2474 = vmatprep.subr.mxu0 0.0
    %2475 = vmatpush1.msra.mxu0 0.0
    %2476 = vmatprep.subr.mxu0 0.0
    %2477 = vmatpush1.msra.mxu0 0.0
    %2478 = vmatprep.subr.mxu0 0.0
    %2479 = vmatpush1.msra.mxu0 0.0
    %2480 = vmatprep.subr.mxu0 0.0
    %2481 = vmatpush1.msra.mxu0 0.0
    %2482 = vmatprep.mubr.f32.mxu0 0.0
    %2483 = vmatmul.mubr.f32.gmra.mrb[0].mxu0 %v2407
    %v2484 = vpop.f32.mrb[0].mxu0
    %v2485 = vadd.f32 0.0, %v2484
    %v2486 = vpop.f32.mrb[0].mxu0
    %2487 = vmatprep.mubr.f32.mxu0 0.0
    %2488 = vmatmul.mubr.f32.gmra.mrb[0].mxu0 %v2410
    %v2489 = vpop.f32.mrb[0].mxu0
    %v2490 = vadd.f32 0.0, %v2489
    %v2491 = vpop.f32.mrb[0].mxu0
    %2492 = vmatprep.mubr.f32.mxu0 0.0
    %2493 = vmatmul.mubr.f32.gmra.mrb[0].mxu0 %v2413
    %v2494 = vpop.f32.mrb[0].mxu0
    %v2495 = vadd.f32 0.0, %v2494
    %v2496 = vpop.f32.mrb[0].mxu0
    %2497 = vmatprep.mubr.f32.mxu0 0.0
    %2498 = vmatmul.mubr.f32.gmra.mrb[0].mxu0 %v2416
    %v2499 = vpop.f32.mrb[0].mxu0
    %v2500 = vadd.f32 0.0, %v2499
    %v2501 = vpop.f32.mrb[0].mxu0
    %2502 = vdwg.mxu0
    %v2503 = vmul.f32 %v2485, 0.25
    %v2504 = vmul.f32 %v2490, 0.25
    %v2505 = vmul.f32 %v2495, 0.25
    %v2506 = vmul.f32 %v2500, 0.25
    %2507 = vmatprep.subr.mxu0 0.0
    %2508 = vmatpush1.msra.mxu0 %v2503
    %2509 = vmatprep.subr.mxu0 0.0
    %2510 = vmatpush1.msra.mxu0 %v2504
    %2511 = vmatprep.subr.mxu0 0.0
    %2512 = vmatpush1.msra.mxu0 %v2505
    %2513 = vmatprep.subr.mxu0 0.0
    %2514 = vmatpush1.msra.mxu0 %v2506
    %2515 = vmatprep.subr.mxu0 0.0
    %2516 = vmatpush1.msra.mxu0 0.0
    %2517 = vmatprep.subr.mxu0 0.0
    %2518 = vmatpush1.msra.mxu0 0.0
    %2519 = vmatprep.subr.mxu0 0.0
    %2520 = vmatpush1.msra.mxu0 0.0
    %2521 = vmatprep.subr.mxu0 0.0
    %2522 = vmatpush1.msra.mxu0 0.0
    %2523 = vmatprep.subr.mxu0 0.0
    %2524 = vmatpush1.msra.mxu0 0.0
    %2525 = vmatprep.subr.mxu0 0.0
    %2526 = vmatpush1.msra.mxu0 0.0
    %2527 = vmatprep.subr.mxu0 0.0
    %2528 = vmatpush1.msra.mxu0 0.0
    %2529 = vmatprep.subr.mxu0 0.0
    %2530 = vmatpush1.msra.mxu0 0.0
    %2531 = vmatprep.subr.mxu0 0.0
    %2532 = vmatpush1.msra.mxu0 0.0
    %2533 = vmatprep.subr.mxu0 0.0
    %2534 = vmatpush1.msra.mxu0 0.0
    %2535 = vmatprep.subr.mxu0 0.0
    %2536 = vmatpush1.msra.mxu0 0.0
    %2537 = vmatprep.subr.mxu0 0.0
    %2538 = vmatpush1.msra.mxu0 0.0
    %2539 = vmatprep.subr.mxu0 0.0
    %2540 = vmatpush1.msra.mxu0 0.0
    %2541 = vmatprep.subr.mxu0 0.0
    %2542 = vmatpush1.msra.mxu0 0.0
    %2543 = vmatprep.subr.mxu0 0.0
    %2544 = vmatpush1.msra.mxu0 0.0
    %2545 = vmatprep.subr.mxu0 0.0
    %2546 = vmatpush1.msra.mxu0 0.0
    %2547 = vmatprep.subr.mxu0 0.0
    %2548 = vmatpush1.msra.mxu0 0.0
    %2549 = vmatprep.subr.mxu0 0.0
    %2550 = vmatpush1.msra.mxu0 0.0
    %2551 = vmatprep.subr.mxu0 0.0
    %2552 = vmatpush1.msra.mxu0 0.0
    %2553 = vmatprep.subr.mxu0 0.0
    %2554 = vmatpush1.msra.mxu0 0.0
    %2555 = vmatprep.subr.mxu0 0.0
    %2556 = vmatpush1.msra.mxu0 0.0
    %2557 = vmatprep.subr.mxu0 0.0
    %2558 = vmatpush1.msra.mxu0 0.0
    %2559 = vmatprep.subr.mxu0 0.0
    %2560 = vmatpush1.msra.mxu0 0.0
    %2561 = vmatprep.subr.mxu0 0.0
    %2562 = vmatpush1.msra.mxu0 0.0
    %2563 = vmatprep.subr.mxu0 0.0
    %2564 = vmatpush1.msra.mxu0 0.0
    %2565 = vmatprep.subr.mxu0 0.0
    %2566 = vmatpush1.msra.mxu0 0.0
    %2567 = vmatprep.subr.mxu0 0.0
    %2568 = vmatpush1.msra.mxu0 0.0
    %2569 = vmatprep.subr.mxu0 0.0
    %2570 = vmatpush1.msra.mxu0 0.0
    %2571 = vmatprep.mubr.f32.mxu0 0.0
    %2572 = vmatmul.mubr.f32.gmra.mrb[0].mxu0 %v1724
    %v2573 = vpop.f32.mrb[0].mxu0
    %v2574 = vadd.f32 0.0, %v2573
    %v2575 = vpop.f32.mrb[0].mxu0
    %2576 = vmatprep.mubr.f32.mxu0 0.0
    %2577 = vmatmul.mubr.f32.gmra.mrb[0].mxu0 %v1727
    %v2578 = vpop.f32.mrb[0].mxu0
    %v2579 = vadd.f32 0.0, %v2578
    %v2580 = vpop.f32.mrb[0].mxu0
    %2581 = vmatprep.mubr.f32.mxu0 0.0
    %2582 = vmatmul.mubr.f32.gmra.mrb[0].mxu0 %v1730
    %v2583 = vpop.f32.mrb[0].mxu0
    %v2584 = vadd.f32 0.0, %v2583
    %v2585 = vpop.f32.mrb[0].mxu0
    %2586 = vmatprep.mubr.f32.mxu0 0.0
    %2587 = vmatmul.mubr.f32.gmra.mrb[0].mxu0 %v1733
    %v2588 = vpop.f32.mrb[0].mxu0
    %v2589 = vadd.f32 0.0, %v2588
    %v2590 = vpop.f32.mrb[0].mxu0
    %2591 = vdwg.mxu0
    %v2592 = vsub.f32 %v1820, %v2574
    %v2593 = vsub.f32 %v1821, %v2579
    %v2594 = vsub.f32 %v1822, %v2584
    %v2595 = vsub.f32 %v1823, %v2589
    %v2597 = vsel %vm86, %v2574, 0
    %v2600 = vsel %vm86, %v2579, 0
    %v2603 = vsel %vm86, %v2584, 0
    %v2606 = vsel %vm86, %v2589, 0
    %2608 = vmatprep.subr.mxu0 0.0
    %2609 = vmatpush1.msra.mxu0 %v2592
    %2610 = vmatprep.subr.mxu0 0.0
    %2611 = vmatpush1.msra.mxu0 %v2593
    %2612 = vmatprep.subr.mxu0 0.0
    %2613 = vmatpush1.msra.mxu0 %v2594
    %2614 = vmatprep.subr.mxu0 0.0
    %2615 = vmatpush1.msra.mxu0 %v2595
    %2616 = vmatprep.subr.mxu0 0.0
    %2617 = vmatpush1.msra.mxu0 0.0
    %2618 = vmatprep.subr.mxu0 0.0
    %2619 = vmatpush1.msra.mxu0 0.0
    %2620 = vmatprep.subr.mxu0 0.0
    %2621 = vmatpush1.msra.mxu0 0.0
    %2622 = vmatprep.subr.mxu0 0.0
    %2623 = vmatpush1.msra.mxu0 0.0
    %2624 = vmatprep.subr.mxu0 0.0
    %2625 = vmatpush1.msra.mxu0 0.0
    %2626 = vmatprep.subr.mxu0 0.0
    %2627 = vmatpush1.msra.mxu0 0.0
    %2628 = vmatprep.subr.mxu0 0.0
    %2629 = vmatpush1.msra.mxu0 0.0
    %2630 = vmatprep.subr.mxu0 0.0
    %2631 = vmatpush1.msra.mxu0 0.0
    %2632 = vmatprep.subr.mxu0 0.0
    %2633 = vmatpush1.msra.mxu0 0.0
    %2634 = vmatprep.subr.mxu0 0.0
    %2635 = vmatpush1.msra.mxu0 0.0
    %2636 = vmatprep.subr.mxu0 0.0
    %2637 = vmatpush1.msra.mxu0 0.0
    %2638 = vmatprep.subr.mxu0 0.0
    %2639 = vmatpush1.msra.mxu0 0.0
    %2640 = vmatprep.subr.mxu0 0.0
    %2641 = vmatpush1.msra.mxu0 0.0
    %2642 = vmatprep.subr.mxu0 0.0
    %2643 = vmatpush1.msra.mxu0 0.0
    %2644 = vmatprep.subr.mxu0 0.0
    %2645 = vmatpush1.msra.mxu0 0.0
    %2646 = vmatprep.subr.mxu0 0.0
    %2647 = vmatpush1.msra.mxu0 0.0
    %2648 = vmatprep.subr.mxu0 0.0
    %2649 = vmatpush1.msra.mxu0 0.0
    %2650 = vmatprep.subr.mxu0 0.0
    %2651 = vmatpush1.msra.mxu0 0.0
    %2652 = vmatprep.subr.mxu0 0.0
    %2653 = vmatpush1.msra.mxu0 0.0
    %2654 = vmatprep.subr.mxu0 0.0
    %2655 = vmatpush1.msra.mxu0 0.0
    %2656 = vmatprep.subr.mxu0 0.0
    %2657 = vmatpush1.msra.mxu0 0.0
    %2658 = vmatprep.subr.mxu0 0.0
    %2659 = vmatpush1.msra.mxu0 0.0
    %2660 = vmatprep.subr.mxu0 0.0
    %2661 = vmatpush1.msra.mxu0 0.0
    %2662 = vmatprep.subr.mxu0 0.0
    %2663 = vmatpush1.msra.mxu0 0.0
    %2664 = vmatprep.subr.mxu0 0.0
    %2665 = vmatpush1.msra.mxu0 0.0
    %2666 = vmatprep.subr.mxu0 0.0
    %2667 = vmatpush1.msra.mxu0 0.0
    %2668 = vmatprep.subr.mxu0 0.0
    %2669 = vmatpush1.msra.mxu0 0.0
    %2670 = vmatprep.subr.mxu0 0.0
    %2671 = vmatpush1.msra.mxu0 0.0
    %2672 = vmatprep.mubr.f32.mxu0 0.0
    %2673 = vmatmul.mubr.f32.gmra.mrb[0].mxu0 %v2597
    %v2674 = vpop.f32.mrb[0].mxu0
    %v2675 = vadd.f32 0.0, %v2674
    %v2676 = vpop.f32.mrb[0].mxu0
    %2677 = vmatprep.mubr.f32.mxu0 0.0
    %2678 = vmatmul.mubr.f32.gmra.mrb[0].mxu0 %v2600
    %v2679 = vpop.f32.mrb[0].mxu0
    %v2680 = vadd.f32 0.0, %v2679
    %v2681 = vpop.f32.mrb[0].mxu0
    %2682 = vmatprep.mubr.f32.mxu0 0.0
    %2683 = vmatmul.mubr.f32.gmra.mrb[0].mxu0 %v2603
    %v2684 = vpop.f32.mrb[0].mxu0
    %v2685 = vadd.f32 0.0, %v2684
    %v2686 = vpop.f32.mrb[0].mxu0
    %2687 = vmatprep.mubr.f32.mxu0 0.0
    %2688 = vmatmul.mubr.f32.gmra.mrb[0].mxu0 %v2606
    %v2689 = vpop.f32.mrb[0].mxu0
    %v2690 = vadd.f32 0.0, %v2689
    %v2691 = vpop.f32.mrb[0].mxu0
    %2692 = vdwg.mxu0
    %v2693 = vsub.f32 %v1828, %v2675
    %v2694 = vsub.f32 %v1829, %v2680
    %v2695 = vsub.f32 %v1830, %v2685
    %v2696 = vsub.f32 %v1831, %v2690
    %2697 = vmatprep.subr.mxu0 0.0
    %2698 = vmatpush1.msra.mxu0 %v2693
    %2699 = vmatprep.subr.mxu0 0.0
    %2700 = vmatpush1.msra.mxu0 %v2694
    %2701 = vmatprep.subr.mxu0 0.0
    %2702 = vmatpush1.msra.mxu0 %v2695
    %2703 = vmatprep.subr.mxu0 0.0
    %2704 = vmatpush1.msra.mxu0 %v2696
    %2705 = vmatprep.subr.mxu0 0.0
    %2706 = vmatpush1.msra.mxu0 0.0
    %2707 = vmatprep.subr.mxu0 0.0
    %2708 = vmatpush1.msra.mxu0 0.0
    %2709 = vmatprep.subr.mxu0 0.0
    %2710 = vmatpush1.msra.mxu0 0.0
    %2711 = vmatprep.subr.mxu0 0.0
    %2712 = vmatpush1.msra.mxu0 0.0
    %2713 = vmatprep.subr.mxu0 0.0
    %2714 = vmatpush1.msra.mxu0 0.0
    %2715 = vmatprep.subr.mxu0 0.0
    %2716 = vmatpush1.msra.mxu0 0.0
    %2717 = vmatprep.subr.mxu0 0.0
    %2718 = vmatpush1.msra.mxu0 0.0
    %2719 = vmatprep.subr.mxu0 0.0
    %2720 = vmatpush1.msra.mxu0 0.0
    %2721 = vmatprep.subr.mxu0 0.0
    %2722 = vmatpush1.msra.mxu0 0.0
    %2723 = vmatprep.subr.mxu0 0.0
    %2724 = vmatpush1.msra.mxu0 0.0
    %2725 = vmatprep.subr.mxu0 0.0
    %2726 = vmatpush1.msra.mxu0 0.0
    %2727 = vmatprep.subr.mxu0 0.0
    %2728 = vmatpush1.msra.mxu0 0.0
    %2729 = vmatprep.subr.mxu0 0.0
    %2730 = vmatpush1.msra.mxu0 0.0
    %2731 = vmatprep.subr.mxu0 0.0
    %2732 = vmatpush1.msra.mxu0 0.0
    %2733 = vmatprep.subr.mxu0 0.0
    %2734 = vmatpush1.msra.mxu0 0.0
    %2735 = vmatprep.subr.mxu0 0.0
    %2736 = vmatpush1.msra.mxu0 0.0
    %2737 = vmatprep.subr.mxu0 0.0
    %2738 = vmatpush1.msra.mxu0 0.0
    %2739 = vmatprep.subr.mxu0 0.0
    %2740 = vmatpush1.msra.mxu0 0.0
    %2741 = vmatprep.subr.mxu0 0.0
    %2742 = vmatpush1.msra.mxu0 0.0
    %2743 = vmatprep.subr.mxu0 0.0
    %2744 = vmatpush1.msra.mxu0 0.0
    %2745 = vmatprep.subr.mxu0 0.0
    %2746 = vmatpush1.msra.mxu0 0.0
    %2747 = vmatprep.subr.mxu0 0.0
    %2748 = vmatpush1.msra.mxu0 0.0
    %2749 = vmatprep.subr.mxu0 0.0
    %2750 = vmatpush1.msra.mxu0 0.0
    %2751 = vmatprep.subr.mxu0 0.0
    %2752 = vmatpush1.msra.mxu0 0.0
    %2753 = vmatprep.subr.mxu0 0.0
    %2754 = vmatpush1.msra.mxu0 0.0
    %2755 = vmatprep.subr.mxu0 0.0
    %2756 = vmatpush1.msra.mxu0 0.0
    %2757 = vmatprep.subr.mxu0 0.0
    %2758 = vmatpush1.msra.mxu0 0.0
    %2759 = vmatprep.subr.mxu0 0.0
    %2760 = vmatpush1.msra.mxu0 0.0
    %2761 = vmatprep.mubr.f32.mxu0 0.0
    %2762 = vmatmul.mubr.f32.gmra.mrb[0].mxu0 %v2597
    %v2763 = vpop.f32.mrb[0].mxu0
    %v2764 = vadd.f32 0.0, %v2763
    %v2765 = vpop.f32.mrb[0].mxu0
    %2766 = vmatprep.mubr.f32.mxu0 0.0
    %2767 = vmatmul.mubr.f32.gmra.mrb[0].mxu0 %v2600
    %v2768 = vpop.f32.mrb[0].mxu0
    %v2769 = vadd.f32 0.0, %v2768
    %v2770 = vpop.f32.mrb[0].mxu0
    %2771 = vmatprep.mubr.f32.mxu0 0.0
    %2772 = vmatmul.mubr.f32.gmra.mrb[0].mxu0 %v2603
    %v2773 = vpop.f32.mrb[0].mxu0
    %v2774 = vadd.f32 0.0, %v2773
    %v2775 = vpop.f32.mrb[0].mxu0
    %2776 = vmatprep.mubr.f32.mxu0 0.0
    %2777 = vmatmul.mubr.f32.gmra.mrb[0].mxu0 %v2606
    %v2778 = vpop.f32.mrb[0].mxu0
    %v2779 = vadd.f32 0.0, %v2778
    %v2780 = vpop.f32.mrb[0].mxu0
    %2781 = vdwg.mxu0
    %v2782 = vsub.f32 %v1933, %v2764
    %v2783 = vsub.f32 %v1934, %v2769
    %v2784 = vsub.f32 %v1935, %v2774
    %v2785 = vsub.f32 %v1936, %v2779
    %v2787 = vsel %vm86, %v2503, 0
    %v2790 = vsel %vm86, %v2504, 0
    %v2793 = vsel %vm86, %v2505, 0
    %v2796 = vsel %vm86, %v2506, 0
    %2798 = vmatprep.subr.mxu0 0.0
    %2799 = vmatpush1.msra.mxu0 %v2782
    %2800 = vmatprep.subr.mxu0 0.0
    %2801 = vmatpush1.msra.mxu0 %v2783
    %2802 = vmatprep.subr.mxu0 0.0
    %2803 = vmatpush1.msra.mxu0 %v2784
    %2804 = vmatprep.subr.mxu0 0.0
    %2805 = vmatpush1.msra.mxu0 %v2785
    %2806 = vmatprep.subr.mxu0 0.0
    %2807 = vmatpush1.msra.mxu0 0.0
    %2808 = vmatprep.subr.mxu0 0.0
    %2809 = vmatpush1.msra.mxu0 0.0
    %2810 = vmatprep.subr.mxu0 0.0
    %2811 = vmatpush1.msra.mxu0 0.0
    %2812 = vmatprep.subr.mxu0 0.0
    %2813 = vmatpush1.msra.mxu0 0.0
    %2814 = vmatprep.subr.mxu0 0.0
    %2815 = vmatpush1.msra.mxu0 0.0
    %2816 = vmatprep.subr.mxu0 0.0
    %2817 = vmatpush1.msra.mxu0 0.0
    %2818 = vmatprep.subr.mxu0 0.0
    %2819 = vmatpush1.msra.mxu0 0.0
    %2820 = vmatprep.subr.mxu0 0.0
    %2821 = vmatpush1.msra.mxu0 0.0
    %2822 = vmatprep.subr.mxu0 0.0
    %2823 = vmatpush1.msra.mxu0 0.0
    %2824 = vmatprep.subr.mxu0 0.0
    %2825 = vmatpush1.msra.mxu0 0.0
    %2826 = vmatprep.subr.mxu0 0.0
    %2827 = vmatpush1.msra.mxu0 0.0
    %2828 = vmatprep.subr.mxu0 0.0
    %2829 = vmatpush1.msra.mxu0 0.0
    %2830 = vmatprep.subr.mxu0 0.0
    %2831 = vmatpush1.msra.mxu0 0.0
    %2832 = vmatprep.subr.mxu0 0.0
    %2833 = vmatpush1.msra.mxu0 0.0
    %2834 = vmatprep.subr.mxu0 0.0
    %2835 = vmatpush1.msra.mxu0 0.0
    %2836 = vmatprep.subr.mxu0 0.0
    %2837 = vmatpush1.msra.mxu0 0.0
    %2838 = vmatprep.subr.mxu0 0.0
    %2839 = vmatpush1.msra.mxu0 0.0
    %2840 = vmatprep.subr.mxu0 0.0
    %2841 = vmatpush1.msra.mxu0 0.0
    %2842 = vmatprep.subr.mxu0 0.0
    %2843 = vmatpush1.msra.mxu0 0.0
    %2844 = vmatprep.subr.mxu0 0.0
    %2845 = vmatpush1.msra.mxu0 0.0
    %2846 = vmatprep.subr.mxu0 0.0
    %2847 = vmatpush1.msra.mxu0 0.0
    %2848 = vmatprep.subr.mxu0 0.0
    %2849 = vmatpush1.msra.mxu0 0.0
    %2850 = vmatprep.subr.mxu0 0.0
    %2851 = vmatpush1.msra.mxu0 0.0
    %2852 = vmatprep.subr.mxu0 0.0
    %2853 = vmatpush1.msra.mxu0 0.0
    %2854 = vmatprep.subr.mxu0 0.0
    %2855 = vmatpush1.msra.mxu0 0.0
    %2856 = vmatprep.subr.mxu0 0.0
    %2857 = vmatpush1.msra.mxu0 0.0
    %2858 = vmatprep.subr.mxu0 0.0
    %2859 = vmatpush1.msra.mxu0 0.0
    %2860 = vmatprep.subr.mxu0 0.0
    %2861 = vmatpush1.msra.mxu0 0.0
    %2862 = vmatprep.mubr.f32.mxu0 0.0
    %2863 = vmatmul.mubr.f32.gmra.mrb[0].mxu0 %v2787
    %v2864 = vpop.f32.mrb[0].mxu0
    %v2865 = vadd.f32 0.0, %v2864
    %v2866 = vpop.f32.mrb[0].mxu0
    %2867 = vmatprep.mubr.f32.mxu0 0.0
    %2868 = vmatmul.mubr.f32.gmra.mrb[0].mxu0 %v2790
    %v2869 = vpop.f32.mrb[0].mxu0
    %v2870 = vadd.f32 0.0, %v2869
    %v2871 = vpop.f32.mrb[0].mxu0
    %2872 = vmatprep.mubr.f32.mxu0 0.0
    %2873 = vmatmul.mubr.f32.gmra.mrb[0].mxu0 %v2793
    %v2874 = vpop.f32.mrb[0].mxu0
    %v2875 = vadd.f32 0.0, %v2874
    %v2876 = vpop.f32.mrb[0].mxu0
    %2877 = vmatprep.mubr.f32.mxu0 0.0
    %2878 = vmatmul.mubr.f32.gmra.mrb[0].mxu0 %v2796
    %v2879 = vpop.f32.mrb[0].mxu0
    %v2880 = vadd.f32 0.0, %v2879
    %v2881 = vpop.f32.mrb[0].mxu0
    %2882 = vdwg.mxu0
    %v2883 = vmul.f32 %v2865, 0.25
    %v2884 = vmul.f32 %v2870, 0.25
    %v2885 = vmul.f32 %v2875, 0.25
    %v2886 = vmul.f32 %v2880, 0.25
    %2887 = vmatprep.subr.mxu0 0.0
    %2888 = vmatpush1.msra.mxu0 %v2883
    %2889 = vmatprep.subr.mxu0 0.0
    %2890 = vmatpush1.msra.mxu0 %v2884
    %2891 = vmatprep.subr.mxu0 0.0
    %2892 = vmatpush1.msra.mxu0 %v2885
    %2893 = vmatprep.subr.mxu0 0.0
    %2894 = vmatpush1.msra.mxu0 %v2886
    %2895 = vmatprep.subr.mxu0 0.0
    %2896 = vmatpush1.msra.mxu0 0.0
    %2897 = vmatprep.subr.mxu0 0.0
    %2898 = vmatpush1.msra.mxu0 0.0
    %2899 = vmatprep.subr.mxu0 0.0
    %2900 = vmatpush1.msra.mxu0 0.0
    %2901 = vmatprep.subr.mxu0 0.0
    %2902 = vmatpush1.msra.mxu0 0.0
    %2903 = vmatprep.subr.mxu0 0.0
    %2904 = vmatpush1.msra.mxu0 0.0
    %2905 = vmatprep.subr.mxu0 0.0
    %2906 = vmatpush1.msra.mxu0 0.0
    %2907 = vmatprep.subr.mxu0 0.0
    %2908 = vmatpush1.msra.mxu0 0.0
    %2909 = vmatprep.subr.mxu0 0.0
    %2910 = vmatpush1.msra.mxu0 0.0
    %2911 = vmatprep.subr.mxu0 0.0
    %2912 = vmatpush1.msra.mxu0 0.0
    %2913 = vmatprep.subr.mxu0 0.0
    %2914 = vmatpush1.msra.mxu0 0.0
    %2915 = vmatprep.subr.mxu0 0.0
    %2916 = vmatpush1.msra.mxu0 0.0
    %2917 = vmatprep.subr.mxu0 0.0
    %2918 = vmatpush1.msra.mxu0 0.0
    %2919 = vmatprep.subr.mxu0 0.0
    %2920 = vmatpush1.msra.mxu0 0.0
    %2921 = vmatprep.subr.mxu0 0.0
    %2922 = vmatpush1.msra.mxu0 0.0
    %2923 = vmatprep.subr.mxu0 0.0
    %2924 = vmatpush1.msra.mxu0 0.0
    %2925 = vmatprep.subr.mxu0 0.0
    %2926 = vmatpush1.msra.mxu0 0.0
    %2927 = vmatprep.subr.mxu0 0.0
    %2928 = vmatpush1.msra.mxu0 0.0
    %2929 = vmatprep.subr.mxu0 0.0
    %2930 = vmatpush1.msra.mxu0 0.0
    %2931 = vmatprep.subr.mxu0 0.0
    %2932 = vmatpush1.msra.mxu0 0.0
    %2933 = vmatprep.subr.mxu0 0.0
    %2934 = vmatpush1.msra.mxu0 0.0
    %2935 = vmatprep.subr.mxu0 0.0
    %2936 = vmatpush1.msra.mxu0 0.0
    %2937 = vmatprep.subr.mxu0 0.0
    %2938 = vmatpush1.msra.mxu0 0.0
    %2939 = vmatprep.subr.mxu0 0.0
    %2940 = vmatpush1.msra.mxu0 0.0
    %2941 = vmatprep.subr.mxu0 0.0
    %2942 = vmatpush1.msra.mxu0 0.0
    %2943 = vmatprep.subr.mxu0 0.0
    %2944 = vmatpush1.msra.mxu0 0.0
    %2945 = vmatprep.subr.mxu0 0.0
    %2946 = vmatpush1.msra.mxu0 0.0
    %2947 = vmatprep.subr.mxu0 0.0
    %2948 = vmatpush1.msra.mxu0 0.0
    %2949 = vmatprep.subr.mxu0 0.0
    %2950 = vmatpush1.msra.mxu0 0.0
    %2951 = vmatprep.mubr.f32.mxu0 0.0
    %2952 = vmatmul.mubr.f32.gmra.mrb[0].mxu0 %v1724
    %v2953 = vpop.f32.mrb[0].mxu0
    %v2954 = vadd.f32 0.0, %v2953
    %v2955 = vpop.f32.mrb[0].mxu0
    %2956 = vmatprep.mubr.f32.mxu0 0.0
    %2957 = vmatmul.mubr.f32.gmra.mrb[0].mxu0 %v1727
    %v2958 = vpop.f32.mrb[0].mxu0
    %v2959 = vadd.f32 0.0, %v2958
    %v2960 = vpop.f32.mrb[0].mxu0
    %2961 = vmatprep.mubr.f32.mxu0 0.0
    %2962 = vmatmul.mubr.f32.gmra.mrb[0].mxu0 %v1730
    %v2963 = vpop.f32.mrb[0].mxu0
    %v2964 = vadd.f32 0.0, %v2963
    %v2965 = vpop.f32.mrb[0].mxu0
    %2966 = vmatprep.mubr.f32.mxu0 0.0
    %2967 = vmatmul.mubr.f32.gmra.mrb[0].mxu0 %v1733
    %v2968 = vpop.f32.mrb[0].mxu0
    %v2969 = vadd.f32 0.0, %v2968
    %v2970 = vpop.f32.mrb[0].mxu0
    %2971 = vdwg.mxu0
    %v2972 = vsub.f32 %v1820, %v2954
    %v2973 = vsub.f32 %v1821, %v2959
    %v2974 = vsub.f32 %v1822, %v2964
    %v2975 = vsub.f32 %v1823, %v2969
    %v2977 = vsel %vm86, %v2954, 0
    %v2980 = vsel %vm86, %v2959, 0
    %v2983 = vsel %vm86, %v2964, 0
    %v2986 = vsel %vm86, %v2969, 0
    %2988 = vmatprep.subr.mxu0 0.0
    %2989 = vmatpush1.msra.mxu0 %v2972
    %2990 = vmatprep.subr.mxu0 0.0
    %2991 = vmatpush1.msra.mxu0 %v2973
    %2992 = vmatprep.subr.mxu0 0.0
    %2993 = vmatpush1.msra.mxu0 %v2974
    %2994 = vmatprep.subr.mxu0 0.0
    %2995 = vmatpush1.msra.mxu0 %v2975
    %2996 = vmatprep.subr.mxu0 0.0
    %2997 = vmatpush1.msra.mxu0 0.0
    %2998 = vmatprep.subr.mxu0 0.0
    %2999 = vmatpush1.msra.mxu0 0.0
    %3000 = vmatprep.subr.mxu0 0.0
    %3001 = vmatpush1.msra.mxu0 0.0
    %3002 = vmatprep.subr.mxu0 0.0
    %3003 = vmatpush1.msra.mxu0 0.0
    %3004 = vmatprep.subr.mxu0 0.0
    %3005 = vmatpush1.msra.mxu0 0.0
    %3006 = vmatprep.subr.mxu0 0.0
    %3007 = vmatpush1.msra.mxu0 0.0
    %3008 = vmatprep.subr.mxu0 0.0
    %3009 = vmatpush1.msra.mxu0 0.0
    %3010 = vmatprep.subr.mxu0 0.0
    %3011 = vmatpush1.msra.mxu0 0.0
    %3012 = vmatprep.subr.mxu0 0.0
    %3013 = vmatpush1.msra.mxu0 0.0
    %3014 = vmatprep.subr.mxu0 0.0
    %3015 = vmatpush1.msra.mxu0 0.0
    %3016 = vmatprep.subr.mxu0 0.0
    %3017 = vmatpush1.msra.mxu0 0.0
    %3018 = vmatprep.subr.mxu0 0.0
    %3019 = vmatpush1.msra.mxu0 0.0
    %3020 = vmatprep.subr.mxu0 0.0
    %3021 = vmatpush1.msra.mxu0 0.0
    %3022 = vmatprep.subr.mxu0 0.0
    %3023 = vmatpush1.msra.mxu0 0.0
    %3024 = vmatprep.subr.mxu0 0.0
    %3025 = vmatpush1.msra.mxu0 0.0
    %3026 = vmatprep.subr.mxu0 0.0
    %3027 = vmatpush1.msra.mxu0 0.0
    %3028 = vmatprep.subr.mxu0 0.0
    %3029 = vmatpush1.msra.mxu0 0.0
    %3030 = vmatprep.subr.mxu0 0.0
    %3031 = vmatpush1.msra.mxu0 0.0
    %3032 = vmatprep.subr.mxu0 0.0
    %3033 = vmatpush1.msra.mxu0 0.0
    %3034 = vmatprep.subr.mxu0 0.0
    %3035 = vmatpush1.msra.mxu0 0.0
    %3036 = vmatprep.subr.mxu0 0.0
    %3037 = vmatpush1.msra.mxu0 0.0
    %3038 = vmatprep.subr.mxu0 0.0
    %3039 = vmatpush1.msra.mxu0 0.0
    %3040 = vmatprep.subr.mxu0 0.0
    %3041 = vmatpush1.msra.mxu0 0.0
    %3042 = vmatprep.subr.mxu0 0.0
    %3043 = vmatpush1.msra.mxu0 0.0
    %3044 = vmatprep.subr.mxu0 0.0
    %3045 = vmatpush1.msra.mxu0 0.0
    %3046 = vmatprep.subr.mxu0 0.0
    %3047 = vmatpush1.msra.mxu0 0.0
    %3048 = vmatprep.subr.mxu0 0.0
    %3049 = vmatpush1.msra.mxu0 0.0
    %3050 = vmatprep.subr.mxu0 0.0
    %3051 = vmatpush1.msra.mxu0 0.0
    %3052 = vmatprep.mubr.f32.mxu0 0.0
    %3053 = vmatmul.mubr.f32.gmra.mrb[0].mxu0 %v2977
    %v3054 = vpop.f32.mrb[0].mxu0
    %v3055 = vadd.f32 0.0, %v3054
    %v3056 = vpop.f32.mrb[0].mxu0
    %3057 = vmatprep.mubr.f32.mxu0 0.0
    %3058 = vmatmul.mubr.f32.gmra.mrb[0].mxu0 %v2980
    %v3059 = vpop.f32.mrb[0].mxu0
    %v3060 = vadd.f32 0.0, %v3059
    %v3061 = vpop.f32.mrb[0].mxu0
    %3062 = vmatprep.mubr.f32.mxu0 0.0
    %3063 = vmatmul.mubr.f32.gmra.mrb[0].mxu0 %v2983
    %v3064 = vpop.f32.mrb[0].mxu0
    %v3065 = vadd.f32 0.0, %v3064
    %v3066 = vpop.f32.mrb[0].mxu0
    %3067 = vmatprep.mubr.f32.mxu0 0.0
    %3068 = vmatmul.mubr.f32.gmra.mrb[0].mxu0 %v2986
    %v3069 = vpop.f32.mrb[0].mxu0
    %v3070 = vadd.f32 0.0, %v3069
    %v3071 = vpop.f32.mrb[0].mxu0
    %3072 = vdwg.mxu0
    %v3073 = vsub.f32 %v1828, %v3055
    %v3074 = vsub.f32 %v1829, %v3060
    %v3075 = vsub.f32 %v1830, %v3065
    %v3076 = vsub.f32 %v1831, %v3070
    %3077 = vmatprep.subr.mxu0 0.0
    %3078 = vmatpush1.msra.mxu0 %v3073
    %3079 = vmatprep.subr.mxu0 0.0
    %3080 = vmatpush1.msra.mxu0 %v3074
    %3081 = vmatprep.subr.mxu0 0.0
    %3082 = vmatpush1.msra.mxu0 %v3075
    %3083 = vmatprep.subr.mxu0 0.0
    %3084 = vmatpush1.msra.mxu0 %v3076
    %3085 = vmatprep.subr.mxu0 0.0
    %3086 = vmatpush1.msra.mxu0 0.0
    %3087 = vmatprep.subr.mxu0 0.0
    %3088 = vmatpush1.msra.mxu0 0.0
    %3089 = vmatprep.subr.mxu0 0.0
    %3090 = vmatpush1.msra.mxu0 0.0
    %3091 = vmatprep.subr.mxu0 0.0
    %3092 = vmatpush1.msra.mxu0 0.0
    %3093 = vmatprep.subr.mxu0 0.0
    %3094 = vmatpush1.msra.mxu0 0.0
    %3095 = vmatprep.subr.mxu0 0.0
    %3096 = vmatpush1.msra.mxu0 0.0
    %3097 = vmatprep.subr.mxu0 0.0
    %3098 = vmatpush1.msra.mxu0 0.0
    %3099 = vmatprep.subr.mxu0 0.0
    %3100 = vmatpush1.msra.mxu0 0.0
    %3101 = vmatprep.subr.mxu0 0.0
    %3102 = vmatpush1.msra.mxu0 0.0
    %3103 = vmatprep.subr.mxu0 0.0
    %3104 = vmatpush1.msra.mxu0 0.0
    %3105 = vmatprep.subr.mxu0 0.0
    %3106 = vmatpush1.msra.mxu0 0.0
    %3107 = vmatprep.subr.mxu0 0.0
    %3108 = vmatpush1.msra.mxu0 0.0
    %3109 = vmatprep.subr.mxu0 0.0
    %3110 = vmatpush1.msra.mxu0 0.0
    %3111 = vmatprep.subr.mxu0 0.0
    %3112 = vmatpush1.msra.mxu0 0.0
    %3113 = vmatprep.subr.mxu0 0.0
    %3114 = vmatpush1.msra.mxu0 0.0
    %3115 = vmatprep.subr.mxu0 0.0
    %3116 = vmatpush1.msra.mxu0 0.0
    %3117 = vmatprep.subr.mxu0 0.0
    %3118 = vmatpush1.msra.mxu0 0.0
    %3119 = vmatprep.subr.mxu0 0.0
    %3120 = vmatpush1.msra.mxu0 0.0
    %3121 = vmatprep.subr.mxu0 0.0
    %3122 = vmatpush1.msra.mxu0 0.0
    %3123 = vmatprep.subr.mxu0 0.0
    %3124 = vmatpush1.msra.mxu0 0.0
    %3125 = vmatprep.subr.mxu0 0.0
    %3126 = vmatpush1.msra.mxu0 0.0
    %3127 = vmatprep.subr.mxu0 0.0
    %3128 = vmatpush1.msra.mxu0 0.0
    %3129 = vmatprep.subr.mxu0 0.0
    %3130 = vmatpush1.msra.mxu0 0.0
    %3131 = vmatprep.subr.mxu0 0.0
    %3132 = vmatpush1.msra.mxu0 0.0
    %3133 = vmatprep.subr.mxu0 0.0
    %3134 = vmatpush1.msra.mxu0 0.0
    %3135 = vmatprep.subr.mxu0 0.0
    %3136 = vmatpush1.msra.mxu0 0.0
    %3137 = vmatprep.subr.mxu0 0.0
    %3138 = vmatpush1.msra.mxu0 0.0
    %3139 = vmatprep.subr.mxu0 0.0
    %3140 = vmatpush1.msra.mxu0 0.0
    %3141 = vmatprep.mubr.f32.mxu0 0.0
    %3142 = vmatmul.mubr.f32.gmra.mrb[0].mxu0 %v2977
    %v3143 = vpop.f32.mrb[0].mxu0
    %v3144 = vadd.f32 0.0, %v3143
    %v3145 = vpop.f32.mrb[0].mxu0
    %3146 = vmatprep.mubr.f32.mxu0 0.0
    %3147 = vmatmul.mubr.f32.gmra.mrb[0].mxu0 %v2980
    %v3148 = vpop.f32.mrb[0].mxu0
    %v3149 = vadd.f32 0.0, %v3148
    %v3150 = vpop.f32.mrb[0].mxu0
    %3151 = vmatprep.mubr.f32.mxu0 0.0
    %3152 = vmatmul.mubr.f32.gmra.mrb[0].mxu0 %v2983
    %v3153 = vpop.f32.mrb[0].mxu0
    %v3154 = vadd.f32 0.0, %v3153
    %v3155 = vpop.f32.mrb[0].mxu0
    %3156 = vmatprep.mubr.f32.mxu0 0.0
    %3157 = vmatmul.mubr.f32.gmra.mrb[0].mxu0 %v2986
    %v3158 = vpop.f32.mrb[0].mxu0
    %v3159 = vadd.f32 0.0, %v3158
    %v3160 = vpop.f32.mrb[0].mxu0
    %3161 = vdwg.mxu0
    %v3162 = vsub.f32 %v1933, %v3144
    %v3163 = vsub.f32 %v1934, %v3149
    %v3164 = vsub.f32 %v1935, %v3154
    %v3165 = vsub.f32 %v1936, %v3159
    %v3167 = vsel %vm86, %v2883, 0
    %v3170 = vsel %vm86, %v2884, 0
    %v3173 = vsel %vm86, %v2885, 0
    %v3176 = vsel %vm86, %v2886, 0
    %3178 = vmatprep.subr.mxu0 0.0
    %3179 = vmatpush1.msra.mxu0 %v3162
    %3180 = vmatprep.subr.mxu0 0.0
    %3181 = vmatpush1.msra.mxu0 %v3163
    %3182 = vmatprep.subr.mxu0 0.0
    %3183 = vmatpush1.msra.mxu0 %v3164
    %3184 = vmatprep.subr.mxu0 0.0
    %3185 = vmatpush1.msra.mxu0 %v3165
    %3186 = vmatprep.subr.mxu0 0.0
    %3187 = vmatpush1.msra.mxu0 0.0
    %3188 = vmatprep.subr.mxu0 0.0
    %3189 = vmatpush1.msra.mxu0 0.0
    %3190 = vmatprep.subr.mxu0 0.0
    %3191 = vmatpush1.msra.mxu0 0.0
    %3192 = vmatprep.subr.mxu0 0.0
    %3193 = vmatpush1.msra.mxu0 0.0
    %3194 = vmatprep.subr.mxu0 0.0
    %3195 = vmatpush1.msra.mxu0 0.0
    %3196 = vmatprep.subr.mxu0 0.0
    %3197 = vmatpush1.msra.mxu0 0.0
    %3198 = vmatprep.subr.mxu0 0.0
    %3199 = vmatpush1.msra.mxu0 0.0
    %3200 = vmatprep.subr.mxu0 0.0
    %3201 = vmatpush1.msra.mxu0 0.0
    %3202 = vmatprep.subr.mxu0 0.0
    %3203 = vmatpush1.msra.mxu0 0.0
    %3204 = vmatprep.subr.mxu0 0.0
    %3205 = vmatpush1.msra.mxu0 0.0
    %3206 = vmatprep.subr.mxu0 0.0
    %3207 = vmatpush1.msra.mxu0 0.0
    %3208 = vmatprep.subr.mxu0 0.0
    %3209 = vmatpush1.msra.mxu0 0.0
    %3210 = vmatprep.subr.mxu0 0.0
    %3211 = vmatpush1.msra.mxu0 0.0
    %3212 = vmatprep.subr.mxu0 0.0
    %3213 = vmatpush1.msra.mxu0 0.0
    %3214 = vmatprep.subr.mxu0 0.0
    %3215 = vmatpush1.msra.mxu0 0.0
    %3216 = vmatprep.subr.mxu0 0.0
    %3217 = vmatpush1.msra.mxu0 0.0
    %3218 = vmatprep.subr.mxu0 0.0
    %3219 = vmatpush1.msra.mxu0 0.0
    %3220 = vmatprep.subr.mxu0 0.0
    %3221 = vmatpush1.msra.mxu0 0.0
    %3222 = vmatprep.subr.mxu0 0.0
    %3223 = vmatpush1.msra.mxu0 0.0
    %3224 = vmatprep.subr.mxu0 0.0
    %3225 = vmatpush1.msra.mxu0 0.0
    %3226 = vmatprep.subr.mxu0 0.0
    %3227 = vmatpush1.msra.mxu0 0.0
    %3228 = vmatprep.subr.mxu0 0.0
    %3229 = vmatpush1.msra.mxu0 0.0
    %3230 = vmatprep.subr.mxu0 0.0
    %3231 = vmatpush1.msra.mxu0 0.0
    %3232 = vmatprep.subr.mxu0 0.0
    %3233 = vmatpush1.msra.mxu0 0.0
    %3234 = vmatprep.subr.mxu0 0.0
    %3235 = vmatpush1.msra.mxu0 0.0
    %3236 = vmatprep.subr.mxu0 0.0
    %3237 = vmatpush1.msra.mxu0 0.0
    %3238 = vmatprep.subr.mxu0 0.0
    %3239 = vmatpush1.msra.mxu0 0.0
    %3240 = vmatprep.subr.mxu0 0.0
    %3241 = vmatpush1.msra.mxu0 0.0
    %3242 = vmatprep.mubr.f32.mxu0 0.0
    %3243 = vmatmul.mubr.f32.gmra.mrb[0].mxu0 %v3167
    %v3244 = vpop.f32.mrb[0].mxu0
    %v3245 = vadd.f32 0.0, %v3244
    %v3246 = vpop.f32.mrb[0].mxu0
    %3247 = vmatprep.mubr.f32.mxu0 0.0
    %3248 = vmatmul.mubr.f32.gmra.mrb[0].mxu0 %v3170
    %v3249 = vpop.f32.mrb[0].mxu0
    %v3250 = vadd.f32 0.0, %v3249
    %v3251 = vpop.f32.mrb[0].mxu0
    %3252 = vmatprep.mubr.f32.mxu0 0.0
    %3253 = vmatmul.mubr.f32.gmra.mrb[0].mxu0 %v3173
    %v3254 = vpop.f32.mrb[0].mxu0
    %v3255 = vadd.f32 0.0, %v3254
    %v3256 = vpop.f32.mrb[0].mxu0
    %3257 = vmatprep.mubr.f32.mxu0 0.0
    %3258 = vmatmul.mubr.f32.gmra.mrb[0].mxu0 %v3176
    %v3259 = vpop.f32.mrb[0].mxu0
    %v3260 = vadd.f32 0.0, %v3259
    %v3261 = vpop.f32.mrb[0].mxu0
    %3262 = vdwg.mxu0
    %v3263 = vmul.f32 %v3245, 0.25
    %v3264 = vmul.f32 %v3250, 0.25
    %v3265 = vmul.f32 %v3255, 0.25
    %v3266 = vmul.f32 %v3260, 0.25
    %3267 = vmatprep.subr.mxu0 0.0
    %3268 = vmatpush1.msra.mxu0 %v3263
    %3269 = vmatprep.subr.mxu0 0.0
    %3270 = vmatpush1.msra.mxu0 %v3264
    %3271 = vmatprep.subr.mxu0 0.0
    %3272 = vmatpush1.msra.mxu0 %v3265
    %3273 = vmatprep.subr.mxu0 0.0
    %3274 = vmatpush1.msra.mxu0 %v3266
    %3275 = vmatprep.subr.mxu0 0.0
    %3276 = vmatpush1.msra.mxu0 0.0
    %3277 = vmatprep.subr.mxu0 0.0
    %3278 = vmatpush1.msra.mxu0 0.0
    %3279 = vmatprep.subr.mxu0 0.0
    %3280 = vmatpush1.msra.mxu0 0.0
    %3281 = vmatprep.subr.mxu0 0.0
    %3282 = vmatpush1.msra.mxu0 0.0
    %3283 = vmatprep.subr.mxu0 0.0
    %3284 = vmatpush1.msra.mxu0 0.0
    %3285 = vmatprep.subr.mxu0 0.0
    %3286 = vmatpush1.msra.mxu0 0.0
    %3287 = vmatprep.subr.mxu0 0.0
    %3288 = vmatpush1.msra.mxu0 0.0
    %3289 = vmatprep.subr.mxu0 0.0
    %3290 = vmatpush1.msra.mxu0 0.0
    %3291 = vmatprep.subr.mxu0 0.0
    %3292 = vmatpush1.msra.mxu0 0.0
    %3293 = vmatprep.subr.mxu0 0.0
    %3294 = vmatpush1.msra.mxu0 0.0
    %3295 = vmatprep.subr.mxu0 0.0
    %3296 = vmatpush1.msra.mxu0 0.0
    %3297 = vmatprep.subr.mxu0 0.0
    %3298 = vmatpush1.msra.mxu0 0.0
    %3299 = vmatprep.subr.mxu0 0.0
    %3300 = vmatpush1.msra.mxu0 0.0
    %3301 = vmatprep.subr.mxu0 0.0
    %3302 = vmatpush1.msra.mxu0 0.0
    %3303 = vmatprep.subr.mxu0 0.0
    %3304 = vmatpush1.msra.mxu0 0.0
    %3305 = vmatprep.subr.mxu0 0.0
    %3306 = vmatpush1.msra.mxu0 0.0
    %3307 = vmatprep.subr.mxu0 0.0
    %3308 = vmatpush1.msra.mxu0 0.0
    %3309 = vmatprep.subr.mxu0 0.0
    %3310 = vmatpush1.msra.mxu0 0.0
    %3311 = vmatprep.subr.mxu0 0.0
    %3312 = vmatpush1.msra.mxu0 0.0
    %3313 = vmatprep.subr.mxu0 0.0
    %3314 = vmatpush1.msra.mxu0 0.0
    %3315 = vmatprep.subr.mxu0 0.0
    %3316 = vmatpush1.msra.mxu0 0.0
    %3317 = vmatprep.subr.mxu0 0.0
    %3318 = vmatpush1.msra.mxu0 0.0
    %3319 = vmatprep.subr.mxu0 0.0
    %3320 = vmatpush1.msra.mxu0 0.0
    %3321 = vmatprep.subr.mxu0 0.0
    %3322 = vmatpush1.msra.mxu0 0.0
    %3323 = vmatprep.subr.mxu0 0.0
    %3324 = vmatpush1.msra.mxu0 0.0
    %3325 = vmatprep.subr.mxu0 0.0
    %3326 = vmatpush1.msra.mxu0 0.0
    %3327 = vmatprep.subr.mxu0 0.0
    %3328 = vmatpush1.msra.mxu0 0.0
    %3329 = vmatprep.subr.mxu0 0.0
    %3330 = vmatpush1.msra.mxu0 0.0
    %3331 = vmatprep.mubr.f32.mxu0 0.0
    %3332 = vmatmul.mubr.f32.gmra.mrb[0].mxu0 %v1724
    %v3333 = vpop.f32.mrb[0].mxu0
    %v3334 = vadd.f32 0.0, %v3333
    %v3335 = vpop.f32.mrb[0].mxu0
    %3336 = vmatprep.mubr.f32.mxu0 0.0
    %3337 = vmatmul.mubr.f32.gmra.mrb[0].mxu0 %v1727
    %v3338 = vpop.f32.mrb[0].mxu0
    %v3339 = vadd.f32 0.0, %v3338
    %v3340 = vpop.f32.mrb[0].mxu0
    %3341 = vmatprep.mubr.f32.mxu0 0.0
    %3342 = vmatmul.mubr.f32.gmra.mrb[0].mxu0 %v1730
    %v3343 = vpop.f32.mrb[0].mxu0
    %v3344 = vadd.f32 0.0, %v3343
    %v3345 = vpop.f32.mrb[0].mxu0
    %3346 = vmatprep.mubr.f32.mxu0 0.0
    %3347 = vmatmul.mubr.f32.gmra.mrb[0].mxu0 %v1733
    %v3348 = vpop.f32.mrb[0].mxu0
    %v3349 = vadd.f32 0.0, %v3348
    %v3350 = vpop.f32.mrb[0].mxu0
    %3351 = vdwg.mxu0
    %v3352 = vsub.f32 %v1820, %v3334
    %v3353 = vsub.f32 %v1821, %v3339
    %v3354 = vsub.f32 %v1822, %v3344
    %v3355 = vsub.f32 %v1823, %v3349
    %v3357 = vsel %vm86, %v3334, 0
    %v3360 = vsel %vm86, %v3339, 0
    %v3363 = vsel %vm86, %v3344, 0
    %v3366 = vsel %vm86, %v3349, 0
    %3368 = vmatprep.subr.mxu0 0.0
    %3369 = vmatpush1.msra.mxu0 %v3352
    %3370 = vmatprep.subr.mxu0 0.0
    %3371 = vmatpush1.msra.mxu0 %v3353
    %3372 = vmatprep.subr.mxu0 0.0
    %3373 = vmatpush1.msra.mxu0 %v3354
    %3374 = vmatprep.subr.mxu0 0.0
    %3375 = vmatpush1.msra.mxu0 %v3355
    %3376 = vmatprep.subr.mxu0 0.0
    %3377 = vmatpush1.msra.mxu0 0.0
    %3378 = vmatprep.subr.mxu0 0.0
    %3379 = vmatpush1.msra.mxu0 0.0
    %3380 = vmatprep.subr.mxu0 0.0
    %3381 = vmatpush1.msra.mxu0 0.0
    %3382 = vmatprep.subr.mxu0 0.0
    %3383 = vmatpush1.msra.mxu0 0.0
    %3384 = vmatprep.subr.mxu0 0.0
    %3385 = vmatpush1.msra.mxu0 0.0
    %3386 = vmatprep.subr.mxu0 0.0
    %3387 = vmatpush1.msra.mxu0 0.0
    %3388 = vmatprep.subr.mxu0 0.0
    %3389 = vmatpush1.msra.mxu0 0.0
    %3390 = vmatprep.subr.mxu0 0.0
    %3391 = vmatpush1.msra.mxu0 0.0
    %3392 = vmatprep.subr.mxu0 0.0
    %3393 = vmatpush1.msra.mxu0 0.0
    %3394 = vmatprep.subr.mxu0 0.0
    %3395 = vmatpush1.msra.mxu0 0.0
    %3396 = vmatprep.subr.mxu0 0.0
    %3397 = vmatpush1.msra.mxu0 0.0
    %3398 = vmatprep.subr.mxu0 0.0
    %3399 = vmatpush1.msra.mxu0 0.0
    %3400 = vmatprep.subr.mxu0 0.0
    %3401 = vmatpush1.msra.mxu0 0.0
    %3402 = vmatprep.subr.mxu0 0.0
    %3403 = vmatpush1.msra.mxu0 0.0
    %3404 = vmatprep.subr.mxu0 0.0
    %3405 = vmatpush1.msra.mxu0 0.0
    %3406 = vmatprep.subr.mxu0 0.0
    %3407 = vmatpush1.msra.mxu0 0.0
    %3408 = vmatprep.subr.mxu0 0.0
    %3409 = vmatpush1.msra.mxu0 0.0
    %3410 = vmatprep.subr.mxu0 0.0
    %3411 = vmatpush1.msra.mxu0 0.0
    %3412 = vmatprep.subr.mxu0 0.0
    %3413 = vmatpush1.msra.mxu0 0.0
    %3414 = vmatprep.subr.mxu0 0.0
    %3415 = vmatpush1.msra.mxu0 0.0
    %3416 = vmatprep.subr.mxu0 0.0
    %3417 = vmatpush1.msra.mxu0 0.0
    %3418 = vmatprep.subr.mxu0 0.0
    %3419 = vmatpush1.msra.mxu0 0.0
    %3420 = vmatprep.subr.mxu0 0.0
    %3421 = vmatpush1.msra.mxu0 0.0
    %3422 = vmatprep.subr.mxu0 0.0
    %3423 = vmatpush1.msra.mxu0 0.0
    %3424 = vmatprep.subr.mxu0 0.0
    %3425 = vmatpush1.msra.mxu0 0.0
    %3426 = vmatprep.subr.mxu0 0.0
    %3427 = vmatpush1.msra.mxu0 0.0
    %3428 = vmatprep.subr.mxu0 0.0
    %3429 = vmatpush1.msra.mxu0 0.0
    %3430 = vmatprep.subr.mxu0 0.0
    %3431 = vmatpush1.msra.mxu0 0.0
    %3432 = vmatprep.mubr.f32.mxu0 0.0
    %3433 = vmatmul.mubr.f32.gmra.mrb[0].mxu0 %v3357
    %v3434 = vpop.f32.mrb[0].mxu0
    %v3435 = vadd.f32 0.0, %v3434
    %v3436 = vpop.f32.mrb[0].mxu0
    %3437 = vmatprep.mubr.f32.mxu0 0.0
    %3438 = vmatmul.mubr.f32.gmra.mrb[0].mxu0 %v3360
    %v3439 = vpop.f32.mrb[0].mxu0
    %v3440 = vadd.f32 0.0, %v3439
    %v3441 = vpop.f32.mrb[0].mxu0
    %3442 = vmatprep.mubr.f32.mxu0 0.0
    %3443 = vmatmul.mubr.f32.gmra.mrb[0].mxu0 %v3363
    %v3444 = vpop.f32.mrb[0].mxu0
    %v3445 = vadd.f32 0.0, %v3444
    %v3446 = vpop.f32.mrb[0].mxu0
    %3447 = vmatprep.mubr.f32.mxu0 0.0
    %3448 = vmatmul.mubr.f32.gmra.mrb[0].mxu0 %v3366
    %v3449 = vpop.f32.mrb[0].mxu0
    %v3450 = vadd.f32 0.0, %v3449
    %v3451 = vpop.f32.mrb[0].mxu0
    %3452 = vdwg.mxu0
    %v3453 = vsub.f32 %v1828, %v3435
    %v3454 = vsub.f32 %v1829, %v3440
    %v3455 = vsub.f32 %v1830, %v3445
    %v3456 = vsub.f32 %v1831, %v3450
    %3457 = vmatprep.subr.mxu0 0.0
    %3458 = vmatpush1.msra.mxu0 %v3453
    %3459 = vmatprep.subr.mxu0 0.0
    %3460 = vmatpush1.msra.mxu0 %v3454
    %3461 = vmatprep.subr.mxu0 0.0
    %3462 = vmatpush1.msra.mxu0 %v3455
    %3463 = vmatprep.subr.mxu0 0.0
    %3464 = vmatpush1.msra.mxu0 %v3456
    %3465 = vmatprep.subr.mxu0 0.0
    %3466 = vmatpush1.msra.mxu0 0.0
    %3467 = vmatprep.subr.mxu0 0.0
    %3468 = vmatpush1.msra.mxu0 0.0
    %3469 = vmatprep.subr.mxu0 0.0
    %3470 = vmatpush1.msra.mxu0 0.0
    %3471 = vmatprep.subr.mxu0 0.0
    %3472 = vmatpush1.msra.mxu0 0.0
    %3473 = vmatprep.subr.mxu0 0.0
    %3474 = vmatpush1.msra.mxu0 0.0
    %3475 = vmatprep.subr.mxu0 0.0
    %3476 = vmatpush1.msra.mxu0 0.0
    %3477 = vmatprep.subr.mxu0 0.0
    %3478 = vmatpush1.msra.mxu0 0.0
    %3479 = vmatprep.subr.mxu0 0.0
    %3480 = vmatpush1.msra.mxu0 0.0
    %3481 = vmatprep.subr.mxu0 0.0
    %3482 = vmatpush1.msra.mxu0 0.0
    %3483 = vmatprep.subr.mxu0 0.0
    %3484 = vmatpush1.msra.mxu0 0.0
    %3485 = vmatprep.subr.mxu0 0.0
    %3486 = vmatpush1.msra.mxu0 0.0
    %3487 = vmatprep.subr.mxu0 0.0
    %3488 = vmatpush1.msra.mxu0 0.0
    %3489 = vmatprep.subr.mxu0 0.0
    %3490 = vmatpush1.msra.mxu0 0.0
    %3491 = vmatprep.subr.mxu0 0.0
    %3492 = vmatpush1.msra.mxu0 0.0
    %3493 = vmatprep.subr.mxu0 0.0
    %3494 = vmatpush1.msra.mxu0 0.0
    %3495 = vmatprep.subr.mxu0 0.0
    %3496 = vmatpush1.msra.mxu0 0.0
    %3497 = vmatprep.subr.mxu0 0.0
    %3498 = vmatpush1.msra.mxu0 0.0
    %3499 = vmatprep.subr.mxu0 0.0
    %3500 = vmatpush1.msra.mxu0 0.0
    %3501 = vmatprep.subr.mxu0 0.0
    %3502 = vmatpush1.msra.mxu0 0.0
    %3503 = vmatprep.subr.mxu0 0.0
    %3504 = vmatpush1.msra.mxu0 0.0
    %3505 = vmatprep.subr.mxu0 0.0
    %3506 = vmatpush1.msra.mxu0 0.0
    %3507 = vmatprep.subr.mxu0 0.0
    %3508 = vmatpush1.msra.mxu0 0.0
    %3509 = vmatprep.subr.mxu0 0.0
    %3510 = vmatpush1.msra.mxu0 0.0
    %3511 = vmatprep.subr.mxu0 0.0
    %3512 = vmatpush1.msra.mxu0 0.0
    %3513 = vmatprep.subr.mxu0 0.0
    %3514 = vmatpush1.msra.mxu0 0.0
    %3515 = vmatprep.subr.mxu0 0.0
    %3516 = vmatpush1.msra.mxu0 0.0
    %3517 = vmatprep.subr.mxu0 0.0
    %3518 = vmatpush1.msra.mxu0 0.0
    %3519 = vmatprep.subr.mxu0 0.0
    %3520 = vmatpush1.msra.mxu0 0.0
    %3521 = vmatprep.mubr.f32.mxu0 0.0
    %3522 = vmatmul.mubr.f32.gmra.mrb[0].mxu0 %v3357
    %v3523 = vpop.f32.mrb[0].mxu0
    %v3524 = vadd.f32 0.0, %v3523
    %v3525 = vpop.f32.mrb[0].mxu0
    %3526 = vmatprep.mubr.f32.mxu0 0.0
    %3527 = vmatmul.mubr.f32.gmra.mrb[0].mxu0 %v3360
    %v3528 = vpop.f32.mrb[0].mxu0
    %v3529 = vadd.f32 0.0, %v3528
    %v3530 = vpop.f32.mrb[0].mxu0
    %3531 = vmatprep.mubr.f32.mxu0 0.0
    %3532 = vmatmul.mubr.f32.gmra.mrb[0].mxu0 %v3363
    %v3533 = vpop.f32.mrb[0].mxu0
    %v3534 = vadd.f32 0.0, %v3533
    %v3535 = vpop.f32.mrb[0].mxu0
    %3536 = vmatprep.mubr.f32.mxu0 0.0
    %3537 = vmatmul.mubr.f32.gmra.mrb[0].mxu0 %v3366
    %v3538 = vpop.f32.mrb[0].mxu0
    %v3539 = vadd.f32 0.0, %v3538
    %v3540 = vpop.f32.mrb[0].mxu0
    %3541 = vdwg.mxu0
    %v3542 = vsub.f32 %v1933, %v3524
    %v3543 = vsub.f32 %v1934, %v3529
    %v3544 = vsub.f32 %v1935, %v3534
    %v3545 = vsub.f32 %v1936, %v3539
    %v3547 = vsel %vm86, %v3263, 0
    %v3550 = vsel %vm86, %v3264, 0
    %v3553 = vsel %vm86, %v3265, 0
    %v3556 = vsel %vm86, %v3266, 0
    %3558 = vmatprep.subr.mxu0 0.0
    %3559 = vmatpush1.msra.mxu0 %v3542
    %3560 = vmatprep.subr.mxu0 0.0
    %3561 = vmatpush1.msra.mxu0 %v3543
    %3562 = vmatprep.subr.mxu0 0.0
    %3563 = vmatpush1.msra.mxu0 %v3544
    %3564 = vmatprep.subr.mxu0 0.0
    %3565 = vmatpush1.msra.mxu0 %v3545
    %3566 = vmatprep.subr.mxu0 0.0
    %3567 = vmatpush1.msra.mxu0 0.0
    %3568 = vmatprep.subr.mxu0 0.0
    %3569 = vmatpush1.msra.mxu0 0.0
    %3570 = vmatprep.subr.mxu0 0.0
    %3571 = vmatpush1.msra.mxu0 0.0
    %3572 = vmatprep.subr.mxu0 0.0
    %3573 = vmatpush1.msra.mxu0 0.0
    %3574 = vmatprep.subr.mxu0 0.0
    %3575 = vmatpush1.msra.mxu0 0.0
    %3576 = vmatprep.subr.mxu0 0.0
    %3577 = vmatpush1.msra.mxu0 0.0
    %3578 = vmatprep.subr.mxu0 0.0
    %3579 = vmatpush1.msra.mxu0 0.0
    %3580 = vmatprep.subr.mxu0 0.0
    %3581 = vmatpush1.msra.mxu0 0.0
    %3582 = vmatprep.subr.mxu0 0.0
    %3583 = vmatpush1.msra.mxu0 0.0
    %3584 = vmatprep.subr.mxu0 0.0
    %3585 = vmatpush1.msra.mxu0 0.0
    %3586 = vmatprep.subr.mxu0 0.0
    %3587 = vmatpush1.msra.mxu0 0.0
    %3588 = vmatprep.subr.mxu0 0.0
    %3589 = vmatpush1.msra.mxu0 0.0
    %3590 = vmatprep.subr.mxu0 0.0
    %3591 = vmatpush1.msra.mxu0 0.0
    %3592 = vmatprep.subr.mxu0 0.0
    %3593 = vmatpush1.msra.mxu0 0.0
    %3594 = vmatprep.subr.mxu0 0.0
    %3595 = vmatpush1.msra.mxu0 0.0
    %3596 = vmatprep.subr.mxu0 0.0
    %3597 = vmatpush1.msra.mxu0 0.0
    %3598 = vmatprep.subr.mxu0 0.0
    %3599 = vmatpush1.msra.mxu0 0.0
    %3600 = vmatprep.subr.mxu0 0.0
    %3601 = vmatpush1.msra.mxu0 0.0
    %3602 = vmatprep.subr.mxu0 0.0
    %3603 = vmatpush1.msra.mxu0 0.0
    %3604 = vmatprep.subr.mxu0 0.0
    %3605 = vmatpush1.msra.mxu0 0.0
    %3606 = vmatprep.subr.mxu0 0.0
    %3607 = vmatpush1.msra.mxu0 0.0
    %3608 = vmatprep.subr.mxu0 0.0
    %3609 = vmatpush1.msra.mxu0 0.0
    %3610 = vmatprep.subr.mxu0 0.0
    %3611 = vmatpush1.msra.mxu0 0.0
    %3612 = vmatprep.subr.mxu0 0.0
    %3613 = vmatpush1.msra.mxu0 0.0
    %3614 = vmatprep.subr.mxu0 0.0
    %3615 = vmatpush1.msra.mxu0 0.0
    %3616 = vmatprep.subr.mxu0 0.0
    %3617 = vmatpush1.msra.mxu0 0.0
    %3618 = vmatprep.subr.mxu0 0.0
    %3619 = vmatpush1.msra.mxu0 0.0
    %3620 = vmatprep.subr.mxu0 0.0
    %3621 = vmatpush1.msra.mxu0 0.0
    %3622 = vmatprep.mubr.f32.mxu0 0.0
    %3623 = vmatmul.mubr.f32.gmra.mrb[0].mxu0 %v3547
    %v3624 = vpop.f32.mrb[0].mxu0
    %v3625 = vadd.f32 0.0, %v3624
    %v3626 = vpop.f32.mrb[0].mxu0
    %3627 = vmatprep.mubr.f32.mxu0 0.0
    %3628 = vmatmul.mubr.f32.gmra.mrb[0].mxu0 %v3550
    %v3629 = vpop.f32.mrb[0].mxu0
    %v3630 = vadd.f32 0.0, %v3629
    %v3631 = vpop.f32.mrb[0].mxu0
    %3632 = vmatprep.mubr.f32.mxu0 0.0
    %3633 = vmatmul.mubr.f32.gmra.mrb[0].mxu0 %v3553
    %v3634 = vpop.f32.mrb[0].mxu0
    %v3635 = vadd.f32 0.0, %v3634
    %v3636 = vpop.f32.mrb[0].mxu0
    %3637 = vmatprep.mubr.f32.mxu0 0.0
    %3638 = vmatmul.mubr.f32.gmra.mrb[0].mxu0 %v3556
    %v3639 = vpop.f32.mrb[0].mxu0
    %v3640 = vadd.f32 0.0, %v3639
    %v3641 = vpop.f32.mrb[0].mxu0
    %3642 = vdwg.mxu0
    %v3643 = vmul.f32 %v3625, 0.25
    %v3644 = vmul.f32 %v3630, 0.25
    %v3645 = vmul.f32 %v3635, 0.25
    %v3646 = vmul.f32 %v3640, 0.25
    %3647 = vmatprep.subr.mxu0 0.0
    %3648 = vmatpush1.msra.mxu0 %v3643
    %3649 = vmatprep.subr.mxu0 0.0
    %3650 = vmatpush1.msra.mxu0 %v3644
    %3651 = vmatprep.subr.mxu0 0.0
    %3652 = vmatpush1.msra.mxu0 %v3645
    %3653 = vmatprep.subr.mxu0 0.0
    %3654 = vmatpush1.msra.mxu0 %v3646
    %3655 = vmatprep.subr.mxu0 0.0
    %3656 = vmatpush1.msra.mxu0 0.0
    %3657 = vmatprep.subr.mxu0 0.0
    %3658 = vmatpush1.msra.mxu0 0.0
    %3659 = vmatprep.subr.mxu0 0.0
    %3660 = vmatpush1.msra.mxu0 0.0
    %3661 = vmatprep.subr.mxu0 0.0
    %3662 = vmatpush1.msra.mxu0 0.0
    %3663 = vmatprep.subr.mxu0 0.0
    %3664 = vmatpush1.msra.mxu0 0.0
    %3665 = vmatprep.subr.mxu0 0.0
    %3666 = vmatpush1.msra.mxu0 0.0
    %3667 = vmatprep.subr.mxu0 0.0
    %3668 = vmatpush1.msra.mxu0 0.0
    %3669 = vmatprep.subr.mxu0 0.0
    %3670 = vmatpush1.msra.mxu0 0.0
    %3671 = vmatprep.subr.mxu0 0.0
    %3672 = vmatpush1.msra.mxu0 0.0
    %3673 = vmatprep.subr.mxu0 0.0
    %3674 = vmatpush1.msra.mxu0 0.0
    %3675 = vmatprep.subr.mxu0 0.0
    %3676 = vmatpush1.msra.mxu0 0.0
    %3677 = vmatprep.subr.mxu0 0.0
    %3678 = vmatpush1.msra.mxu0 0.0
    %3679 = vmatprep.subr.mxu0 0.0
    %3680 = vmatpush1.msra.mxu0 0.0
    %3681 = vmatprep.subr.mxu0 0.0
    %3682 = vmatpush1.msra.mxu0 0.0
    %3683 = vmatprep.subr.mxu0 0.0
    %3684 = vmatpush1.msra.mxu0 0.0
    %3685 = vmatprep.subr.mxu0 0.0
    %3686 = vmatpush1.msra.mxu0 0.0
    %3687 = vmatprep.subr.mxu0 0.0
    %3688 = vmatpush1.msra.mxu0 0.0
    %3689 = vmatprep.subr.mxu0 0.0
    %3690 = vmatpush1.msra.mxu0 0.0
    %3691 = vmatprep.subr.mxu0 0.0
    %3692 = vmatpush1.msra.mxu0 0.0
    %3693 = vmatprep.subr.mxu0 0.0
    %3694 = vmatpush1.msra.mxu0 0.0
    %3695 = vmatprep.subr.mxu0 0.0
    %3696 = vmatpush1.msra.mxu0 0.0
    %3697 = vmatprep.subr.mxu0 0.0
    %3698 = vmatpush1.msra.mxu0 0.0
    %3699 = vmatprep.subr.mxu0 0.0
    %3700 = vmatpush1.msra.mxu0 0.0
    %3701 = vmatprep.subr.mxu0 0.0
    %3702 = vmatpush1.msra.mxu0 0.0
    %3703 = vmatprep.subr.mxu0 0.0
    %3704 = vmatpush1.msra.mxu0 0.0
    %3705 = vmatprep.subr.mxu0 0.0
    %3706 = vmatpush1.msra.mxu0 0.0
    %3707 = vmatprep.subr.mxu0 0.0
    %3708 = vmatpush1.msra.mxu0 0.0
    %3709 = vmatprep.subr.mxu0 0.0
    %3710 = vmatpush1.msra.mxu0 0.0
    %3711 = vmatprep.mubr.f32.mxu0 0.0
    %3712 = vmatmul.mubr.f32.gmra.mrb[0].mxu0 %v1724
    %v3713 = vpop.f32.mrb[0].mxu0
    %v3714 = vadd.f32 0.0, %v3713
    %v3715 = vpop.f32.mrb[0].mxu0
    %3716 = vmatprep.mubr.f32.mxu0 0.0
    %3717 = vmatmul.mubr.f32.gmra.mrb[0].mxu0 %v1727
    %v3718 = vpop.f32.mrb[0].mxu0
    %v3719 = vadd.f32 0.0, %v3718
    %v3720 = vpop.f32.mrb[0].mxu0
    %3721 = vmatprep.mubr.f32.mxu0 0.0
    %3722 = vmatmul.mubr.f32.gmra.mrb[0].mxu0 %v1730
    %v3723 = vpop.f32.mrb[0].mxu0
    %v3724 = vadd.f32 0.0, %v3723
    %v3725 = vpop.f32.mrb[0].mxu0
    %3726 = vmatprep.mubr.f32.mxu0 0.0
    %3727 = vmatmul.mubr.f32.gmra.mrb[0].mxu0 %v1733
    %v3728 = vpop.f32.mrb[0].mxu0
    %v3729 = vadd.f32 0.0, %v3728
    %v3730 = vpop.f32.mrb[0].mxu0
    %3731 = vdwg.mxu0
    %v3732 = vsub.f32 %v1820, %v3714
    %v3733 = vsub.f32 %v1821, %v3719
    %v3734 = vsub.f32 %v1822, %v3724
    %v3735 = vsub.f32 %v1823, %v3729
    %v3737 = vsel %vm86, %v3714, 0
    %v3740 = vsel %vm86, %v3719, 0
    %v3743 = vsel %vm86, %v3724, 0
    %v3746 = vsel %vm86, %v3729, 0
    %3748 = vmatprep.subr.mxu0 0.0
    %3749 = vmatpush1.msra.mxu0 %v3732
    %3750 = vmatprep.subr.mxu0 0.0
    %3751 = vmatpush1.msra.mxu0 %v3733
    %3752 = vmatprep.subr.mxu0 0.0
    %3753 = vmatpush1.msra.mxu0 %v3734
    %3754 = vmatprep.subr.mxu0 0.0
    %3755 = vmatpush1.msra.mxu0 %v3735
    %3756 = vmatprep.subr.mxu0 0.0
    %3757 = vmatpush1.msra.mxu0 0.0
    %3758 = vmatprep.subr.mxu0 0.0
    %3759 = vmatpush1.msra.mxu0 0.0
    %3760 = vmatprep.subr.mxu0 0.0
    %3761 = vmatpush1.msra.mxu0 0.0
    %3762 = vmatprep.subr.mxu0 0.0
    %3763 = vmatpush1.msra.mxu0 0.0
    %3764 = vmatprep.subr.mxu0 0.0
    %3765 = vmatpush1.msra.mxu0 0.0
    %3766 = vmatprep.subr.mxu0 0.0
    %3767 = vmatpush1.msra.mxu0 0.0
    %3768 = vmatprep.subr.mxu0 0.0
    %3769 = vmatpush1.msra.mxu0 0.0
    %3770 = vmatprep.subr.mxu0 0.0
    %3771 = vmatpush1.msra.mxu0 0.0
    %3772 = vmatprep.subr.mxu0 0.0
    %3773 = vmatpush1.msra.mxu0 0.0
    %3774 = vmatprep.subr.mxu0 0.0
    %3775 = vmatpush1.msra.mxu0 0.0
    %3776 = vmatprep.subr.mxu0 0.0
    %3777 = vmatpush1.msra.mxu0 0.0
    %3778 = vmatprep.subr.mxu0 0.0
    %3779 = vmatpush1.msra.mxu0 0.0
    %3780 = vmatprep.subr.mxu0 0.0
    %3781 = vmatpush1.msra.mxu0 0.0
    %3782 = vmatprep.subr.mxu0 0.0
    %3783 = vmatpush1.msra.mxu0 0.0
    %3784 = vmatprep.subr.mxu0 0.0
    %3785 = vmatpush1.msra.mxu0 0.0
    %3786 = vmatprep.subr.mxu0 0.0
    %3787 = vmatpush1.msra.mxu0 0.0
    %3788 = vmatprep.subr.mxu0 0.0
    %3789 = vmatpush1.msra.mxu0 0.0
    %3790 = vmatprep.subr.mxu0 0.0
    %3791 = vmatpush1.msra.mxu0 0.0
    %3792 = vmatprep.subr.mxu0 0.0
    %3793 = vmatpush1.msra.mxu0 0.0
    %3794 = vmatprep.subr.mxu0 0.0
    %3795 = vmatpush1.msra.mxu0 0.0
    %3796 = vmatprep.subr.mxu0 0.0
    %3797 = vmatpush1.msra.mxu0 0.0
    %3798 = vmatprep.subr.mxu0 0.0
    %3799 = vmatpush1.msra.mxu0 0.0
    %3800 = vmatprep.subr.mxu0 0.0
    %3801 = vmatpush1.msra.mxu0 0.0
    %3802 = vmatprep.subr.mxu0 0.0
    %3803 = vmatpush1.msra.mxu0 0.0
    %3804 = vmatprep.subr.mxu0 0.0
    %3805 = vmatpush1.msra.mxu0 0.0
    %3806 = vmatprep.subr.mxu0 0.0
    %3807 = vmatpush1.msra.mxu0 0.0
    %3808 = vmatprep.subr.mxu0 0.0
    %3809 = vmatpush1.msra.mxu0 0.0
    %3810 = vmatprep.subr.mxu0 0.0
    %3811 = vmatpush1.msra.mxu0 0.0
    %3812 = vmatprep.mubr.f32.mxu0 0.0
    %3813 = vmatmul.mubr.f32.gmra.mrb[0].mxu0 %v3737
    %v3814 = vpop.f32.mrb[0].mxu0
    %v3815 = vadd.f32 0.0, %v3814
    %v3816 = vpop.f32.mrb[0].mxu0
    %3817 = vmatprep.mubr.f32.mxu0 0.0
    %3818 = vmatmul.mubr.f32.gmra.mrb[0].mxu0 %v3740
    %v3819 = vpop.f32.mrb[0].mxu0
    %v3820 = vadd.f32 0.0, %v3819
    %v3821 = vpop.f32.mrb[0].mxu0
    %3822 = vmatprep.mubr.f32.mxu0 0.0
    %3823 = vmatmul.mubr.f32.gmra.mrb[0].mxu0 %v3743
    %v3824 = vpop.f32.mrb[0].mxu0
    %v3825 = vadd.f32 0.0, %v3824
    %v3826 = vpop.f32.mrb[0].mxu0
    %3827 = vmatprep.mubr.f32.mxu0 0.0
    %3828 = vmatmul.mubr.f32.gmra.mrb[0].mxu0 %v3746
    %v3829 = vpop.f32.mrb[0].mxu0
    %v3830 = vadd.f32 0.0, %v3829
    %v3831 = vpop.f32.mrb[0].mxu0
    %3832 = vdwg.mxu0
    %v3833 = vsub.f32 %v1828, %v3815
    %v3834 = vsub.f32 %v1829, %v3820
    %v3835 = vsub.f32 %v1830, %v3825
    %v3836 = vsub.f32 %v1831, %v3830
    %3837 = vmatprep.subr.mxu0 0.0
    %3838 = vmatpush1.msra.mxu0 %v3833
    %3839 = vmatprep.subr.mxu0 0.0
    %3840 = vmatpush1.msra.mxu0 %v3834
    %3841 = vmatprep.subr.mxu0 0.0
    %3842 = vmatpush1.msra.mxu0 %v3835
    %3843 = vmatprep.subr.mxu0 0.0
    %3844 = vmatpush1.msra.mxu0 %v3836
    %3845 = vmatprep.subr.mxu0 0.0
    %3846 = vmatpush1.msra.mxu0 0.0
    %3847 = vmatprep.subr.mxu0 0.0
    %3848 = vmatpush1.msra.mxu0 0.0
    %3849 = vmatprep.subr.mxu0 0.0
    %3850 = vmatpush1.msra.mxu0 0.0
    %3851 = vmatprep.subr.mxu0 0.0
    %3852 = vmatpush1.msra.mxu0 0.0
    %3853 = vmatprep.subr.mxu0 0.0
    %3854 = vmatpush1.msra.mxu0 0.0
    %3855 = vmatprep.subr.mxu0 0.0
    %3856 = vmatpush1.msra.mxu0 0.0
    %3857 = vmatprep.subr.mxu0 0.0
    %3858 = vmatpush1.msra.mxu0 0.0
    %3859 = vmatprep.subr.mxu0 0.0
    %3860 = vmatpush1.msra.mxu0 0.0
    %3861 = vmatprep.subr.mxu0 0.0
    %3862 = vmatpush1.msra.mxu0 0.0
    %3863 = vmatprep.subr.mxu0 0.0
    %3864 = vmatpush1.msra.mxu0 0.0
    %3865 = vmatprep.subr.mxu0 0.0
    %3866 = vmatpush1.msra.mxu0 0.0
    %3867 = vmatprep.subr.mxu0 0.0
    %3868 = vmatpush1.msra.mxu0 0.0
    %3869 = vmatprep.subr.mxu0 0.0
    %3870 = vmatpush1.msra.mxu0 0.0
    %3871 = vmatprep.subr.mxu0 0.0
    %3872 = vmatpush1.msra.mxu0 0.0
    %3873 = vmatprep.subr.mxu0 0.0
    %3874 = vmatpush1.msra.mxu0 0.0
    %3875 = vmatprep.subr.mxu0 0.0
    %3876 = vmatpush1.msra.mxu0 0.0
    %3877 = vmatprep.subr.mxu0 0.0
    %3878 = vmatpush1.msra.mxu0 0.0
    %3879 = vmatprep.subr.mxu0 0.0
    %3880 = vmatpush1.msra.mxu0 0.0
    %3881 = vmatprep.subr.mxu0 0.0
    %3882 = vmatpush1.msra.mxu0 0.0
    %3883 = vmatprep.subr.mxu0 0.0
    %3884 = vmatpush1.msra.mxu0 0.0
    %3885 = vmatprep.subr.mxu0 0.0
    %3886 = vmatpush1.msra.mxu0 0.0
    %3887 = vmatprep.subr.mxu0 0.0
    %3888 = vmatpush1.msra.mxu0 0.0
    %3889 = vmatprep.subr.mxu0 0.0
    %3890 = vmatpush1.msra.mxu0 0.0
    %3891 = vmatprep.subr.mxu0 0.0
    %3892 = vmatpush1.msra.mxu0 0.0
    %3893 = vmatprep.subr.mxu0 0.0
    %3894 = vmatpush1.msra.mxu0 0.0
    %3895 = vmatprep.subr.mxu0 0.0
    %3896 = vmatpush1.msra.mxu0 0.0
    %3897 = vmatprep.subr.mxu0 0.0
    %3898 = vmatpush1.msra.mxu0 0.0
    %3899 = vmatprep.subr.mxu0 0.0
    %3900 = vmatpush1.msra.mxu0 0.0
    %3901 = vmatprep.mubr.f32.mxu0 0.0
    %3902 = vmatmul.mubr.f32.gmra.mrb[0].mxu0 %v3737
    %v3903 = vpop.f32.mrb[0].mxu0
    %v3904 = vadd.f32 0.0, %v3903
    %v3905 = vpop.f32.mrb[0].mxu0
    %3906 = vmatprep.mubr.f32.mxu0 0.0
    %3907 = vmatmul.mubr.f32.gmra.mrb[0].mxu0 %v3740
    %v3908 = vpop.f32.mrb[0].mxu0
    %v3909 = vadd.f32 0.0, %v3908
    %v3910 = vpop.f32.mrb[0].mxu0
    %3911 = vmatprep.mubr.f32.mxu0 0.0
    %3912 = vmatmul.mubr.f32.gmra.mrb[0].mxu0 %v3743
    %v3913 = vpop.f32.mrb[0].mxu0
    %v3914 = vadd.f32 0.0, %v3913
    %v3915 = vpop.f32.mrb[0].mxu0
    %3916 = vmatprep.mubr.f32.mxu0 0.0
    %3917 = vmatmul.mubr.f32.gmra.mrb[0].mxu0 %v3746
    %v3918 = vpop.f32.mrb[0].mxu0
    %v3919 = vadd.f32 0.0, %v3918
    %v3920 = vpop.f32.mrb[0].mxu0
    %3921 = vdwg.mxu0
    %v3922 = vsub.f32 %v1933, %v3904
    %v3923 = vsub.f32 %v1934, %v3909
    %v3924 = vsub.f32 %v1935, %v3914
    %v3925 = vsub.f32 %v1936, %v3919
    %v3927 = vsel %vm86, %v3643, 0
    %v3930 = vsel %vm86, %v3644, 0
    %v3933 = vsel %vm86, %v3645, 0
    %v3936 = vsel %vm86, %v3646, 0
    %3938 = vmatprep.subr.mxu0 0.0
    %3939 = vmatpush1.msra.mxu0 %v3922
    %3940 = vmatprep.subr.mxu0 0.0
    %3941 = vmatpush1.msra.mxu0 %v3923
    %3942 = vmatprep.subr.mxu0 0.0
    %3943 = vmatpush1.msra.mxu0 %v3924
    %3944 = vmatprep.subr.mxu0 0.0
    %3945 = vmatpush1.msra.mxu0 %v3925
    %3946 = vmatprep.subr.mxu0 0.0
    %3947 = vmatpush1.msra.mxu0 0.0
    %3948 = vmatprep.subr.mxu0 0.0
    %3949 = vmatpush1.msra.mxu0 0.0
    %3950 = vmatprep.subr.mxu0 0.0
    %3951 = vmatpush1.msra.mxu0 0.0
    %3952 = vmatprep.subr.mxu0 0.0
    %3953 = vmatpush1.msra.mxu0 0.0
    %3954 = vmatprep.subr.mxu0 0.0
    %3955 = vmatpush1.msra.mxu0 0.0
    %3956 = vmatprep.subr.mxu0 0.0
    %3957 = vmatpush1.msra.mxu0 0.0
    %3958 = vmatprep.subr.mxu0 0.0
    %3959 = vmatpush1.msra.mxu0 0.0
    %3960 = vmatprep.subr.mxu0 0.0
    %3961 = vmatpush1.msra.mxu0 0.0
    %3962 = vmatprep.subr.mxu0 0.0
    %3963 = vmatpush1.msra.mxu0 0.0
    %3964 = vmatprep.subr.mxu0 0.0
    %3965 = vmatpush1.msra.mxu0 0.0
    %3966 = vmatprep.subr.mxu0 0.0
    %3967 = vmatpush1.msra.mxu0 0.0
    %3968 = vmatprep.subr.mxu0 0.0
    %3969 = vmatpush1.msra.mxu0 0.0
    %3970 = vmatprep.subr.mxu0 0.0
    %3971 = vmatpush1.msra.mxu0 0.0
    %3972 = vmatprep.subr.mxu0 0.0
    %3973 = vmatpush1.msra.mxu0 0.0
    %3974 = vmatprep.subr.mxu0 0.0
    %3975 = vmatpush1.msra.mxu0 0.0
    %3976 = vmatprep.subr.mxu0 0.0
    %3977 = vmatpush1.msra.mxu0 0.0
    %3978 = vmatprep.subr.mxu0 0.0
    %3979 = vmatpush1.msra.mxu0 0.0
    %3980 = vmatprep.subr.mxu0 0.0
    %3981 = vmatpush1.msra.mxu0 0.0
    %3982 = vmatprep.subr.mxu0 0.0
    %3983 = vmatpush1.msra.mxu0 0.0
    %3984 = vmatprep.subr.mxu0 0.0
    %3985 = vmatpush1.msra.mxu0 0.0
    %3986 = vmatprep.subr.mxu0 0.0
    %3987 = vmatpush1.msra.mxu0 0.0
    %3988 = vmatprep.subr.mxu0 0.0
    %3989 = vmatpush1.msra.mxu0 0.0
    %3990 = vmatprep.subr.mxu0 0.0
    %3991 = vmatpush1.msra.mxu0 0.0
    %3992 = vmatprep.subr.mxu0 0.0
    %3993 = vmatpush1.msra.mxu0 0.0
    %3994 = vmatprep.subr.mxu0 0.0
    %3995 = vmatpush1.msra.mxu0 0.0
    %3996 = vmatprep.subr.mxu0 0.0
    %3997 = vmatpush1.msra.mxu0 0.0
    %3998 = vmatprep.subr.mxu0 0.0
    %3999 = vmatpush1.msra.mxu0 0.0
    %4000 = vmatprep.subr.mxu0 0.0
    %4001 = vmatpush1.msra.mxu0 0.0
    %4002 = vmatprep.mubr.f32.mxu0 0.0
    %4003 = vmatmul.mubr.f32.gmra.mrb[0].mxu0 %v3927
    %v4004 = vpop.f32.mrb[0].mxu0
    %v4005 = vadd.f32 0.0, %v4004
    %v4006 = vpop.f32.mrb[0].mxu0
    %4007 = vmatprep.mubr.f32.mxu0 0.0
    %4008 = vmatmul.mubr.f32.gmra.mrb[0].mxu0 %v3930
    %v4009 = vpop.f32.mrb[0].mxu0
    %v4010 = vadd.f32 0.0, %v4009
    %v4011 = vpop.f32.mrb[0].mxu0
    %4012 = vmatprep.mubr.f32.mxu0 0.0
    %4013 = vmatmul.mubr.f32.gmra.mrb[0].mxu0 %v3933
    %v4014 = vpop.f32.mrb[0].mxu0
    %v4015 = vadd.f32 0.0, %v4014
    %v4016 = vpop.f32.mrb[0].mxu0
    %4017 = vmatprep.mubr.f32.mxu0 0.0
    %4018 = vmatmul.mubr.f32.gmra.mrb[0].mxu0 %v3936
    %v4019 = vpop.f32.mrb[0].mxu0
    %v4020 = vadd.f32 0.0, %v4019
    %v4021 = vpop.f32.mrb[0].mxu0
    %4022 = vdwg.mxu0
    %v4023 = vmul.f32 %v4005, 0.25
    %v4024 = vmul.f32 %v4010, 0.25
    %v4025 = vmul.f32 %v4015, 0.25
    %v4026 = vmul.f32 %v4020, 0.25
    %v4027 = vld [vmem:[%s12] sm:$0x7]
    %4028 = vrot.lane.b32.xlu0 %v243, 64
    %v4029 = vpop.permute.xlu0 %4028
    %4030 = vrot.lane.b32.xlu0 %v248, 64
    %v4031 = vpop.permute.xlu0 %4030
    %v4035 = vsel %vm265, %v872, 0
    %v4038 = vsel %vm265, %v874, 0
    %4040 = vmatprep.subr.mxu0 0.0
    %4041 = vmatpush1.msra.mxu0 %v4029
    %4042 = vmatprep.subr.mxu0 0.0
    %4043 = vmatpush1.msra.mxu0 %v4031
    %4044 = vmatprep.subr.mxu0 0.0
    %4045 = vmatpush1.msra.mxu0 0.0
    %4046 = vmatprep.subr.mxu0 0.0
    %4047 = vmatpush1.msra.mxu0 0.0
    %4048 = vmatprep.subr.mxu0 0.0
    %4049 = vmatpush1.msra.mxu0 0.0
    %4050 = vmatprep.subr.mxu0 0.0
    %4051 = vmatpush1.msra.mxu0 0.0
    %4052 = vmatprep.subr.mxu0 0.0
    %4053 = vmatpush1.msra.mxu0 0.0
    %4054 = vmatprep.subr.mxu0 0.0
    %4055 = vmatpush1.msra.mxu0 0.0
    %4056 = vmatprep.subr.mxu0 0.0
    %4057 = vmatpush1.msra.mxu0 0.0
    %4058 = vmatprep.subr.mxu0 0.0
    %4059 = vmatpush1.msra.mxu0 0.0
    %4060 = vmatprep.subr.mxu0 0.0
    %4061 = vmatpush1.msra.mxu0 0.0
    %4062 = vmatprep.subr.mxu0 0.0
    %4063 = vmatpush1.msra.mxu0 0.0
    %4064 = vmatprep.subr.mxu0 0.0
    %4065 = vmatpush1.msra.mxu0 0.0
    %4066 = vmatprep.subr.mxu0 0.0
    %4067 = vmatpush1.msra.mxu0 0.0
    %4068 = vmatprep.subr.mxu0 0.0
    %4069 = vmatpush1.msra.mxu0 0.0
    %4070 = vmatprep.subr.mxu0 0.0
    %4071 = vmatpush1.msra.mxu0 0.0
    %4072 = vmatprep.subr.mxu0 0.0
    %4073 = vmatpush1.msra.mxu0 0.0
    %4074 = vmatprep.subr.mxu0 0.0
    %4075 = vmatpush1.msra.mxu0 0.0
    %4076 = vmatprep.subr.mxu0 0.0
    %4077 = vmatpush1.msra.mxu0 0.0
    %4078 = vmatprep.subr.mxu0 0.0
    %4079 = vmatpush1.msra.mxu0 0.0
    %4080 = vmatprep.subr.mxu0 0.0
    %4081 = vmatpush1.msra.mxu0 0.0
    %4082 = vmatprep.subr.mxu0 0.0
    %4083 = vmatpush1.msra.mxu0 0.0
    %4084 = vmatprep.subr.mxu0 0.0
    %4085 = vmatpush1.msra.mxu0 0.0
    %4086 = vmatprep.subr.mxu0 0.0
    %4087 = vmatpush1.msra.mxu0 0.0
    %4088 = vmatprep.subr.mxu0 0.0
    %4089 = vmatpush1.msra.mxu0 0.0
    %4090 = vmatprep.subr.mxu0 0.0
    %4091 = vmatpush1.msra.mxu0 0.0
    %4092 = vmatprep.subr.mxu0 0.0
    %4093 = vmatpush1.msra.mxu0 0.0
    %4094 = vmatprep.subr.mxu0 0.0
    %4095 = vmatpush1.msra.mxu0 0.0
    %4096 = vmatprep.subr.mxu0 0.0
    %4097 = vmatpush1.msra.mxu0 0.0
    %4098 = vmatprep.subr.mxu0 0.0
    %4099 = vmatpush1.msra.mxu0 0.0
    %4100 = vmatprep.subr.mxu0 0.0
    %4101 = vmatpush1.msra.mxu0 0.0
    %4102 = vmatprep.subr.mxu0 0.0
    %4103 = vmatpush1.msra.mxu0 0.0
    %4104 = vmatprep.mubr.f32.mxu0 0.0
    %4105 = vmatmul.mubr.f32.gmra.mrb[0].mxu0 %v4035
    %v4106 = vpop.f32.mrb[0].mxu0
    %v4107 = vadd.f32 0.0, %v4106
    %v4108 = vpop.f32.mrb[0].mxu0
    %4109 = vmatprep.mubr.f32.mxu0 0.0
    %4110 = vmatmul.mubr.f32.gmra.mrb[0].mxu0 %v4038
    %v4111 = vpop.f32.mrb[0].mxu0
    %v4112 = vadd.f32 0.0, %v4111
    %v4113 = vpop.f32.mrb[0].mxu0
    %4114 = vdwg.mxu0
    %v4115 = vmul.f32 %v4107, %v72
    %v4116 = vmul.f32 %v4112, %v73
    %v4118 = vsel %vm265, %v4023, 0
    %v4121 = vsel %vm265, %v4024, 0
    %4123 = vmatprep.subr.mxu0 0.0
    %4124 = vmatpush1.msra.mxu0 %v4115
    %4125 = vmatprep.subr.mxu0 0.0
    %4126 = vmatpush1.msra.mxu0 %v4116
    %4127 = vmatprep.subr.mxu0 0.0
    %4128 = vmatpush1.msra.mxu0 0.0
    %4129 = vmatprep.subr.mxu0 0.0
    %4130 = vmatpush1.msra.mxu0 0.0
    %4131 = vmatprep.subr.mxu0 0.0
    %4132 = vmatpush1.msra.mxu0 0.0
    %4133 = vmatprep.subr.mxu0 0.0
    %4134 = vmatpush1.msra.mxu0 0.0
    %4135 = vmatprep.subr.mxu0 0.0
    %4136 = vmatpush1.msra.mxu0 0.0
    %4137 = vmatprep.subr.mxu0 0.0
    %4138 = vmatpush1.msra.mxu0 0.0
    %4139 = vmatprep.subr.mxu0 0.0
    %4140 = vmatpush1.msra.mxu0 0.0
    %4141 = vmatprep.subr.mxu0 0.0
    %4142 = vmatpush1.msra.mxu0 0.0
    %4143 = vmatprep.subr.mxu0 0.0
    %4144 = vmatpush1.msra.mxu0 0.0
    %4145 = vmatprep.subr.mxu0 0.0
    %4146 = vmatpush1.msra.mxu0 0.0
    %4147 = vmatprep.subr.mxu0 0.0
    %4148 = vmatpush1.msra.mxu0 0.0
    %4149 = vmatprep.subr.mxu0 0.0
    %4150 = vmatpush1.msra.mxu0 0.0
    %4151 = vmatprep.subr.mxu0 0.0
    %4152 = vmatpush1.msra.mxu0 0.0
    %4153 = vmatprep.subr.mxu0 0.0
    %4154 = vmatpush1.msra.mxu0 0.0
    %4155 = vmatprep.subr.mxu0 0.0
    %4156 = vmatpush1.msra.mxu0 0.0
    %4157 = vmatprep.subr.mxu0 0.0
    %4158 = vmatpush1.msra.mxu0 0.0
    %4159 = vmatprep.subr.mxu0 0.0
    %4160 = vmatpush1.msra.mxu0 0.0
    %4161 = vmatprep.subr.mxu0 0.0
    %4162 = vmatpush1.msra.mxu0 0.0
    %4163 = vmatprep.subr.mxu0 0.0
    %4164 = vmatpush1.msra.mxu0 0.0
    %4165 = vmatprep.subr.mxu0 0.0
    %4166 = vmatpush1.msra.mxu0 0.0
    %4167 = vmatprep.subr.mxu0 0.0
    %4168 = vmatpush1.msra.mxu0 0.0
    %4169 = vmatprep.subr.mxu0 0.0
    %4170 = vmatpush1.msra.mxu0 0.0
    %4171 = vmatprep.subr.mxu0 0.0
    %4172 = vmatpush1.msra.mxu0 0.0
    %4173 = vmatprep.subr.mxu0 0.0
    %4174 = vmatpush1.msra.mxu0 0.0
    %4175 = vmatprep.subr.mxu0 0.0
    %4176 = vmatpush1.msra.mxu0 0.0
    %4177 = vmatprep.subr.mxu0 0.0
    %4178 = vmatpush1.msra.mxu0 0.0
    %4179 = vmatprep.subr.mxu0 0.0
    %4180 = vmatpush1.msra.mxu0 0.0
    %4181 = vmatprep.subr.mxu0 0.0
    %4182 = vmatpush1.msra.mxu0 0.0
    %4183 = vmatprep.subr.mxu0 0.0
    %4184 = vmatpush1.msra.mxu0 0.0
    %4185 = vmatprep.subr.mxu0 0.0
    %4186 = vmatpush1.msra.mxu0 0.0
    %4187 = vmatprep.mubr.f32.mxu0 0.0
    %4188 = vmatmul.mubr.f32.gmra.mrb[0].mxu0 %v4118
    %v4189 = vpop.f32.mrb[0].mxu0
    %v4190 = vadd.f32 0.0, %v4189
    %v4191 = vpop.f32.mrb[0].mxu0
    %4192 = vmatprep.mubr.f32.mxu0 0.0
    %4193 = vmatmul.mubr.f32.gmra.mrb[0].mxu0 %v4121
    %v4194 = vpop.f32.mrb[0].mxu0
    %v4195 = vadd.f32 0.0, %v4194
    %v4196 = vpop.f32.mrb[0].mxu0
    %4197 = vdwg.mxu0
    %vm4198 = vcmask 1040384
    %v4199 = vrot.slane %v243, 7
    %v4200 = vrot.slane %v248, 7
    %v4201 = vsel %vm4198, %v4199, %v4200
    %4202 = vrot.lane.b32.xlu0 %v4199, 64
    %v4203 = vpop.permute.xlu0 %4202
    %4204 = vrot.lane.b32.xlu0 %v4201, 64
    %v4205 = vpop.permute.xlu0 %4204
    %v4208 = vsel %vm4198, 0.0, %v4203
    %v4209 = vlaneseq
    %v4210 = vshrl.u32 %v4209, 7
    %v4211 = vsub.s32 0, %v4210
    %v4212 = vrot.slane %v4027, %v4211
    %v4213 = vmul.f32 %v4212, %v4208
    %v4214 = vmul.f32 %v4212, %v4205
    %v4215 = vadd.f32 %v4213, 0.0
    %v4216 = vadd.f32 %v4214, 0.0
    %v4217 = vlaneseq
    %v4218 = vshrl.u32 %v4217, 7
    %v4219 = vsub.s32 1, %v4218
    %v4220 = vrot.slane %v4027, %v4219
    %v4221 = vmul.f32 %v4220, %v4029
    %v4222 = vmul.f32 %v4220, %v4031
    %v4223 = vadd.f32 %v4215, %v4221
    %v4224 = vadd.f32 %v4216, %v4222
    %vm4225 = vcmask 1046528
    %v4226 = vrot.slane %v243, 1
    %v4227 = vrot.slane %v248, 1
    %v4228 = vsel %vm4225, %v4226, %v4227
    %v4230 = vsel %vm4225, %v4227, 0.0
    %v4231 = vlaneseq
    %v4232 = vshrl.u32 %v4231, 7
    %v4233 = vsub.s32 2, %v4232
    %v4234 = vrot.slane %v4027, %v4233
    %4236 = vrot.lane.b32.xlu0 %v4228, 64
    %v4237 = vpop.permute.xlu0 %4236
    %4238 = vrot.lane.b32.xlu0 %v4230, 64
    %v4239 = vpop.permute.xlu0 %4238
    %v4242 = vmul.f32 %v4234, %v4237
    %v4243 = vmul.f32 %v4234, %v4239
    %v4244 = vadd.f32 %v4223, %v4242
    %v4245 = vadd.f32 %v4224, %v4243
    %v4247 = vsel %vm265, %v850, 0
    %v4250 = vsel %vm265, %v852, 0
    %4252 = vmatprep.subr.mxu0 0.0
    %4253 = vmatpush1.msra.mxu0 %v4190
    %4254 = vmatprep.subr.mxu0 0.0
    %4255 = vmatpush1.msra.mxu0 %v4195
    %4256 = vmatprep.subr.mxu0 0.0
    %4257 = vmatpush1.msra.mxu0 0.0
    %4258 = vmatprep.subr.mxu0 0.0
    %4259 = vmatpush1.msra.mxu0 0.0
    %4260 = vmatprep.subr.mxu0 0.0
    %4261 = vmatpush1.msra.mxu0 0.0
    %4262 = vmatprep.subr.mxu0 0.0
    %4263 = vmatpush1.msra.mxu0 0.0
    %4264 = vmatprep.subr.mxu0 0.0
    %4265 = vmatpush1.msra.mxu0 0.0
    %4266 = vmatprep.subr.mxu0 0.0
    %4267 = vmatpush1.msra.mxu0 0.0
    %4268 = vmatprep.subr.mxu0 0.0
    %4269 = vmatpush1.msra.mxu0 0.0
    %4270 = vmatprep.subr.mxu0 0.0
    %4271 = vmatpush1.msra.mxu0 0.0
    %4272 = vmatprep.subr.mxu0 0.0
    %4273 = vmatpush1.msra.mxu0 0.0
    %4274 = vmatprep.subr.mxu0 0.0
    %4275 = vmatpush1.msra.mxu0 0.0
    %4276 = vmatprep.subr.mxu0 0.0
    %4277 = vmatpush1.msra.mxu0 0.0
    %4278 = vmatprep.subr.mxu0 0.0
    %4279 = vmatpush1.msra.mxu0 0.0
    %4280 = vmatprep.subr.mxu0 0.0
    %4281 = vmatpush1.msra.mxu0 0.0
    %4282 = vmatprep.subr.mxu0 0.0
    %4283 = vmatpush1.msra.mxu0 0.0
    %4284 = vmatprep.subr.mxu0 0.0
    %4285 = vmatpush1.msra.mxu0 0.0
    %4286 = vmatprep.subr.mxu0 0.0
    %4287 = vmatpush1.msra.mxu0 0.0
    %4288 = vmatprep.subr.mxu0 0.0
    %4289 = vmatpush1.msra.mxu0 0.0
    %4290 = vmatprep.subr.mxu0 0.0
    %4291 = vmatpush1.msra.mxu0 0.0
    %4292 = vmatprep.subr.mxu0 0.0
    %4293 = vmatpush1.msra.mxu0 0.0
    %4294 = vmatprep.subr.mxu0 0.0
    %4295 = vmatpush1.msra.mxu0 0.0
    %4296 = vmatprep.subr.mxu0 0.0
    %4297 = vmatpush1.msra.mxu0 0.0
    %4298 = vmatprep.subr.mxu0 0.0
    %4299 = vmatpush1.msra.mxu0 0.0
    %4300 = vmatprep.subr.mxu0 0.0
    %4301 = vmatpush1.msra.mxu0 0.0
    %4302 = vmatprep.subr.mxu0 0.0
    %4303 = vmatpush1.msra.mxu0 0.0
    %4304 = vmatprep.subr.mxu0 0.0
    %4305 = vmatpush1.msra.mxu0 0.0
    %4306 = vmatprep.subr.mxu0 0.0
    %4307 = vmatpush1.msra.mxu0 0.0
    %4308 = vmatprep.subr.mxu0 0.0
    %4309 = vmatpush1.msra.mxu0 0.0
    %4310 = vmatprep.subr.mxu0 0.0
    %4311 = vmatpush1.msra.mxu0 0.0
    %4312 = vmatprep.subr.mxu0 0.0
    %4313 = vmatpush1.msra.mxu0 0.0
    %4314 = vmatprep.subr.mxu0 0.0
    %4315 = vmatpush1.msra.mxu0 0.0
    %4316 = vmatprep.mubr.f32.mxu0 0.0
    %4317 = vmatmul.mubr.f32.gmra.mrb[0].mxu0 %v4247
    %v4318 = vpop.f32.mrb[0].mxu0
    %v4319 = vadd.f32 %v4244, %v4318
    %v4320 = vpop.f32.mrb[0].mxu0
    %4321 = vmatprep.mubr.f32.mxu0 0.0
    %4322 = vmatmul.mubr.f32.gmra.mrb[0].mxu0 %v4250
    %v4323 = vpop.f32.mrb[0].mxu0
    %v4324 = vadd.f32 %v4245, %v4323
    %v4325 = vpop.f32.mrb[0].mxu0
    %4326 = vdwg.mxu0
    %4327 = vrot.lane.b32.xlu0 %v253, 64
    %v4328 = vpop.permute.xlu0 %4327
    %4329 = vrot.lane.b32.xlu0 %v258, 64
    %v4330 = vpop.permute.xlu0 %4329
    %v4334 = vsel %vm265, %v1474, 0
    %v4337 = vsel %vm265, %v1476, 0
    %4339 = vmatprep.subr.mxu0 0.0
    %4340 = vmatpush1.msra.mxu0 %v4328
    %4341 = vmatprep.subr.mxu0 0.0
    %4342 = vmatpush1.msra.mxu0 %v4330
    %4343 = vmatprep.subr.mxu0 0.0
    %4344 = vmatpush1.msra.mxu0 0.0
    %4345 = vmatprep.subr.mxu0 0.0
    %4346 = vmatpush1.msra.mxu0 0.0
    %4347 = vmatprep.subr.mxu0 0.0
    %4348 = vmatpush1.msra.mxu0 0.0
    %4349 = vmatprep.subr.mxu0 0.0
    %4350 = vmatpush1.msra.mxu0 0.0
    %4351 = vmatprep.subr.mxu0 0.0
    %4352 = vmatpush1.msra.mxu0 0.0
    %4353 = vmatprep.subr.mxu0 0.0
    %4354 = vmatpush1.msra.mxu0 0.0
    %4355 = vmatprep.subr.mxu0 0.0
    %4356 = vmatpush1.msra.mxu0 0.0
    %4357 = vmatprep.subr.mxu0 0.0
    %4358 = vmatpush1.msra.mxu0 0.0
    %4359 = vmatprep.subr.mxu0 0.0
    %4360 = vmatpush1.msra.mxu0 0.0
    %4361 = vmatprep.subr.mxu0 0.0
    %4362 = vmatpush1.msra.mxu0 0.0
    %4363 = vmatprep.subr.mxu0 0.0
    %4364 = vmatpush1.msra.mxu0 0.0
    %4365 = vmatprep.subr.mxu0 0.0
    %4366 = vmatpush1.msra.mxu0 0.0
    %4367 = vmatprep.subr.mxu0 0.0
    %4368 = vmatpush1.msra.mxu0 0.0
    %4369 = vmatprep.subr.mxu0 0.0
    %4370 = vmatpush1.msra.mxu0 0.0
    %4371 = vmatprep.subr.mxu0 0.0
    %4372 = vmatpush1.msra.mxu0 0.0
    %4373 = vmatprep.subr.mxu0 0.0
    %4374 = vmatpush1.msra.mxu0 0.0
    %4375 = vmatprep.subr.mxu0 0.0
    %4376 = vmatpush1.msra.mxu0 0.0
    %4377 = vmatprep.subr.mxu0 0.0
    %4378 = vmatpush1.msra.mxu0 0.0
    %4379 = vmatprep.subr.mxu0 0.0
    %4380 = vmatpush1.msra.mxu0 0.0
    %4381 = vmatprep.subr.mxu0 0.0
    %4382 = vmatpush1.msra.mxu0 0.0
    %4383 = vmatprep.subr.mxu0 0.0
    %4384 = vmatpush1.msra.mxu0 0.0
    %4385 = vmatprep.subr.mxu0 0.0
    %4386 = vmatpush1.msra.mxu0 0.0
    %4387 = vmatprep.subr.mxu0 0.0
    %4388 = vmatpush1.msra.mxu0 0.0
    %4389 = vmatprep.subr.mxu0 0.0
    %4390 = vmatpush1.msra.mxu0 0.0
    %4391 = vmatprep.subr.mxu0 0.0
    %4392 = vmatpush1.msra.mxu0 0.0
    %4393 = vmatprep.subr.mxu0 0.0
    %4394 = vmatpush1.msra.mxu0 0.0
    %4395 = vmatprep.subr.mxu0 0.0
    %4396 = vmatpush1.msra.mxu0 0.0
    %4397 = vmatprep.subr.mxu0 0.0
    %4398 = vmatpush1.msra.mxu0 0.0
    %4399 = vmatprep.subr.mxu0 0.0
    %4400 = vmatpush1.msra.mxu0 0.0
    %4401 = vmatprep.subr.mxu0 0.0
    %4402 = vmatpush1.msra.mxu0 0.0
    %4403 = vmatprep.mubr.f32.mxu0 0.0
    %4404 = vmatmul.mubr.f32.gmra.mrb[0].mxu0 %v4334
    %v4405 = vpop.f32.mrb[0].mxu0
    %v4406 = vadd.f32 0.0, %v4405
    %v4407 = vpop.f32.mrb[0].mxu0
    %4408 = vmatprep.mubr.f32.mxu0 0.0
    %4409 = vmatmul.mubr.f32.gmra.mrb[0].mxu0 %v4337
    %v4410 = vpop.f32.mrb[0].mxu0
    %v4411 = vadd.f32 0.0, %v4410
    %v4412 = vpop.f32.mrb[0].mxu0
    %4413 = vdwg.mxu0
    %v4414 = vmul.f32 %v4406, %v72
    %v4415 = vmul.f32 %v4411, %v73
    %4418 = vrot.lane.b32.xlu0 %v4025, 112
    %v4419 = vpop.permute.xlu0 %4418
    %4420 = vrot.lane.b32.xlu0 %v4026, 112
    %v4421 = vpop.permute.xlu0 %4420
    %v4422 = vsel %vm265, %v4419, 0
    %v4424 = vsel %vm265, %v4421, 0
    %4426 = vmatprep.subr.mxu0 0.0
    %4427 = vmatpush1.msra.mxu0 %v4414
    %4428 = vmatprep.subr.mxu0 0.0
    %4429 = vmatpush1.msra.mxu0 %v4415
    %4430 = vmatprep.subr.mxu0 0.0
    %4431 = vmatpush1.msra.mxu0 0.0
    %4432 = vmatprep.subr.mxu0 0.0
    %4433 = vmatpush1.msra.mxu0 0.0
    %4434 = vmatprep.subr.mxu0 0.0
    %4435 = vmatpush1.msra.mxu0 0.0
    %4436 = vmatprep.subr.mxu0 0.0
    %4437 = vmatpush1.msra.mxu0 0.0
    %4438 = vmatprep.subr.mxu0 0.0
    %4439 = vmatpush1.msra.mxu0 0.0
    %4440 = vmatprep.subr.mxu0 0.0
    %4441 = vmatpush1.msra.mxu0 0.0
    %4442 = vmatprep.subr.mxu0 0.0
    %4443 = vmatpush1.msra.mxu0 0.0
    %4444 = vmatprep.subr.mxu0 0.0
    %4445 = vmatpush1.msra.mxu0 0.0
    %4446 = vmatprep.subr.mxu0 0.0
    %4447 = vmatpush1.msra.mxu0 0.0
    %4448 = vmatprep.subr.mxu0 0.0
    %4449 = vmatpush1.msra.mxu0 0.0
    %4450 = vmatprep.subr.mxu0 0.0
    %4451 = vmatpush1.msra.mxu0 0.0
    %4452 = vmatprep.subr.mxu0 0.0
    %4453 = vmatpush1.msra.mxu0 0.0
    %4454 = vmatprep.subr.mxu0 0.0
    %4455 = vmatpush1.msra.mxu0 0.0
    %4456 = vmatprep.subr.mxu0 0.0
    %4457 = vmatpush1.msra.mxu0 0.0
    %4458 = vmatprep.subr.mxu0 0.0
    %4459 = vmatpush1.msra.mxu0 0.0
    %4460 = vmatprep.subr.mxu0 0.0
    %4461 = vmatpush1.msra.mxu0 0.0
    %4462 = vmatprep.subr.mxu0 0.0
    %4463 = vmatpush1.msra.mxu0 0.0
    %4464 = vmatprep.subr.mxu0 0.0
    %4465 = vmatpush1.msra.mxu0 0.0
    %4466 = vmatprep.subr.mxu0 0.0
    %4467 = vmatpush1.msra.mxu0 0.0
    %4468 = vmatprep.subr.mxu0 0.0
    %4469 = vmatpush1.msra.mxu0 0.0
    %4470 = vmatprep.subr.mxu0 0.0
    %4471 = vmatpush1.msra.mxu0 0.0
    %4472 = vmatprep.subr.mxu0 0.0
    %4473 = vmatpush1.msra.mxu0 0.0
    %4474 = vmatprep.subr.mxu0 0.0
    %4475 = vmatpush1.msra.mxu0 0.0
    %4476 = vmatprep.subr.mxu0 0.0
    %4477 = vmatpush1.msra.mxu0 0.0
    %4478 = vmatprep.subr.mxu0 0.0
    %4479 = vmatpush1.msra.mxu0 0.0
    %4480 = vmatprep.subr.mxu0 0.0
    %4481 = vmatpush1.msra.mxu0 0.0
    %4482 = vmatprep.subr.mxu0 0.0
    %4483 = vmatpush1.msra.mxu0 0.0
    %4484 = vmatprep.subr.mxu0 0.0
    %4485 = vmatpush1.msra.mxu0 0.0
    %4486 = vmatprep.subr.mxu0 0.0
    %4487 = vmatpush1.msra.mxu0 0.0
    %4488 = vmatprep.subr.mxu0 0.0
    %4489 = vmatpush1.msra.mxu0 0.0
    %4490 = vmatprep.mubr.f32.mxu0 0.0
    %4491 = vmatmul.mubr.f32.gmra.mrb[0].mxu0 %v4422
    %v4492 = vpop.f32.mrb[0].mxu0
    %v4493 = vadd.f32 0.0, %v4492
    %v4494 = vpop.f32.mrb[0].mxu0
    %4495 = vmatprep.mubr.f32.mxu0 0.0
    %4496 = vmatmul.mubr.f32.gmra.mrb[0].mxu0 %v4424
    %v4497 = vpop.f32.mrb[0].mxu0
    %v4498 = vadd.f32 0.0, %v4497
    %v4499 = vpop.f32.mrb[0].mxu0
    %4500 = vdwg.mxu0
    %v4501 = vrot.slane %v253, 7
    %v4502 = vrot.slane %v258, 7
    %v4503 = vsel %vm4198, %v4501, %v4502
    %4504 = vrot.lane.b32.xlu0 %v4501, 64
    %v4505 = vpop.permute.xlu0 %4504
    %4506 = vrot.lane.b32.xlu0 %v4503, 64
    %v4507 = vpop.permute.xlu0 %4506
    %v4510 = vsel %vm4198, 0.0, %v4505
    %v4511 = vmul.f32 %v4212, %v4510
    %v4512 = vmul.f32 %v4212, %v4507
    %v4513 = vadd.f32 %v4511, 0.0
    %v4514 = vadd.f32 %v4512, 0.0
    %v4515 = vmul.f32 %v4220, %v4328
    %v4516 = vmul.f32 %v4220, %v4330
    %v4517 = vadd.f32 %v4513, %v4515
    %v4518 = vadd.f32 %v4514, %v4516
    %v4519 = vrot.slane %v253, 1
    %v4520 = vrot.slane %v258, 1
    %v4521 = vsel %vm4225, %v4519, %v4520
    %v4523 = vsel %vm4225, %v4520, 0.0
    %4525 = vrot.lane.b32.xlu0 %v4521, 64
    %v4526 = vpop.permute.xlu0 %4525
    %4527 = vrot.lane.b32.xlu0 %v4523, 64
    %v4528 = vpop.permute.xlu0 %4527
    %v4531 = vmul.f32 %v4234, %v4526
    %v4532 = vmul.f32 %v4234, %v4528
    %v4533 = vadd.f32 %v4517, %v4531
    %v4534 = vadd.f32 %v4518, %v4532
    %v4536 = vsel %vm265, %v1452, 0
    %v4539 = vsel %vm265, %v1454, 0
    %4541 = vmatprep.subr.mxu0 0.0
    %4542 = vmatpush1.msra.mxu0 %v4493
    %4543 = vmatprep.subr.mxu0 0.0
    %4544 = vmatpush1.msra.mxu0 %v4498
    %4545 = vmatprep.subr.mxu0 0.0
    %4546 = vmatpush1.msra.mxu0 0.0
    %4547 = vmatprep.subr.mxu0 0.0
    %4548 = vmatpush1.msra.mxu0 0.0
    %4549 = vmatprep.subr.mxu0 0.0
    %4550 = vmatpush1.msra.mxu0 0.0
    %4551 = vmatprep.subr.mxu0 0.0
    %4552 = vmatpush1.msra.mxu0 0.0
    %4553 = vmatprep.subr.mxu0 0.0
    %4554 = vmatpush1.msra.mxu0 0.0
    %4555 = vmatprep.subr.mxu0 0.0
    %4556 = vmatpush1.msra.mxu0 0.0
    %4557 = vmatprep.subr.mxu0 0.0
    %4558 = vmatpush1.msra.mxu0 0.0
    %4559 = vmatprep.subr.mxu0 0.0
    %4560 = vmatpush1.msra.mxu0 0.0
    %4561 = vmatprep.subr.mxu0 0.0
    %4562 = vmatpush1.msra.mxu0 0.0
    %4563 = vmatprep.subr.mxu0 0.0
    %4564 = vmatpush1.msra.mxu0 0.0
    %4565 = vmatprep.subr.mxu0 0.0
    %4566 = vmatpush1.msra.mxu0 0.0
    %4567 = vmatprep.subr.mxu0 0.0
    %4568 = vmatpush1.msra.mxu0 0.0
    %4569 = vmatprep.subr.mxu0 0.0
    %4570 = vmatpush1.msra.mxu0 0.0
    %4571 = vmatprep.subr.mxu0 0.0
    %4572 = vmatpush1.msra.mxu0 0.0
    %4573 = vmatprep.subr.mxu0 0.0
    %4574 = vmatpush1.msra.mxu0 0.0
    %4575 = vmatprep.subr.mxu0 0.0
    %4576 = vmatpush1.msra.mxu0 0.0
    %4577 = vmatprep.subr.mxu0 0.0
    %4578 = vmatpush1.msra.mxu0 0.0
    %4579 = vmatprep.subr.mxu0 0.0
    %4580 = vmatpush1.msra.mxu0 0.0
    %4581 = vmatprep.subr.mxu0 0.0
    %4582 = vmatpush1.msra.mxu0 0.0
    %4583 = vmatprep.subr.mxu0 0.0
    %4584 = vmatpush1.msra.mxu0 0.0
    %4585 = vmatprep.subr.mxu0 0.0
    %4586 = vmatpush1.msra.mxu0 0.0
    %4587 = vmatprep.subr.mxu0 0.0
    %4588 = vmatpush1.msra.mxu0 0.0
    %4589 = vmatprep.subr.mxu0 0.0
    %4590 = vmatpush1.msra.mxu0 0.0
    %4591 = vmatprep.subr.mxu0 0.0
    %4592 = vmatpush1.msra.mxu0 0.0
    %4593 = vmatprep.subr.mxu0 0.0
    %4594 = vmatpush1.msra.mxu0 0.0
    %4595 = vmatprep.subr.mxu0 0.0
    %4596 = vmatpush1.msra.mxu0 0.0
    %4597 = vmatprep.subr.mxu0 0.0
    %4598 = vmatpush1.msra.mxu0 0.0
    %4599 = vmatprep.subr.mxu0 0.0
    %4600 = vmatpush1.msra.mxu0 0.0
    %4601 = vmatprep.subr.mxu0 0.0
    %4602 = vmatpush1.msra.mxu0 0.0
    %4603 = vmatprep.subr.mxu0 0.0
    %4604 = vmatpush1.msra.mxu0 0.0
    %4605 = vmatprep.mubr.f32.mxu0 0.0
    %4606 = vmatmul.mubr.f32.gmra.mrb[0].mxu0 %v4536
    %v4607 = vpop.f32.mrb[0].mxu0
    %v4608 = vadd.f32 %v4533, %v4607
    %v4609 = vpop.f32.mrb[0].mxu0
    %4610 = vmatprep.mubr.f32.mxu0 0.0
    %4611 = vmatmul.mubr.f32.gmra.mrb[0].mxu0 %v4539
    %v4612 = vpop.f32.mrb[0].mxu0
    %v4613 = vadd.f32 %v4534, %v4612
    %v4614 = vpop.f32.mrb[0].mxu0
    %4615 = vdwg.mxu0
    %v4616 = vld [vmem:[%s10] sm:$0xff]
    %v4617 = vld [vmem:[%s10 + $0x8] sm:$0xff]
    %v4618 = vld [vmem:[%s10 + $0x10] sm:$0xff]
    %v4619 = vld [vmem:[%s10 + $0x18] sm:$0xff]
    %v4621 = vsel %vm86, %v4319, 0
    %v4624 = vsel %vm86, %v4324, 0
    %v4627 = vsel %vm86, %v4608, 0
    %v4630 = vsel %vm86, %v4613, 0
    %4632 = vmatprep.subr.mxu0 0.0
    %4633 = vmatpush1.msra.mxu0 %v4616
    %4634 = vmatprep.subr.mxu0 0.0
    %4635 = vmatpush1.msra.mxu0 %v4617
    %4636 = vmatprep.subr.mxu0 0.0
    %4637 = vmatpush1.msra.mxu0 %v4618
    %4638 = vmatprep.subr.mxu0 0.0
    %4639 = vmatpush1.msra.mxu0 %v4619
    %4640 = vmatprep.subr.mxu0 0.0
    %4641 = vmatpush1.msra.mxu0 0.0
    %4642 = vmatprep.subr.mxu0 0.0
    %4643 = vmatpush1.msra.mxu0 0.0
    %4644 = vmatprep.subr.mxu0 0.0
    %4645 = vmatpush1.msra.mxu0 0.0
    %4646 = vmatprep.subr.mxu0 0.0
    %4647 = vmatpush1.msra.mxu0 0.0
    %4648 = vmatprep.subr.mxu0 0.0
    %4649 = vmatpush1.msra.mxu0 0.0
    %4650 = vmatprep.subr.mxu0 0.0
    %4651 = vmatpush1.msra.mxu0 0.0
    %4652 = vmatprep.subr.mxu0 0.0
    %4653 = vmatpush1.msra.mxu0 0.0
    %4654 = vmatprep.subr.mxu0 0.0
    %4655 = vmatpush1.msra.mxu0 0.0
    %4656 = vmatprep.subr.mxu0 0.0
    %4657 = vmatpush1.msra.mxu0 0.0
    %4658 = vmatprep.subr.mxu0 0.0
    %4659 = vmatpush1.msra.mxu0 0.0
    %4660 = vmatprep.subr.mxu0 0.0
    %4661 = vmatpush1.msra.mxu0 0.0
    %4662 = vmatprep.subr.mxu0 0.0
    %4663 = vmatpush1.msra.mxu0 0.0
    %4664 = vmatprep.subr.mxu0 0.0
    %4665 = vmatpush1.msra.mxu0 0.0
    %4666 = vmatprep.subr.mxu0 0.0
    %4667 = vmatpush1.msra.mxu0 0.0
    %4668 = vmatprep.subr.mxu0 0.0
    %4669 = vmatpush1.msra.mxu0 0.0
    %4670 = vmatprep.subr.mxu0 0.0
    %4671 = vmatpush1.msra.mxu0 0.0
    %4672 = vmatprep.subr.mxu0 0.0
    %4673 = vmatpush1.msra.mxu0 0.0
    %4674 = vmatprep.subr.mxu0 0.0
    %4675 = vmatpush1.msra.mxu0 0.0
    %4676 = vmatprep.subr.mxu0 0.0
    %4677 = vmatpush1.msra.mxu0 0.0
    %4678 = vmatprep.subr.mxu0 0.0
    %4679 = vmatpush1.msra.mxu0 0.0
    %4680 = vmatprep.subr.mxu0 0.0
    %4681 = vmatpush1.msra.mxu0 0.0
    %4682 = vmatprep.subr.mxu0 0.0
    %4683 = vmatpush1.msra.mxu0 0.0
    %4684 = vmatprep.subr.mxu0 0.0
    %4685 = vmatpush1.msra.mxu0 0.0
    %4686 = vmatprep.subr.mxu0 0.0
    %4687 = vmatpush1.msra.mxu0 0.0
    %4688 = vmatprep.subr.mxu0 0.0
    %4689 = vmatpush1.msra.mxu0 0.0
    %4690 = vmatprep.subr.mxu0 0.0
    %4691 = vmatpush1.msra.mxu0 0.0
    %4692 = vmatprep.subr.mxu0 0.0
    %4693 = vmatpush1.msra.mxu0 0.0
    %4694 = vmatprep.subr.mxu0 0.0
    %4695 = vmatpush1.msra.mxu0 0.0
    %4696 = vmatprep.mubr.f32.mxu0 0.0
    %4697 = vmatmul.mubr.f32.gmra.mrb[0].mxu0 %v4621
    %v4698 = vpop.f32.mrb[0].mxu0
    %v4699 = vadd.f32 0.0, %v4698
    %v4700 = vpop.f32.mrb[0].mxu0
    %4701 = vmatprep.mubr.f32.mxu0 0.0
    %4702 = vmatmul.mubr.f32.gmra.mrb[0].mxu0 %v4624
    %v4703 = vpop.f32.mrb[0].mxu0
    %v4704 = vadd.f32 0.0, %v4703
    %v4705 = vpop.f32.mrb[0].mxu0
    %4706 = vmatprep.mubr.f32.mxu0 0.0
    %4707 = vmatmul.mubr.f32.gmra.mrb[0].mxu0 %v4627
    %v4708 = vpop.f32.mrb[0].mxu0
    %v4709 = vadd.f32 0.0, %v4708
    %v4710 = vpop.f32.mrb[0].mxu0
    %4711 = vmatprep.mubr.f32.mxu0 0.0
    %4712 = vmatmul.mubr.f32.gmra.mrb[0].mxu0 %v4630
    %v4713 = vpop.f32.mrb[0].mxu0
    %v4714 = vadd.f32 0.0, %v4713
    %v4715 = vpop.f32.mrb[0].mxu0
    %4716 = vdwg.mxu0
    %v4717 = vadd.f32 %v63, %v4699
    %v4718 = vadd.f32 %v64, %v4704
    %v4719 = vadd.f32 %v65, %v4709
    %v4720 = vadd.f32 %v66, %v4714
    %v4721 = vld [vmem:[%s11] sm:$0x1]
    %v4723 = vlaneseq
    %v4724 = vshrl.u32 %v4723, 7
    %v4725 = vsub.s32 0, %v4724
    %v4726 = vrot.slane %v4721, %v4725
    %v4728 = vadd.f32 %v4717, %v4726
    %v4729 = vadd.f32 %v4718, %v4726
    %v4730 = vadd.f32 %v4719, %v4726
    %v4731 = vadd.f32 %v4720, %v4726
    %v4732 = vld [vmem:[%s13] sm:$0x1]
    %v4733 = vld [vmem:[%s14] sm:$0x1]
    %v4734 = vsel %vm86, %v4728, 0.0
    %4735 = vadd.xlane.f32.xlu0 %v4734
    %v4736 = vpop.xlane.xlu0 %4735
    %v4737 = vsel %vm86, %v4729, 0.0
    %4738 = vadd.xlane.f32.xlu0 %v4737
    %v4739 = vpop.xlane.xlu0 %4738
    %v4740 = vsel %vm86, %v4730, 0.0
    %4741 = vadd.xlane.f32.xlu0 %v4740
    %v4742 = vpop.xlane.xlu0 %4741
    %v4743 = vsel %vm86, %v4731, 0.0
    %4744 = vadd.xlane.f32.xlu0 %v4743
    %v4745 = vpop.xlane.xlu0 %4744
    %v4746 = vmul.f32 %v4736, %v99
    %v4747 = vmul.f32 %v4739, %v99
    %v4748 = vmul.f32 %v4742, %v99
    %v4749 = vmul.f32 %v4745, %v99
    %v4750 = vsub.f32 %v4728, %v4746
    %v4751 = vsub.f32 %v4729, %v4747
    %v4752 = vsub.f32 %v4730, %v4748
    %v4753 = vsub.f32 %v4731, %v4749
    %v4754 = vmul.f32 %v4750, %v4750
    %v4755 = vmul.f32 %v4751, %v4751
    %v4756 = vmul.f32 %v4752, %v4752
    %v4757 = vmul.f32 %v4753, %v4753
    %v4758 = vsel %vm86, %v4754, 0.0
    %4759 = vadd.xlane.f32.xlu0 %v4758
    %v4760 = vpop.xlane.xlu0 %4759
    %v4761 = vsel %vm86, %v4755, 0.0
    %4762 = vadd.xlane.f32.xlu0 %v4761
    %v4763 = vpop.xlane.xlu0 %4762
    %v4764 = vsel %vm86, %v4756, 0.0
    %4765 = vadd.xlane.f32.xlu0 %v4764
    %v4766 = vpop.xlane.xlu0 %4765
    %v4767 = vsel %vm86, %v4757, 0.0
    %4768 = vadd.xlane.f32.xlu0 %v4767
    %v4769 = vpop.xlane.xlu0 %4768
    %v4770 = vmul.f32 %v4760, %v99
    %v4771 = vmul.f32 %v4763, %v99
    %v4772 = vmul.f32 %v4766, %v99
    %v4773 = vmul.f32 %v4769, %v99
    %v4774 = vadd.f32 %v4770, 1e-05
    %v4775 = vadd.f32 %v4771, 1e-05
    %v4776 = vadd.f32 %v4772, 1e-05
    %v4777 = vadd.f32 %v4773, 1e-05
    %v4778 = vrsqrt.pop %v4774
    %v4779 = vrsqrt.pop %v4775
    %v4780 = vrsqrt.pop %v4776
    %v4781 = vrsqrt.pop %v4777
    %v4782 = vmul.f32 %v4750, %v4778
    %v4783 = vmul.f32 %v4751, %v4779
    %v4784 = vmul.f32 %v4752, %v4780
    %v4785 = vmul.f32 %v4753, %v4781
    %v4787 = vlaneseq
    %v4788 = vshrl.u32 %v4787, 7
    %v4789 = vsub.s32 0, %v4788
    %v4790 = vrot.slane %v4732, %v4789
    %v4792 = vmul.f32 %v4782, %v4790
    %v4793 = vmul.f32 %v4783, %v4790
    %v4794 = vmul.f32 %v4784, %v4790
    %v4795 = vmul.f32 %v4785, %v4790
    %v4797 = vlaneseq
    %v4798 = vshrl.u32 %v4797, 7
    %v4799 = vsub.s32 0, %v4798
    %v4800 = vrot.slane %v4733, %v4799
    %v4802 = vadd.f32 %v4792, %v4800
    %v4803 = vadd.f32 %v4793, %v4800
    %v4804 = vadd.f32 %v4794, %v4800
    %v4805 = vadd.f32 %v4795, %v4800
    %v4806 = vld [vmem:[%s15] sm:$0xff]
    %v4807 = vld [vmem:[%s15 + $0x8] sm:$0xff]
    %v4808 = vld [vmem:[%s15 + $0x10] sm:$0xff]
    %v4809 = vld [vmem:[%s15 + $0x18] sm:$0xff]
    %v4810 = vld [vmem:[%s16] sm:$0x1]
    %v4812 = vlaneseq
    %v4813 = vshrl.u32 %v4812, 7
    %v4814 = vsub.s32 0, %v4813
    %v4815 = vrot.slane %v4810, %v4814
    %v4818 = vsel %vm86, %v4802, 0
    %v4821 = vsel %vm86, %v4803, 0
    %v4824 = vsel %vm86, %v4804, 0
    %v4827 = vsel %vm86, %v4805, 0
    %4829 = vmatprep.subr.mxu0 0.0
    %4830 = vmatpush1.msra.mxu0 %v4806
    %4831 = vmatprep.subr.mxu0 0.0
    %4832 = vmatpush1.msra.mxu0 %v4807
    %4833 = vmatprep.subr.mxu0 0.0
    %4834 = vmatpush1.msra.mxu0 %v4808
    %4835 = vmatprep.subr.mxu0 0.0
    %4836 = vmatpush1.msra.mxu0 %v4809
    %4837 = vmatprep.subr.mxu0 0.0
    %4838 = vmatpush1.msra.mxu0 0.0
    %4839 = vmatprep.subr.mxu0 0.0
    %4840 = vmatpush1.msra.mxu0 0.0
    %4841 = vmatprep.subr.mxu0 0.0
    %4842 = vmatpush1.msra.mxu0 0.0
    %4843 = vmatprep.subr.mxu0 0.0
    %4844 = vmatpush1.msra.mxu0 0.0
    %4845 = vmatprep.subr.mxu0 0.0
    %4846 = vmatpush1.msra.mxu0 0.0
    %4847 = vmatprep.subr.mxu0 0.0
    %4848 = vmatpush1.msra.mxu0 0.0
    %4849 = vmatprep.subr.mxu0 0.0
    %4850 = vmatpush1.msra.mxu0 0.0
    %4851 = vmatprep.subr.mxu0 0.0
    %4852 = vmatpush1.msra.mxu0 0.0
    %4853 = vmatprep.subr.mxu0 0.0
    %4854 = vmatpush1.msra.mxu0 0.0
    %4855 = vmatprep.subr.mxu0 0.0
    %4856 = vmatpush1.msra.mxu0 0.0
    %4857 = vmatprep.subr.mxu0 0.0
    %4858 = vmatpush1.msra.mxu0 0.0
    %4859 = vmatprep.subr.mxu0 0.0
    %4860 = vmatpush1.msra.mxu0 0.0
    %4861 = vmatprep.subr.mxu0 0.0
    %4862 = vmatpush1.msra.mxu0 0.0
    %4863 = vmatprep.subr.mxu0 0.0
    %4864 = vmatpush1.msra.mxu0 0.0
    %4865 = vmatprep.subr.mxu0 0.0
    %4866 = vmatpush1.msra.mxu0 0.0
    %4867 = vmatprep.subr.mxu0 0.0
    %4868 = vmatpush1.msra.mxu0 0.0
    %4869 = vmatprep.subr.mxu0 0.0
    %4870 = vmatpush1.msra.mxu0 0.0
    %4871 = vmatprep.subr.mxu0 0.0
    %4872 = vmatpush1.msra.mxu0 0.0
    %4873 = vmatprep.subr.mxu0 0.0
    %4874 = vmatpush1.msra.mxu0 0.0
    %4875 = vmatprep.subr.mxu0 0.0
    %4876 = vmatpush1.msra.mxu0 0.0
    %4877 = vmatprep.subr.mxu0 0.0
    %4878 = vmatpush1.msra.mxu0 0.0
    %4879 = vmatprep.subr.mxu0 0.0
    %4880 = vmatpush1.msra.mxu0 0.0
    %4881 = vmatprep.subr.mxu0 0.0
    %4882 = vmatpush1.msra.mxu0 0.0
    %4883 = vmatprep.subr.mxu0 0.0
    %4884 = vmatpush1.msra.mxu0 0.0
    %4885 = vmatprep.subr.mxu0 0.0
    %4886 = vmatpush1.msra.mxu0 0.0
    %4887 = vmatprep.subr.mxu0 0.0
    %4888 = vmatpush1.msra.mxu0 0.0
    %4889 = vmatprep.subr.mxu0 0.0
    %4890 = vmatpush1.msra.mxu0 0.0
    %4891 = vmatprep.subr.mxu0 0.0
    %4892 = vmatpush1.msra.mxu0 0.0
    %4893 = vmatprep.mubr.f32.mxu0 0.0
    %4894 = vmatmul.mubr.f32.gmra.mrb[0].mxu0 %v4818
    %v4895 = vpop.f32.mrb[0].mxu0
    %v4896 = vadd.f32 %v4815, %v4895
    %v4897 = vpop.f32.mrb[0].mxu0
    %4898 = vmatprep.mubr.f32.mxu0 0.0
    %4899 = vmatmul.mubr.f32.gmra.mrb[0].mxu0 %v4821
    %v4900 = vpop.f32.mrb[0].mxu0
    %v4901 = vadd.f32 %v4815, %v4900
    %v4902 = vpop.f32.mrb[0].mxu0
    %4903 = vmatprep.mubr.f32.mxu0 0.0
    %4904 = vmatmul.mubr.f32.gmra.mrb[0].mxu0 %v4824
    %v4905 = vpop.f32.mrb[0].mxu0
    %v4906 = vadd.f32 %v4815, %v4905
    %v4907 = vpop.f32.mrb[0].mxu0
    %4908 = vmatprep.mubr.f32.mxu0 0.0
    %4909 = vmatmul.mubr.f32.gmra.mrb[0].mxu0 %v4827
    %v4910 = vpop.f32.mrb[0].mxu0
    %v4911 = vadd.f32 %v4815, %v4910
    %v4912 = vpop.f32.mrb[0].mxu0
    %4913 = vdwg.mxu0
    %v4914 = vmul.f32 %v4896, 0.5
    %v4915 = vmul.f32 %v4901, 0.5
    %v4916 = vmul.f32 %v4906, 0.5
    %v4917 = vmul.f32 %v4911, 0.5
    %v4918 = vmul.f32 %v4896, 0.70710677
    %v4919 = vmul.f32 %v4901, 0.70710677
    %v4920 = vmul.f32 %v4906, 0.70710677
    %v4921 = vmul.f32 %v4911, 0.70710677
    %vm4922 = vcmp.ge.f32.partialorder %v4918, 0.0
    %vm4923 = vcmp.ge.f32.partialorder %v4919, 0.0
    %vm4924 = vcmp.ge.f32.partialorder %v4920, 0.0
    %vm4925 = vcmp.ge.f32.partialorder %v4921, 0.0
    %v4926 = vsel %vm4922, 1.0, -1.0
    %v4927 = vsel %vm4923, 1.0, -1.0
    %v4928 = vsel %vm4924, 1.0, -1.0
    %v4929 = vsel %vm4925, 1.0, -1.0
    %v4930 = vand.u32 2147483647, %v4918
    %v4931 = vand.u32 2147483647, %v4919
    %v4932 = vand.u32 2147483647, %v4920
    %v4933 = vand.u32 2147483647, %v4921
    %v4934 = vmul.f32 %v4930, 0.3275911
    %v4935 = vmul.f32 %v4931, 0.3275911
    %v4936 = vmul.f32 %v4932, 0.3275911
    %v4937 = vmul.f32 %v4933, 0.3275911
    %v4938 = vadd.f32 %v4934, 1.0
    %v4939 = vadd.f32 %v4935, 1.0
    %v4940 = vadd.f32 %v4936, 1.0
    %v4941 = vadd.f32 %v4937, 1.0
    %v4942 = vrcp.pop %v4938
    %v4943 = vmul.f32 1.0, %v4942
    %v4944 = vrcp.pop %v4939
    %v4945 = vmul.f32 1.0, %v4944
    %v4946 = vrcp.pop %v4940
    %v4947 = vmul.f32 1.0, %v4946
    %v4948 = vrcp.pop %v4941
    %v4949 = vmul.f32 1.0, %v4948
    %v4950 = vmul.f32 %v4943, 1.0614054
    %v4951 = vmul.f32 %v4945, 1.0614054
    %v4952 = vmul.f32 %v4947, 1.0614054
    %v4953 = vmul.f32 %v4949, 1.0614054
    %v4954 = vadd.f32 %v4950, -1.4531521
    %v4955 = vadd.f32 %v4951, -1.4531521
    %v4956 = vadd.f32 %v4952, -1.4531521
    %v4957 = vadd.f32 %v4953, -1.4531521
    %v4958 = vmul.f32 %v4954, %v4943
    %v4959 = vmul.f32 %v4955, %v4945
    %v4960 = vmul.f32 %v4956, %v4947
    %v4961 = vmul.f32 %v4957, %v4949
    %v4962 = vadd.f32 %v4958, 1.4214138
    %v4963 = vadd.f32 %v4959, 1.4214138
    %v4964 = vadd.f32 %v4960, 1.4214138
    %v4965 = vadd.f32 %v4961, 1.4214138
    %v4966 = vmul.f32 %v4962, %v4943
    %v4967 = vmul.f32 %v4963, %v4945
    %v4968 = vmul.f32 %v4964, %v4947
    %v4969 = vmul.f32 %v4965, %v4949
    %v4970 = vadd.f32 %v4966, -0.28449672
    %v4971 = vadd.f32 %v4967, -0.28449672
    %v4972 = vadd.f32 %v4968, -0.28449672
    %v4973 = vadd.f32 %v4969, -0.28449672
    %v4974 = vmul.f32 %v4970, %v4943
    %v4975 = vmul.f32 %v4971, %v4945
    %v4976 = vmul.f32 %v4972, %v4947
    %v4977 = vmul.f32 %v4973, %v4949
    %v4978 = vadd.f32 %v4974, 0.2548296
    %v4979 = vadd.f32 %v4975, 0.2548296
    %v4980 = vadd.f32 %v4976, 0.2548296
    %v4981 = vadd.f32 %v4977, 0.2548296
    %v4982 = vmul.f32 %v4978, %v4943
    %v4983 = vmul.f32 %v4979, %v4945
    %v4984 = vmul.f32 %v4980, %v4947
    %v4985 = vmul.f32 %v4981, %v4949
    %v4986 = vsub.f32 0.0, %v4930
    %v4987 = vsub.f32 0.0, %v4931
    %v4988 = vsub.f32 0.0, %v4932
    %v4989 = vsub.f32 0.0, %v4933
    %v4990 = vmul.f32 %v4986, %v4930
    %v4991 = vmul.f32 %v4987, %v4931
    %v4992 = vmul.f32 %v4988, %v4932
    %v4993 = vmul.f32 %v4989, %v4933
    %v4994 = vmul.f32 %v4990, 1.442695
    %v4995 = vpow.pop %v4994
    %v4996 = vmul.f32 %v4991, 1.442695
    %v4997 = vpow.pop %v4996
    %v4998 = vmul.f32 %v4992, 1.442695
    %v4999 = vpow.pop %v4998
    %v5000 = vmul.f32 %v4993, 1.442695
    %v5001 = vpow.pop %v5000
    %v5002 = vmul.f32 %v4982, %v4995
    %v5003 = vmul.f32 %v4983, %v4997
    %v5004 = vmul.f32 %v4984, %v4999
    %v5005 = vmul.f32 %v4985, %v5001
    %v5006 = vsub.f32 1.0, %v5002
    %v5007 = vsub.f32 1.0, %v5003
    %v5008 = vsub.f32 1.0, %v5004
    %v5009 = vsub.f32 1.0, %v5005
    %v5010 = vmul.f32 %v4926, %v5006
    %v5011 = vmul.f32 %v4927, %v5007
    %v5012 = vmul.f32 %v4928, %v5008
    %v5013 = vmul.f32 %v4929, %v5009
    %v5014 = vadd.f32 %v5010, 1.0
    %v5015 = vadd.f32 %v5011, 1.0
    %v5016 = vadd.f32 %v5012, 1.0
    %v5017 = vadd.f32 %v5013, 1.0
    %v5018 = vmul.f32 %v4914, %v5014
    %v5019 = vmul.f32 %v4915, %v5015
    %v5020 = vmul.f32 %v4916, %v5016
    %v5021 = vmul.f32 %v4917, %v5017
    %v5022 = vld [vmem:[%s17] sm:$0xff]
    %v5023 = vld [vmem:[%s17 + $0x8] sm:$0xff]
    %v5024 = vld [vmem:[%s17 + $0x10] sm:$0xff]
    %v5025 = vld [vmem:[%s17 + $0x18] sm:$0xff]
    %v5026 = vld [vmem:[%s17 + $0x20] sm:$0xff]
    %v5027 = vld [vmem:[%s17 + $0x28] sm:$0xff]
    %v5028 = vld [vmem:[%s17 + $0x30] sm:$0xff]
    %v5029 = vld [vmem:[%s17 + $0x38] sm:$0xff]
    %v5030 = vld [vmem:[%s17 + $0x40] sm:$0xff]
    %v5031 = vld [vmem:[%s17 + $0x48] sm:$0xff]
    %v5032 = vld [vmem:[%s17 + $0x50] sm:$0xff]
    %v5033 = vld [vmem:[%s17 + $0x58] sm:$0xff]
    %v5034 = vld [vmem:[%s17 + $0x60] sm:$0xff]
    %v5035 = vld [vmem:[%s17 + $0x68] sm:$0xff]
    %v5036 = vld [vmem:[%s17 + $0x70] sm:$0xff]
    %v5037 = vld [vmem:[%s17 + $0x78] sm:$0xff]
    %5038 = vmatprep.subr.mxu0 0.0
    %5039 = vmatpush1.msra.mxu0 %v5022
    %5040 = vmatprep.subr.mxu0 0.0
    %5041 = vmatpush1.msra.mxu0 %v5023
    %5042 = vmatprep.subr.mxu0 0.0
    %5043 = vmatpush1.msra.mxu0 %v5024
    %5044 = vmatprep.subr.mxu0 0.0
    %5045 = vmatpush1.msra.mxu0 %v5025
    %5046 = vmatprep.subr.mxu0 0.0
    %5047 = vmatpush1.msra.mxu0 %v5026
    %5048 = vmatprep.subr.mxu0 0.0
    %5049 = vmatpush1.msra.mxu0 %v5027
    %5050 = vmatprep.subr.mxu0 0.0
    %5051 = vmatpush1.msra.mxu0 %v5028
    %5052 = vmatprep.subr.mxu0 0.0
    %5053 = vmatpush1.msra.mxu0 %v5029
    %5054 = vmatprep.subr.mxu0 0.0
    %5055 = vmatpush1.msra.mxu0 %v5030
    %5056 = vmatprep.subr.mxu0 0.0
    %5057 = vmatpush1.msra.mxu0 %v5031
    %5058 = vmatprep.subr.mxu0 0.0
    %5059 = vmatpush1.msra.mxu0 %v5032
    %5060 = vmatprep.subr.mxu0 0.0
    %5061 = vmatpush1.msra.mxu0 %v5033
    %5062 = vmatprep.subr.mxu0 0.0
    %5063 = vmatpush1.msra.mxu0 %v5034
    %5064 = vmatprep.subr.mxu0 0.0
    %5065 = vmatpush1.msra.mxu0 %v5035
    %5066 = vmatprep.subr.mxu0 0.0
    %5067 = vmatpush1.msra.mxu0 %v5036
    %5068 = vmatprep.subr.mxu0 0.0
    %5069 = vmatpush1.msra.mxu0 %v5037
    %5070 = vmatprep.subr.mxu0 0.0
    %5071 = vmatpush1.msra.mxu0 0.0
    %5072 = vmatprep.subr.mxu0 0.0
    %5073 = vmatpush1.msra.mxu0 0.0
    %5074 = vmatprep.subr.mxu0 0.0
    %5075 = vmatpush1.msra.mxu0 0.0
    %5076 = vmatprep.subr.mxu0 0.0
    %5077 = vmatpush1.msra.mxu0 0.0
    %5078 = vmatprep.subr.mxu0 0.0
    %5079 = vmatpush1.msra.mxu0 0.0
    %5080 = vmatprep.subr.mxu0 0.0
    %5081 = vmatpush1.msra.mxu0 0.0
    %5082 = vmatprep.subr.mxu0 0.0
    %5083 = vmatpush1.msra.mxu0 0.0
    %5084 = vmatprep.subr.mxu0 0.0
    %5085 = vmatpush1.msra.mxu0 0.0
    %5086 = vmatprep.subr.mxu0 0.0
    %5087 = vmatpush1.msra.mxu0 0.0
    %5088 = vmatprep.subr.mxu0 0.0
    %5089 = vmatpush1.msra.mxu0 0.0
    %5090 = vmatprep.subr.mxu0 0.0
    %5091 = vmatpush1.msra.mxu0 0.0
    %5092 = vmatprep.subr.mxu0 0.0
    %5093 = vmatpush1.msra.mxu0 0.0
    %5094 = vmatprep.subr.mxu0 0.0
    %5095 = vmatpush1.msra.mxu0 0.0
    %5096 = vmatprep.subr.mxu0 0.0
    %5097 = vmatpush1.msra.mxu0 0.0
    %5098 = vmatprep.subr.mxu0 0.0
    %5099 = vmatpush1.msra.mxu0 0.0
    %5100 = vmatprep.subr.mxu0 0.0
    %5101 = vmatpush1.msra.mxu0 0.0
    %5102 = vmatprep.mubr.f32.mxu0 0.0
    %5103 = vmatmul.mubr.f32.gmra.mrb[0].mxu0 %v5018
    %v5104 = vpop.f32.mrb[0].mxu0
    %v5105 = vadd.f32 0.0, %v5104
    %v5106 = vpop.f32.mrb[0].mxu0
    %5107 = vmatprep.mubr.f32.mxu0 0.0
    %5108 = vmatmul.mubr.f32.gmra.mrb[0].mxu0 %v5019
    %v5109 = vpop.f32.mrb[0].mxu0
    %v5110 = vadd.f32 0.0, %v5109
    %v5111 = vpop.f32.mrb[0].mxu0
    %5112 = vmatprep.mubr.f32.mxu0 0.0
    %5113 = vmatmul.mubr.f32.gmra.mrb[0].mxu0 %v5020
    %v5114 = vpop.f32.mrb[0].mxu0
    %v5115 = vadd.f32 0.0, %v5114
    %v5116 = vpop.f32.mrb[0].mxu0
    %5117 = vmatprep.mubr.f32.mxu0 0.0
    %5118 = vmatmul.mubr.f32.gmra.mrb[0].mxu0 %v5021
    %v5119 = vpop.f32.mrb[0].mxu0
    %v5120 = vadd.f32 0.0, %v5119
    %v5121 = vpop.f32.mrb[0].mxu0
    %5122 = vdwg.mxu0
    %v5123 = vadd.f32 %v4728, %v5105
    %v5124 = vadd.f32 %v4729, %v5110
    %v5125 = vadd.f32 %v4730, %v5115
    %v5126 = vadd.f32 %v4731, %v5120
    %v5127 = vld [vmem:[%s18] sm:$0x1]
    %v5129 = vlaneseq
    %v5130 = vshrl.u32 %v5129, 7
    %v5131 = vsub.s32 0, %v5130
    %v5132 = vrot.slane %v5127, %v5131
    %v5134 = vadd.f32 %v5123, %v5132
    %v5135 = vadd.f32 %v5124, %v5132
    %v5136 = vadd.f32 %v5125, %v5132
    %v5137 = vadd.f32 %v5126, %v5132
    %s5138 = scalar_lea.vmem %s7, 1
    %v5139 = vld [vmem:[%s5138] sm:$0x1]
    %s5140 = scalar_lea.vmem %s8, 1
    %v5141 = vld [vmem:[%s5140] sm:$0x1]
    %v5142 = vsel %vm86, %v5134, 0.0
    %5143 = vadd.xlane.f32.xlu0 %v5142
    %v5144 = vpop.xlane.xlu0 %5143
    %v5145 = vsel %vm86, %v5135, 0.0
    %5146 = vadd.xlane.f32.xlu0 %v5145
    %v5147 = vpop.xlane.xlu0 %5146
    %v5148 = vsel %vm86, %v5136, 0.0
    %5149 = vadd.xlane.f32.xlu0 %v5148
    %v5150 = vpop.xlane.xlu0 %5149
    %v5151 = vsel %vm86, %v5137, 0.0
    %5152 = vadd.xlane.f32.xlu0 %v5151
    %v5153 = vpop.xlane.xlu0 %5152
    %v5154 = vmul.f32 %v5144, %v99
    %v5155 = vmul.f32 %v5147, %v99
    %v5156 = vmul.f32 %v5150, %v99
    %v5157 = vmul.f32 %v5153, %v99
    %v5158 = vsub.f32 %v5134, %v5154
    %v5159 = vsub.f32 %v5135, %v5155
    %v5160 = vsub.f32 %v5136, %v5156
    %v5161 = vsub.f32 %v5137, %v5157
    %v5162 = vmul.f32 %v5158, %v5158
    %v5163 = vmul.f32 %v5159, %v5159
    %v5164 = vmul.f32 %v5160, %v5160
    %v5165 = vmul.f32 %v5161, %v5161
    %v5166 = vsel %vm86, %v5162, 0.0
    %5167 = vadd.xlane.f32.xlu0 %v5166
    %v5168 = vpop.xlane.xlu0 %5167
    %v5169 = vsel %vm86, %v5163, 0.0
    %5170 = vadd.xlane.f32.xlu0 %v5169
    %v5171 = vpop.xlane.xlu0 %5170
    %v5172 = vsel %vm86, %v5164, 0.0
    %5173 = vadd.xlane.f32.xlu0 %v5172
    %v5174 = vpop.xlane.xlu0 %5173
    %v5175 = vsel %vm86, %v5165, 0.0
    %5176 = vadd.xlane.f32.xlu0 %v5175
    %v5177 = vpop.xlane.xlu0 %5176
    %v5178 = vmul.f32 %v5168, %v99
    %v5179 = vmul.f32 %v5171, %v99
    %v5180 = vmul.f32 %v5174, %v99
    %v5181 = vmul.f32 %v5177, %v99
    %v5182 = vadd.f32 %v5178, 1e-05
    %v5183 = vadd.f32 %v5179, 1e-05
    %v5184 = vadd.f32 %v5180, 1e-05
    %v5185 = vadd.f32 %v5181, 1e-05
    %v5186 = vrsqrt.pop %v5182
    %v5187 = vrsqrt.pop %v5183
    %v5188 = vrsqrt.pop %v5184
    %v5189 = vrsqrt.pop %v5185
    %v5190 = vmul.f32 %v5158, %v5186
    %v5191 = vmul.f32 %v5159, %v5187
    %v5192 = vmul.f32 %v5160, %v5188
    %v5193 = vmul.f32 %v5161, %v5189
    %v5195 = vlaneseq
    %v5196 = vshrl.u32 %v5195, 7
    %v5197 = vsub.s32 0, %v5196
    %v5198 = vrot.slane %v5139, %v5197
    %v5200 = vmul.f32 %v5190, %v5198
    %v5201 = vmul.f32 %v5191, %v5198
    %v5202 = vmul.f32 %v5192, %v5198
    %v5203 = vmul.f32 %v5193, %v5198
    %v5205 = vlaneseq
    %v5206 = vshrl.u32 %v5205, 7
    %v5207 = vsub.s32 0, %v5206
    %v5208 = vrot.slane %v5141, %v5207
    %v5210 = vadd.f32 %v5200, %v5208
    %v5211 = vadd.f32 %v5201, %v5208
    %v5212 = vadd.f32 %v5202, %v5208
    %v5213 = vadd.f32 %v5203, %v5208
    %s5214 = scalar_lea.vmem %s9, 32
    %v5215 = vld [vmem:[%s5214] sm:$0xff]
    %v5216 = vld [vmem:[%s5214 + $0x8] sm:$0xff]
    %v5217 = vld [vmem:[%s5214 + $0x10] sm:$0xff]
    %v5218 = vld [vmem:[%s5214 + $0x18] sm:$0xff]
    %v5220 = vsel %vm86, %v5210, 0
    %v5223 = vsel %vm86, %v5211, 0
    %v5226 = vsel %vm86, %v5212, 0
    %v5229 = vsel %vm86, %v5213, 0
    %5231 = vmatprep.subr.mxu0 0.0
    %5232 = vmatpush1.msra.mxu0 %v5215
    %5233 = vmatprep.subr.mxu0 0.0
    %5234 = vmatpush1.msra.mxu0 %v5216
    %5235 = vmatprep.subr.mxu0 0.0
    %5236 = vmatpush1.msra.mxu0 %v5217
    %5237 = vmatprep.subr.mxu0 0.0
    %5238 = vmatpush1.msra.mxu0 %v5218
    %5239 = vmatprep.subr.mxu0 0.0
    %5240 = vmatpush1.msra.mxu0 0.0
    %5241 = vmatprep.subr.mxu0 0.0
    %5242 = vmatpush1.msra.mxu0 0.0
    %5243 = vmatprep.subr.mxu0 0.0
    %5244 = vmatpush1.msra.mxu0 0.0
    %5245 = vmatprep.subr.mxu0 0.0
    %5246 = vmatpush1.msra.mxu0 0.0
    %5247 = vmatprep.subr.mxu0 0.0
    %5248 = vmatpush1.msra.mxu0 0.0
    %5249 = vmatprep.subr.mxu0 0.0
    %5250 = vmatpush1.msra.mxu0 0.0
    %5251 = vmatprep.subr.mxu0 0.0
    %5252 = vmatpush1.msra.mxu0 0.0
    %5253 = vmatprep.subr.mxu0 0.0
    %5254 = vmatpush1.msra.mxu0 0.0
    %5255 = vmatprep.subr.mxu0 0.0
    %5256 = vmatpush1.msra.mxu0 0.0
    %5257 = vmatprep.subr.mxu0 0.0
    %5258 = vmatpush1.msra.mxu0 0.0
    %5259 = vmatprep.subr.mxu0 0.0
    %5260 = vmatpush1.msra.mxu0 0.0
    %5261 = vmatprep.subr.mxu0 0.0
    %5262 = vmatpush1.msra.mxu0 0.0
    %5263 = vmatprep.subr.mxu0 0.0
    %5264 = vmatpush1.msra.mxu0 0.0
    %5265 = vmatprep.subr.mxu0 0.0
    %5266 = vmatpush1.msra.mxu0 0.0
    %5267 = vmatprep.subr.mxu0 0.0
    %5268 = vmatpush1.msra.mxu0 0.0
    %5269 = vmatprep.subr.mxu0 0.0
    %5270 = vmatpush1.msra.mxu0 0.0
    %5271 = vmatprep.subr.mxu0 0.0
    %5272 = vmatpush1.msra.mxu0 0.0
    %5273 = vmatprep.subr.mxu0 0.0
    %5274 = vmatpush1.msra.mxu0 0.0
    %5275 = vmatprep.subr.mxu0 0.0
    %5276 = vmatpush1.msra.mxu0 0.0
    %5277 = vmatprep.subr.mxu0 0.0
    %5278 = vmatpush1.msra.mxu0 0.0
    %5279 = vmatprep.subr.mxu0 0.0
    %5280 = vmatpush1.msra.mxu0 0.0
    %5281 = vmatprep.subr.mxu0 0.0
    %5282 = vmatpush1.msra.mxu0 0.0
    %5283 = vmatprep.subr.mxu0 0.0
    %5284 = vmatpush1.msra.mxu0 0.0
    %5285 = vmatprep.subr.mxu0 0.0
    %5286 = vmatpush1.msra.mxu0 0.0
    %5287 = vmatprep.subr.mxu0 0.0
    %5288 = vmatpush1.msra.mxu0 0.0
    %5289 = vmatprep.subr.mxu0 0.0
    %5290 = vmatpush1.msra.mxu0 0.0
    %5291 = vmatprep.subr.mxu0 0.0
    %5292 = vmatpush1.msra.mxu0 0.0
    %5293 = vmatprep.subr.mxu0 0.0
    %5294 = vmatpush1.msra.mxu0 0.0
    %5295 = vmatprep.mubr.f32.mxu0 0.0
    %5296 = vmatmul.mubr.f32.gmra.mrb[0].mxu0 %v5220
    %v5297 = vpop.f32.mrb[0].mxu0
    %v5298 = vadd.f32 0.0, %v5297
    %v5299 = vpop.f32.mrb[0].mxu0
    %5300 = vmatprep.mubr.f32.mxu0 0.0
    %5301 = vmatmul.mubr.f32.gmra.mrb[0].mxu0 %v5223
    %v5302 = vpop.f32.mrb[0].mxu0
    %v5303 = vadd.f32 0.0, %v5302
    %v5304 = vpop.f32.mrb[0].mxu0
    %5305 = vmatprep.mubr.f32.mxu0 0.0
    %5306 = vmatmul.mubr.f32.gmra.mrb[0].mxu0 %v5226
    %v5307 = vpop.f32.mrb[0].mxu0
    %v5308 = vadd.f32 0.0, %v5307
    %v5309 = vpop.f32.mrb[0].mxu0
    %5310 = vmatprep.mubr.f32.mxu0 0.0
    %5311 = vmatmul.mubr.f32.gmra.mrb[0].mxu0 %v5229
    %v5312 = vpop.f32.mrb[0].mxu0
    %v5313 = vadd.f32 0.0, %v5312
    %v5314 = vpop.f32.mrb[0].mxu0
    %5315 = vdwg.mxu0
    %v5316 = vmul.f32 %v5298, 0.35355338
    %v5317 = vmul.f32 %v5303, 0.35355338
    %v5318 = vmul.f32 %v5308, 0.35355338
    %v5319 = vmul.f32 %v5313, 0.35355338
    %5320 = vmatprep.subr.mxu0 0.0
    %5321 = vmatpush1.msra.mxu0 %v5316
    %5322 = vmatprep.subr.mxu0 0.0
    %5323 = vmatpush1.msra.mxu0 %v5317
    %5324 = vmatprep.subr.mxu0 0.0
    %5325 = vmatpush1.msra.mxu0 0.0
    %5326 = vmatprep.subr.mxu0 0.0
    %5327 = vmatpush1.msra.mxu0 0.0
    %5328 = vmatprep.subr.mxu0 0.0
    %5329 = vmatpush1.msra.mxu0 0.0
    %5330 = vmatprep.subr.mxu0 0.0
    %5331 = vmatpush1.msra.mxu0 0.0
    %5332 = vmatprep.subr.mxu0 0.0
    %5333 = vmatpush1.msra.mxu0 0.0
    %5334 = vmatprep.subr.mxu0 0.0
    %5335 = vmatpush1.msra.mxu0 0.0
    %5336 = vmatprep.subr.mxu0 0.0
    %5337 = vmatpush1.msra.mxu0 0.0
    %5338 = vmatprep.subr.mxu0 0.0
    %5339 = vmatpush1.msra.mxu0 0.0
    %5340 = vmatprep.subr.mxu0 0.0
    %5341 = vmatpush1.msra.mxu0 0.0
    %5342 = vmatprep.subr.mxu0 0.0
    %5343 = vmatpush1.msra.mxu0 0.0
    %5344 = vmatprep.subr.mxu0 0.0
    %5345 = vmatpush1.msra.mxu0 0.0
    %5346 = vmatprep.subr.mxu0 0.0
    %5347 = vmatpush1.msra.mxu0 0.0
    %5348 = vmatprep.subr.mxu0 0.0
    %5349 = vmatpush1.msra.mxu0 0.0
    %5350 = vmatprep.subr.mxu0 0.0
    %5351 = vmatpush1.msra.mxu0 0.0
    %5352 = vmatprep.subr.mxu0 0.0
    %5353 = vmatpush1.msra.mxu0 0.0
    %5354 = vmatprep.subr.mxu0 0.0
    %5355 = vmatpush1.msra.mxu0 0.0
    %5356 = vmatprep.subr.mxu0 0.0
    %5357 = vmatpush1.msra.mxu0 0.0
    %5358 = vmatprep.subr.mxu0 0.0
    %5359 = vmatpush1.msra.mxu0 0.0
    %5360 = vmatprep.subr.mxu0 0.0
    %5361 = vmatpush1.msra.mxu0 0.0
    %5362 = vmatprep.subr.mxu0 0.0
    %5363 = vmatpush1.msra.mxu0 0.0
    %5364 = vmatprep.subr.mxu0 0.0
    %5365 = vmatpush1.msra.mxu0 0.0
    %5366 = vmatprep.subr.mxu0 0.0
    %5367 = vmatpush1.msra.mxu0 0.0
    %5368 = vmatprep.subr.mxu0 0.0
    %5369 = vmatpush1.msra.mxu0 0.0
    %5370 = vmatprep.subr.mxu0 0.0
    %5371 = vmatpush1.msra.mxu0 0.0
    %5372 = vmatprep.subr.mxu0 0.0
    %5373 = vmatpush1.msra.mxu0 0.0
    %5374 = vmatprep.subr.mxu0 0.0
    %5375 = vmatpush1.msra.mxu0 0.0
    %5376 = vmatprep.subr.mxu0 0.0
    %5377 = vmatpush1.msra.mxu0 0.0
    %5378 = vmatprep.subr.mxu0 0.0
    %5379 = vmatpush1.msra.mxu0 0.0
    %5380 = vmatprep.subr.mxu0 0.0
    %5381 = vmatpush1.msra.mxu0 0.0
    %5382 = vmatprep.subr.mxu0 0.0
    %5383 = vmatpush1.msra.mxu0 0.0
    %5384 = vmatprep.mubr.f32.mxu0 0.0
    %5385 = vmatmul.mubr.f32.gmra.mrb[0].mxu0 %v267
    %v5386 = vpop.f32.mrb[0].mxu0
    %v5387 = vadd.f32 0.0, %v5386
    %v5388 = vpop.f32.mrb[0].mxu0
    %5389 = vdwg.mxu0
    %5392 = vrot.lane.b32.xlu0 %v5298, 96
    %v5393 = vpop.permute.xlu0 %5392
    %5394 = vrot.lane.b32.xlu0 %v5303, 96
    %v5395 = vpop.permute.xlu0 %5394
    %5398 = vmatprep.subr.mxu0 0.0
    %5399 = vmatpush1.msra.mxu0 %v5393
    %5400 = vmatprep.subr.mxu0 0.0
    %5401 = vmatpush1.msra.mxu0 %v5395
    %5402 = vmatprep.subr.mxu0 0.0
    %5403 = vmatpush1.msra.mxu0 0.0
    %5404 = vmatprep.subr.mxu0 0.0
    %5405 = vmatpush1.msra.mxu0 0.0
    %5406 = vmatprep.subr.mxu0 0.0
    %5407 = vmatpush1.msra.mxu0 0.0
    %5408 = vmatprep.subr.mxu0 0.0
    %5409 = vmatpush1.msra.mxu0 0.0
    %5410 = vmatprep.subr.mxu0 0.0
    %5411 = vmatpush1.msra.mxu0 0.0
    %5412 = vmatprep.subr.mxu0 0.0
    %5413 = vmatpush1.msra.mxu0 0.0
    %5414 = vmatprep.subr.mxu0 0.0
    %5415 = vmatpush1.msra.mxu0 0.0
    %5416 = vmatprep.subr.mxu0 0.0
    %5417 = vmatpush1.msra.mxu0 0.0
    %5418 = vmatprep.subr.mxu0 0.0
    %5419 = vmatpush1.msra.mxu0 0.0
    %5420 = vmatprep.subr.mxu0 0.0
    %5421 = vmatpush1.msra.mxu0 0.0
    %5422 = vmatprep.subr.mxu0 0.0
    %5423 = vmatpush1.msra.mxu0 0.0
    %5424 = vmatprep.subr.mxu0 0.0
    %5425 = vmatpush1.msra.mxu0 0.0
    %5426 = vmatprep.subr.mxu0 0.0
    %5427 = vmatpush1.msra.mxu0 0.0
    %5428 = vmatprep.subr.mxu0 0.0
    %5429 = vmatpush1.msra.mxu0 0.0
    %5430 = vmatprep.subr.mxu0 0.0
    %5431 = vmatpush1.msra.mxu0 0.0
    %5432 = vmatprep.subr.mxu0 0.0
    %5433 = vmatpush1.msra.mxu0 0.0
    %5434 = vmatprep.subr.mxu0 0.0
    %5435 = vmatpush1.msra.mxu0 0.0
    %5436 = vmatprep.subr.mxu0 0.0
    %5437 = vmatpush1.msra.mxu0 0.0
    %5438 = vmatprep.subr.mxu0 0.0
    %5439 = vmatpush1.msra.mxu0 0.0
    %5440 = vmatprep.subr.mxu0 0.0
    %5441 = vmatpush1.msra.mxu0 0.0
    %5442 = vmatprep.subr.mxu0 0.0
    %5443 = vmatpush1.msra.mxu0 0.0
    %5444 = vmatprep.subr.mxu0 0.0
    %5445 = vmatpush1.msra.mxu0 0.0
    %5446 = vmatprep.subr.mxu0 0.0
    %5447 = vmatpush1.msra.mxu0 0.0
    %5448 = vmatprep.subr.mxu0 0.0
    %5449 = vmatpush1.msra.mxu0 0.0
    %5450 = vmatprep.subr.mxu0 0.0
    %5451 = vmatpush1.msra.mxu0 0.0
    %5452 = vmatprep.subr.mxu0 0.0
    %5453 = vmatpush1.msra.mxu0 0.0
    %5454 = vmatprep.subr.mxu0 0.0
    %5455 = vmatpush1.msra.mxu0 0.0
    %5456 = vmatprep.subr.mxu0 0.0
    %5457 = vmatpush1.msra.mxu0 0.0
    %5458 = vmatprep.subr.mxu0 0.0
    %5459 = vmatpush1.msra.mxu0 0.0
    %5460 = vmatprep.subr.mxu0 0.0
    %5461 = vmatpush1.msra.mxu0 0.0
    %5462 = vmatprep.mubr.f32.mxu0 0.0
    %5463 = vmatmul.mubr.f32.gmra.mrb[0].mxu0 %v267
    %v5464 = vpop.f32.mrb[0].mxu0
    %v5465 = vadd.f32 0.0, %v5464
    %v5466 = vpop.f32.mrb[0].mxu0
    %5467 = vdwg.mxu0
    %5468 = vxpose.xlu0.b32.start [1/16] %v5465, 128
    %5469 = vxpose.xlu0.b32.cont [2/16] 0.0, 128
    %5470 = vxpose.xlu0.b32.cont [3/16] 0.0, 128
    %5471 = vxpose.xlu0.b32.cont [4/16] 0.0, 128
    %5472 = vxpose.xlu0.b32.cont [5/16] 0.0, 128
    %5473 = vxpose.xlu0.b32.cont [6/16] 0.0, 128
    %5474 = vxpose.xlu0.b32.cont [7/16] 0.0, 128
    %5475 = vxpose.xlu0.b32.cont [8/16] 0.0, 128
    %5476 = vxpose.xlu0.b32.cont [9/16] 0.0, 128
    %5477 = vxpose.xlu0.b32.cont [10/16] 0.0, 128
    %5478 = vxpose.xlu0.b32.cont [11/16] 0.0, 128
    %5479 = vxpose.xlu0.b32.cont [12/16] 0.0, 128
    %5480 = vxpose.xlu0.b32.cont [13/16] 0.0, 128
    %5481 = vxpose.xlu0.b32.cont [14/16] 0.0, 128
    %5482 = vxpose.xlu0.b32.cont [15/16] 0.0, 128
    %5483 = vxpose.xlu0.b32.end [16/16] 0.0, 128
    %v5484 = vpop.trf.xlu0
    %v5485 = vpop.trf.xlu0
    %v5486 = vpop.trf.xlu0
    %v5487 = vpop.trf.xlu0
    %v5488 = vpop.trf.xlu0
    %v5489 = vpop.trf.xlu0
    %v5490 = vpop.trf.xlu0
    %v5491 = vpop.trf.xlu0
    %v5492 = vpop.trf.xlu0
    %v5493 = vpop.trf.xlu0
    %v5494 = vpop.trf.xlu0
    %v5495 = vpop.trf.xlu0
    %v5496 = vpop.trf.xlu0
    %v5497 = vpop.trf.xlu0
    %v5498 = vpop.trf.xlu0
    %v5499 = vpop.trf.xlu0
    %5504 = vrot.lane.b32.xlu0 %v5484, 4
    %v5505 = vpop.permute.xlu0 %5504
    %5506 = vrot.lane.b32.xlu0 %v5485, 4
    %v5507 = vpop.permute.xlu0 %5506
    %5508 = vrot.lane.b32.xlu0 %v5486, 4
    %v5509 = vpop.permute.xlu0 %5508
    %5510 = vrot.lane.b32.xlu0 %v5487, 4
    %v5511 = vpop.permute.xlu0 %5510
    %5516 = vrot.lane.b32.xlu0 %v5484, 8
    %v5517 = vpop.permute.xlu0 %5516
    %5518 = vrot.lane.b32.xlu0 %v5485, 8
    %v5519 = vpop.permute.xlu0 %5518
    %5520 = vrot.lane.b32.xlu0 %v5486, 8
    %v5521 = vpop.permute.xlu0 %5520
    %5522 = vrot.lane.b32.xlu0 %v5487, 8
    %v5523 = vpop.permute.xlu0 %5522
    %5528 = vrot.lane.b32.xlu0 %v5484, 12
    %v5529 = vpop.permute.xlu0 %5528
    %5530 = vrot.lane.b32.xlu0 %v5485, 12
    %v5531 = vpop.permute.xlu0 %5530
    %5532 = vrot.lane.b32.xlu0 %v5486, 12
    %v5533 = vpop.permute.xlu0 %5532
    %5534 = vrot.lane.b32.xlu0 %v5487, 12
    %v5535 = vpop.permute.xlu0 %5534
    %v5540 = vsel %vm489, %v5484, %v5505
    %v5541 = vsel %vm489, %v5485, %v5507
    %v5542 = vsel %vm489, %v5486, %v5509
    %v5543 = vsel %vm489, %v5487, %v5511
    %v5544 = vsel %vm494, %v5540, %v5517
    %v5545 = vsel %vm494, %v5541, %v5519
    %v5546 = vsel %vm494, %v5542, %v5521
    %v5547 = vsel %vm494, %v5543, %v5523
    %v5548 = vsel %vm499, %v5544, %v5529
    %v5549 = vsel %vm499, %v5545, %v5531
    %v5550 = vsel %vm499, %v5546, %v5533
    %v5551 = vsel %vm499, %v5547, %v5535
    %v5552 = vmul.f32 %v5548, %v68
    %v5553 = vmul.f32 %v5549, %v69
    %v5554 = vmul.f32 %v5550, %v70
    %v5555 = vmul.f32 %v5551, %v71
    %v5557 = vrot.slane %v5387, 4
    %v5559 = vsel %vm511, %v5387, %v5557
    %v5560 = vmul.f32 %v5559, %v72
    %v5561 = vmul.f32 %v5559, %v73
    %v5563 = vsel %vm86, %v5316, 0
    %v5566 = vsel %vm86, %v5317, 0
    %5568 = vmatprep.subr.mxu0 0.0
    %5569 = vmatpush1.msra.mxu0 %v5552
    %5570 = vmatprep.subr.mxu0 0.0
    %5571 = vmatpush1.msra.mxu0 %v5553
    %5572 = vmatprep.subr.mxu0 0.0
    %5573 = vmatpush1.msra.mxu0 %v5554
    %5574 = vmatprep.subr.mxu0 0.0
    %5575 = vmatpush1.msra.mxu0 %v5555
    %5576 = vmatprep.subr.mxu0 0.0
    %5577 = vmatpush1.msra.mxu0 0.0
    %5578 = vmatprep.subr.mxu0 0.0
    %5579 = vmatpush1.msra.mxu0 0.0
    %5580 = vmatprep.subr.mxu0 0.0
    %5581 = vmatpush1.msra.mxu0 0.0
    %5582 = vmatprep.subr.mxu0 0.0
    %5583 = vmatpush1.msra.mxu0 0.0
    %5584 = vmatprep.subr.mxu0 0.0
    %5585 = vmatpush1.msra.mxu0 0.0
    %5586 = vmatprep.subr.mxu0 0.0
    %5587 = vmatpush1.msra.mxu0 0.0
    %5588 = vmatprep.subr.mxu0 0.0
    %5589 = vmatpush1.msra.mxu0 0.0
    %5590 = vmatprep.subr.mxu0 0.0
    %5591 = vmatpush1.msra.mxu0 0.0
    %5592 = vmatprep.subr.mxu0 0.0
    %5593 = vmatpush1.msra.mxu0 0.0
    %5594 = vmatprep.subr.mxu0 0.0
    %5595 = vmatpush1.msra.mxu0 0.0
    %5596 = vmatprep.subr.mxu0 0.0
    %5597 = vmatpush1.msra.mxu0 0.0
    %5598 = vmatprep.subr.mxu0 0.0
    %5599 = vmatpush1.msra.mxu0 0.0
    %5600 = vmatprep.subr.mxu0 0.0
    %5601 = vmatpush1.msra.mxu0 0.0
    %5602 = vmatprep.subr.mxu0 0.0
    %5603 = vmatpush1.msra.mxu0 0.0
    %5604 = vmatprep.subr.mxu0 0.0
    %5605 = vmatpush1.msra.mxu0 0.0
    %5606 = vmatprep.subr.mxu0 0.0
    %5607 = vmatpush1.msra.mxu0 0.0
    %5608 = vmatprep.subr.mxu0 0.0
    %5609 = vmatpush1.msra.mxu0 0.0
    %5610 = vmatprep.subr.mxu0 0.0
    %5611 = vmatpush1.msra.mxu0 0.0
    %5612 = vmatprep.subr.mxu0 0.0
    %5613 = vmatpush1.msra.mxu0 0.0
    %5614 = vmatprep.subr.mxu0 0.0
    %5615 = vmatpush1.msra.mxu0 0.0
    %5616 = vmatprep.subr.mxu0 0.0
    %5617 = vmatpush1.msra.mxu0 0.0
    %5618 = vmatprep.subr.mxu0 0.0
    %5619 = vmatpush1.msra.mxu0 0.0
    %5620 = vmatprep.subr.mxu0 0.0
    %5621 = vmatpush1.msra.mxu0 0.0
    %5622 = vmatprep.subr.mxu0 0.0
    %5623 = vmatpush1.msra.mxu0 0.0
    %5624 = vmatprep.subr.mxu0 0.0
    %5625 = vmatpush1.msra.mxu0 0.0
    %5626 = vmatprep.subr.mxu0 0.0
    %5627 = vmatpush1.msra.mxu0 0.0
    %5628 = vmatprep.subr.mxu0 0.0
    %5629 = vmatpush1.msra.mxu0 0.0
    %5630 = vmatprep.subr.mxu0 0.0
    %5631 = vmatpush1.msra.mxu0 0.0
    %5632 = vmatprep.mubr.f32.mxu0 0.0
    %5633 = vmatmul.mubr.f32.gmra.mrb[0].mxu0 %v5563
    %v5634 = vpop.f32.mrb[0].mxu0
    %v5635 = vadd.f32 0.0, %v5634
    %v5636 = vpop.f32.mrb[0].mxu0
    %5637 = vmatprep.mubr.f32.mxu0 0.0
    %5638 = vmatmul.mubr.f32.gmra.mrb[0].mxu0 %v5566
    %v5639 = vpop.f32.mrb[0].mxu0
    %v5640 = vadd.f32 0.0, %v5639
    %v5641 = vpop.f32.mrb[0].mxu0
    %5642 = vdwg.mxu0
    %v5644 = vsel %vm86, %v5560, 0
    %v5647 = vsel %vm86, %v5561, 0
    %v5649 = vsel %vm86, %v5393, 0
    %v5651 = vsel %vm86, %v5395, 0
    %5653 = vmatprep.subr.mxu0 0.0
    %5654 = vmatpush1.xpose.msra.mxu0 %v5649
    %5655 = vmatprep.subr.mxu0 0.0
    %5656 = vmatpush1.xpose.msra.mxu0 %v5651
    %5657 = vmatprep.subr.mxu0 0.0
    %5658 = vmatpush1.xpose.msra.mxu0 0.0
    %5659 = vmatprep.subr.mxu0 0.0
    %5660 = vmatpush1.xpose.msra.mxu0 0.0
    %5661 = vmatprep.subr.mxu0 0.0
    %5662 = vmatpush1.xpose.msra.mxu0 0.0
    %5663 = vmatprep.subr.mxu0 0.0
    %5664 = vmatpush1.xpose.msra.mxu0 0.0
    %5665 = vmatprep.subr.mxu0 0.0
    %5666 = vmatpush1.xpose.msra.mxu0 0.0
    %5667 = vmatprep.subr.mxu0 0.0
    %5668 = vmatpush1.xpose.msra.mxu0 0.0
    %5669 = vmatprep.subr.mxu0 0.0
    %5670 = vmatpush1.xpose.msra.mxu0 0.0
    %5671 = vmatprep.subr.mxu0 0.0
    %5672 = vmatpush1.xpose.msra.mxu0 0.0
    %5673 = vmatprep.subr.mxu0 0.0
    %5674 = vmatpush1.xpose.msra.mxu0 0.0
    %5675 = vmatprep.subr.mxu0 0.0
    %5676 = vmatpush1.xpose.msra.mxu0 0.0
    %5677 = vmatprep.subr.mxu0 0.0
    %5678 = vmatpush1.xpose.msra.mxu0 0.0
    %5679 = vmatprep.subr.mxu0 0.0
    %5680 = vmatpush1.xpose.msra.mxu0 0.0
    %5681 = vmatprep.subr.mxu0 0.0
    %5682 = vmatpush1.xpose.msra.mxu0 0.0
    %5683 = vmatprep.subr.mxu0 0.0
    %5684 = vmatpush1.xpose.msra.mxu0 0.0
    %5685 = vmatprep.subr.mxu0 0.0
    %5686 = vmatpush1.xpose.msra.mxu0 0.0
    %5687 = vmatprep.subr.mxu0 0.0
    %5688 = vmatpush1.xpose.msra.mxu0 0.0
    %5689 = vmatprep.subr.mxu0 0.0
    %5690 = vmatpush1.xpose.msra.mxu0 0.0
    %5691 = vmatprep.subr.mxu0 0.0
    %5692 = vmatpush1.xpose.msra.mxu0 0.0
    %5693 = vmatprep.subr.mxu0 0.0
    %5694 = vmatpush1.xpose.msra.mxu0 0.0
    %5695 = vmatprep.subr.mxu0 0.0
    %5696 = vmatpush1.xpose.msra.mxu0 0.0
    %5697 = vmatprep.subr.mxu0 0.0
    %5698 = vmatpush1.xpose.msra.mxu0 0.0
    %5699 = vmatprep.subr.mxu0 0.0
    %5700 = vmatpush1.xpose.msra.mxu0 0.0
    %5701 = vmatprep.subr.mxu0 0.0
    %5702 = vmatpush1.xpose.msra.mxu0 0.0
    %5703 = vmatprep.subr.mxu0 0.0
    %5704 = vmatpush1.xpose.msra.mxu0 0.0
    %5705 = vmatprep.subr.mxu0 0.0
    %5706 = vmatpush1.xpose.msra.mxu0 0.0
    %5707 = vmatprep.subr.mxu0 0.0
    %5708 = vmatpush1.xpose.msra.mxu0 0.0
    %5709 = vmatprep.subr.mxu0 0.0
    %5710 = vmatpush1.xpose.msra.mxu0 0.0
    %5711 = vmatprep.subr.mxu0 0.0
    %5712 = vmatpush1.xpose.msra.mxu0 0.0
    %5713 = vmatprep.subr.mxu0 0.0
    %5714 = vmatpush1.xpose.msra.mxu0 0.0
    %5715 = vmatprep.subr.mxu0 0.0
    %5716 = vmatpush1.xpose.msra.mxu0 0.0
    %5717 = vmatprep.mubr.f32.mxu0 0.0
    %5718 = vmatmul.mubr.f32.gmra.mrb[0].mxu0 %v5644
    %v5719 = vpop.f32.mrb[0].mxu0
    %v5720 = vadd.f32 0.0, %v5719
    %v5721 = vpop.f32.mrb[0].mxu0
    %5722 = vmatprep.mubr.f32.mxu0 0.0
    %5723 = vmatmul.mubr.f32.gmra.mrb[0].mxu0 %v5647
    %v5724 = vpop.f32.mrb[0].mxu0
    %v5725 = vadd.f32 0.0, %v5724
    %v5726 = vpop.f32.mrb[0].mxu0
    %5727 = vdwg.mxu0
    %5728 = vmatprep.subr.mxu0 0.0
    %5729 = vmatpush1.msra.mxu0 %v5484
    %5730 = vmatprep.subr.mxu0 0.0
    %5731 = vmatpush1.msra.mxu0 %v5485
    %5732 = vmatprep.subr.mxu0 0.0
    %5733 = vmatpush1.msra.mxu0 %v5486
    %5734 = vmatprep.subr.mxu0 0.0
    %5735 = vmatpush1.msra.mxu0 %v5487
    %5736 = vmatprep.subr.mxu0 0.0
    %5737 = vmatpush1.msra.mxu0 0.0
    %5738 = vmatprep.subr.mxu0 0.0
    %5739 = vmatpush1.msra.mxu0 0.0
    %5740 = vmatprep.subr.mxu0 0.0
    %5741 = vmatpush1.msra.mxu0 0.0
    %5742 = vmatprep.subr.mxu0 0.0
    %5743 = vmatpush1.msra.mxu0 0.0
    %5744 = vmatprep.subr.mxu0 0.0
    %5745 = vmatpush1.msra.mxu0 0.0
    %5746 = vmatprep.subr.mxu0 0.0
    %5747 = vmatpush1.msra.mxu0 0.0
    %5748 = vmatprep.subr.mxu0 0.0
    %5749 = vmatpush1.msra.mxu0 0.0
    %5750 = vmatprep.subr.mxu0 0.0
    %5751 = vmatpush1.msra.mxu0 0.0
    %5752 = vmatprep.subr.mxu0 0.0
    %5753 = vmatpush1.msra.mxu0 0.0
    %5754 = vmatprep.subr.mxu0 0.0
    %5755 = vmatpush1.msra.mxu0 0.0
    %5756 = vmatprep.subr.mxu0 0.0
    %5757 = vmatpush1.msra.mxu0 0.0
    %5758 = vmatprep.subr.mxu0 0.0
    %5759 = vmatpush1.msra.mxu0 0.0
    %5760 = vmatprep.subr.mxu0 0.0
    %5761 = vmatpush1.msra.mxu0 0.0
    %5762 = vmatprep.subr.mxu0 0.0
    %5763 = vmatpush1.msra.mxu0 0.0
    %5764 = vmatprep.subr.mxu0 0.0
    %5765 = vmatpush1.msra.mxu0 0.0
    %5766 = vmatprep.subr.mxu0 0.0
    %5767 = vmatpush1.msra.mxu0 0.0
    %5768 = vmatprep.subr.mxu0 0.0
    %5769 = vmatpush1.msra.mxu0 0.0
    %5770 = vmatprep.subr.mxu0 0.0
    %5771 = vmatpush1.msra.mxu0 0.0
    %5772 = vmatprep.subr.mxu0 0.0
    %5773 = vmatpush1.msra.mxu0 0.0
    %5774 = vmatprep.subr.mxu0 0.0
    %5775 = vmatpush1.msra.mxu0 0.0
    %5776 = vmatprep.subr.mxu0 0.0
    %5777 = vmatpush1.msra.mxu0 0.0
    %5778 = vmatprep.subr.mxu0 0.0
    %5779 = vmatpush1.msra.mxu0 0.0
    %5780 = vmatprep.subr.mxu0 0.0
    %5781 = vmatpush1.msra.mxu0 0.0
    %5782 = vmatprep.subr.mxu0 0.0
    %5783 = vmatpush1.msra.mxu0 0.0
    %5784 = vmatprep.subr.mxu0 0.0
    %5785 = vmatpush1.msra.mxu0 0.0
    %5786 = vmatprep.subr.mxu0 0.0
    %5787 = vmatpush1.msra.mxu0 0.0
    %5788 = vmatprep.subr.mxu0 0.0
    %5789 = vmatpush1.msra.mxu0 0.0
    %5790 = vmatprep.subr.mxu0 0.0
    %5791 = vmatpush1.msra.mxu0 0.0
    %5792 = vmatprep.mubr.f32.mxu0 0.0
    %5793 = vmatmul.mubr.f32.gmra.mrb[0].mxu0 %v5644
    %v5794 = vpop.f32.mrb[0].mxu0
    %v5795 = vadd.f32 0.0, %v5794
    %v5796 = vpop.f32.mrb[0].mxu0
    %5797 = vmatprep.mubr.f32.mxu0 0.0
    %5798 = vmatmul.mubr.f32.gmra.mrb[0].mxu0 %v5647
    %v5799 = vpop.f32.mrb[0].mxu0
    %v5800 = vadd.f32 0.0, %v5799
    %v5801 = vpop.f32.mrb[0].mxu0
    %5802 = vdwg.mxu0
    %v5803 = vsel %vm265, %v5635, -inf
    %5804 = vmax.xlane.f32.xlu0 %v5803
    %v5805 = vpop.xlane.xlu0 %5804
    %v5806 = vsel %vm265, %v5640, -inf
    %5807 = vmax.xlane.f32.xlu0 %v5806
    %v5808 = vpop.xlane.xlu0 %5807
    %v5809 = vsub.f32 %v5635, %v5805
    %v5810 = vsub.f32 %v5640, %v5808
    %v5811 = vmul.f32 %v5809, 1.442695
    %v5812 = vpow.pop %v5811
    %v5813 = vmul.f32 %v5810, 1.442695
    %v5814 = vpow.pop %v5813
    %v5816 = vsel %vm265, %v5812, 0
    %v5819 = vsel %vm265, %v5814, 0
    %5821 = vmatprep.subr.mxu0 0.0
    %5822 = vmatpush1.msra.mxu0 %v74
    %5823 = vmatprep.subr.mxu0 0.0
    %5824 = vmatpush1.msra.mxu0 %v75
    %5825 = vmatprep.subr.mxu0 0.0
    %5826 = vmatpush1.msra.mxu0 0.0
    %5827 = vmatprep.subr.mxu0 0.0
    %5828 = vmatpush1.msra.mxu0 0.0
    %5829 = vmatprep.subr.mxu0 0.0
    %5830 = vmatpush1.msra.mxu0 0.0
    %5831 = vmatprep.subr.mxu0 0.0
    %5832 = vmatpush1.msra.mxu0 0.0
    %5833 = vmatprep.subr.mxu0 0.0
    %5834 = vmatpush1.msra.mxu0 0.0
    %5835 = vmatprep.subr.mxu0 0.0
    %5836 = vmatpush1.msra.mxu0 0.0
    %5837 = vmatprep.subr.mxu0 0.0
    %5838 = vmatpush1.msra.mxu0 0.0
    %5839 = vmatprep.subr.mxu0 0.0
    %5840 = vmatpush1.msra.mxu0 0.0
    %5841 = vmatprep.subr.mxu0 0.0
    %5842 = vmatpush1.msra.mxu0 0.0
    %5843 = vmatprep.subr.mxu0 0.0
    %5844 = vmatpush1.msra.mxu0 0.0
    %5845 = vmatprep.subr.mxu0 0.0
    %5846 = vmatpush1.msra.mxu0 0.0
    %5847 = vmatprep.subr.mxu0 0.0
    %5848 = vmatpush1.msra.mxu0 0.0
    %5849 = vmatprep.subr.mxu0 0.0
    %5850 = vmatpush1.msra.mxu0 0.0
    %5851 = vmatprep.subr.mxu0 0.0
    %5852 = vmatpush1.msra.mxu0 0.0
    %5853 = vmatprep.subr.mxu0 0.0
    %5854 = vmatpush1.msra.mxu0 0.0
    %5855 = vmatprep.subr.mxu0 0.0
    %5856 = vmatpush1.msra.mxu0 0.0
    %5857 = vmatprep.subr.mxu0 0.0
    %5858 = vmatpush1.msra.mxu0 0.0
    %5859 = vmatprep.subr.mxu0 0.0
    %5860 = vmatpush1.msra.mxu0 0.0
    %5861 = vmatprep.subr.mxu0 0.0
    %5862 = vmatpush1.msra.mxu0 0.0
    %5863 = vmatprep.subr.mxu0 0.0
    %5864 = vmatpush1.msra.mxu0 0.0
    %5865 = vmatprep.subr.mxu0 0.0
    %5866 = vmatpush1.msra.mxu0 0.0
    %5867 = vmatprep.subr.mxu0 0.0
    %5868 = vmatpush1.msra.mxu0 0.0
    %5869 = vmatprep.subr.mxu0 0.0
    %5870 = vmatpush1.msra.mxu0 0.0
    %5871 = vmatprep.subr.mxu0 0.0
    %5872 = vmatpush1.msra.mxu0 0.0
    %5873 = vmatprep.subr.mxu0 0.0
    %5874 = vmatpush1.msra.mxu0 0.0
    %5875 = vmatprep.subr.mxu0 0.0
    %5876 = vmatpush1.msra.mxu0 0.0
    %5877 = vmatprep.subr.mxu0 0.0
    %5878 = vmatpush1.msra.mxu0 0.0
    %5879 = vmatprep.subr.mxu0 0.0
    %5880 = vmatpush1.msra.mxu0 0.0
    %5881 = vmatprep.subr.mxu0 0.0
    %5882 = vmatpush1.msra.mxu0 0.0
    %5883 = vmatprep.subr.mxu0 0.0
    %5884 = vmatpush1.msra.mxu0 0.0
    %5885 = vmatprep.mubr.f32.mxu0 0.0
    %5886 = vmatmul.mubr.f32.gmra.mrb[0].mxu0 %v5816
    %v5887 = vpop.f32.mrb[0].mxu0
    %v5888 = vadd.f32 0.0, %v5887
    %v5889 = vpop.f32.mrb[0].mxu0
    %5890 = vmatprep.mubr.f32.mxu0 0.0
    %5891 = vmatmul.mubr.f32.gmra.mrb[0].mxu0 %v5819
    %v5892 = vpop.f32.mrb[0].mxu0
    %v5893 = vadd.f32 0.0, %v5892
    %v5894 = vpop.f32.mrb[0].mxu0
    %5895 = vdwg.mxu0
    %v5896 = vrcp.pop %v5888
    %v5897 = vmul.f32 %v5812, %v5896
    %v5898 = vrcp.pop %v5893
    %v5899 = vmul.f32 %v5814, %v5898
    %v5900 = vsel %vm265, %v5720, -inf
    %5901 = vmax.xlane.f32.xlu0 %v5900
    %v5902 = vpop.xlane.xlu0 %5901
    %v5903 = vsel %vm265, %v5725, -inf
    %5904 = vmax.xlane.f32.xlu0 %v5903
    %v5905 = vpop.xlane.xlu0 %5904
    %v5906 = vsub.f32 %v5720, %v5902
    %v5907 = vsub.f32 %v5725, %v5905
    %v5908 = vmul.f32 %v5906, 1.442695
    %v5909 = vpow.pop %v5908
    %v5910 = vmul.f32 %v5907, 1.442695
    %v5911 = vpow.pop %v5910
    %v5912 = vsel %vm265, %v5909, 0.0
    %5913 = vadd.xlane.f32.xlu0 %v5912
    %v5914 = vpop.xlane.xlu0 %5913
    %v5915 = vsel %vm265, %v5911, 0.0
    %5916 = vadd.xlane.f32.xlu0 %v5915
    %v5917 = vpop.xlane.xlu0 %5916
    %v5918 = vrcp.pop %v5914
    %v5919 = vmul.f32 %v5909, %v5918
    %v5920 = vrcp.pop %v5917
    %v5921 = vmul.f32 %v5911, %v5920
    %5922 = vmatprep.subr.mxu0 0.0
    %5923 = vmatpush1.msra.mxu0 %v5318
    %5924 = vmatprep.subr.mxu0 0.0
    %5925 = vmatpush1.msra.mxu0 %v5319
    %5926 = vmatprep.subr.mxu0 0.0
    %5927 = vmatpush1.msra.mxu0 0.0
    %5928 = vmatprep.subr.mxu0 0.0
    %5929 = vmatpush1.msra.mxu0 0.0
    %5930 = vmatprep.subr.mxu0 0.0
    %5931 = vmatpush1.msra.mxu0 0.0
    %5932 = vmatprep.subr.mxu0 0.0
    %5933 = vmatpush1.msra.mxu0 0.0
    %5934 = vmatprep.subr.mxu0 0.0
    %5935 = vmatpush1.msra.mxu0 0.0
    %5936 = vmatprep.subr.mxu0 0.0
    %5937 = vmatpush1.msra.mxu0 0.0
    %5938 = vmatprep.subr.mxu0 0.0
    %5939 = vmatpush1.msra.mxu0 0.0
    %5940 = vmatprep.subr.mxu0 0.0
    %5941 = vmatpush1.msra.mxu0 0.0
    %5942 = vmatprep.subr.mxu0 0.0
    %5943 = vmatpush1.msra.mxu0 0.0
    %5944 = vmatprep.subr.mxu0 0.0
    %5945 = vmatpush1.msra.mxu0 0.0
    %5946 = vmatprep.subr.mxu0 0.0
    %5947 = vmatpush1.msra.mxu0 0.0
    %5948 = vmatprep.subr.mxu0 0.0
    %5949 = vmatpush1.msra.mxu0 0.0
    %5950 = vmatprep.subr.mxu0 0.0
    %5951 = vmatpush1.msra.mxu0 0.0
    %5952 = vmatprep.subr.mxu0 0.0
    %5953 = vmatpush1.msra.mxu0 0.0
    %5954 = vmatprep.subr.mxu0 0.0
    %5955 = vmatpush1.msra.mxu0 0.0
    %5956 = vmatprep.subr.mxu0 0.0
    %5957 = vmatpush1.msra.mxu0 0.0
    %5958 = vmatprep.subr.mxu0 0.0
    %5959 = vmatpush1.msra.mxu0 0.0
    %5960 = vmatprep.subr.mxu0 0.0
    %5961 = vmatpush1.msra.mxu0 0.0
    %5962 = vmatprep.subr.mxu0 0.0
    %5963 = vmatpush1.msra.mxu0 0.0
    %5964 = vmatprep.subr.mxu0 0.0
    %5965 = vmatpush1.msra.mxu0 0.0
    %5966 = vmatprep.subr.mxu0 0.0
    %5967 = vmatpush1.msra.mxu0 0.0
    %5968 = vmatprep.subr.mxu0 0.0
    %5969 = vmatpush1.msra.mxu0 0.0
    %5970 = vmatprep.subr.mxu0 0.0
    %5971 = vmatpush1.msra.mxu0 0.0
    %5972 = vmatprep.subr.mxu0 0.0
    %5973 = vmatpush1.msra.mxu0 0.0
    %5974 = vmatprep.subr.mxu0 0.0
    %5975 = vmatpush1.msra.mxu0 0.0
    %5976 = vmatprep.subr.mxu0 0.0
    %5977 = vmatpush1.msra.mxu0 0.0
    %5978 = vmatprep.subr.mxu0 0.0
    %5979 = vmatpush1.msra.mxu0 0.0
    %5980 = vmatprep.subr.mxu0 0.0
    %5981 = vmatpush1.msra.mxu0 0.0
    %5982 = vmatprep.subr.mxu0 0.0
    %5983 = vmatpush1.msra.mxu0 0.0
    %5984 = vmatprep.subr.mxu0 0.0
    %5985 = vmatpush1.msra.mxu0 0.0
    %5986 = vmatprep.mubr.f32.mxu0 0.0
    %5987 = vmatmul.mubr.f32.gmra.mrb[0].mxu0 %v267
    %v5988 = vpop.f32.mrb[0].mxu0
    %v5989 = vadd.f32 0.0, %v5988
    %v5990 = vpop.f32.mrb[0].mxu0
    %5991 = vdwg.mxu0
    %5994 = vrot.lane.b32.xlu0 %v5308, 96
    %v5995 = vpop.permute.xlu0 %5994
    %5996 = vrot.lane.b32.xlu0 %v5313, 96
    %v5997 = vpop.permute.xlu0 %5996
    %6000 = vmatprep.subr.mxu0 0.0
    %6001 = vmatpush1.msra.mxu0 %v5995
    %6002 = vmatprep.subr.mxu0 0.0
    %6003 = vmatpush1.msra.mxu0 %v5997
    %6004 = vmatprep.subr.mxu0 0.0
    %6005 = vmatpush1.msra.mxu0 0.0
    %6006 = vmatprep.subr.mxu0 0.0
    %6007 = vmatpush1.msra.mxu0 0.0
    %6008 = vmatprep.subr.mxu0 0.0
    %6009 = vmatpush1.msra.mxu0 0.0
    %6010 = vmatprep.subr.mxu0 0.0
    %6011 = vmatpush1.msra.mxu0 0.0
    %6012 = vmatprep.subr.mxu0 0.0
    %6013 = vmatpush1.msra.mxu0 0.0
    %6014 = vmatprep.subr.mxu0 0.0
    %6015 = vmatpush1.msra.mxu0 0.0
    %6016 = vmatprep.subr.mxu0 0.0
    %6017 = vmatpush1.msra.mxu0 0.0
    %6018 = vmatprep.subr.mxu0 0.0
    %6019 = vmatpush1.msra.mxu0 0.0
    %6020 = vmatprep.subr.mxu0 0.0
    %6021 = vmatpush1.msra.mxu0 0.0
    %6022 = vmatprep.subr.mxu0 0.0
    %6023 = vmatpush1.msra.mxu0 0.0
    %6024 = vmatprep.subr.mxu0 0.0
    %6025 = vmatpush1.msra.mxu0 0.0
    %6026 = vmatprep.subr.mxu0 0.0
    %6027 = vmatpush1.msra.mxu0 0.0
    %6028 = vmatprep.subr.mxu0 0.0
    %6029 = vmatpush1.msra.mxu0 0.0
    %6030 = vmatprep.subr.mxu0 0.0
    %6031 = vmatpush1.msra.mxu0 0.0
    %6032 = vmatprep.subr.mxu0 0.0
    %6033 = vmatpush1.msra.mxu0 0.0
    %6034 = vmatprep.subr.mxu0 0.0
    %6035 = vmatpush1.msra.mxu0 0.0
    %6036 = vmatprep.subr.mxu0 0.0
    %6037 = vmatpush1.msra.mxu0 0.0
    %6038 = vmatprep.subr.mxu0 0.0
    %6039 = vmatpush1.msra.mxu0 0.0
    %6040 = vmatprep.subr.mxu0 0.0
    %6041 = vmatpush1.msra.mxu0 0.0
    %6042 = vmatprep.subr.mxu0 0.0
    %6043 = vmatpush1.msra.mxu0 0.0
    %6044 = vmatprep.subr.mxu0 0.0
    %6045 = vmatpush1.msra.mxu0 0.0
    %6046 = vmatprep.subr.mxu0 0.0
    %6047 = vmatpush1.msra.mxu0 0.0
    %6048 = vmatprep.subr.mxu0 0.0
    %6049 = vmatpush1.msra.mxu0 0.0
    %6050 = vmatprep.subr.mxu0 0.0
    %6051 = vmatpush1.msra.mxu0 0.0
    %6052 = vmatprep.subr.mxu0 0.0
    %6053 = vmatpush1.msra.mxu0 0.0
    %6054 = vmatprep.subr.mxu0 0.0
    %6055 = vmatpush1.msra.mxu0 0.0
    %6056 = vmatprep.subr.mxu0 0.0
    %6057 = vmatpush1.msra.mxu0 0.0
    %6058 = vmatprep.subr.mxu0 0.0
    %6059 = vmatpush1.msra.mxu0 0.0
    %6060 = vmatprep.subr.mxu0 0.0
    %6061 = vmatpush1.msra.mxu0 0.0
    %6062 = vmatprep.subr.mxu0 0.0
    %6063 = vmatpush1.msra.mxu0 0.0
    %6064 = vmatprep.mubr.f32.mxu0 0.0
    %6065 = vmatmul.mubr.f32.gmra.mrb[0].mxu0 %v267
    %v6066 = vpop.f32.mrb[0].mxu0
    %v6067 = vadd.f32 0.0, %v6066
    %v6068 = vpop.f32.mrb[0].mxu0
    %6069 = vdwg.mxu0
    %6070 = vxpose.xlu0.b32.start [1/16] %v6067, 128
    %6071 = vxpose.xlu0.b32.cont [2/16] 0.0, 128
    %6072 = vxpose.xlu0.b32.cont [3/16] 0.0, 128
    %6073 = vxpose.xlu0.b32.cont [4/16] 0.0, 128
    %6074 = vxpose.xlu0.b32.cont [5/16] 0.0, 128
    %6075 = vxpose.xlu0.b32.cont [6/16] 0.0, 128
    %6076 = vxpose.xlu0.b32.cont [7/16] 0.0, 128
    %6077 = vxpose.xlu0.b32.cont [8/16] 0.0, 128
    %6078 = vxpose.xlu0.b32.cont [9/16] 0.0, 128
    %6079 = vxpose.xlu0.b32.cont [10/16] 0.0, 128
    %6080 = vxpose.xlu0.b32.cont [11/16] 0.0, 128
    %6081 = vxpose.xlu0.b32.cont [12/16] 0.0, 128
    %6082 = vxpose.xlu0.b32.cont [13/16] 0.0, 128
    %6083 = vxpose.xlu0.b32.cont [14/16] 0.0, 128
    %6084 = vxpose.xlu0.b32.cont [15/16] 0.0, 128
    %6085 = vxpose.xlu0.b32.end [16/16] 0.0, 128
    %v6086 = vpop.trf.xlu0
    %v6087 = vpop.trf.xlu0
    %v6088 = vpop.trf.xlu0
    %v6089 = vpop.trf.xlu0
    %v6090 = vpop.trf.xlu0
    %v6091 = vpop.trf.xlu0
    %v6092 = vpop.trf.xlu0
    %v6093 = vpop.trf.xlu0
    %v6094 = vpop.trf.xlu0
    %v6095 = vpop.trf.xlu0
    %v6096 = vpop.trf.xlu0
    %v6097 = vpop.trf.xlu0
    %v6098 = vpop.trf.xlu0
    %v6099 = vpop.trf.xlu0
    %v6100 = vpop.trf.xlu0
    %v6101 = vpop.trf.xlu0
    %6106 = vrot.lane.b32.xlu0 %v6086, 4
    %v6107 = vpop.permute.xlu0 %6106
    %6108 = vrot.lane.b32.xlu0 %v6087, 4
    %v6109 = vpop.permute.xlu0 %6108
    %6110 = vrot.lane.b32.xlu0 %v6088, 4
    %v6111 = vpop.permute.xlu0 %6110
    %6112 = vrot.lane.b32.xlu0 %v6089, 4
    %v6113 = vpop.permute.xlu0 %6112
    %6118 = vrot.lane.b32.xlu0 %v6086, 8
    %v6119 = vpop.permute.xlu0 %6118
    %6120 = vrot.lane.b32.xlu0 %v6087, 8
    %v6121 = vpop.permute.xlu0 %6120
    %6122 = vrot.lane.b32.xlu0 %v6088, 8
    %v6123 = vpop.permute.xlu0 %6122
    %6124 = vrot.lane.b32.xlu0 %v6089, 8
    %v6125 = vpop.permute.xlu0 %6124
    %6130 = vrot.lane.b32.xlu0 %v6086, 12
    %v6131 = vpop.permute.xlu0 %6130
    %6132 = vrot.lane.b32.xlu0 %v6087, 12
    %v6133 = vpop.permute.xlu0 %6132
    %6134 = vrot.lane.b32.xlu0 %v6088, 12
    %v6135 = vpop.permute.xlu0 %6134
    %6136 = vrot.lane.b32.xlu0 %v6089, 12
    %v6137 = vpop.permute.xlu0 %6136
    %v6142 = vsel %vm489, %v6086, %v6107
    %v6143 = vsel %vm489, %v6087, %v6109
    %v6144 = vsel %vm489, %v6088, %v6111
    %v6145 = vsel %vm489, %v6089, %v6113
    %v6146 = vsel %vm494, %v6142, %v6119
    %v6147 = vsel %vm494, %v6143, %v6121
    %v6148 = vsel %vm494, %v6144, %v6123
    %v6149 = vsel %vm494, %v6145, %v6125
    %v6150 = vsel %vm499, %v6146, %v6131
    %v6151 = vsel %vm499, %v6147, %v6133
    %v6152 = vsel %vm499, %v6148, %v6135
    %v6153 = vsel %vm499, %v6149, %v6137
    %v6154 = vmul.f32 %v6150, %v68
    %v6155 = vmul.f32 %v6151, %v69
    %v6156 = vmul.f32 %v6152, %v70
    %v6157 = vmul.f32 %v6153, %v71
    %v6159 = vrot.slane %v5989, 4
    %v6161 = vsel %vm511, %v5989, %v6159
    %v6162 = vmul.f32 %v6161, %v72
    %v6163 = vmul.f32 %v6161, %v73
    %v6165 = vsel %vm86, %v5318, 0
    %v6168 = vsel %vm86, %v5319, 0
    %6170 = vmatprep.subr.mxu0 0.0
    %6171 = vmatpush1.msra.mxu0 %v6154
    %6172 = vmatprep.subr.mxu0 0.0
    %6173 = vmatpush1.msra.mxu0 %v6155
    %6174 = vmatprep.subr.mxu0 0.0
    %6175 = vmatpush1.msra.mxu0 %v6156
    %6176 = vmatprep.subr.mxu0 0.0
    %6177 = vmatpush1.msra.mxu0 %v6157
    %6178 = vmatprep.subr.mxu0 0.0
    %6179 = vmatpush1.msra.mxu0 0.0
    %6180 = vmatprep.subr.mxu0 0.0
    %6181 = vmatpush1.msra.mxu0 0.0
    %6182 = vmatprep.subr.mxu0 0.0
    %6183 = vmatpush1.msra.mxu0 0.0
    %6184 = vmatprep.subr.mxu0 0.0
    %6185 = vmatpush1.msra.mxu0 0.0
    %6186 = vmatprep.subr.mxu0 0.0
    %6187 = vmatpush1.msra.mxu0 0.0
    %6188 = vmatprep.subr.mxu0 0.0
    %6189 = vmatpush1.msra.mxu0 0.0
    %6190 = vmatprep.subr.mxu0 0.0
    %6191 = vmatpush1.msra.mxu0 0.0
    %6192 = vmatprep.subr.mxu0 0.0
    %6193 = vmatpush1.msra.mxu0 0.0
    %6194 = vmatprep.subr.mxu0 0.0
    %6195 = vmatpush1.msra.mxu0 0.0
    %6196 = vmatprep.subr.mxu0 0.0
    %6197 = vmatpush1.msra.mxu0 0.0
    %6198 = vmatprep.subr.mxu0 0.0
    %6199 = vmatpush1.msra.mxu0 0.0
    %6200 = vmatprep.subr.mxu0 0.0
    %6201 = vmatpush1.msra.mxu0 0.0
    %6202 = vmatprep.subr.mxu0 0.0
    %6203 = vmatpush1.msra.mxu0 0.0
    %6204 = vmatprep.subr.mxu0 0.0
    %6205 = vmatpush1.msra.mxu0 0.0
    %6206 = vmatprep.subr.mxu0 0.0
    %6207 = vmatpush1.msra.mxu0 0.0
    %6208 = vmatprep.subr.mxu0 0.0
    %6209 = vmatpush1.msra.mxu0 0.0
    %6210 = vmatprep.subr.mxu0 0.0
    %6211 = vmatpush1.msra.mxu0 0.0
    %6212 = vmatprep.subr.mxu0 0.0
    %6213 = vmatpush1.msra.mxu0 0.0
    %6214 = vmatprep.subr.mxu0 0.0
    %6215 = vmatpush1.msra.mxu0 0.0
    %6216 = vmatprep.subr.mxu0 0.0
    %6217 = vmatpush1.msra.mxu0 0.0
    %6218 = vmatprep.subr.mxu0 0.0
    %6219 = vmatpush1.msra.mxu0 0.0
    %6220 = vmatprep.subr.mxu0 0.0
    %6221 = vmatpush1.msra.mxu0 0.0
    %6222 = vmatprep.subr.mxu0 0.0
    %6223 = vmatpush1.msra.mxu0 0.0
    %6224 = vmatprep.subr.mxu0 0.0
    %6225 = vmatpush1.msra.mxu0 0.0
    %6226 = vmatprep.subr.mxu0 0.0
    %6227 = vmatpush1.msra.mxu0 0.0
    %6228 = vmatprep.subr.mxu0 0.0
    %6229 = vmatpush1.msra.mxu0 0.0
    %6230 = vmatprep.subr.mxu0 0.0
    %6231 = vmatpush1.msra.mxu0 0.0
    %6232 = vmatprep.subr.mxu0 0.0
    %6233 = vmatpush1.msra.mxu0 0.0
    %6234 = vmatprep.mubr.f32.mxu0 0.0
    %6235 = vmatmul.mubr.f32.gmra.mrb[0].mxu0 %v6165
    %v6236 = vpop.f32.mrb[0].mxu0
    %v6237 = vadd.f32 0.0, %v6236
    %v6238 = vpop.f32.mrb[0].mxu0
    %6239 = vmatprep.mubr.f32.mxu0 0.0
    %6240 = vmatmul.mubr.f32.gmra.mrb[0].mxu0 %v6168
    %v6241 = vpop.f32.mrb[0].mxu0
    %v6242 = vadd.f32 0.0, %v6241
    %v6243 = vpop.f32.mrb[0].mxu0
    %6244 = vdwg.mxu0
    %v6246 = vsel %vm86, %v6162, 0
    %v6249 = vsel %vm86, %v6163, 0
    %v6251 = vsel %vm86, %v5995, 0
    %v6253 = vsel %vm86, %v5997, 0
    %6255 = vmatprep.subr.mxu0 0.0
    %6256 = vmatpush1.xpose.msra.mxu0 %v6251
    %6257 = vmatprep.subr.mxu0 0.0
    %6258 = vmatpush1.xpose.msra.mxu0 %v6253
    %6259 = vmatprep.subr.mxu0 0.0
    %6260 = vmatpush1.xpose.msra.mxu0 0.0
    %6261 = vmatprep.subr.mxu0 0.0
    %6262 = vmatpush1.xpose.msra.mxu0 0.0
    %6263 = vmatprep.subr.mxu0 0.0
    %6264 = vmatpush1.xpose.msra.mxu0 0.0
    %6265 = vmatprep.subr.mxu0 0.0
    %6266 = vmatpush1.xpose.msra.mxu0 0.0
    %6267 = vmatprep.subr.mxu0 0.0
    %6268 = vmatpush1.xpose.msra.mxu0 0.0
    %6269 = vmatprep.subr.mxu0 0.0
    %6270 = vmatpush1.xpose.msra.mxu0 0.0
    %6271 = vmatprep.subr.mxu0 0.0
    %6272 = vmatpush1.xpose.msra.mxu0 0.0
    %6273 = vmatprep.subr.mxu0 0.0
    %6274 = vmatpush1.xpose.msra.mxu0 0.0
    %6275 = vmatprep.subr.mxu0 0.0
    %6276 = vmatpush1.xpose.msra.mxu0 0.0
    %6277 = vmatprep.subr.mxu0 0.0
    %6278 = vmatpush1.xpose.msra.mxu0 0.0
    %6279 = vmatprep.subr.mxu0 0.0
    %6280 = vmatpush1.xpose.msra.mxu0 0.0
    %6281 = vmatprep.subr.mxu0 0.0
    %6282 = vmatpush1.xpose.msra.mxu0 0.0
    %6283 = vmatprep.subr.mxu0 0.0
    %6284 = vmatpush1.xpose.msra.mxu0 0.0
    %6285 = vmatprep.subr.mxu0 0.0
    %6286 = vmatpush1.xpose.msra.mxu0 0.0
    %6287 = vmatprep.subr.mxu0 0.0
    %6288 = vmatpush1.xpose.msra.mxu0 0.0
    %6289 = vmatprep.subr.mxu0 0.0
    %6290 = vmatpush1.xpose.msra.mxu0 0.0
    %6291 = vmatprep.subr.mxu0 0.0
    %6292 = vmatpush1.xpose.msra.mxu0 0.0
    %6293 = vmatprep.subr.mxu0 0.0
    %6294 = vmatpush1.xpose.msra.mxu0 0.0
    %6295 = vmatprep.subr.mxu0 0.0
    %6296 = vmatpush1.xpose.msra.mxu0 0.0
    %6297 = vmatprep.subr.mxu0 0.0
    %6298 = vmatpush1.xpose.msra.mxu0 0.0
    %6299 = vmatprep.subr.mxu0 0.0
    %6300 = vmatpush1.xpose.msra.mxu0 0.0
    %6301 = vmatprep.subr.mxu0 0.0
    %6302 = vmatpush1.xpose.msra.mxu0 0.0
    %6303 = vmatprep.subr.mxu0 0.0
    %6304 = vmatpush1.xpose.msra.mxu0 0.0
    %6305 = vmatprep.subr.mxu0 0.0
    %6306 = vmatpush1.xpose.msra.mxu0 0.0
    %6307 = vmatprep.subr.mxu0 0.0
    %6308 = vmatpush1.xpose.msra.mxu0 0.0
    %6309 = vmatprep.subr.mxu0 0.0
    %6310 = vmatpush1.xpose.msra.mxu0 0.0
    %6311 = vmatprep.subr.mxu0 0.0
    %6312 = vmatpush1.xpose.msra.mxu0 0.0
    %6313 = vmatprep.subr.mxu0 0.0
    %6314 = vmatpush1.xpose.msra.mxu0 0.0
    %6315 = vmatprep.subr.mxu0 0.0
    %6316 = vmatpush1.xpose.msra.mxu0 0.0
    %6317 = vmatprep.subr.mxu0 0.0
    %6318 = vmatpush1.xpose.msra.mxu0 0.0
    %6319 = vmatprep.mubr.f32.mxu0 0.0
    %6320 = vmatmul.mubr.f32.gmra.mrb[0].mxu0 %v6246
    %v6321 = vpop.f32.mrb[0].mxu0
    %v6322 = vadd.f32 0.0, %v6321
    %v6323 = vpop.f32.mrb[0].mxu0
    %6324 = vmatprep.mubr.f32.mxu0 0.0
    %6325 = vmatmul.mubr.f32.gmra.mrb[0].mxu0 %v6249
    %v6326 = vpop.f32.mrb[0].mxu0
    %v6327 = vadd.f32 0.0, %v6326
    %v6328 = vpop.f32.mrb[0].mxu0
    %6329 = vdwg.mxu0
    %6330 = vmatprep.subr.mxu0 0.0
    %6331 = vmatpush1.msra.mxu0 %v6086
    %6332 = vmatprep.subr.mxu0 0.0
    %6333 = vmatpush1.msra.mxu0 %v6087
    %6334 = vmatprep.subr.mxu0 0.0
    %6335 = vmatpush1.msra.mxu0 %v6088
    %6336 = vmatprep.subr.mxu0 0.0
    %6337 = vmatpush1.msra.mxu0 %v6089
    %6338 = vmatprep.subr.mxu0 0.0
    %6339 = vmatpush1.msra.mxu0 0.0
    %6340 = vmatprep.subr.mxu0 0.0
    %6341 = vmatpush1.msra.mxu0 0.0
    %6342 = vmatprep.subr.mxu0 0.0
    %6343 = vmatpush1.msra.mxu0 0.0
    %6344 = vmatprep.subr.mxu0 0.0
    %6345 = vmatpush1.msra.mxu0 0.0
    %6346 = vmatprep.subr.mxu0 0.0
    %6347 = vmatpush1.msra.mxu0 0.0
    %6348 = vmatprep.subr.mxu0 0.0
    %6349 = vmatpush1.msra.mxu0 0.0
    %6350 = vmatprep.subr.mxu0 0.0
    %6351 = vmatpush1.msra.mxu0 0.0
    %6352 = vmatprep.subr.mxu0 0.0
    %6353 = vmatpush1.msra.mxu0 0.0
    %6354 = vmatprep.subr.mxu0 0.0
    %6355 = vmatpush1.msra.mxu0 0.0
    %6356 = vmatprep.subr.mxu0 0.0
    %6357 = vmatpush1.msra.mxu0 0.0
    %6358 = vmatprep.subr.mxu0 0.0
    %6359 = vmatpush1.msra.mxu0 0.0
    %6360 = vmatprep.subr.mxu0 0.0
    %6361 = vmatpush1.msra.mxu0 0.0
    %6362 = vmatprep.subr.mxu0 0.0
    %6363 = vmatpush1.msra.mxu0 0.0
    %6364 = vmatprep.subr.mxu0 0.0
    %6365 = vmatpush1.msra.mxu0 0.0
    %6366 = vmatprep.subr.mxu0 0.0
    %6367 = vmatpush1.msra.mxu0 0.0
    %6368 = vmatprep.subr.mxu0 0.0
    %6369 = vmatpush1.msra.mxu0 0.0
    %6370 = vmatprep.subr.mxu0 0.0
    %6371 = vmatpush1.msra.mxu0 0.0
    %6372 = vmatprep.subr.mxu0 0.0
    %6373 = vmatpush1.msra.mxu0 0.0
    %6374 = vmatprep.subr.mxu0 0.0
    %6375 = vmatpush1.msra.mxu0 0.0
    %6376 = vmatprep.subr.mxu0 0.0
    %6377 = vmatpush1.msra.mxu0 0.0
    %6378 = vmatprep.subr.mxu0 0.0
    %6379 = vmatpush1.msra.mxu0 0.0
    %6380 = vmatprep.subr.mxu0 0.0
    %6381 = vmatpush1.msra.mxu0 0.0
    %6382 = vmatprep.subr.mxu0 0.0
    %6383 = vmatpush1.msra.mxu0 0.0
    %6384 = vmatprep.subr.mxu0 0.0
    %6385 = vmatpush1.msra.mxu0 0.0
    %6386 = vmatprep.subr.mxu0 0.0
    %6387 = vmatpush1.msra.mxu0 0.0
    %6388 = vmatprep.subr.mxu0 0.0
    %6389 = vmatpush1.msra.mxu0 0.0
    %6390 = vmatprep.subr.mxu0 0.0
    %6391 = vmatpush1.msra.mxu0 0.0
    %6392 = vmatprep.subr.mxu0 0.0
    %6393 = vmatpush1.msra.mxu0 0.0
    %6394 = vmatprep.mubr.f32.mxu0 0.0
    %6395 = vmatmul.mubr.f32.gmra.mrb[0].mxu0 %v6246
    %v6396 = vpop.f32.mrb[0].mxu0
    %v6397 = vadd.f32 0.0, %v6396
    %v6398 = vpop.f32.mrb[0].mxu0
    %6399 = vmatprep.mubr.f32.mxu0 0.0
    %6400 = vmatmul.mubr.f32.gmra.mrb[0].mxu0 %v6249
    %v6401 = vpop.f32.mrb[0].mxu0
    %v6402 = vadd.f32 0.0, %v6401
    %v6403 = vpop.f32.mrb[0].mxu0
    %6404 = vdwg.mxu0
    %v6405 = vsel %vm265, %v6237, -inf
    %6406 = vmax.xlane.f32.xlu0 %v6405
    %v6407 = vpop.xlane.xlu0 %6406
    %v6408 = vsel %vm265, %v6242, -inf
    %6409 = vmax.xlane.f32.xlu0 %v6408
    %v6410 = vpop.xlane.xlu0 %6409
    %v6411 = vsub.f32 %v6237, %v6407
    %v6412 = vsub.f32 %v6242, %v6410
    %v6413 = vmul.f32 %v6411, 1.442695
    %v6414 = vpow.pop %v6413
    %v6415 = vmul.f32 %v6412, 1.442695
    %v6416 = vpow.pop %v6415
    %v6418 = vsel %vm265, %v6414, 0
    %v6421 = vsel %vm265, %v6416, 0
    %6423 = vmatprep.subr.mxu0 0.0
    %6424 = vmatpush1.msra.mxu0 %v74
    %6425 = vmatprep.subr.mxu0 0.0
    %6426 = vmatpush1.msra.mxu0 %v75
    %6427 = vmatprep.subr.mxu0 0.0
    %6428 = vmatpush1.msra.mxu0 0.0
    %6429 = vmatprep.subr.mxu0 0.0
    %6430 = vmatpush1.msra.mxu0 0.0
    %6431 = vmatprep.subr.mxu0 0.0
    %6432 = vmatpush1.msra.mxu0 0.0
    %6433 = vmatprep.subr.mxu0 0.0
    %6434 = vmatpush1.msra.mxu0 0.0
    %6435 = vmatprep.subr.mxu0 0.0
    %6436 = vmatpush1.msra.mxu0 0.0
    %6437 = vmatprep.subr.mxu0 0.0
    %6438 = vmatpush1.msra.mxu0 0.0
    %6439 = vmatprep.subr.mxu0 0.0
    %6440 = vmatpush1.msra.mxu0 0.0
    %6441 = vmatprep.subr.mxu0 0.0
    %6442 = vmatpush1.msra.mxu0 0.0
    %6443 = vmatprep.subr.mxu0 0.0
    %6444 = vmatpush1.msra.mxu0 0.0
    %6445 = vmatprep.subr.mxu0 0.0
    %6446 = vmatpush1.msra.mxu0 0.0
    %6447 = vmatprep.subr.mxu0 0.0
    %6448 = vmatpush1.msra.mxu0 0.0
    %6449 = vmatprep.subr.mxu0 0.0
    %6450 = vmatpush1.msra.mxu0 0.0
    %6451 = vmatprep.subr.mxu0 0.0
    %6452 = vmatpush1.msra.mxu0 0.0
    %6453 = vmatprep.subr.mxu0 0.0
    %6454 = vmatpush1.msra.mxu0 0.0
    %6455 = vmatprep.subr.mxu0 0.0
    %6456 = vmatpush1.msra.mxu0 0.0
    %6457 = vmatprep.subr.mxu0 0.0
    %6458 = vmatpush1.msra.mxu0 0.0
    %6459 = vmatprep.subr.mxu0 0.0
    %6460 = vmatpush1.msra.mxu0 0.0
    %6461 = vmatprep.subr.mxu0 0.0
    %6462 = vmatpush1.msra.mxu0 0.0
    %6463 = vmatprep.subr.mxu0 0.0
    %6464 = vmatpush1.msra.mxu0 0.0
    %6465 = vmatprep.subr.mxu0 0.0
    %6466 = vmatpush1.msra.mxu0 0.0
    %6467 = vmatprep.subr.mxu0 0.0
    %6468 = vmatpush1.msra.mxu0 0.0
    %6469 = vmatprep.subr.mxu0 0.0
    %6470 = vmatpush1.msra.mxu0 0.0
    %6471 = vmatprep.subr.mxu0 0.0
    %6472 = vmatpush1.msra.mxu0 0.0
    %6473 = vmatprep.subr.mxu0 0.0
    %6474 = vmatpush1.msra.mxu0 0.0
    %6475 = vmatprep.subr.mxu0 0.0
    %6476 = vmatpush1.msra.mxu0 0.0
    %6477 = vmatprep.subr.mxu0 0.0
    %6478 = vmatpush1.msra.mxu0 0.0
    %6479 = vmatprep.subr.mxu0 0.0
    %6480 = vmatpush1.msra.mxu0 0.0
    %6481 = vmatprep.subr.mxu0 0.0
    %6482 = vmatpush1.msra.mxu0 0.0
    %6483 = vmatprep.subr.mxu0 0.0
    %6484 = vmatpush1.msra.mxu0 0.0
    %6485 = vmatprep.subr.mxu0 0.0
    %6486 = vmatpush1.msra.mxu0 0.0
    %6487 = vmatprep.mubr.f32.mxu0 0.0
    %6488 = vmatmul.mubr.f32.gmra.mrb[0].mxu0 %v6418
    %v6489 = vpop.f32.mrb[0].mxu0
    %v6490 = vadd.f32 0.0, %v6489
    %v6491 = vpop.f32.mrb[0].mxu0
    %6492 = vmatprep.mubr.f32.mxu0 0.0
    %6493 = vmatmul.mubr.f32.gmra.mrb[0].mxu0 %v6421
    %v6494 = vpop.f32.mrb[0].mxu0
    %v6495 = vadd.f32 0.0, %v6494
    %v6496 = vpop.f32.mrb[0].mxu0
    %6497 = vdwg.mxu0
    %v6498 = vrcp.pop %v6490
    %v6499 = vmul.f32 %v6414, %v6498
    %v6500 = vrcp.pop %v6495
    %v6501 = vmul.f32 %v6416, %v6500
    %v6502 = vsel %vm265, %v6322, -inf
    %6503 = vmax.xlane.f32.xlu0 %v6502
    %v6504 = vpop.xlane.xlu0 %6503
    %v6505 = vsel %vm265, %v6327, -inf
    %6506 = vmax.xlane.f32.xlu0 %v6505
    %v6507 = vpop.xlane.xlu0 %6506
    %v6508 = vsub.f32 %v6322, %v6504
    %v6509 = vsub.f32 %v6327, %v6507
    %v6510 = vmul.f32 %v6508, 1.442695
    %v6511 = vpow.pop %v6510
    %v6512 = vmul.f32 %v6509, 1.442695
    %v6513 = vpow.pop %v6512
    %v6514 = vsel %vm265, %v6511, 0.0
    %6515 = vadd.xlane.f32.xlu0 %v6514
    %v6516 = vpop.xlane.xlu0 %6515
    %v6517 = vsel %vm265, %v6513, 0.0
    %6518 = vadd.xlane.f32.xlu0 %v6517
    %v6519 = vpop.xlane.xlu0 %6518
    %v6520 = vrcp.pop %v6516
    %v6521 = vmul.f32 %v6511, %v6520
    %v6522 = vrcp.pop %v6519
    %v6523 = vmul.f32 %v6513, %v6522
    %v6524 = vsel %vm489, %v5795, -inf
    %6525 = vmax.xlane.f32.xlu0 %v6524
    %v6526 = vpop.xlane.xlu0 %6525
    %v6527 = vsel %vm489, %v5800, -inf
    %6528 = vmax.xlane.f32.xlu0 %v6527
    %v6529 = vpop.xlane.xlu0 %6528
    %v6530 = vsel %vm489, %v6397, -inf
    %6531 = vmax.xlane.f32.xlu0 %v6530
    %v6532 = vpop.xlane.xlu0 %6531
    %v6533 = vsel %vm489, %v6402, -inf
    %6534 = vmax.xlane.f32.xlu0 %v6533
    %v6535 = vpop.xlane.xlu0 %6534
    %v6536 = vsub.f32 %v5795, %v6526
    %v6537 = vsub.f32 %v5800, %v6529
    %v6538 = vsub.f32 %v6397, %v6532
    %v6539 = vsub.f32 %v6402, %v6535
    %v6540 = vmul.f32 %v6536, 1.442695
    %v6541 = vpow.pop %v6540
    %v6542 = vmul.f32 %v6537, 1.442695
    %v6543 = vpow.pop %v6542
    %v6544 = vmul.f32 %v6538, 1.442695
    %v6545 = vpow.pop %v6544
    %v6546 = vmul.f32 %v6539, 1.442695
    %v6547 = vpow.pop %v6546
    %v6548 = vsel %vm489, %v6541, 0.0
    %6549 = vadd.xlane.f32.xlu0 %v6548
    %v6550 = vpop.xlane.xlu0 %6549
    %v6551 = vsel %vm489, %v6543, 0.0
    %6552 = vadd.xlane.f32.xlu0 %v6551
    %v6553 = vpop.xlane.xlu0 %6552
    %v6554 = vsel %vm489, %v6545, 0.0
    %6555 = vadd.xlane.f32.xlu0 %v6554
    %v6556 = vpop.xlane.xlu0 %6555
    %v6557 = vsel %vm489, %v6547, 0.0
    %6558 = vadd.xlane.f32.xlu0 %v6557
    %v6559 = vpop.xlane.xlu0 %6558
    %v6560 = vrcp.pop %v6550
    %v6561 = vmul.f32 %v6541, %v6560
    %v6562 = vrcp.pop %v6553
    %v6563 = vmul.f32 %v6543, %v6562
    %v6564 = vrcp.pop %v6556
    %v6565 = vmul.f32 %v6545, %v6564
    %v6566 = vrcp.pop %v6559
    %v6567 = vmul.f32 %v6547, %v6566
    %6572 = vrot.lane.b32.xlu0 %v6561, 4
    %v6573 = vpop.permute.xlu0 %6572
    %6574 = vrot.lane.b32.xlu0 %v6563, 4
    %v6575 = vpop.permute.xlu0 %6574
    %6576 = vrot.lane.b32.xlu0 %v6565, 4
    %v6577 = vpop.permute.xlu0 %6576
    %6578 = vrot.lane.b32.xlu0 %v6567, 4
    %v6579 = vpop.permute.xlu0 %6578
    %6584 = vrot.lane.b32.xlu0 %v6561, 8
    %v6585 = vpop.permute.xlu0 %6584
    %6586 = vrot.lane.b32.xlu0 %v6563, 8
    %v6587 = vpop.permute.xlu0 %6586
    %6588 = vrot.lane.b32.xlu0 %v6565, 8
    %v6589 = vpop.permute.xlu0 %6588
    %6590 = vrot.lane.b32.xlu0 %v6567, 8
    %v6591 = vpop.permute.xlu0 %6590
    %6596 = vrot.lane.b32.xlu0 %v6561, 12
    %v6597 = vpop.permute.xlu0 %6596
    %6598 = vrot.lane.b32.xlu0 %v6563, 12
    %v6599 = vpop.permute.xlu0 %6598
    %6600 = vrot.lane.b32.xlu0 %v6565, 12
    %v6601 = vpop.permute.xlu0 %6600
    %6602 = vrot.lane.b32.xlu0 %v6567, 12
    %v6603 = vpop.permute.xlu0 %6602
    %6608 = vrot.lane.b32.xlu0 %v6561, 16
    %v6609 = vpop.permute.xlu0 %6608
    %6610 = vrot.lane.b32.xlu0 %v6563, 16
    %v6611 = vpop.permute.xlu0 %6610
    %6612 = vrot.lane.b32.xlu0 %v6565, 16
    %v6613 = vpop.permute.xlu0 %6612
    %6614 = vrot.lane.b32.xlu0 %v6567, 16
    %v6615 = vpop.permute.xlu0 %6614
    %6620 = vrot.lane.b32.xlu0 %v6561, 20
    %v6621 = vpop.permute.xlu0 %6620
    %6622 = vrot.lane.b32.xlu0 %v6563, 20
    %v6623 = vpop.permute.xlu0 %6622
    %6624 = vrot.lane.b32.xlu0 %v6565, 20
    %v6625 = vpop.permute.xlu0 %6624
    %6626 = vrot.lane.b32.xlu0 %v6567, 20
    %v6627 = vpop.permute.xlu0 %6626
    %6632 = vrot.lane.b32.xlu0 %v6561, 24
    %v6633 = vpop.permute.xlu0 %6632
    %6634 = vrot.lane.b32.xlu0 %v6563, 24
    %v6635 = vpop.permute.xlu0 %6634
    %6636 = vrot.lane.b32.xlu0 %v6565, 24
    %v6637 = vpop.permute.xlu0 %6636
    %6638 = vrot.lane.b32.xlu0 %v6567, 24
    %v6639 = vpop.permute.xlu0 %6638
    %6644 = vrot.lane.b32.xlu0 %v6561, 28
    %v6645 = vpop.permute.xlu0 %6644
    %6646 = vrot.lane.b32.xlu0 %v6563, 28
    %v6647 = vpop.permute.xlu0 %6646
    %6648 = vrot.lane.b32.xlu0 %v6565, 28
    %v6649 = vpop.permute.xlu0 %6648
    %6650 = vrot.lane.b32.xlu0 %v6567, 28
    %v6651 = vpop.permute.xlu0 %6650
    %v6656 = vsel %vm489, %v6561, %v6573
    %v6657 = vsel %vm489, %v6563, %v6575
    %v6658 = vsel %vm489, %v6565, %v6577
    %v6659 = vsel %vm489, %v6567, %v6579
    %v6660 = vsel %vm494, %v6656, %v6585
    %v6661 = vsel %vm494, %v6657, %v6587
    %v6662 = vsel %vm494, %v6658, %v6589
    %v6663 = vsel %vm494, %v6659, %v6591
    %v6664 = vsel %vm499, %v6660, %v6597
    %v6665 = vsel %vm499, %v6661, %v6599
    %v6666 = vsel %vm499, %v6662, %v6601
    %v6667 = vsel %vm499, %v6663, %v6603
    %v6668 = vsel %vm265, %v6664, %v6609
    %v6669 = vsel %vm265, %v6665, %v6611
    %v6670 = vsel %vm265, %v6666, %v6613
    %v6671 = vsel %vm265, %v6667, %v6615
    %v6672 = vsel %vm1625, %v6668, %v6621
    %v6673 = vsel %vm1625, %v6669, %v6623
    %v6674 = vsel %vm1625, %v6670, %v6625
    %v6675 = vsel %vm1625, %v6671, %v6627
    %v6676 = vsel %vm1630, %v6672, %v6633
    %v6677 = vsel %vm1630, %v6673, %v6635
    %v6678 = vsel %vm1630, %v6674, %v6637
    %v6679 = vsel %vm1630, %v6675, %v6639
    %v6680 = vsel %vm1635, %v6676, %v6645
    %v6681 = vsel %vm1635, %v6677, %v6647
    %v6682 = vsel %vm1635, %v6678, %v6649
    %v6683 = vsel %vm1635, %v6679, %v6651
    %v6684 = vmul.f32 %v6680, %v76
    %v6685 = vmul.f32 %v6681, %v77
    %v6686 = vmul.f32 %v6682, %v78
    %v6687 = vmul.f32 %v6683, %v79
    %v6688 = vand.u32 2147483647, %v6684
    %v6689 = vand.u32 2147483647, %v6685
    %v6690 = vand.u32 2147483647, %v6686
    %v6691 = vand.u32 2147483647, %v6687
    %v6692 = vsel %vm86, %v6688, 0.0
    %6693 = vadd.xlane.f32.xlu0 %v6692
    %v6694 = vpop.xlane.xlu0 %6693
    %v6695 = vsel %vm86, %v6689, 0.0
    %6696 = vadd.xlane.f32.xlu0 %v6695
    %v6697 = vpop.xlane.xlu0 %6696
    %v6698 = vsel %vm86, %v6690, 0.0
    %6699 = vadd.xlane.f32.xlu0 %v6698
    %v6700 = vpop.xlane.xlu0 %6699
    %v6701 = vsel %vm86, %v6691, 0.0
    %6702 = vadd.xlane.f32.xlu0 %v6701
    %v6703 = vpop.xlane.xlu0 %6702
    %v6704 = vadd.f32 %v6692, %v6695
    %v6705 = vadd.f32 %v6704, %v6698
    %v6706 = vadd.f32 %v6705, %v6701
    %v6707 = vrot.slane %v6706, 4
    %v6708 = vadd.f32 %v6706, %v6707
    %v6709 = vrot.slane %v6708, 2
    %v6710 = vadd.f32 %v6708, %v6709
    %v6711 = vrot.slane %v6710, 1
    %v6712 = vadd.f32 %v6710, %v6711
    %v6713 = vmax.f32 %v6694, %v6697
    %v6714 = vmax.f32 %v6700, %v6703
    %v6715 = vmax.f32 %v6713, %v6714
    %v6716 = vrot.slane %v6715, 4
    %v6717 = vmax.f32 %v6715, %v6716
    %v6718 = vrot.slane %v6717, 2
    %v6719 = vmax.f32 %v6717, %v6718
    %v6720 = vrot.slane %v6719, 1
    %v6721 = vmax.f32 %v6719, %v6720
    %s6722 = vtos %v6721
    %v6723 = vstv %s6722
    %v6724 = vsel %vm86, %v6712, -inf
    %6725 = vmax.xlane.f32.xlu0 %v6724
    %v6726 = vpop.xlane.xlu0 %6725
    %s6727 = vtos %v6726
    %v6728 = vstv %s6727
    %v6729 = vmul.f32 %v6723, %v6728
    %6730 = vxpose.xlu0.b32.start [1/16] %v6684, 128
    %6731 = vxpose.xlu0.b32.cont [2/16] %v6685, 128
    %6732 = vxpose.xlu0.b32.cont [3/16] %v6686, 128
    %6733 = vxpose.xlu0.b32.cont [4/16] %v6687, 128
    %6734 = vxpose.xlu0.b32.cont [5/16] 0.0, 128
    %6735 = vxpose.xlu0.b32.cont [6/16] 0.0, 128
    %6736 = vxpose.xlu0.b32.cont [7/16] 0.0, 128
    %6737 = vxpose.xlu0.b32.cont [8/16] 0.0, 128
    %6738 = vxpose.xlu0.b32.cont [9/16] 0.0, 128
    %6739 = vxpose.xlu0.b32.cont [10/16] 0.0, 128
    %6740 = vxpose.xlu0.b32.cont [11/16] 0.0, 128
    %6741 = vxpose.xlu0.b32.cont [12/16] 0.0, 128
    %6742 = vxpose.xlu0.b32.cont [13/16] 0.0, 128
    %6743 = vxpose.xlu0.b32.cont [14/16] 0.0, 128
    %6744 = vxpose.xlu0.b32.cont [15/16] 0.0, 128
    %6745 = vxpose.xlu0.b32.end [16/16] 0.0, 128
    %v6746 = vpop.trf.xlu0
    %v6747 = vpop.trf.xlu0
    %v6748 = vpop.trf.xlu0
    %v6749 = vpop.trf.xlu0
    %v6750 = vpop.trf.xlu0
    %v6751 = vpop.trf.xlu0
    %v6752 = vpop.trf.xlu0
    %v6753 = vpop.trf.xlu0
    %v6754 = vpop.trf.xlu0
    %v6755 = vpop.trf.xlu0
    %v6756 = vpop.trf.xlu0
    %v6757 = vpop.trf.xlu0
    %v6758 = vpop.trf.xlu0
    %v6759 = vpop.trf.xlu0
    %v6760 = vpop.trf.xlu0
    %v6761 = vpop.trf.xlu0
    %v6762 = vrcp.pop %v6729
    %v6763 = vmul.f32 %v6746, %v6762
    %v6764 = vmul.f32 %v6747, %v6762
    %v6765 = vmul.f32 %v6748, %v6762
    %v6766 = vmul.f32 %v6749, %v6762
    %v6768 = vsel %vm86, %v6684, 0
    %v6771 = vsel %vm86, %v6685, 0
    %v6774 = vsel %vm86, %v6686, 0
    %v6777 = vsel %vm86, %v6687, 0
    %6779 = vmatprep.subr.mxu0 0.0
    %6780 = vmatpush1.msra.mxu0 %v6763
    %6781 = vmatprep.subr.mxu0 0.0
    %6782 = vmatpush1.msra.mxu0 %v6764
    %6783 = vmatprep.subr.mxu0 0.0
    %6784 = vmatpush1.msra.mxu0 %v6765
    %6785 = vmatprep.subr.mxu0 0.0
    %6786 = vmatpush1.msra.mxu0 %v6766
    %6787 = vmatprep.subr.mxu0 0.0
    %6788 = vmatpush1.msra.mxu0 0.0
    %6789 = vmatprep.subr.mxu0 0.0
    %6790 = vmatpush1.msra.mxu0 0.0
    %6791 = vmatprep.subr.mxu0 0.0
    %6792 = vmatpush1.msra.mxu0 0.0
    %6793 = vmatprep.subr.mxu0 0.0
    %6794 = vmatpush1.msra.mxu0 0.0
    %6795 = vmatprep.subr.mxu0 0.0
    %6796 = vmatpush1.msra.mxu0 0.0
    %6797 = vmatprep.subr.mxu0 0.0
    %6798 = vmatpush1.msra.mxu0 0.0
    %6799 = vmatprep.subr.mxu0 0.0
    %6800 = vmatpush1.msra.mxu0 0.0
    %6801 = vmatprep.subr.mxu0 0.0
    %6802 = vmatpush1.msra.mxu0 0.0
    %6803 = vmatprep.subr.mxu0 0.0
    %6804 = vmatpush1.msra.mxu0 0.0
    %6805 = vmatprep.subr.mxu0 0.0
    %6806 = vmatpush1.msra.mxu0 0.0
    %6807 = vmatprep.subr.mxu0 0.0
    %6808 = vmatpush1.msra.mxu0 0.0
    %6809 = vmatprep.subr.mxu0 0.0
    %6810 = vmatpush1.msra.mxu0 0.0
    %6811 = vmatprep.subr.mxu0 0.0
    %6812 = vmatpush1.msra.mxu0 0.0
    %6813 = vmatprep.subr.mxu0 0.0
    %6814 = vmatpush1.msra.mxu0 0.0
    %6815 = vmatprep.subr.mxu0 0.0
    %6816 = vmatpush1.msra.mxu0 0.0
    %6817 = vmatprep.subr.mxu0 0.0
    %6818 = vmatpush1.msra.mxu0 0.0
    %6819 = vmatprep.subr.mxu0 0.0
    %6820 = vmatpush1.msra.mxu0 0.0
    %6821 = vmatprep.subr.mxu0 0.0
    %6822 = vmatpush1.msra.mxu0 0.0
    %6823 = vmatprep.subr.mxu0 0.0
    %6824 = vmatpush1.msra.mxu0 0.0
    %6825 = vmatprep.subr.mxu0 0.0
    %6826 = vmatpush1.msra.mxu0 0.0
    %6827 = vmatprep.subr.mxu0 0.0
    %6828 = vmatpush1.msra.mxu0 0.0
    %6829 = vmatprep.subr.mxu0 0.0
    %6830 = vmatpush1.msra.mxu0 0.0
    %6831 = vmatprep.subr.mxu0 0.0
    %6832 = vmatpush1.msra.mxu0 0.0
    %6833 = vmatprep.subr.mxu0 0.0
    %6834 = vmatpush1.msra.mxu0 0.0
    %6835 = vmatprep.subr.mxu0 0.0
    %6836 = vmatpush1.msra.mxu0 0.0
    %6837 = vmatprep.subr.mxu0 0.0
    %6838 = vmatpush1.msra.mxu0 0.0
    %6839 = vmatprep.subr.mxu0 0.0
    %6840 = vmatpush1.msra.mxu0 0.0
    %6841 = vmatprep.subr.mxu0 0.0
    %6842 = vmatpush1.msra.mxu0 0.0
    %6843 = vmatprep.mubr.f32.mxu0 0.0
    %6844 = vmatmul.mubr.f32.gmra.mrb[0].mxu0 %v6768
    %v6845 = vpop.f32.mrb[0].mxu0
    %v6846 = vadd.f32 0.0, %v6845
    %v6847 = vpop.f32.mrb[0].mxu0
    %6848 = vmatprep.mubr.f32.mxu0 0.0
    %6849 = vmatmul.mubr.f32.gmra.mrb[0].mxu0 %v6771
    %v6850 = vpop.f32.mrb[0].mxu0
    %v6851 = vadd.f32 0.0, %v6850
    %v6852 = vpop.f32.mrb[0].mxu0
    %6853 = vmatprep.mubr.f32.mxu0 0.0
    %6854 = vmatmul.mubr.f32.gmra.mrb[0].mxu0 %v6774
    %v6855 = vpop.f32.mrb[0].mxu0
    %v6856 = vadd.f32 0.0, %v6855
    %v6857 = vpop.f32.mrb[0].mxu0
    %6858 = vmatprep.mubr.f32.mxu0 0.0
    %6859 = vmatmul.mubr.f32.gmra.mrb[0].mxu0 %v6777
    %v6860 = vpop.f32.mrb[0].mxu0
    %v6861 = vadd.f32 0.0, %v6860
    %v6862 = vpop.f32.mrb[0].mxu0
    %6863 = vdwg.mxu0
    %v6864 = vsub.f32 %v1820, %v6846
    %v6865 = vsub.f32 %v1821, %v6851
    %v6866 = vsub.f32 %v1822, %v6856
    %v6867 = vsub.f32 %v1823, %v6861
    %v6869 = vsel %vm86, %v6846, 0
    %v6872 = vsel %vm86, %v6851, 0
    %v6875 = vsel %vm86, %v6856, 0
    %v6878 = vsel %vm86, %v6861, 0
    %6880 = vmatprep.subr.mxu0 0.0
    %6881 = vmatpush1.msra.mxu0 %v6864
    %6882 = vmatprep.subr.mxu0 0.0
    %6883 = vmatpush1.msra.mxu0 %v6865
    %6884 = vmatprep.subr.mxu0 0.0
    %6885 = vmatpush1.msra.mxu0 %v6866
    %6886 = vmatprep.subr.mxu0 0.0
    %6887 = vmatpush1.msra.mxu0 %v6867
    %6888 = vmatprep.subr.mxu0 0.0
    %6889 = vmatpush1.msra.mxu0 0.0
    %6890 = vmatprep.subr.mxu0 0.0
    %6891 = vmatpush1.msra.mxu0 0.0
    %6892 = vmatprep.subr.mxu0 0.0
    %6893 = vmatpush1.msra.mxu0 0.0
    %6894 = vmatprep.subr.mxu0 0.0
    %6895 = vmatpush1.msra.mxu0 0.0
    %6896 = vmatprep.subr.mxu0 0.0
    %6897 = vmatpush1.msra.mxu0 0.0
    %6898 = vmatprep.subr.mxu0 0.0
    %6899 = vmatpush1.msra.mxu0 0.0
    %6900 = vmatprep.subr.mxu0 0.0
    %6901 = vmatpush1.msra.mxu0 0.0
    %6902 = vmatprep.subr.mxu0 0.0
    %6903 = vmatpush1.msra.mxu0 0.0
    %6904 = vmatprep.subr.mxu0 0.0
    %6905 = vmatpush1.msra.mxu0 0.0
    %6906 = vmatprep.subr.mxu0 0.0
    %6907 = vmatpush1.msra.mxu0 0.0
    %6908 = vmatprep.subr.mxu0 0.0
    %6909 = vmatpush1.msra.mxu0 0.0
    %6910 = vmatprep.subr.mxu0 0.0
    %6911 = vmatpush1.msra.mxu0 0.0
    %6912 = vmatprep.subr.mxu0 0.0
    %6913 = vmatpush1.msra.mxu0 0.0
    %6914 = vmatprep.subr.mxu0 0.0
    %6915 = vmatpush1.msra.mxu0 0.0
    %6916 = vmatprep.subr.mxu0 0.0
    %6917 = vmatpush1.msra.mxu0 0.0
    %6918 = vmatprep.subr.mxu0 0.0
    %6919 = vmatpush1.msra.mxu0 0.0
    %6920 = vmatprep.subr.mxu0 0.0
    %6921 = vmatpush1.msra.mxu0 0.0
    %6922 = vmatprep.subr.mxu0 0.0
    %6923 = vmatpush1.msra.mxu0 0.0
    %6924 = vmatprep.subr.mxu0 0.0
    %6925 = vmatpush1.msra.mxu0 0.0
    %6926 = vmatprep.subr.mxu0 0.0
    %6927 = vmatpush1.msra.mxu0 0.0
    %6928 = vmatprep.subr.mxu0 0.0
    %6929 = vmatpush1.msra.mxu0 0.0
    %6930 = vmatprep.subr.mxu0 0.0
    %6931 = vmatpush1.msra.mxu0 0.0
    %6932 = vmatprep.subr.mxu0 0.0
    %6933 = vmatpush1.msra.mxu0 0.0
    %6934 = vmatprep.subr.mxu0 0.0
    %6935 = vmatpush1.msra.mxu0 0.0
    %6936 = vmatprep.subr.mxu0 0.0
    %6937 = vmatpush1.msra.mxu0 0.0
    %6938 = vmatprep.subr.mxu0 0.0
    %6939 = vmatpush1.msra.mxu0 0.0
    %6940 = vmatprep.subr.mxu0 0.0
    %6941 = vmatpush1.msra.mxu0 0.0
    %6942 = vmatprep.subr.mxu0 0.0
    %6943 = vmatpush1.msra.mxu0 0.0
    %6944 = vmatprep.mubr.f32.mxu0 0.0
    %6945 = vmatmul.mubr.f32.gmra.mrb[0].mxu0 %v6869
    %v6946 = vpop.f32.mrb[0].mxu0
    %v6947 = vadd.f32 0.0, %v6946
    %v6948 = vpop.f32.mrb[0].mxu0
    %6949 = vmatprep.mubr.f32.mxu0 0.0
    %6950 = vmatmul.mubr.f32.gmra.mrb[0].mxu0 %v6872
    %v6951 = vpop.f32.mrb[0].mxu0
    %v6952 = vadd.f32 0.0, %v6951
    %v6953 = vpop.f32.mrb[0].mxu0
    %6954 = vmatprep.mubr.f32.mxu0 0.0
    %6955 = vmatmul.mubr.f32.gmra.mrb[0].mxu0 %v6875
    %v6956 = vpop.f32.mrb[0].mxu0
    %v6957 = vadd.f32 0.0, %v6956
    %v6958 = vpop.f32.mrb[0].mxu0
    %6959 = vmatprep.mubr.f32.mxu0 0.0
    %6960 = vmatmul.mubr.f32.gmra.mrb[0].mxu0 %v6878
    %v6961 = vpop.f32.mrb[0].mxu0
    %v6962 = vadd.f32 0.0, %v6961
    %v6963 = vpop.f32.mrb[0].mxu0
    %6964 = vdwg.mxu0
    %v6965 = vsub.f32 %v1828, %v6947
    %v6966 = vsub.f32 %v1829, %v6952
    %v6967 = vsub.f32 %v1830, %v6957
    %v6968 = vsub.f32 %v1831, %v6962
    %6969 = vmatprep.subr.mxu0 0.0
    %6970 = vmatpush1.msra.mxu0 %v6965
    %6971 = vmatprep.subr.mxu0 0.0
    %6972 = vmatpush1.msra.mxu0 %v6966
    %6973 = vmatprep.subr.mxu0 0.0
    %6974 = vmatpush1.msra.mxu0 %v6967
    %6975 = vmatprep.subr.mxu0 0.0
    %6976 = vmatpush1.msra.mxu0 %v6968
    %6977 = vmatprep.subr.mxu0 0.0
    %6978 = vmatpush1.msra.mxu0 0.0
    %6979 = vmatprep.subr.mxu0 0.0
    %6980 = vmatpush1.msra.mxu0 0.0
    %6981 = vmatprep.subr.mxu0 0.0
    %6982 = vmatpush1.msra.mxu0 0.0
    %6983 = vmatprep.subr.mxu0 0.0
    %6984 = vmatpush1.msra.mxu0 0.0
    %6985 = vmatprep.subr.mxu0 0.0
    %6986 = vmatpush1.msra.mxu0 0.0
    %6987 = vmatprep.subr.mxu0 0.0
    %6988 = vmatpush1.msra.mxu0 0.0
    %6989 = vmatprep.subr.mxu0 0.0
    %6990 = vmatpush1.msra.mxu0 0.0
    %6991 = vmatprep.subr.mxu0 0.0
    %6992 = vmatpush1.msra.mxu0 0.0
    %6993 = vmatprep.subr.mxu0 0.0
    %6994 = vmatpush1.msra.mxu0 0.0
    %6995 = vmatprep.subr.mxu0 0.0
    %6996 = vmatpush1.msra.mxu0 0.0
    %6997 = vmatprep.subr.mxu0 0.0
    %6998 = vmatpush1.msra.mxu0 0.0
    %6999 = vmatprep.subr.mxu0 0.0
    %7000 = vmatpush1.msra.mxu0 0.0
    %7001 = vmatprep.subr.mxu0 0.0
    %7002 = vmatpush1.msra.mxu0 0.0
    %7003 = vmatprep.subr.mxu0 0.0
    %7004 = vmatpush1.msra.mxu0 0.0
    %7005 = vmatprep.subr.mxu0 0.0
    %7006 = vmatpush1.msra.mxu0 0.0
    %7007 = vmatprep.subr.mxu0 0.0
    %7008 = vmatpush1.msra.mxu0 0.0
    %7009 = vmatprep.subr.mxu0 0.0
    %7010 = vmatpush1.msra.mxu0 0.0
    %7011 = vmatprep.subr.mxu0 0.0
    %7012 = vmatpush1.msra.mxu0 0.0
    %7013 = vmatprep.subr.mxu0 0.0
    %7014 = vmatpush1.msra.mxu0 0.0
    %7015 = vmatprep.subr.mxu0 0.0
    %7016 = vmatpush1.msra.mxu0 0.0
    %7017 = vmatprep.subr.mxu0 0.0
    %7018 = vmatpush1.msra.mxu0 0.0
    %7019 = vmatprep.subr.mxu0 0.0
    %7020 = vmatpush1.msra.mxu0 0.0
    %7021 = vmatprep.subr.mxu0 0.0
    %7022 = vmatpush1.msra.mxu0 0.0
    %7023 = vmatprep.subr.mxu0 0.0
    %7024 = vmatpush1.msra.mxu0 0.0
    %7025 = vmatprep.subr.mxu0 0.0
    %7026 = vmatpush1.msra.mxu0 0.0
    %7027 = vmatprep.subr.mxu0 0.0
    %7028 = vmatpush1.msra.mxu0 0.0
    %7029 = vmatprep.subr.mxu0 0.0
    %7030 = vmatpush1.msra.mxu0 0.0
    %7031 = vmatprep.subr.mxu0 0.0
    %7032 = vmatpush1.msra.mxu0 0.0
    %7033 = vmatprep.mubr.f32.mxu0 0.0
    %7034 = vmatmul.mubr.f32.gmra.mrb[0].mxu0 %v6869
    %v7035 = vpop.f32.mrb[0].mxu0
    %v7036 = vadd.f32 0.0, %v7035
    %v7037 = vpop.f32.mrb[0].mxu0
    %7038 = vmatprep.mubr.f32.mxu0 0.0
    %7039 = vmatmul.mubr.f32.gmra.mrb[0].mxu0 %v6872
    %v7040 = vpop.f32.mrb[0].mxu0
    %v7041 = vadd.f32 0.0, %v7040
    %v7042 = vpop.f32.mrb[0].mxu0
    %7043 = vmatprep.mubr.f32.mxu0 0.0
    %7044 = vmatmul.mubr.f32.gmra.mrb[0].mxu0 %v6875
    %v7045 = vpop.f32.mrb[0].mxu0
    %v7046 = vadd.f32 0.0, %v7045
    %v7047 = vpop.f32.mrb[0].mxu0
    %7048 = vmatprep.mubr.f32.mxu0 0.0
    %7049 = vmatmul.mubr.f32.gmra.mrb[0].mxu0 %v6878
    %v7050 = vpop.f32.mrb[0].mxu0
    %v7051 = vadd.f32 0.0, %v7050
    %v7052 = vpop.f32.mrb[0].mxu0
    %7053 = vdwg.mxu0
    %v7054 = vsub.f32 %v1933, %v7036
    %v7055 = vsub.f32 %v1934, %v7041
    %v7056 = vsub.f32 %v1935, %v7046
    %v7057 = vsub.f32 %v1936, %v7051
    %v7059 = vsel %vm86, %v6763, 0
    %v7062 = vsel %vm86, %v6764, 0
    %v7065 = vsel %vm86, %v6765, 0
    %v7068 = vsel %vm86, %v6766, 0
    %7070 = vmatprep.subr.mxu0 0.0
    %7071 = vmatpush1.msra.mxu0 %v7054
    %7072 = vmatprep.subr.mxu0 0.0
    %7073 = vmatpush1.msra.mxu0 %v7055
    %7074 = vmatprep.subr.mxu0 0.0
    %7075 = vmatpush1.msra.mxu0 %v7056
    %7076 = vmatprep.subr.mxu0 0.0
    %7077 = vmatpush1.msra.mxu0 %v7057
    %7078 = vmatprep.subr.mxu0 0.0
    %7079 = vmatpush1.msra.mxu0 0.0
    %7080 = vmatprep.subr.mxu0 0.0
    %7081 = vmatpush1.msra.mxu0 0.0
    %7082 = vmatprep.subr.mxu0 0.0
    %7083 = vmatpush1.msra.mxu0 0.0
    %7084 = vmatprep.subr.mxu0 0.0
    %7085 = vmatpush1.msra.mxu0 0.0
    %7086 = vmatprep.subr.mxu0 0.0
    %7087 = vmatpush1.msra.mxu0 0.0
    %7088 = vmatprep.subr.mxu0 0.0
    %7089 = vmatpush1.msra.mxu0 0.0
    %7090 = vmatprep.subr.mxu0 0.0
    %7091 = vmatpush1.msra.mxu0 0.0
    %7092 = vmatprep.subr.mxu0 0.0
    %7093 = vmatpush1.msra.mxu0 0.0
    %7094 = vmatprep.subr.mxu0 0.0
    %7095 = vmatpush1.msra.mxu0 0.0
    %7096 = vmatprep.subr.mxu0 0.0
    %7097 = vmatpush1.msra.mxu0 0.0
    %7098 = vmatprep.subr.mxu0 0.0
    %7099 = vmatpush1.msra.mxu0 0.0
    %7100 = vmatprep.subr.mxu0 0.0
    %7101 = vmatpush1.msra.mxu0 0.0
    %7102 = vmatprep.subr.mxu0 0.0
    %7103 = vmatpush1.msra.mxu0 0.0
    %7104 = vmatprep.subr.mxu0 0.0
    %7105 = vmatpush1.msra.mxu0 0.0
    %7106 = vmatprep.subr.mxu0 0.0
    %7107 = vmatpush1.msra.mxu0 0.0
    %7108 = vmatprep.subr.mxu0 0.0
    %7109 = vmatpush1.msra.mxu0 0.0
    %7110 = vmatprep.subr.mxu0 0.0
    %7111 = vmatpush1.msra.mxu0 0.0
    %7112 = vmatprep.subr.mxu0 0.0
    %7113 = vmatpush1.msra.mxu0 0.0
    %7114 = vmatprep.subr.mxu0 0.0
    %7115 = vmatpush1.msra.mxu0 0.0
    %7116 = vmatprep.subr.mxu0 0.0
    %7117 = vmatpush1.msra.mxu0 0.0
    %7118 = vmatprep.subr.mxu0 0.0
    %7119 = vmatpush1.msra.mxu0 0.0
    %7120 = vmatprep.subr.mxu0 0.0
    %7121 = vmatpush1.msra.mxu0 0.0
    %7122 = vmatprep.subr.mxu0 0.0
    %7123 = vmatpush1.msra.mxu0 0.0
    %7124 = vmatprep.subr.mxu0 0.0
    %7125 = vmatpush1.msra.mxu0 0.0
    %7126 = vmatprep.subr.mxu0 0.0
    %7127 = vmatpush1.msra.mxu0 0.0
    %7128 = vmatprep.subr.mxu0 0.0
    %7129 = vmatpush1.msra.mxu0 0.0
    %7130 = vmatprep.subr.mxu0 0.0
    %7131 = vmatpush1.msra.mxu0 0.0
    %7132 = vmatprep.subr.mxu0 0.0
    %7133 = vmatpush1.msra.mxu0 0.0
    %7134 = vmatprep.mubr.f32.mxu0 0.0
    %7135 = vmatmul.mubr.f32.gmra.mrb[0].mxu0 %v7059
    %v7136 = vpop.f32.mrb[0].mxu0
    %v7137 = vadd.f32 0.0, %v7136
    %v7138 = vpop.f32.mrb[0].mxu0
    %7139 = vmatprep.mubr.f32.mxu0 0.0
    %7140 = vmatmul.mubr.f32.gmra.mrb[0].mxu0 %v7062
    %v7141 = vpop.f32.mrb[0].mxu0
    %v7142 = vadd.f32 0.0, %v7141
    %v7143 = vpop.f32.mrb[0].mxu0
    %7144 = vmatprep.mubr.f32.mxu0 0.0
    %7145 = vmatmul.mubr.f32.gmra.mrb[0].mxu0 %v7065
    %v7146 = vpop.f32.mrb[0].mxu0
    %v7147 = vadd.f32 0.0, %v7146
    %v7148 = vpop.f32.mrb[0].mxu0
    %7149 = vmatprep.mubr.f32.mxu0 0.0
    %7150 = vmatmul.mubr.f32.gmra.mrb[0].mxu0 %v7068
    %v7151 = vpop.f32.mrb[0].mxu0
    %v7152 = vadd.f32 0.0, %v7151
    %v7153 = vpop.f32.mrb[0].mxu0
    %7154 = vdwg.mxu0
    %v7155 = vmul.f32 %v7137, 0.25
    %v7156 = vmul.f32 %v7142, 0.25
    %v7157 = vmul.f32 %v7147, 0.25
    %v7158 = vmul.f32 %v7152, 0.25
    %7159 = vmatprep.subr.mxu0 0.0
    %7160 = vmatpush1.msra.mxu0 %v7155
    %7161 = vmatprep.subr.mxu0 0.0
    %7162 = vmatpush1.msra.mxu0 %v7156
    %7163 = vmatprep.subr.mxu0 0.0
    %7164 = vmatpush1.msra.mxu0 %v7157
    %7165 = vmatprep.subr.mxu0 0.0
    %7166 = vmatpush1.msra.mxu0 %v7158
    %7167 = vmatprep.subr.mxu0 0.0
    %7168 = vmatpush1.msra.mxu0 0.0
    %7169 = vmatprep.subr.mxu0 0.0
    %7170 = vmatpush1.msra.mxu0 0.0
    %7171 = vmatprep.subr.mxu0 0.0
    %7172 = vmatpush1.msra.mxu0 0.0
    %7173 = vmatprep.subr.mxu0 0.0
    %7174 = vmatpush1.msra.mxu0 0.0
    %7175 = vmatprep.subr.mxu0 0.0
    %7176 = vmatpush1.msra.mxu0 0.0
    %7177 = vmatprep.subr.mxu0 0.0
    %7178 = vmatpush1.msra.mxu0 0.0
    %7179 = vmatprep.subr.mxu0 0.0
    %7180 = vmatpush1.msra.mxu0 0.0
    %7181 = vmatprep.subr.mxu0 0.0
    %7182 = vmatpush1.msra.mxu0 0.0
    %7183 = vmatprep.subr.mxu0 0.0
    %7184 = vmatpush1.msra.mxu0 0.0
    %7185 = vmatprep.subr.mxu0 0.0
    %7186 = vmatpush1.msra.mxu0 0.0
    %7187 = vmatprep.subr.mxu0 0.0
    %7188 = vmatpush1.msra.mxu0 0.0
    %7189 = vmatprep.subr.mxu0 0.0
    %7190 = vmatpush1.msra.mxu0 0.0
    %7191 = vmatprep.subr.mxu0 0.0
    %7192 = vmatpush1.msra.mxu0 0.0
    %7193 = vmatprep.subr.mxu0 0.0
    %7194 = vmatpush1.msra.mxu0 0.0
    %7195 = vmatprep.subr.mxu0 0.0
    %7196 = vmatpush1.msra.mxu0 0.0
    %7197 = vmatprep.subr.mxu0 0.0
    %7198 = vmatpush1.msra.mxu0 0.0
    %7199 = vmatprep.subr.mxu0 0.0
    %7200 = vmatpush1.msra.mxu0 0.0
    %7201 = vmatprep.subr.mxu0 0.0
    %7202 = vmatpush1.msra.mxu0 0.0
    %7203 = vmatprep.subr.mxu0 0.0
    %7204 = vmatpush1.msra.mxu0 0.0
    %7205 = vmatprep.subr.mxu0 0.0
    %7206 = vmatpush1.msra.mxu0 0.0
    %7207 = vmatprep.subr.mxu0 0.0
    %7208 = vmatpush1.msra.mxu0 0.0
    %7209 = vmatprep.subr.mxu0 0.0
    %7210 = vmatpush1.msra.mxu0 0.0
    %7211 = vmatprep.subr.mxu0 0.0
    %7212 = vmatpush1.msra.mxu0 0.0
    %7213 = vmatprep.subr.mxu0 0.0
    %7214 = vmatpush1.msra.mxu0 0.0
    %7215 = vmatprep.subr.mxu0 0.0
    %7216 = vmatpush1.msra.mxu0 0.0
    %7217 = vmatprep.subr.mxu0 0.0
    %7218 = vmatpush1.msra.mxu0 0.0
    %7219 = vmatprep.subr.mxu0 0.0
    %7220 = vmatpush1.msra.mxu0 0.0
    %7221 = vmatprep.subr.mxu0 0.0
    %7222 = vmatpush1.msra.mxu0 0.0
    %7223 = vmatprep.mubr.f32.mxu0 0.0
    %7224 = vmatmul.mubr.f32.gmra.mrb[0].mxu0 %v6768
    %v7225 = vpop.f32.mrb[0].mxu0
    %v7226 = vadd.f32 0.0, %v7225
    %v7227 = vpop.f32.mrb[0].mxu0
    %7228 = vmatprep.mubr.f32.mxu0 0.0
    %7229 = vmatmul.mubr.f32.gmra.mrb[0].mxu0 %v6771
    %v7230 = vpop.f32.mrb[0].mxu0
    %v7231 = vadd.f32 0.0, %v7230
    %v7232 = vpop.f32.mrb[0].mxu0
    %7233 = vmatprep.mubr.f32.mxu0 0.0
    %7234 = vmatmul.mubr.f32.gmra.mrb[0].mxu0 %v6774
    %v7235 = vpop.f32.mrb[0].mxu0
    %v7236 = vadd.f32 0.0, %v7235
    %v7237 = vpop.f32.mrb[0].mxu0
    %7238 = vmatprep.mubr.f32.mxu0 0.0
    %7239 = vmatmul.mubr.f32.gmra.mrb[0].mxu0 %v6777
    %v7240 = vpop.f32.mrb[0].mxu0
    %v7241 = vadd.f32 0.0, %v7240
    %v7242 = vpop.f32.mrb[0].mxu0
    %7243 = vdwg.mxu0
    %v7244 = vsub.f32 %v1820, %v7226
    %v7245 = vsub.f32 %v1821, %v7231
    %v7246 = vsub.f32 %v1822, %v7236
    %v7247 = vsub.f32 %v1823, %v7241
    %v7249 = vsel %vm86, %v7226, 0
    %v7252 = vsel %vm86, %v7231, 0
    %v7255 = vsel %vm86, %v7236, 0
    %v7258 = vsel %vm86, %v7241, 0
    %7260 = vmatprep.subr.mxu0 0.0
    %7261 = vmatpush1.msra.mxu0 %v7244
    %7262 = vmatprep.subr.mxu0 0.0
    %7263 = vmatpush1.msra.mxu0 %v7245
    %7264 = vmatprep.subr.mxu0 0.0
    %7265 = vmatpush1.msra.mxu0 %v7246
    %7266 = vmatprep.subr.mxu0 0.0
    %7267 = vmatpush1.msra.mxu0 %v7247
    %7268 = vmatprep.subr.mxu0 0.0
    %7269 = vmatpush1.msra.mxu0 0.0
    %7270 = vmatprep.subr.mxu0 0.0
    %7271 = vmatpush1.msra.mxu0 0.0
    %7272 = vmatprep.subr.mxu0 0.0
    %7273 = vmatpush1.msra.mxu0 0.0
    %7274 = vmatprep.subr.mxu0 0.0
    %7275 = vmatpush1.msra.mxu0 0.0
    %7276 = vmatprep.subr.mxu0 0.0
    %7277 = vmatpush1.msra.mxu0 0.0
    %7278 = vmatprep.subr.mxu0 0.0
    %7279 = vmatpush1.msra.mxu0 0.0
    %7280 = vmatprep.subr.mxu0 0.0
    %7281 = vmatpush1.msra.mxu0 0.0
    %7282 = vmatprep.subr.mxu0 0.0
    %7283 = vmatpush1.msra.mxu0 0.0
    %7284 = vmatprep.subr.mxu0 0.0
    %7285 = vmatpush1.msra.mxu0 0.0
    %7286 = vmatprep.subr.mxu0 0.0
    %7287 = vmatpush1.msra.mxu0 0.0
    %7288 = vmatprep.subr.mxu0 0.0
    %7289 = vmatpush1.msra.mxu0 0.0
    %7290 = vmatprep.subr.mxu0 0.0
    %7291 = vmatpush1.msra.mxu0 0.0
    %7292 = vmatprep.subr.mxu0 0.0
    %7293 = vmatpush1.msra.mxu0 0.0
    %7294 = vmatprep.subr.mxu0 0.0
    %7295 = vmatpush1.msra.mxu0 0.0
    %7296 = vmatprep.subr.mxu0 0.0
    %7297 = vmatpush1.msra.mxu0 0.0
    %7298 = vmatprep.subr.mxu0 0.0
    %7299 = vmatpush1.msra.mxu0 0.0
    %7300 = vmatprep.subr.mxu0 0.0
    %7301 = vmatpush1.msra.mxu0 0.0
    %7302 = vmatprep.subr.mxu0 0.0
    %7303 = vmatpush1.msra.mxu0 0.0
    %7304 = vmatprep.subr.mxu0 0.0
    %7305 = vmatpush1.msra.mxu0 0.0
    %7306 = vmatprep.subr.mxu0 0.0
    %7307 = vmatpush1.msra.mxu0 0.0
    %7308 = vmatprep.subr.mxu0 0.0
    %7309 = vmatpush1.msra.mxu0 0.0
    %7310 = vmatprep.subr.mxu0 0.0
    %7311 = vmatpush1.msra.mxu0 0.0
    %7312 = vmatprep.subr.mxu0 0.0
    %7313 = vmatpush1.msra.mxu0 0.0
    %7314 = vmatprep.subr.mxu0 0.0
    %7315 = vmatpush1.msra.mxu0 0.0
    %7316 = vmatprep.subr.mxu0 0.0
    %7317 = vmatpush1.msra.mxu0 0.0
    %7318 = vmatprep.subr.mxu0 0.0
    %7319 = vmatpush1.msra.mxu0 0.0
    %7320 = vmatprep.subr.mxu0 0.0
    %7321 = vmatpush1.msra.mxu0 0.0
    %7322 = vmatprep.subr.mxu0 0.0
    %7323 = vmatpush1.msra.mxu0 0.0
    %7324 = vmatprep.mubr.f32.mxu0 0.0
    %7325 = vmatmul.mubr.f32.gmra.mrb[0].mxu0 %v7249
    %v7326 = vpop.f32.mrb[0].mxu0
    %v7327 = vadd.f32 0.0, %v7326
    %v7328 = vpop.f32.mrb[0].mxu0
    %7329 = vmatprep.mubr.f32.mxu0 0.0
    %7330 = vmatmul.mubr.f32.gmra.mrb[0].mxu0 %v7252
    %v7331 = vpop.f32.mrb[0].mxu0
    %v7332 = vadd.f32 0.0, %v7331
    %v7333 = vpop.f32.mrb[0].mxu0
    %7334 = vmatprep.mubr.f32.mxu0 0.0
    %7335 = vmatmul.mubr.f32.gmra.mrb[0].mxu0 %v7255
    %v7336 = vpop.f32.mrb[0].mxu0
    %v7337 = vadd.f32 0.0, %v7336
    %v7338 = vpop.f32.mrb[0].mxu0
    %7339 = vmatprep.mubr.f32.mxu0 0.0
    %7340 = vmatmul.mubr.f32.gmra.mrb[0].mxu0 %v7258
    %v7341 = vpop.f32.mrb[0].mxu0
    %v7342 = vadd.f32 0.0, %v7341
    %v7343 = vpop.f32.mrb[0].mxu0
    %7344 = vdwg.mxu0
    %v7345 = vsub.f32 %v1828, %v7327
    %v7346 = vsub.f32 %v1829, %v7332
    %v7347 = vsub.f32 %v1830, %v7337
    %v7348 = vsub.f32 %v1831, %v7342
    %7349 = vmatprep.subr.mxu0 0.0
    %7350 = vmatpush1.msra.mxu0 %v7345
    %7351 = vmatprep.subr.mxu0 0.0
    %7352 = vmatpush1.msra.mxu0 %v7346
    %7353 = vmatprep.subr.mxu0 0.0
    %7354 = vmatpush1.msra.mxu0 %v7347
    %7355 = vmatprep.subr.mxu0 0.0
    %7356 = vmatpush1.msra.mxu0 %v7348
    %7357 = vmatprep.subr.mxu0 0.0
    %7358 = vmatpush1.msra.mxu0 0.0
    %7359 = vmatprep.subr.mxu0 0.0
    %7360 = vmatpush1.msra.mxu0 0.0
    %7361 = vmatprep.subr.mxu0 0.0
    %7362 = vmatpush1.msra.mxu0 0.0
    %7363 = vmatprep.subr.mxu0 0.0
    %7364 = vmatpush1.msra.mxu0 0.0
    %7365 = vmatprep.subr.mxu0 0.0
    %7366 = vmatpush1.msra.mxu0 0.0
    %7367 = vmatprep.subr.mxu0 0.0
    %7368 = vmatpush1.msra.mxu0 0.0
    %7369 = vmatprep.subr.mxu0 0.0
    %7370 = vmatpush1.msra.mxu0 0.0
    %7371 = vmatprep.subr.mxu0 0.0
    %7372 = vmatpush1.msra.mxu0 0.0
    %7373 = vmatprep.subr.mxu0 0.0
    %7374 = vmatpush1.msra.mxu0 0.0
    %7375 = vmatprep.subr.mxu0 0.0
    %7376 = vmatpush1.msra.mxu0 0.0
    %7377 = vmatprep.subr.mxu0 0.0
    %7378 = vmatpush1.msra.mxu0 0.0
    %7379 = vmatprep.subr.mxu0 0.0
    %7380 = vmatpush1.msra.mxu0 0.0
    %7381 = vmatprep.subr.mxu0 0.0
    %7382 = vmatpush1.msra.mxu0 0.0
    %7383 = vmatprep.subr.mxu0 0.0
    %7384 = vmatpush1.msra.mxu0 0.0
    %7385 = vmatprep.subr.mxu0 0.0
    %7386 = vmatpush1.msra.mxu0 0.0
    %7387 = vmatprep.subr.mxu0 0.0
    %7388 = vmatpush1.msra.mxu0 0.0
    %7389 = vmatprep.subr.mxu0 0.0
    %7390 = vmatpush1.msra.mxu0 0.0
    %7391 = vmatprep.subr.mxu0 0.0
    %7392 = vmatpush1.msra.mxu0 0.0
    %7393 = vmatprep.subr.mxu0 0.0
    %7394 = vmatpush1.msra.mxu0 0.0
    %7395 = vmatprep.subr.mxu0 0.0
    %7396 = vmatpush1.msra.mxu0 0.0
    %7397 = vmatprep.subr.mxu0 0.0
    %7398 = vmatpush1.msra.mxu0 0.0
    %7399 = vmatprep.subr.mxu0 0.0
    %7400 = vmatpush1.msra.mxu0 0.0
    %7401 = vmatprep.subr.mxu0 0.0
    %7402 = vmatpush1.msra.mxu0 0.0
    %7403 = vmatprep.subr.mxu0 0.0
    %7404 = vmatpush1.msra.mxu0 0.0
    %7405 = vmatprep.subr.mxu0 0.0
    %7406 = vmatpush1.msra.mxu0 0.0
    %7407 = vmatprep.subr.mxu0 0.0
    %7408 = vmatpush1.msra.mxu0 0.0
    %7409 = vmatprep.subr.mxu0 0.0
    %7410 = vmatpush1.msra.mxu0 0.0
    %7411 = vmatprep.subr.mxu0 0.0
    %7412 = vmatpush1.msra.mxu0 0.0
    %7413 = vmatprep.mubr.f32.mxu0 0.0
    %7414 = vmatmul.mubr.f32.gmra.mrb[0].mxu0 %v7249
    %v7415 = vpop.f32.mrb[0].mxu0
    %v7416 = vadd.f32 0.0, %v7415
    %v7417 = vpop.f32.mrb[0].mxu0
    %7418 = vmatprep.mubr.f32.mxu0 0.0
    %7419 = vmatmul.mubr.f32.gmra.mrb[0].mxu0 %v7252
    %v7420 = vpop.f32.mrb[0].mxu0
    %v7421 = vadd.f32 0.0, %v7420
    %v7422 = vpop.f32.mrb[0].mxu0
    %7423 = vmatprep.mubr.f32.mxu0 0.0
    %7424 = vmatmul.mubr.f32.gmra.mrb[0].mxu0 %v7255
    %v7425 = vpop.f32.mrb[0].mxu0
    %v7426 = vadd.f32 0.0, %v7425
    %v7427 = vpop.f32.mrb[0].mxu0
    %7428 = vmatprep.mubr.f32.mxu0 0.0
    %7429 = vmatmul.mubr.f32.gmra.mrb[0].mxu0 %v7258
    %v7430 = vpop.f32.mrb[0].mxu0
    %v7431 = vadd.f32 0.0, %v7430
    %v7432 = vpop.f32.mrb[0].mxu0
    %7433 = vdwg.mxu0
    %v7434 = vsub.f32 %v1933, %v7416
    %v7435 = vsub.f32 %v1934, %v7421
    %v7436 = vsub.f32 %v1935, %v7426
    %v7437 = vsub.f32 %v1936, %v7431
    %v7439 = vsel %vm86, %v7155, 0
    %v7442 = vsel %vm86, %v7156, 0
    %v7445 = vsel %vm86, %v7157, 0
    %v7448 = vsel %vm86, %v7158, 0
    %7450 = vmatprep.subr.mxu0 0.0
    %7451 = vmatpush1.msra.mxu0 %v7434
    %7452 = vmatprep.subr.mxu0 0.0
    %7453 = vmatpush1.msra.mxu0 %v7435
    %7454 = vmatprep.subr.mxu0 0.0
    %7455 = vmatpush1.msra.mxu0 %v7436
    %7456 = vmatprep.subr.mxu0 0.0
    %7457 = vmatpush1.msra.mxu0 %v7437
    %7458 = vmatprep.subr.mxu0 0.0
    %7459 = vmatpush1.msra.mxu0 0.0
    %7460 = vmatprep.subr.mxu0 0.0
    %7461 = vmatpush1.msra.mxu0 0.0
    %7462 = vmatprep.subr.mxu0 0.0
    %7463 = vmatpush1.msra.mxu0 0.0
    %7464 = vmatprep.subr.mxu0 0.0
    %7465 = vmatpush1.msra.mxu0 0.0
    %7466 = vmatprep.subr.mxu0 0.0
    %7467 = vmatpush1.msra.mxu0 0.0
    %7468 = vmatprep.subr.mxu0 0.0
    %7469 = vmatpush1.msra.mxu0 0.0
    %7470 = vmatprep.subr.mxu0 0.0
    %7471 = vmatpush1.msra.mxu0 0.0
    %7472 = vmatprep.subr.mxu0 0.0
    %7473 = vmatpush1.msra.mxu0 0.0
    %7474 = vmatprep.subr.mxu0 0.0
    %7475 = vmatpush1.msra.mxu0 0.0
    %7476 = vmatprep.subr.mxu0 0.0
    %7477 = vmatpush1.msra.mxu0 0.0
    %7478 = vmatprep.subr.mxu0 0.0
    %7479 = vmatpush1.msra.mxu0 0.0
    %7480 = vmatprep.subr.mxu0 0.0
    %7481 = vmatpush1.msra.mxu0 0.0
    %7482 = vmatprep.subr.mxu0 0.0
    %7483 = vmatpush1.msra.mxu0 0.0
    %7484 = vmatprep.subr.mxu0 0.0
    %7485 = vmatpush1.msra.mxu0 0.0
    %7486 = vmatprep.subr.mxu0 0.0
    %7487 = vmatpush1.msra.mxu0 0.0
    %7488 = vmatprep.subr.mxu0 0.0
    %7489 = vmatpush1.msra.mxu0 0.0
    %7490 = vmatprep.subr.mxu0 0.0
    %7491 = vmatpush1.msra.mxu0 0.0
    %7492 = vmatprep.subr.mxu0 0.0
    %7493 = vmatpush1.msra.mxu0 0.0
    %7494 = vmatprep.subr.mxu0 0.0
    %7495 = vmatpush1.msra.mxu0 0.0
    %7496 = vmatprep.subr.mxu0 0.0
    %7497 = vmatpush1.msra.mxu0 0.0
    %7498 = vmatprep.subr.mxu0 0.0
    %7499 = vmatpush1.msra.mxu0 0.0
    %7500 = vmatprep.subr.mxu0 0.0
    %7501 = vmatpush1.msra.mxu0 0.0
    %7502 = vmatprep.subr.mxu0 0.0
    %7503 = vmatpush1.msra.mxu0 0.0
    %7504 = vmatprep.subr.mxu0 0.0
    %7505 = vmatpush1.msra.mxu0 0.0
    %7506 = vmatprep.subr.mxu0 0.0
    %7507 = vmatpush1.msra.mxu0 0.0
    %7508 = vmatprep.subr.mxu0 0.0
    %7509 = vmatpush1.msra.mxu0 0.0
    %7510 = vmatprep.subr.mxu0 0.0
    %7511 = vmatpush1.msra.mxu0 0.0
    %7512 = vmatprep.subr.mxu0 0.0
    %7513 = vmatpush1.msra.mxu0 0.0
    %7514 = vmatprep.mubr.f32.mxu0 0.0
    %7515 = vmatmul.mubr.f32.gmra.mrb[0].mxu0 %v7439
    %v7516 = vpop.f32.mrb[0].mxu0
    %v7517 = vadd.f32 0.0, %v7516
    %v7518 = vpop.f32.mrb[0].mxu0
    %7519 = vmatprep.mubr.f32.mxu0 0.0
    %7520 = vmatmul.mubr.f32.gmra.mrb[0].mxu0 %v7442
    %v7521 = vpop.f32.mrb[0].mxu0
    %v7522 = vadd.f32 0.0, %v7521
    %v7523 = vpop.f32.mrb[0].mxu0
    %7524 = vmatprep.mubr.f32.mxu0 0.0
    %7525 = vmatmul.mubr.f32.gmra.mrb[0].mxu0 %v7445
    %v7526 = vpop.f32.mrb[0].mxu0
    %v7527 = vadd.f32 0.0, %v7526
    %v7528 = vpop.f32.mrb[0].mxu0
    %7529 = vmatprep.mubr.f32.mxu0 0.0
    %7530 = vmatmul.mubr.f32.gmra.mrb[0].mxu0 %v7448
    %v7531 = vpop.f32.mrb[0].mxu0
    %v7532 = vadd.f32 0.0, %v7531
    %v7533 = vpop.f32.mrb[0].mxu0
    %7534 = vdwg.mxu0
    %v7535 = vmul.f32 %v7517, 0.25
    %v7536 = vmul.f32 %v7522, 0.25
    %v7537 = vmul.f32 %v7527, 0.25
    %v7538 = vmul.f32 %v7532, 0.25
    %7539 = vmatprep.subr.mxu0 0.0
    %7540 = vmatpush1.msra.mxu0 %v7535
    %7541 = vmatprep.subr.mxu0 0.0
    %7542 = vmatpush1.msra.mxu0 %v7536
    %7543 = vmatprep.subr.mxu0 0.0
    %7544 = vmatpush1.msra.mxu0 %v7537
    %7545 = vmatprep.subr.mxu0 0.0
    %7546 = vmatpush1.msra.mxu0 %v7538
    %7547 = vmatprep.subr.mxu0 0.0
    %7548 = vmatpush1.msra.mxu0 0.0
    %7549 = vmatprep.subr.mxu0 0.0
    %7550 = vmatpush1.msra.mxu0 0.0
    %7551 = vmatprep.subr.mxu0 0.0
    %7552 = vmatpush1.msra.mxu0 0.0
    %7553 = vmatprep.subr.mxu0 0.0
    %7554 = vmatpush1.msra.mxu0 0.0
    %7555 = vmatprep.subr.mxu0 0.0
    %7556 = vmatpush1.msra.mxu0 0.0
    %7557 = vmatprep.subr.mxu0 0.0
    %7558 = vmatpush1.msra.mxu0 0.0
    %7559 = vmatprep.subr.mxu0 0.0
    %7560 = vmatpush1.msra.mxu0 0.0
    %7561 = vmatprep.subr.mxu0 0.0
    %7562 = vmatpush1.msra.mxu0 0.0
    %7563 = vmatprep.subr.mxu0 0.0
    %7564 = vmatpush1.msra.mxu0 0.0
    %7565 = vmatprep.subr.mxu0 0.0
    %7566 = vmatpush1.msra.mxu0 0.0
    %7567 = vmatprep.subr.mxu0 0.0
    %7568 = vmatpush1.msra.mxu0 0.0
    %7569 = vmatprep.subr.mxu0 0.0
    %7570 = vmatpush1.msra.mxu0 0.0
    %7571 = vmatprep.subr.mxu0 0.0
    %7572 = vmatpush1.msra.mxu0 0.0
    %7573 = vmatprep.subr.mxu0 0.0
    %7574 = vmatpush1.msra.mxu0 0.0
    %7575 = vmatprep.subr.mxu0 0.0
    %7576 = vmatpush1.msra.mxu0 0.0
    %7577 = vmatprep.subr.mxu0 0.0
    %7578 = vmatpush1.msra.mxu0 0.0
    %7579 = vmatprep.subr.mxu0 0.0
    %7580 = vmatpush1.msra.mxu0 0.0
    %7581 = vmatprep.subr.mxu0 0.0
    %7582 = vmatpush1.msra.mxu0 0.0
    %7583 = vmatprep.subr.mxu0 0.0
    %7584 = vmatpush1.msra.mxu0 0.0
    %7585 = vmatprep.subr.mxu0 0.0
    %7586 = vmatpush1.msra.mxu0 0.0
    %7587 = vmatprep.subr.mxu0 0.0
    %7588 = vmatpush1.msra.mxu0 0.0
    %7589 = vmatprep.subr.mxu0 0.0
    %7590 = vmatpush1.msra.mxu0 0.0
    %7591 = vmatprep.subr.mxu0 0.0
    %7592 = vmatpush1.msra.mxu0 0.0
    %7593 = vmatprep.subr.mxu0 0.0
    %7594 = vmatpush1.msra.mxu0 0.0
    %7595 = vmatprep.subr.mxu0 0.0
    %7596 = vmatpush1.msra.mxu0 0.0
    %7597 = vmatprep.subr.mxu0 0.0
    %7598 = vmatpush1.msra.mxu0 0.0
    %7599 = vmatprep.subr.mxu0 0.0
    %7600 = vmatpush1.msra.mxu0 0.0
    %7601 = vmatprep.subr.mxu0 0.0
    %7602 = vmatpush1.msra.mxu0 0.0
    %7603 = vmatprep.mubr.f32.mxu0 0.0
    %7604 = vmatmul.mubr.f32.gmra.mrb[0].mxu0 %v6768
    %v7605 = vpop.f32.mrb[0].mxu0
    %v7606 = vadd.f32 0.0, %v7605
    %v7607 = vpop.f32.mrb[0].mxu0
    %7608 = vmatprep.mubr.f32.mxu0 0.0
    %7609 = vmatmul.mubr.f32.gmra.mrb[0].mxu0 %v6771
    %v7610 = vpop.f32.mrb[0].mxu0
    %v7611 = vadd.f32 0.0, %v7610
    %v7612 = vpop.f32.mrb[0].mxu0
    %7613 = vmatprep.mubr.f32.mxu0 0.0
    %7614 = vmatmul.mubr.f32.gmra.mrb[0].mxu0 %v6774
    %v7615 = vpop.f32.mrb[0].mxu0
    %v7616 = vadd.f32 0.0, %v7615
    %v7617 = vpop.f32.mrb[0].mxu0
    %7618 = vmatprep.mubr.f32.mxu0 0.0
    %7619 = vmatmul.mubr.f32.gmra.mrb[0].mxu0 %v6777
    %v7620 = vpop.f32.mrb[0].mxu0
    %v7621 = vadd.f32 0.0, %v7620
    %v7622 = vpop.f32.mrb[0].mxu0
    %7623 = vdwg.mxu0
    %v7624 = vsub.f32 %v1820, %v7606
    %v7625 = vsub.f32 %v1821, %v7611
    %v7626 = vsub.f32 %v1822, %v7616
    %v7627 = vsub.f32 %v1823, %v7621
    %v7629 = vsel %vm86, %v7606, 0
    %v7632 = vsel %vm86, %v7611, 0
    %v7635 = vsel %vm86, %v7616, 0
    %v7638 = vsel %vm86, %v7621, 0
    %7640 = vmatprep.subr.mxu0 0.0
    %7641 = vmatpush1.msra.mxu0 %v7624
    %7642 = vmatprep.subr.mxu0 0.0
    %7643 = vmatpush1.msra.mxu0 %v7625
    %7644 = vmatprep.subr.mxu0 0.0
    %7645 = vmatpush1.msra.mxu0 %v7626
    %7646 = vmatprep.subr.mxu0 0.0
    %7647 = vmatpush1.msra.mxu0 %v7627
    %7648 = vmatprep.subr.mxu0 0.0
    %7649 = vmatpush1.msra.mxu0 0.0
    %7650 = vmatprep.subr.mxu0 0.0
    %7651 = vmatpush1.msra.mxu0 0.0
    %7652 = vmatprep.subr.mxu0 0.0
    %7653 = vmatpush1.msra.mxu0 0.0
    %7654 = vmatprep.subr.mxu0 0.0
    %7655 = vmatpush1.msra.mxu0 0.0
    %7656 = vmatprep.subr.mxu0 0.0
    %7657 = vmatpush1.msra.mxu0 0.0
    %7658 = vmatprep.subr.mxu0 0.0
    %7659 = vmatpush1.msra.mxu0 0.0
    %7660 = vmatprep.subr.mxu0 0.0
    %7661 = vmatpush1.msra.mxu0 0.0
    %7662 = vmatprep.subr.mxu0 0.0
    %7663 = vmatpush1.msra.mxu0 0.0
    %7664 = vmatprep.subr.mxu0 0.0
    %7665 = vmatpush1.msra.mxu0 0.0
    %7666 = vmatprep.subr.mxu0 0.0
    %7667 = vmatpush1.msra.mxu0 0.0
    %7668 = vmatprep.subr.mxu0 0.0
    %7669 = vmatpush1.msra.mxu0 0.0
    %7670 = vmatprep.subr.mxu0 0.0
    %7671 = vmatpush1.msra.mxu0 0.0
    %7672 = vmatprep.subr.mxu0 0.0
    %7673 = vmatpush1.msra.mxu0 0.0
    %7674 = vmatprep.subr.mxu0 0.0
    %7675 = vmatpush1.msra.mxu0 0.0
    %7676 = vmatprep.subr.mxu0 0.0
    %7677 = vmatpush1.msra.mxu0 0.0
    %7678 = vmatprep.subr.mxu0 0.0
    %7679 = vmatpush1.msra.mxu0 0.0
    %7680 = vmatprep.subr.mxu0 0.0
    %7681 = vmatpush1.msra.mxu0 0.0
    %7682 = vmatprep.subr.mxu0 0.0
    %7683 = vmatpush1.msra.mxu0 0.0
    %7684 = vmatprep.subr.mxu0 0.0
    %7685 = vmatpush1.msra.mxu0 0.0
    %7686 = vmatprep.subr.mxu0 0.0
    %7687 = vmatpush1.msra.mxu0 0.0
    %7688 = vmatprep.subr.mxu0 0.0
    %7689 = vmatpush1.msra.mxu0 0.0
    %7690 = vmatprep.subr.mxu0 0.0
    %7691 = vmatpush1.msra.mxu0 0.0
    %7692 = vmatprep.subr.mxu0 0.0
    %7693 = vmatpush1.msra.mxu0 0.0
    %7694 = vmatprep.subr.mxu0 0.0
    %7695 = vmatpush1.msra.mxu0 0.0
    %7696 = vmatprep.subr.mxu0 0.0
    %7697 = vmatpush1.msra.mxu0 0.0
    %7698 = vmatprep.subr.mxu0 0.0
    %7699 = vmatpush1.msra.mxu0 0.0
    %7700 = vmatprep.subr.mxu0 0.0
    %7701 = vmatpush1.msra.mxu0 0.0
    %7702 = vmatprep.subr.mxu0 0.0
    %7703 = vmatpush1.msra.mxu0 0.0
    %7704 = vmatprep.mubr.f32.mxu0 0.0
    %7705 = vmatmul.mubr.f32.gmra.mrb[0].mxu0 %v7629
    %v7706 = vpop.f32.mrb[0].mxu0
    %v7707 = vadd.f32 0.0, %v7706
    %v7708 = vpop.f32.mrb[0].mxu0
    %7709 = vmatprep.mubr.f32.mxu0 0.0
    %7710 = vmatmul.mubr.f32.gmra.mrb[0].mxu0 %v7632
    %v7711 = vpop.f32.mrb[0].mxu0
    %v7712 = vadd.f32 0.0, %v7711
    %v7713 = vpop.f32.mrb[0].mxu0
    %7714 = vmatprep.mubr.f32.mxu0 0.0
    %7715 = vmatmul.mubr.f32.gmra.mrb[0].mxu0 %v7635
    %v7716 = vpop.f32.mrb[0].mxu0
    %v7717 = vadd.f32 0.0, %v7716
    %v7718 = vpop.f32.mrb[0].mxu0
    %7719 = vmatprep.mubr.f32.mxu0 0.0
    %7720 = vmatmul.mubr.f32.gmra.mrb[0].mxu0 %v7638
    %v7721 = vpop.f32.mrb[0].mxu0
    %v7722 = vadd.f32 0.0, %v7721
    %v7723 = vpop.f32.mrb[0].mxu0
    %7724 = vdwg.mxu0
    %v7725 = vsub.f32 %v1828, %v7707
    %v7726 = vsub.f32 %v1829, %v7712
    %v7727 = vsub.f32 %v1830, %v7717
    %v7728 = vsub.f32 %v1831, %v7722
    %7729 = vmatprep.subr.mxu0 0.0
    %7730 = vmatpush1.msra.mxu0 %v7725
    %7731 = vmatprep.subr.mxu0 0.0
    %7732 = vmatpush1.msra.mxu0 %v7726
    %7733 = vmatprep.subr.mxu0 0.0
    %7734 = vmatpush1.msra.mxu0 %v7727
    %7735 = vmatprep.subr.mxu0 0.0
    %7736 = vmatpush1.msra.mxu0 %v7728
    %7737 = vmatprep.subr.mxu0 0.0
    %7738 = vmatpush1.msra.mxu0 0.0
    %7739 = vmatprep.subr.mxu0 0.0
    %7740 = vmatpush1.msra.mxu0 0.0
    %7741 = vmatprep.subr.mxu0 0.0
    %7742 = vmatpush1.msra.mxu0 0.0
    %7743 = vmatprep.subr.mxu0 0.0
    %7744 = vmatpush1.msra.mxu0 0.0
    %7745 = vmatprep.subr.mxu0 0.0
    %7746 = vmatpush1.msra.mxu0 0.0
    %7747 = vmatprep.subr.mxu0 0.0
    %7748 = vmatpush1.msra.mxu0 0.0
    %7749 = vmatprep.subr.mxu0 0.0
    %7750 = vmatpush1.msra.mxu0 0.0
    %7751 = vmatprep.subr.mxu0 0.0
    %7752 = vmatpush1.msra.mxu0 0.0
    %7753 = vmatprep.subr.mxu0 0.0
    %7754 = vmatpush1.msra.mxu0 0.0
    %7755 = vmatprep.subr.mxu0 0.0
    %7756 = vmatpush1.msra.mxu0 0.0
    %7757 = vmatprep.subr.mxu0 0.0
    %7758 = vmatpush1.msra.mxu0 0.0
    %7759 = vmatprep.subr.mxu0 0.0
    %7760 = vmatpush1.msra.mxu0 0.0
    %7761 = vmatprep.subr.mxu0 0.0
    %7762 = vmatpush1.msra.mxu0 0.0
    %7763 = vmatprep.subr.mxu0 0.0
    %7764 = vmatpush1.msra.mxu0 0.0
    %7765 = vmatprep.subr.mxu0 0.0
    %7766 = vmatpush1.msra.mxu0 0.0
    %7767 = vmatprep.subr.mxu0 0.0
    %7768 = vmatpush1.msra.mxu0 0.0
    %7769 = vmatprep.subr.mxu0 0.0
    %7770 = vmatpush1.msra.mxu0 0.0
    %7771 = vmatprep.subr.mxu0 0.0
    %7772 = vmatpush1.msra.mxu0 0.0
    %7773 = vmatprep.subr.mxu0 0.0
    %7774 = vmatpush1.msra.mxu0 0.0
    %7775 = vmatprep.subr.mxu0 0.0
    %7776 = vmatpush1.msra.mxu0 0.0
    %7777 = vmatprep.subr.mxu0 0.0
    %7778 = vmatpush1.msra.mxu0 0.0
    %7779 = vmatprep.subr.mxu0 0.0
    %7780 = vmatpush1.msra.mxu0 0.0
    %7781 = vmatprep.subr.mxu0 0.0
    %7782 = vmatpush1.msra.mxu0 0.0
    %7783 = vmatprep.subr.mxu0 0.0
    %7784 = vmatpush1.msra.mxu0 0.0
    %7785 = vmatprep.subr.mxu0 0.0
    %7786 = vmatpush1.msra.mxu0 0.0
    %7787 = vmatprep.subr.mxu0 0.0
    %7788 = vmatpush1.msra.mxu0 0.0
    %7789 = vmatprep.subr.mxu0 0.0
    %7790 = vmatpush1.msra.mxu0 0.0
    %7791 = vmatprep.subr.mxu0 0.0
    %7792 = vmatpush1.msra.mxu0 0.0
    %7793 = vmatprep.mubr.f32.mxu0 0.0
    %7794 = vmatmul.mubr.f32.gmra.mrb[0].mxu0 %v7629
    %v7795 = vpop.f32.mrb[0].mxu0
    %v7796 = vadd.f32 0.0, %v7795
    %v7797 = vpop.f32.mrb[0].mxu0
    %7798 = vmatprep.mubr.f32.mxu0 0.0
    %7799 = vmatmul.mubr.f32.gmra.mrb[0].mxu0 %v7632
    %v7800 = vpop.f32.mrb[0].mxu0
    %v7801 = vadd.f32 0.0, %v7800
    %v7802 = vpop.f32.mrb[0].mxu0
    %7803 = vmatprep.mubr.f32.mxu0 0.0
    %7804 = vmatmul.mubr.f32.gmra.mrb[0].mxu0 %v7635
    %v7805 = vpop.f32.mrb[0].mxu0
    %v7806 = vadd.f32 0.0, %v7805
    %v7807 = vpop.f32.mrb[0].mxu0
    %7808 = vmatprep.mubr.f32.mxu0 0.0
    %7809 = vmatmul.mubr.f32.gmra.mrb[0].mxu0 %v7638
    %v7810 = vpop.f32.mrb[0].mxu0
    %v7811 = vadd.f32 0.0, %v7810
    %v7812 = vpop.f32.mrb[0].mxu0
    %7813 = vdwg.mxu0
    %v7814 = vsub.f32 %v1933, %v7796
    %v7815 = vsub.f32 %v1934, %v7801
    %v7816 = vsub.f32 %v1935, %v7806
    %v7817 = vsub.f32 %v1936, %v7811
    %v7819 = vsel %vm86, %v7535, 0
    %v7822 = vsel %vm86, %v7536, 0
    %v7825 = vsel %vm86, %v7537, 0
    %v7828 = vsel %vm86, %v7538, 0
    %7830 = vmatprep.subr.mxu0 0.0
    %7831 = vmatpush1.msra.mxu0 %v7814
    %7832 = vmatprep.subr.mxu0 0.0
    %7833 = vmatpush1.msra.mxu0 %v7815
    %7834 = vmatprep.subr.mxu0 0.0
    %7835 = vmatpush1.msra.mxu0 %v7816
    %7836 = vmatprep.subr.mxu0 0.0
    %7837 = vmatpush1.msra.mxu0 %v7817
    %7838 = vmatprep.subr.mxu0 0.0
    %7839 = vmatpush1.msra.mxu0 0.0
    %7840 = vmatprep.subr.mxu0 0.0
    %7841 = vmatpush1.msra.mxu0 0.0
    %7842 = vmatprep.subr.mxu0 0.0
    %7843 = vmatpush1.msra.mxu0 0.0
    %7844 = vmatprep.subr.mxu0 0.0
    %7845 = vmatpush1.msra.mxu0 0.0
    %7846 = vmatprep.subr.mxu0 0.0
    %7847 = vmatpush1.msra.mxu0 0.0
    %7848 = vmatprep.subr.mxu0 0.0
    %7849 = vmatpush1.msra.mxu0 0.0
    %7850 = vmatprep.subr.mxu0 0.0
    %7851 = vmatpush1.msra.mxu0 0.0
    %7852 = vmatprep.subr.mxu0 0.0
    %7853 = vmatpush1.msra.mxu0 0.0
    %7854 = vmatprep.subr.mxu0 0.0
    %7855 = vmatpush1.msra.mxu0 0.0
    %7856 = vmatprep.subr.mxu0 0.0
    %7857 = vmatpush1.msra.mxu0 0.0
    %7858 = vmatprep.subr.mxu0 0.0
    %7859 = vmatpush1.msra.mxu0 0.0
    %7860 = vmatprep.subr.mxu0 0.0
    %7861 = vmatpush1.msra.mxu0 0.0
    %7862 = vmatprep.subr.mxu0 0.0
    %7863 = vmatpush1.msra.mxu0 0.0
    %7864 = vmatprep.subr.mxu0 0.0
    %7865 = vmatpush1.msra.mxu0 0.0
    %7866 = vmatprep.subr.mxu0 0.0
    %7867 = vmatpush1.msra.mxu0 0.0
    %7868 = vmatprep.subr.mxu0 0.0
    %7869 = vmatpush1.msra.mxu0 0.0
    %7870 = vmatprep.subr.mxu0 0.0
    %7871 = vmatpush1.msra.mxu0 0.0
    %7872 = vmatprep.subr.mxu0 0.0
    %7873 = vmatpush1.msra.mxu0 0.0
    %7874 = vmatprep.subr.mxu0 0.0
    %7875 = vmatpush1.msra.mxu0 0.0
    %7876 = vmatprep.subr.mxu0 0.0
    %7877 = vmatpush1.msra.mxu0 0.0
    %7878 = vmatprep.subr.mxu0 0.0
    %7879 = vmatpush1.msra.mxu0 0.0
    %7880 = vmatprep.subr.mxu0 0.0
    %7881 = vmatpush1.msra.mxu0 0.0
    %7882 = vmatprep.subr.mxu0 0.0
    %7883 = vmatpush1.msra.mxu0 0.0
    %7884 = vmatprep.subr.mxu0 0.0
    %7885 = vmatpush1.msra.mxu0 0.0
    %7886 = vmatprep.subr.mxu0 0.0
    %7887 = vmatpush1.msra.mxu0 0.0
    %7888 = vmatprep.subr.mxu0 0.0
    %7889 = vmatpush1.msra.mxu0 0.0
    %7890 = vmatprep.subr.mxu0 0.0
    %7891 = vmatpush1.msra.mxu0 0.0
    %7892 = vmatprep.subr.mxu0 0.0
    %7893 = vmatpush1.msra.mxu0 0.0
    %7894 = vmatprep.mubr.f32.mxu0 0.0
    %7895 = vmatmul.mubr.f32.gmra.mrb[0].mxu0 %v7819
    %v7896 = vpop.f32.mrb[0].mxu0
    %v7897 = vadd.f32 0.0, %v7896
    %v7898 = vpop.f32.mrb[0].mxu0
    %7899 = vmatprep.mubr.f32.mxu0 0.0
    %7900 = vmatmul.mubr.f32.gmra.mrb[0].mxu0 %v7822
    %v7901 = vpop.f32.mrb[0].mxu0
    %v7902 = vadd.f32 0.0, %v7901
    %v7903 = vpop.f32.mrb[0].mxu0
    %7904 = vmatprep.mubr.f32.mxu0 0.0
    %7905 = vmatmul.mubr.f32.gmra.mrb[0].mxu0 %v7825
    %v7906 = vpop.f32.mrb[0].mxu0
    %v7907 = vadd.f32 0.0, %v7906
    %v7908 = vpop.f32.mrb[0].mxu0
    %7909 = vmatprep.mubr.f32.mxu0 0.0
    %7910 = vmatmul.mubr.f32.gmra.mrb[0].mxu0 %v7828
    %v7911 = vpop.f32.mrb[0].mxu0
    %v7912 = vadd.f32 0.0, %v7911
    %v7913 = vpop.f32.mrb[0].mxu0
    %7914 = vdwg.mxu0
    %v7915 = vmul.f32 %v7897, 0.25
    %v7916 = vmul.f32 %v7902, 0.25
    %v7917 = vmul.f32 %v7907, 0.25
    %v7918 = vmul.f32 %v7912, 0.25
    %7919 = vmatprep.subr.mxu0 0.0
    %7920 = vmatpush1.msra.mxu0 %v7915
    %7921 = vmatprep.subr.mxu0 0.0
    %7922 = vmatpush1.msra.mxu0 %v7916
    %7923 = vmatprep.subr.mxu0 0.0
    %7924 = vmatpush1.msra.mxu0 %v7917
    %7925 = vmatprep.subr.mxu0 0.0
    %7926 = vmatpush1.msra.mxu0 %v7918
    %7927 = vmatprep.subr.mxu0 0.0
    %7928 = vmatpush1.msra.mxu0 0.0
    %7929 = vmatprep.subr.mxu0 0.0
    %7930 = vmatpush1.msra.mxu0 0.0
    %7931 = vmatprep.subr.mxu0 0.0
    %7932 = vmatpush1.msra.mxu0 0.0
    %7933 = vmatprep.subr.mxu0 0.0
    %7934 = vmatpush1.msra.mxu0 0.0
    %7935 = vmatprep.subr.mxu0 0.0
    %7936 = vmatpush1.msra.mxu0 0.0
    %7937 = vmatprep.subr.mxu0 0.0
    %7938 = vmatpush1.msra.mxu0 0.0
    %7939 = vmatprep.subr.mxu0 0.0
    %7940 = vmatpush1.msra.mxu0 0.0
    %7941 = vmatprep.subr.mxu0 0.0
    %7942 = vmatpush1.msra.mxu0 0.0
    %7943 = vmatprep.subr.mxu0 0.0
    %7944 = vmatpush1.msra.mxu0 0.0
    %7945 = vmatprep.subr.mxu0 0.0
    %7946 = vmatpush1.msra.mxu0 0.0
    %7947 = vmatprep.subr.mxu0 0.0
    %7948 = vmatpush1.msra.mxu0 0.0
    %7949 = vmatprep.subr.mxu0 0.0
    %7950 = vmatpush1.msra.mxu0 0.0
    %7951 = vmatprep.subr.mxu0 0.0
    %7952 = vmatpush1.msra.mxu0 0.0
    %7953 = vmatprep.subr.mxu0 0.0
    %7954 = vmatpush1.msra.mxu0 0.0
    %7955 = vmatprep.subr.mxu0 0.0
    %7956 = vmatpush1.msra.mxu0 0.0
    %7957 = vmatprep.subr.mxu0 0.0
    %7958 = vmatpush1.msra.mxu0 0.0
    %7959 = vmatprep.subr.mxu0 0.0
    %7960 = vmatpush1.msra.mxu0 0.0
    %7961 = vmatprep.subr.mxu0 0.0
    %7962 = vmatpush1.msra.mxu0 0.0
    %7963 = vmatprep.subr.mxu0 0.0
    %7964 = vmatpush1.msra.mxu0 0.0
    %7965 = vmatprep.subr.mxu0 0.0
    %7966 = vmatpush1.msra.mxu0 0.0
    %7967 = vmatprep.subr.mxu0 0.0
    %7968 = vmatpush1.msra.mxu0 0.0
    %7969 = vmatprep.subr.mxu0 0.0
    %7970 = vmatpush1.msra.mxu0 0.0
    %7971 = vmatprep.subr.mxu0 0.0
    %7972 = vmatpush1.msra.mxu0 0.0
    %7973 = vmatprep.subr.mxu0 0.0
    %7974 = vmatpush1.msra.mxu0 0.0
    %7975 = vmatprep.subr.mxu0 0.0
    %7976 = vmatpush1.msra.mxu0 0.0
    %7977 = vmatprep.subr.mxu0 0.0
    %7978 = vmatpush1.msra.mxu0 0.0
    %7979 = vmatprep.subr.mxu0 0.0
    %7980 = vmatpush1.msra.mxu0 0.0
    %7981 = vmatprep.subr.mxu0 0.0
    %7982 = vmatpush1.msra.mxu0 0.0
    %7983 = vmatprep.mubr.f32.mxu0 0.0
    %7984 = vmatmul.mubr.f32.gmra.mrb[0].mxu0 %v6768
    %v7985 = vpop.f32.mrb[0].mxu0
    %v7986 = vadd.f32 0.0, %v7985
    %v7987 = vpop.f32.mrb[0].mxu0
    %7988 = vmatprep.mubr.f32.mxu0 0.0
    %7989 = vmatmul.mubr.f32.gmra.mrb[0].mxu0 %v6771
    %v7990 = vpop.f32.mrb[0].mxu0
    %v7991 = vadd.f32 0.0, %v7990
    %v7992 = vpop.f32.mrb[0].mxu0
    %7993 = vmatprep.mubr.f32.mxu0 0.0
    %7994 = vmatmul.mubr.f32.gmra.mrb[0].mxu0 %v6774
    %v7995 = vpop.f32.mrb[0].mxu0
    %v7996 = vadd.f32 0.0, %v7995
    %v7997 = vpop.f32.mrb[0].mxu0
    %7998 = vmatprep.mubr.f32.mxu0 0.0
    %7999 = vmatmul.mubr.f32.gmra.mrb[0].mxu0 %v6777
    %v8000 = vpop.f32.mrb[0].mxu0
    %v8001 = vadd.f32 0.0, %v8000
    %v8002 = vpop.f32.mrb[0].mxu0
    %8003 = vdwg.mxu0
    %v8004 = vsub.f32 %v1820, %v7986
    %v8005 = vsub.f32 %v1821, %v7991
    %v8006 = vsub.f32 %v1822, %v7996
    %v8007 = vsub.f32 %v1823, %v8001
    %v8009 = vsel %vm86, %v7986, 0
    %v8012 = vsel %vm86, %v7991, 0
    %v8015 = vsel %vm86, %v7996, 0
    %v8018 = vsel %vm86, %v8001, 0
    %8020 = vmatprep.subr.mxu0 0.0
    %8021 = vmatpush1.msra.mxu0 %v8004
    %8022 = vmatprep.subr.mxu0 0.0
    %8023 = vmatpush1.msra.mxu0 %v8005
    %8024 = vmatprep.subr.mxu0 0.0
    %8025 = vmatpush1.msra.mxu0 %v8006
    %8026 = vmatprep.subr.mxu0 0.0
    %8027 = vmatpush1.msra.mxu0 %v8007
    %8028 = vmatprep.subr.mxu0 0.0
    %8029 = vmatpush1.msra.mxu0 0.0
    %8030 = vmatprep.subr.mxu0 0.0
    %8031 = vmatpush1.msra.mxu0 0.0
    %8032 = vmatprep.subr.mxu0 0.0
    %8033 = vmatpush1.msra.mxu0 0.0
    %8034 = vmatprep.subr.mxu0 0.0
    %8035 = vmatpush1.msra.mxu0 0.0
    %8036 = vmatprep.subr.mxu0 0.0
    %8037 = vmatpush1.msra.mxu0 0.0
    %8038 = vmatprep.subr.mxu0 0.0
    %8039 = vmatpush1.msra.mxu0 0.0
    %8040 = vmatprep.subr.mxu0 0.0
    %8041 = vmatpush1.msra.mxu0 0.0
    %8042 = vmatprep.subr.mxu0 0.0
    %8043 = vmatpush1.msra.mxu0 0.0
    %8044 = vmatprep.subr.mxu0 0.0
    %8045 = vmatpush1.msra.mxu0 0.0
    %8046 = vmatprep.subr.mxu0 0.0
    %8047 = vmatpush1.msra.mxu0 0.0
    %8048 = vmatprep.subr.mxu0 0.0
    %8049 = vmatpush1.msra.mxu0 0.0
    %8050 = vmatprep.subr.mxu0 0.0
    %8051 = vmatpush1.msra.mxu0 0.0
    %8052 = vmatprep.subr.mxu0 0.0
    %8053 = vmatpush1.msra.mxu0 0.0
    %8054 = vmatprep.subr.mxu0 0.0
    %8055 = vmatpush1.msra.mxu0 0.0
    %8056 = vmatprep.subr.mxu0 0.0
    %8057 = vmatpush1.msra.mxu0 0.0
    %8058 = vmatprep.subr.mxu0 0.0
    %8059 = vmatpush1.msra.mxu0 0.0
    %8060 = vmatprep.subr.mxu0 0.0
    %8061 = vmatpush1.msra.mxu0 0.0
    %8062 = vmatprep.subr.mxu0 0.0
    %8063 = vmatpush1.msra.mxu0 0.0
    %8064 = vmatprep.subr.mxu0 0.0
    %8065 = vmatpush1.msra.mxu0 0.0
    %8066 = vmatprep.subr.mxu0 0.0
    %8067 = vmatpush1.msra.mxu0 0.0
    %8068 = vmatprep.subr.mxu0 0.0
    %8069 = vmatpush1.msra.mxu0 0.0
    %8070 = vmatprep.subr.mxu0 0.0
    %8071 = vmatpush1.msra.mxu0 0.0
    %8072 = vmatprep.subr.mxu0 0.0
    %8073 = vmatpush1.msra.mxu0 0.0
    %8074 = vmatprep.subr.mxu0 0.0
    %8075 = vmatpush1.msra.mxu0 0.0
    %8076 = vmatprep.subr.mxu0 0.0
    %8077 = vmatpush1.msra.mxu0 0.0
    %8078 = vmatprep.subr.mxu0 0.0
    %8079 = vmatpush1.msra.mxu0 0.0
    %8080 = vmatprep.subr.mxu0 0.0
    %8081 = vmatpush1.msra.mxu0 0.0
    %8082 = vmatprep.subr.mxu0 0.0
    %8083 = vmatpush1.msra.mxu0 0.0
    %8084 = vmatprep.mubr.f32.mxu0 0.0
    %8085 = vmatmul.mubr.f32.gmra.mrb[0].mxu0 %v8009
    %v8086 = vpop.f32.mrb[0].mxu0
    %v8087 = vadd.f32 0.0, %v8086
    %v8088 = vpop.f32.mrb[0].mxu0
    %8089 = vmatprep.mubr.f32.mxu0 0.0
    %8090 = vmatmul.mubr.f32.gmra.mrb[0].mxu0 %v8012
    %v8091 = vpop.f32.mrb[0].mxu0
    %v8092 = vadd.f32 0.0, %v8091
    %v8093 = vpop.f32.mrb[0].mxu0
    %8094 = vmatprep.mubr.f32.mxu0 0.0
    %8095 = vmatmul.mubr.f32.gmra.mrb[0].mxu0 %v8015
    %v8096 = vpop.f32.mrb[0].mxu0
    %v8097 = vadd.f32 0.0, %v8096
    %v8098 = vpop.f32.mrb[0].mxu0
    %8099 = vmatprep.mubr.f32.mxu0 0.0
    %8100 = vmatmul.mubr.f32.gmra.mrb[0].mxu0 %v8018
    %v8101 = vpop.f32.mrb[0].mxu0
    %v8102 = vadd.f32 0.0, %v8101
    %v8103 = vpop.f32.mrb[0].mxu0
    %8104 = vdwg.mxu0
    %v8105 = vsub.f32 %v1828, %v8087
    %v8106 = vsub.f32 %v1829, %v8092
    %v8107 = vsub.f32 %v1830, %v8097
    %v8108 = vsub.f32 %v1831, %v8102
    %8109 = vmatprep.subr.mxu0 0.0
    %8110 = vmatpush1.msra.mxu0 %v8105
    %8111 = vmatprep.subr.mxu0 0.0
    %8112 = vmatpush1.msra.mxu0 %v8106
    %8113 = vmatprep.subr.mxu0 0.0
    %8114 = vmatpush1.msra.mxu0 %v8107
    %8115 = vmatprep.subr.mxu0 0.0
    %8116 = vmatpush1.msra.mxu0 %v8108
    %8117 = vmatprep.subr.mxu0 0.0
    %8118 = vmatpush1.msra.mxu0 0.0
    %8119 = vmatprep.subr.mxu0 0.0
    %8120 = vmatpush1.msra.mxu0 0.0
    %8121 = vmatprep.subr.mxu0 0.0
    %8122 = vmatpush1.msra.mxu0 0.0
    %8123 = vmatprep.subr.mxu0 0.0
    %8124 = vmatpush1.msra.mxu0 0.0
    %8125 = vmatprep.subr.mxu0 0.0
    %8126 = vmatpush1.msra.mxu0 0.0
    %8127 = vmatprep.subr.mxu0 0.0
    %8128 = vmatpush1.msra.mxu0 0.0
    %8129 = vmatprep.subr.mxu0 0.0
    %8130 = vmatpush1.msra.mxu0 0.0
    %8131 = vmatprep.subr.mxu0 0.0
    %8132 = vmatpush1.msra.mxu0 0.0
    %8133 = vmatprep.subr.mxu0 0.0
    %8134 = vmatpush1.msra.mxu0 0.0
    %8135 = vmatprep.subr.mxu0 0.0
    %8136 = vmatpush1.msra.mxu0 0.0
    %8137 = vmatprep.subr.mxu0 0.0
    %8138 = vmatpush1.msra.mxu0 0.0
    %8139 = vmatprep.subr.mxu0 0.0
    %8140 = vmatpush1.msra.mxu0 0.0
    %8141 = vmatprep.subr.mxu0 0.0
    %8142 = vmatpush1.msra.mxu0 0.0
    %8143 = vmatprep.subr.mxu0 0.0
    %8144 = vmatpush1.msra.mxu0 0.0
    %8145 = vmatprep.subr.mxu0 0.0
    %8146 = vmatpush1.msra.mxu0 0.0
    %8147 = vmatprep.subr.mxu0 0.0
    %8148 = vmatpush1.msra.mxu0 0.0
    %8149 = vmatprep.subr.mxu0 0.0
    %8150 = vmatpush1.msra.mxu0 0.0
    %8151 = vmatprep.subr.mxu0 0.0
    %8152 = vmatpush1.msra.mxu0 0.0
    %8153 = vmatprep.subr.mxu0 0.0
    %8154 = vmatpush1.msra.mxu0 0.0
    %8155 = vmatprep.subr.mxu0 0.0
    %8156 = vmatpush1.msra.mxu0 0.0
    %8157 = vmatprep.subr.mxu0 0.0
    %8158 = vmatpush1.msra.mxu0 0.0
    %8159 = vmatprep.subr.mxu0 0.0
    %8160 = vmatpush1.msra.mxu0 0.0
    %8161 = vmatprep.subr.mxu0 0.0
    %8162 = vmatpush1.msra.mxu0 0.0
    %8163 = vmatprep.subr.mxu0 0.0
    %8164 = vmatpush1.msra.mxu0 0.0
    %8165 = vmatprep.subr.mxu0 0.0
    %8166 = vmatpush1.msra.mxu0 0.0
    %8167 = vmatprep.subr.mxu0 0.0
    %8168 = vmatpush1.msra.mxu0 0.0
    %8169 = vmatprep.subr.mxu0 0.0
    %8170 = vmatpush1.msra.mxu0 0.0
    %8171 = vmatprep.subr.mxu0 0.0
    %8172 = vmatpush1.msra.mxu0 0.0
    %8173 = vmatprep.mubr.f32.mxu0 0.0
    %8174 = vmatmul.mubr.f32.gmra.mrb[0].mxu0 %v8009
    %v8175 = vpop.f32.mrb[0].mxu0
    %v8176 = vadd.f32 0.0, %v8175
    %v8177 = vpop.f32.mrb[0].mxu0
    %8178 = vmatprep.mubr.f32.mxu0 0.0
    %8179 = vmatmul.mubr.f32.gmra.mrb[0].mxu0 %v8012
    %v8180 = vpop.f32.mrb[0].mxu0
    %v8181 = vadd.f32 0.0, %v8180
    %v8182 = vpop.f32.mrb[0].mxu0
    %8183 = vmatprep.mubr.f32.mxu0 0.0
    %8184 = vmatmul.mubr.f32.gmra.mrb[0].mxu0 %v8015
    %v8185 = vpop.f32.mrb[0].mxu0
    %v8186 = vadd.f32 0.0, %v8185
    %v8187 = vpop.f32.mrb[0].mxu0
    %8188 = vmatprep.mubr.f32.mxu0 0.0
    %8189 = vmatmul.mubr.f32.gmra.mrb[0].mxu0 %v8018
    %v8190 = vpop.f32.mrb[0].mxu0
    %v8191 = vadd.f32 0.0, %v8190
    %v8192 = vpop.f32.mrb[0].mxu0
    %8193 = vdwg.mxu0
    %v8194 = vsub.f32 %v1933, %v8176
    %v8195 = vsub.f32 %v1934, %v8181
    %v8196 = vsub.f32 %v1935, %v8186
    %v8197 = vsub.f32 %v1936, %v8191
    %v8199 = vsel %vm86, %v7915, 0
    %v8202 = vsel %vm86, %v7916, 0
    %v8205 = vsel %vm86, %v7917, 0
    %v8208 = vsel %vm86, %v7918, 0
    %8210 = vmatprep.subr.mxu0 0.0
    %8211 = vmatpush1.msra.mxu0 %v8194
    %8212 = vmatprep.subr.mxu0 0.0
    %8213 = vmatpush1.msra.mxu0 %v8195
    %8214 = vmatprep.subr.mxu0 0.0
    %8215 = vmatpush1.msra.mxu0 %v8196
    %8216 = vmatprep.subr.mxu0 0.0
    %8217 = vmatpush1.msra.mxu0 %v8197
    %8218 = vmatprep.subr.mxu0 0.0
    %8219 = vmatpush1.msra.mxu0 0.0
    %8220 = vmatprep.subr.mxu0 0.0
    %8221 = vmatpush1.msra.mxu0 0.0
    %8222 = vmatprep.subr.mxu0 0.0
    %8223 = vmatpush1.msra.mxu0 0.0
    %8224 = vmatprep.subr.mxu0 0.0
    %8225 = vmatpush1.msra.mxu0 0.0
    %8226 = vmatprep.subr.mxu0 0.0
    %8227 = vmatpush1.msra.mxu0 0.0
    %8228 = vmatprep.subr.mxu0 0.0
    %8229 = vmatpush1.msra.mxu0 0.0
    %8230 = vmatprep.subr.mxu0 0.0
    %8231 = vmatpush1.msra.mxu0 0.0
    %8232 = vmatprep.subr.mxu0 0.0
    %8233 = vmatpush1.msra.mxu0 0.0
    %8234 = vmatprep.subr.mxu0 0.0
    %8235 = vmatpush1.msra.mxu0 0.0
    %8236 = vmatprep.subr.mxu0 0.0
    %8237 = vmatpush1.msra.mxu0 0.0
    %8238 = vmatprep.subr.mxu0 0.0
    %8239 = vmatpush1.msra.mxu0 0.0
    %8240 = vmatprep.subr.mxu0 0.0
    %8241 = vmatpush1.msra.mxu0 0.0
    %8242 = vmatprep.subr.mxu0 0.0
    %8243 = vmatpush1.msra.mxu0 0.0
    %8244 = vmatprep.subr.mxu0 0.0
    %8245 = vmatpush1.msra.mxu0 0.0
    %8246 = vmatprep.subr.mxu0 0.0
    %8247 = vmatpush1.msra.mxu0 0.0
    %8248 = vmatprep.subr.mxu0 0.0
    %8249 = vmatpush1.msra.mxu0 0.0
    %8250 = vmatprep.subr.mxu0 0.0
    %8251 = vmatpush1.msra.mxu0 0.0
    %8252 = vmatprep.subr.mxu0 0.0
    %8253 = vmatpush1.msra.mxu0 0.0
    %8254 = vmatprep.subr.mxu0 0.0
    %8255 = vmatpush1.msra.mxu0 0.0
    %8256 = vmatprep.subr.mxu0 0.0
    %8257 = vmatpush1.msra.mxu0 0.0
    %8258 = vmatprep.subr.mxu0 0.0
    %8259 = vmatpush1.msra.mxu0 0.0
    %8260 = vmatprep.subr.mxu0 0.0
    %8261 = vmatpush1.msra.mxu0 0.0
    %8262 = vmatprep.subr.mxu0 0.0
    %8263 = vmatpush1.msra.mxu0 0.0
    %8264 = vmatprep.subr.mxu0 0.0
    %8265 = vmatpush1.msra.mxu0 0.0
    %8266 = vmatprep.subr.mxu0 0.0
    %8267 = vmatpush1.msra.mxu0 0.0
    %8268 = vmatprep.subr.mxu0 0.0
    %8269 = vmatpush1.msra.mxu0 0.0
    %8270 = vmatprep.subr.mxu0 0.0
    %8271 = vmatpush1.msra.mxu0 0.0
    %8272 = vmatprep.subr.mxu0 0.0
    %8273 = vmatpush1.msra.mxu0 0.0
    %8274 = vmatprep.mubr.f32.mxu0 0.0
    %8275 = vmatmul.mubr.f32.gmra.mrb[0].mxu0 %v8199
    %v8276 = vpop.f32.mrb[0].mxu0
    %v8277 = vadd.f32 0.0, %v8276
    %v8278 = vpop.f32.mrb[0].mxu0
    %8279 = vmatprep.mubr.f32.mxu0 0.0
    %8280 = vmatmul.mubr.f32.gmra.mrb[0].mxu0 %v8202
    %v8281 = vpop.f32.mrb[0].mxu0
    %v8282 = vadd.f32 0.0, %v8281
    %v8283 = vpop.f32.mrb[0].mxu0
    %8284 = vmatprep.mubr.f32.mxu0 0.0
    %8285 = vmatmul.mubr.f32.gmra.mrb[0].mxu0 %v8205
    %v8286 = vpop.f32.mrb[0].mxu0
    %v8287 = vadd.f32 0.0, %v8286
    %v8288 = vpop.f32.mrb[0].mxu0
    %8289 = vmatprep.mubr.f32.mxu0 0.0
    %8290 = vmatmul.mubr.f32.gmra.mrb[0].mxu0 %v8208
    %v8291 = vpop.f32.mrb[0].mxu0
    %v8292 = vadd.f32 0.0, %v8291
    %v8293 = vpop.f32.mrb[0].mxu0
    %8294 = vdwg.mxu0
    %v8295 = vmul.f32 %v8277, 0.25
    %v8296 = vmul.f32 %v8282, 0.25
    %v8297 = vmul.f32 %v8287, 0.25
    %v8298 = vmul.f32 %v8292, 0.25
    %8299 = vmatprep.subr.mxu0 0.0
    %8300 = vmatpush1.msra.mxu0 %v8295
    %8301 = vmatprep.subr.mxu0 0.0
    %8302 = vmatpush1.msra.mxu0 %v8296
    %8303 = vmatprep.subr.mxu0 0.0
    %8304 = vmatpush1.msra.mxu0 %v8297
    %8305 = vmatprep.subr.mxu0 0.0
    %8306 = vmatpush1.msra.mxu0 %v8298
    %8307 = vmatprep.subr.mxu0 0.0
    %8308 = vmatpush1.msra.mxu0 0.0
    %8309 = vmatprep.subr.mxu0 0.0
    %8310 = vmatpush1.msra.mxu0 0.0
    %8311 = vmatprep.subr.mxu0 0.0
    %8312 = vmatpush1.msra.mxu0 0.0
    %8313 = vmatprep.subr.mxu0 0.0
    %8314 = vmatpush1.msra.mxu0 0.0
    %8315 = vmatprep.subr.mxu0 0.0
    %8316 = vmatpush1.msra.mxu0 0.0
    %8317 = vmatprep.subr.mxu0 0.0
    %8318 = vmatpush1.msra.mxu0 0.0
    %8319 = vmatprep.subr.mxu0 0.0
    %8320 = vmatpush1.msra.mxu0 0.0
    %8321 = vmatprep.subr.mxu0 0.0
    %8322 = vmatpush1.msra.mxu0 0.0
    %8323 = vmatprep.subr.mxu0 0.0
    %8324 = vmatpush1.msra.mxu0 0.0
    %8325 = vmatprep.subr.mxu0 0.0
    %8326 = vmatpush1.msra.mxu0 0.0
    %8327 = vmatprep.subr.mxu0 0.0
    %8328 = vmatpush1.msra.mxu0 0.0
    %8329 = vmatprep.subr.mxu0 0.0
    %8330 = vmatpush1.msra.mxu0 0.0
    %8331 = vmatprep.subr.mxu0 0.0
    %8332 = vmatpush1.msra.mxu0 0.0
    %8333 = vmatprep.subr.mxu0 0.0
    %8334 = vmatpush1.msra.mxu0 0.0
    %8335 = vmatprep.subr.mxu0 0.0
    %8336 = vmatpush1.msra.mxu0 0.0
    %8337 = vmatprep.subr.mxu0 0.0
    %8338 = vmatpush1.msra.mxu0 0.0
    %8339 = vmatprep.subr.mxu0 0.0
    %8340 = vmatpush1.msra.mxu0 0.0
    %8341 = vmatprep.subr.mxu0 0.0
    %8342 = vmatpush1.msra.mxu0 0.0
    %8343 = vmatprep.subr.mxu0 0.0
    %8344 = vmatpush1.msra.mxu0 0.0
    %8345 = vmatprep.subr.mxu0 0.0
    %8346 = vmatpush1.msra.mxu0 0.0
    %8347 = vmatprep.subr.mxu0 0.0
    %8348 = vmatpush1.msra.mxu0 0.0
    %8349 = vmatprep.subr.mxu0 0.0
    %8350 = vmatpush1.msra.mxu0 0.0
    %8351 = vmatprep.subr.mxu0 0.0
    %8352 = vmatpush1.msra.mxu0 0.0
    %8353 = vmatprep.subr.mxu0 0.0
    %8354 = vmatpush1.msra.mxu0 0.0
    %8355 = vmatprep.subr.mxu0 0.0
    %8356 = vmatpush1.msra.mxu0 0.0
    %8357 = vmatprep.subr.mxu0 0.0
    %8358 = vmatpush1.msra.mxu0 0.0
    %8359 = vmatprep.subr.mxu0 0.0
    %8360 = vmatpush1.msra.mxu0 0.0
    %8361 = vmatprep.subr.mxu0 0.0
    %8362 = vmatpush1.msra.mxu0 0.0
    %8363 = vmatprep.mubr.f32.mxu0 0.0
    %8364 = vmatmul.mubr.f32.gmra.mrb[0].mxu0 %v6768
    %v8365 = vpop.f32.mrb[0].mxu0
    %v8366 = vadd.f32 0.0, %v8365
    %v8367 = vpop.f32.mrb[0].mxu0
    %8368 = vmatprep.mubr.f32.mxu0 0.0
    %8369 = vmatmul.mubr.f32.gmra.mrb[0].mxu0 %v6771
    %v8370 = vpop.f32.mrb[0].mxu0
    %v8371 = vadd.f32 0.0, %v8370
    %v8372 = vpop.f32.mrb[0].mxu0
    %8373 = vmatprep.mubr.f32.mxu0 0.0
    %8374 = vmatmul.mubr.f32.gmra.mrb[0].mxu0 %v6774
    %v8375 = vpop.f32.mrb[0].mxu0
    %v8376 = vadd.f32 0.0, %v8375
    %v8377 = vpop.f32.mrb[0].mxu0
    %8378 = vmatprep.mubr.f32.mxu0 0.0
    %8379 = vmatmul.mubr.f32.gmra.mrb[0].mxu0 %v6777
    %v8380 = vpop.f32.mrb[0].mxu0
    %v8381 = vadd.f32 0.0, %v8380
    %v8382 = vpop.f32.mrb[0].mxu0
    %8383 = vdwg.mxu0
    %v8384 = vsub.f32 %v1820, %v8366
    %v8385 = vsub.f32 %v1821, %v8371
    %v8386 = vsub.f32 %v1822, %v8376
    %v8387 = vsub.f32 %v1823, %v8381
    %v8389 = vsel %vm86, %v8366, 0
    %v8392 = vsel %vm86, %v8371, 0
    %v8395 = vsel %vm86, %v8376, 0
    %v8398 = vsel %vm86, %v8381, 0
    %8400 = vmatprep.subr.mxu0 0.0
    %8401 = vmatpush1.msra.mxu0 %v8384
    %8402 = vmatprep.subr.mxu0 0.0
    %8403 = vmatpush1.msra.mxu0 %v8385
    %8404 = vmatprep.subr.mxu0 0.0
    %8405 = vmatpush1.msra.mxu0 %v8386
    %8406 = vmatprep.subr.mxu0 0.0
    %8407 = vmatpush1.msra.mxu0 %v8387
    %8408 = vmatprep.subr.mxu0 0.0
    %8409 = vmatpush1.msra.mxu0 0.0
    %8410 = vmatprep.subr.mxu0 0.0
    %8411 = vmatpush1.msra.mxu0 0.0
    %8412 = vmatprep.subr.mxu0 0.0
    %8413 = vmatpush1.msra.mxu0 0.0
    %8414 = vmatprep.subr.mxu0 0.0
    %8415 = vmatpush1.msra.mxu0 0.0
    %8416 = vmatprep.subr.mxu0 0.0
    %8417 = vmatpush1.msra.mxu0 0.0
    %8418 = vmatprep.subr.mxu0 0.0
    %8419 = vmatpush1.msra.mxu0 0.0
    %8420 = vmatprep.subr.mxu0 0.0
    %8421 = vmatpush1.msra.mxu0 0.0
    %8422 = vmatprep.subr.mxu0 0.0
    %8423 = vmatpush1.msra.mxu0 0.0
    %8424 = vmatprep.subr.mxu0 0.0
    %8425 = vmatpush1.msra.mxu0 0.0
    %8426 = vmatprep.subr.mxu0 0.0
    %8427 = vmatpush1.msra.mxu0 0.0
    %8428 = vmatprep.subr.mxu0 0.0
    %8429 = vmatpush1.msra.mxu0 0.0
    %8430 = vmatprep.subr.mxu0 0.0
    %8431 = vmatpush1.msra.mxu0 0.0
    %8432 = vmatprep.subr.mxu0 0.0
    %8433 = vmatpush1.msra.mxu0 0.0
    %8434 = vmatprep.subr.mxu0 0.0
    %8435 = vmatpush1.msra.mxu0 0.0
    %8436 = vmatprep.subr.mxu0 0.0
    %8437 = vmatpush1.msra.mxu0 0.0
    %8438 = vmatprep.subr.mxu0 0.0
    %8439 = vmatpush1.msra.mxu0 0.0
    %8440 = vmatprep.subr.mxu0 0.0
    %8441 = vmatpush1.msra.mxu0 0.0
    %8442 = vmatprep.subr.mxu0 0.0
    %8443 = vmatpush1.msra.mxu0 0.0
    %8444 = vmatprep.subr.mxu0 0.0
    %8445 = vmatpush1.msra.mxu0 0.0
    %8446 = vmatprep.subr.mxu0 0.0
    %8447 = vmatpush1.msra.mxu0 0.0
    %8448 = vmatprep.subr.mxu0 0.0
    %8449 = vmatpush1.msra.mxu0 0.0
    %8450 = vmatprep.subr.mxu0 0.0
    %8451 = vmatpush1.msra.mxu0 0.0
    %8452 = vmatprep.subr.mxu0 0.0
    %8453 = vmatpush1.msra.mxu0 0.0
    %8454 = vmatprep.subr.mxu0 0.0
    %8455 = vmatpush1.msra.mxu0 0.0
    %8456 = vmatprep.subr.mxu0 0.0
    %8457 = vmatpush1.msra.mxu0 0.0
    %8458 = vmatprep.subr.mxu0 0.0
    %8459 = vmatpush1.msra.mxu0 0.0
    %8460 = vmatprep.subr.mxu0 0.0
    %8461 = vmatpush1.msra.mxu0 0.0
    %8462 = vmatprep.subr.mxu0 0.0
    %8463 = vmatpush1.msra.mxu0 0.0
    %8464 = vmatprep.mubr.f32.mxu0 0.0
    %8465 = vmatmul.mubr.f32.gmra.mrb[0].mxu0 %v8389
    %v8466 = vpop.f32.mrb[0].mxu0
    %v8467 = vadd.f32 0.0, %v8466
    %v8468 = vpop.f32.mrb[0].mxu0
    %8469 = vmatprep.mubr.f32.mxu0 0.0
    %8470 = vmatmul.mubr.f32.gmra.mrb[0].mxu0 %v8392
    %v8471 = vpop.f32.mrb[0].mxu0
    %v8472 = vadd.f32 0.0, %v8471
    %v8473 = vpop.f32.mrb[0].mxu0
    %8474 = vmatprep.mubr.f32.mxu0 0.0
    %8475 = vmatmul.mubr.f32.gmra.mrb[0].mxu0 %v8395
    %v8476 = vpop.f32.mrb[0].mxu0
    %v8477 = vadd.f32 0.0, %v8476
    %v8478 = vpop.f32.mrb[0].mxu0
    %8479 = vmatprep.mubr.f32.mxu0 0.0
    %8480 = vmatmul.mubr.f32.gmra.mrb[0].mxu0 %v8398
    %v8481 = vpop.f32.mrb[0].mxu0
    %v8482 = vadd.f32 0.0, %v8481
    %v8483 = vpop.f32.mrb[0].mxu0
    %8484 = vdwg.mxu0
    %v8485 = vsub.f32 %v1828, %v8467
    %v8486 = vsub.f32 %v1829, %v8472
    %v8487 = vsub.f32 %v1830, %v8477
    %v8488 = vsub.f32 %v1831, %v8482
    %8489 = vmatprep.subr.mxu0 0.0
    %8490 = vmatpush1.msra.mxu0 %v8485
    %8491 = vmatprep.subr.mxu0 0.0
    %8492 = vmatpush1.msra.mxu0 %v8486
    %8493 = vmatprep.subr.mxu0 0.0
    %8494 = vmatpush1.msra.mxu0 %v8487
    %8495 = vmatprep.subr.mxu0 0.0
    %8496 = vmatpush1.msra.mxu0 %v8488
    %8497 = vmatprep.subr.mxu0 0.0
    %8498 = vmatpush1.msra.mxu0 0.0
    %8499 = vmatprep.subr.mxu0 0.0
    %8500 = vmatpush1.msra.mxu0 0.0
    %8501 = vmatprep.subr.mxu0 0.0
    %8502 = vmatpush1.msra.mxu0 0.0
    %8503 = vmatprep.subr.mxu0 0.0
    %8504 = vmatpush1.msra.mxu0 0.0
    %8505 = vmatprep.subr.mxu0 0.0
    %8506 = vmatpush1.msra.mxu0 0.0
    %8507 = vmatprep.subr.mxu0 0.0
    %8508 = vmatpush1.msra.mxu0 0.0
    %8509 = vmatprep.subr.mxu0 0.0
    %8510 = vmatpush1.msra.mxu0 0.0
    %8511 = vmatprep.subr.mxu0 0.0
    %8512 = vmatpush1.msra.mxu0 0.0
    %8513 = vmatprep.subr.mxu0 0.0
    %8514 = vmatpush1.msra.mxu0 0.0
    %8515 = vmatprep.subr.mxu0 0.0
    %8516 = vmatpush1.msra.mxu0 0.0
    %8517 = vmatprep.subr.mxu0 0.0
    %8518 = vmatpush1.msra.mxu0 0.0
    %8519 = vmatprep.subr.mxu0 0.0
    %8520 = vmatpush1.msra.mxu0 0.0
    %8521 = vmatprep.subr.mxu0 0.0
    %8522 = vmatpush1.msra.mxu0 0.0
    %8523 = vmatprep.subr.mxu0 0.0
    %8524 = vmatpush1.msra.mxu0 0.0
    %8525 = vmatprep.subr.mxu0 0.0
    %8526 = vmatpush1.msra.mxu0 0.0
    %8527 = vmatprep.subr.mxu0 0.0
    %8528 = vmatpush1.msra.mxu0 0.0
    %8529 = vmatprep.subr.mxu0 0.0
    %8530 = vmatpush1.msra.mxu0 0.0
    %8531 = vmatprep.subr.mxu0 0.0
    %8532 = vmatpush1.msra.mxu0 0.0
    %8533 = vmatprep.subr.mxu0 0.0
    %8534 = vmatpush1.msra.mxu0 0.0
    %8535 = vmatprep.subr.mxu0 0.0
    %8536 = vmatpush1.msra.mxu0 0.0
    %8537 = vmatprep.subr.mxu0 0.0
    %8538 = vmatpush1.msra.mxu0 0.0
    %8539 = vmatprep.subr.mxu0 0.0
    %8540 = vmatpush1.msra.mxu0 0.0
    %8541 = vmatprep.subr.mxu0 0.0
    %8542 = vmatpush1.msra.mxu0 0.0
    %8543 = vmatprep.subr.mxu0 0.0
    %8544 = vmatpush1.msra.mxu0 0.0
    %8545 = vmatprep.subr.mxu0 0.0
    %8546 = vmatpush1.msra.mxu0 0.0
    %8547 = vmatprep.subr.mxu0 0.0
    %8548 = vmatpush1.msra.mxu0 0.0
    %8549 = vmatprep.subr.mxu0 0.0
    %8550 = vmatpush1.msra.mxu0 0.0
    %8551 = vmatprep.subr.mxu0 0.0
    %8552 = vmatpush1.msra.mxu0 0.0
    %8553 = vmatprep.mubr.f32.mxu0 0.0
    %8554 = vmatmul.mubr.f32.gmra.mrb[0].mxu0 %v8389
    %v8555 = vpop.f32.mrb[0].mxu0
    %v8556 = vadd.f32 0.0, %v8555
    %v8557 = vpop.f32.mrb[0].mxu0
    %8558 = vmatprep.mubr.f32.mxu0 0.0
    %8559 = vmatmul.mubr.f32.gmra.mrb[0].mxu0 %v8392
    %v8560 = vpop.f32.mrb[0].mxu0
    %v8561 = vadd.f32 0.0, %v8560
    %v8562 = vpop.f32.mrb[0].mxu0
    %8563 = vmatprep.mubr.f32.mxu0 0.0
    %8564 = vmatmul.mubr.f32.gmra.mrb[0].mxu0 %v8395
    %v8565 = vpop.f32.mrb[0].mxu0
    %v8566 = vadd.f32 0.0, %v8565
    %v8567 = vpop.f32.mrb[0].mxu0
    %8568 = vmatprep.mubr.f32.mxu0 0.0
    %8569 = vmatmul.mubr.f32.gmra.mrb[0].mxu0 %v8398
    %v8570 = vpop.f32.mrb[0].mxu0
    %v8571 = vadd.f32 0.0, %v8570
    %v8572 = vpop.f32.mrb[0].mxu0
    %8573 = vdwg.mxu0
    %v8574 = vsub.f32 %v1933, %v8556
    %v8575 = vsub.f32 %v1934, %v8561
    %v8576 = vsub.f32 %v1935, %v8566
    %v8577 = vsub.f32 %v1936, %v8571
    %v8579 = vsel %vm86, %v8295, 0
    %v8582 = vsel %vm86, %v8296, 0
    %v8585 = vsel %vm86, %v8297, 0
    %v8588 = vsel %vm86, %v8298, 0
    %8590 = vmatprep.subr.mxu0 0.0
    %8591 = vmatpush1.msra.mxu0 %v8574
    %8592 = vmatprep.subr.mxu0 0.0
    %8593 = vmatpush1.msra.mxu0 %v8575
    %8594 = vmatprep.subr.mxu0 0.0
    %8595 = vmatpush1.msra.mxu0 %v8576
    %8596 = vmatprep.subr.mxu0 0.0
    %8597 = vmatpush1.msra.mxu0 %v8577
    %8598 = vmatprep.subr.mxu0 0.0
    %8599 = vmatpush1.msra.mxu0 0.0
    %8600 = vmatprep.subr.mxu0 0.0
    %8601 = vmatpush1.msra.mxu0 0.0
    %8602 = vmatprep.subr.mxu0 0.0
    %8603 = vmatpush1.msra.mxu0 0.0
    %8604 = vmatprep.subr.mxu0 0.0
    %8605 = vmatpush1.msra.mxu0 0.0
    %8606 = vmatprep.subr.mxu0 0.0
    %8607 = vmatpush1.msra.mxu0 0.0
    %8608 = vmatprep.subr.mxu0 0.0
    %8609 = vmatpush1.msra.mxu0 0.0
    %8610 = vmatprep.subr.mxu0 0.0
    %8611 = vmatpush1.msra.mxu0 0.0
    %8612 = vmatprep.subr.mxu0 0.0
    %8613 = vmatpush1.msra.mxu0 0.0
    %8614 = vmatprep.subr.mxu0 0.0
    %8615 = vmatpush1.msra.mxu0 0.0
    %8616 = vmatprep.subr.mxu0 0.0
    %8617 = vmatpush1.msra.mxu0 0.0
    %8618 = vmatprep.subr.mxu0 0.0
    %8619 = vmatpush1.msra.mxu0 0.0
    %8620 = vmatprep.subr.mxu0 0.0
    %8621 = vmatpush1.msra.mxu0 0.0
    %8622 = vmatprep.subr.mxu0 0.0
    %8623 = vmatpush1.msra.mxu0 0.0
    %8624 = vmatprep.subr.mxu0 0.0
    %8625 = vmatpush1.msra.mxu0 0.0
    %8626 = vmatprep.subr.mxu0 0.0
    %8627 = vmatpush1.msra.mxu0 0.0
    %8628 = vmatprep.subr.mxu0 0.0
    %8629 = vmatpush1.msra.mxu0 0.0
    %8630 = vmatprep.subr.mxu0 0.0
    %8631 = vmatpush1.msra.mxu0 0.0
    %8632 = vmatprep.subr.mxu0 0.0
    %8633 = vmatpush1.msra.mxu0 0.0
    %8634 = vmatprep.subr.mxu0 0.0
    %8635 = vmatpush1.msra.mxu0 0.0
    %8636 = vmatprep.subr.mxu0 0.0
    %8637 = vmatpush1.msra.mxu0 0.0
    %8638 = vmatprep.subr.mxu0 0.0
    %8639 = vmatpush1.msra.mxu0 0.0
    %8640 = vmatprep.subr.mxu0 0.0
    %8641 = vmatpush1.msra.mxu0 0.0
    %8642 = vmatprep.subr.mxu0 0.0
    %8643 = vmatpush1.msra.mxu0 0.0
    %8644 = vmatprep.subr.mxu0 0.0
    %8645 = vmatpush1.msra.mxu0 0.0
    %8646 = vmatprep.subr.mxu0 0.0
    %8647 = vmatpush1.msra.mxu0 0.0
    %8648 = vmatprep.subr.mxu0 0.0
    %8649 = vmatpush1.msra.mxu0 0.0
    %8650 = vmatprep.subr.mxu0 0.0
    %8651 = vmatpush1.msra.mxu0 0.0
    %8652 = vmatprep.subr.mxu0 0.0
    %8653 = vmatpush1.msra.mxu0 0.0
    %8654 = vmatprep.mubr.f32.mxu0 0.0
    %8655 = vmatmul.mubr.f32.gmra.mrb[0].mxu0 %v8579
    %v8656 = vpop.f32.mrb[0].mxu0
    %v8657 = vadd.f32 0.0, %v8656
    %v8658 = vpop.f32.mrb[0].mxu0
    %8659 = vmatprep.mubr.f32.mxu0 0.0
    %8660 = vmatmul.mubr.f32.gmra.mrb[0].mxu0 %v8582
    %v8661 = vpop.f32.mrb[0].mxu0
    %v8662 = vadd.f32 0.0, %v8661
    %v8663 = vpop.f32.mrb[0].mxu0
    %8664 = vmatprep.mubr.f32.mxu0 0.0
    %8665 = vmatmul.mubr.f32.gmra.mrb[0].mxu0 %v8585
    %v8666 = vpop.f32.mrb[0].mxu0
    %v8667 = vadd.f32 0.0, %v8666
    %v8668 = vpop.f32.mrb[0].mxu0
    %8669 = vmatprep.mubr.f32.mxu0 0.0
    %8670 = vmatmul.mubr.f32.gmra.mrb[0].mxu0 %v8588
    %v8671 = vpop.f32.mrb[0].mxu0
    %v8672 = vadd.f32 0.0, %v8671
    %v8673 = vpop.f32.mrb[0].mxu0
    %8674 = vdwg.mxu0
    %v8675 = vmul.f32 %v8657, 0.25
    %v8676 = vmul.f32 %v8662, 0.25
    %v8677 = vmul.f32 %v8667, 0.25
    %v8678 = vmul.f32 %v8672, 0.25
    %8679 = vmatprep.subr.mxu0 0.0
    %8680 = vmatpush1.msra.mxu0 %v8675
    %8681 = vmatprep.subr.mxu0 0.0
    %8682 = vmatpush1.msra.mxu0 %v8676
    %8683 = vmatprep.subr.mxu0 0.0
    %8684 = vmatpush1.msra.mxu0 %v8677
    %8685 = vmatprep.subr.mxu0 0.0
    %8686 = vmatpush1.msra.mxu0 %v8678
    %8687 = vmatprep.subr.mxu0 0.0
    %8688 = vmatpush1.msra.mxu0 0.0
    %8689 = vmatprep.subr.mxu0 0.0
    %8690 = vmatpush1.msra.mxu0 0.0
    %8691 = vmatprep.subr.mxu0 0.0
    %8692 = vmatpush1.msra.mxu0 0.0
    %8693 = vmatprep.subr.mxu0 0.0
    %8694 = vmatpush1.msra.mxu0 0.0
    %8695 = vmatprep.subr.mxu0 0.0
    %8696 = vmatpush1.msra.mxu0 0.0
    %8697 = vmatprep.subr.mxu0 0.0
    %8698 = vmatpush1.msra.mxu0 0.0
    %8699 = vmatprep.subr.mxu0 0.0
    %8700 = vmatpush1.msra.mxu0 0.0
    %8701 = vmatprep.subr.mxu0 0.0
    %8702 = vmatpush1.msra.mxu0 0.0
    %8703 = vmatprep.subr.mxu0 0.0
    %8704 = vmatpush1.msra.mxu0 0.0
    %8705 = vmatprep.subr.mxu0 0.0
    %8706 = vmatpush1.msra.mxu0 0.0
    %8707 = vmatprep.subr.mxu0 0.0
    %8708 = vmatpush1.msra.mxu0 0.0
    %8709 = vmatprep.subr.mxu0 0.0
    %8710 = vmatpush1.msra.mxu0 0.0
    %8711 = vmatprep.subr.mxu0 0.0
    %8712 = vmatpush1.msra.mxu0 0.0
    %8713 = vmatprep.subr.mxu0 0.0
    %8714 = vmatpush1.msra.mxu0 0.0
    %8715 = vmatprep.subr.mxu0 0.0
    %8716 = vmatpush1.msra.mxu0 0.0
    %8717 = vmatprep.subr.mxu0 0.0
    %8718 = vmatpush1.msra.mxu0 0.0
    %8719 = vmatprep.subr.mxu0 0.0
    %8720 = vmatpush1.msra.mxu0 0.0
    %8721 = vmatprep.subr.mxu0 0.0
    %8722 = vmatpush1.msra.mxu0 0.0
    %8723 = vmatprep.subr.mxu0 0.0
    %8724 = vmatpush1.msra.mxu0 0.0
    %8725 = vmatprep.subr.mxu0 0.0
    %8726 = vmatpush1.msra.mxu0 0.0
    %8727 = vmatprep.subr.mxu0 0.0
    %8728 = vmatpush1.msra.mxu0 0.0
    %8729 = vmatprep.subr.mxu0 0.0
    %8730 = vmatpush1.msra.mxu0 0.0
    %8731 = vmatprep.subr.mxu0 0.0
    %8732 = vmatpush1.msra.mxu0 0.0
    %8733 = vmatprep.subr.mxu0 0.0
    %8734 = vmatpush1.msra.mxu0 0.0
    %8735 = vmatprep.subr.mxu0 0.0
    %8736 = vmatpush1.msra.mxu0 0.0
    %8737 = vmatprep.subr.mxu0 0.0
    %8738 = vmatpush1.msra.mxu0 0.0
    %8739 = vmatprep.subr.mxu0 0.0
    %8740 = vmatpush1.msra.mxu0 0.0
    %8741 = vmatprep.subr.mxu0 0.0
    %8742 = vmatpush1.msra.mxu0 0.0
    %8743 = vmatprep.mubr.f32.mxu0 0.0
    %8744 = vmatmul.mubr.f32.gmra.mrb[0].mxu0 %v6768
    %v8745 = vpop.f32.mrb[0].mxu0
    %v8746 = vadd.f32 0.0, %v8745
    %v8747 = vpop.f32.mrb[0].mxu0
    %8748 = vmatprep.mubr.f32.mxu0 0.0
    %8749 = vmatmul.mubr.f32.gmra.mrb[0].mxu0 %v6771
    %v8750 = vpop.f32.mrb[0].mxu0
    %v8751 = vadd.f32 0.0, %v8750
    %v8752 = vpop.f32.mrb[0].mxu0
    %8753 = vmatprep.mubr.f32.mxu0 0.0
    %8754 = vmatmul.mubr.f32.gmra.mrb[0].mxu0 %v6774
    %v8755 = vpop.f32.mrb[0].mxu0
    %v8756 = vadd.f32 0.0, %v8755
    %v8757 = vpop.f32.mrb[0].mxu0
    %8758 = vmatprep.mubr.f32.mxu0 0.0
    %8759 = vmatmul.mubr.f32.gmra.mrb[0].mxu0 %v6777
    %v8760 = vpop.f32.mrb[0].mxu0
    %v8761 = vadd.f32 0.0, %v8760
    %v8762 = vpop.f32.mrb[0].mxu0
    %8763 = vdwg.mxu0
    %v8764 = vsub.f32 %v1820, %v8746
    %v8765 = vsub.f32 %v1821, %v8751
    %v8766 = vsub.f32 %v1822, %v8756
    %v8767 = vsub.f32 %v1823, %v8761
    %v8769 = vsel %vm86, %v8746, 0
    %v8772 = vsel %vm86, %v8751, 0
    %v8775 = vsel %vm86, %v8756, 0
    %v8778 = vsel %vm86, %v8761, 0
    %8780 = vmatprep.subr.mxu0 0.0
    %8781 = vmatpush1.msra.mxu0 %v8764
    %8782 = vmatprep.subr.mxu0 0.0
    %8783 = vmatpush1.msra.mxu0 %v8765
    %8784 = vmatprep.subr.mxu0 0.0
    %8785 = vmatpush1.msra.mxu0 %v8766
    %8786 = vmatprep.subr.mxu0 0.0
    %8787 = vmatpush1.msra.mxu0 %v8767
    %8788 = vmatprep.subr.mxu0 0.0
    %8789 = vmatpush1.msra.mxu0 0.0
    %8790 = vmatprep.subr.mxu0 0.0
    %8791 = vmatpush1.msra.mxu0 0.0
    %8792 = vmatprep.subr.mxu0 0.0
    %8793 = vmatpush1.msra.mxu0 0.0
    %8794 = vmatprep.subr.mxu0 0.0
    %8795 = vmatpush1.msra.mxu0 0.0
    %8796 = vmatprep.subr.mxu0 0.0
    %8797 = vmatpush1.msra.mxu0 0.0
    %8798 = vmatprep.subr.mxu0 0.0
    %8799 = vmatpush1.msra.mxu0 0.0
    %8800 = vmatprep.subr.mxu0 0.0
    %8801 = vmatpush1.msra.mxu0 0.0
    %8802 = vmatprep.subr.mxu0 0.0
    %8803 = vmatpush1.msra.mxu0 0.0
    %8804 = vmatprep.subr.mxu0 0.0
    %8805 = vmatpush1.msra.mxu0 0.0
    %8806 = vmatprep.subr.mxu0 0.0
    %8807 = vmatpush1.msra.mxu0 0.0
    %8808 = vmatprep.subr.mxu0 0.0
    %8809 = vmatpush1.msra.mxu0 0.0
    %8810 = vmatprep.subr.mxu0 0.0
    %8811 = vmatpush1.msra.mxu0 0.0
    %8812 = vmatprep.subr.mxu0 0.0
    %8813 = vmatpush1.msra.mxu0 0.0
    %8814 = vmatprep.subr.mxu0 0.0
    %8815 = vmatpush1.msra.mxu0 0.0
    %8816 = vmatprep.subr.mxu0 0.0
    %8817 = vmatpush1.msra.mxu0 0.0
    %8818 = vmatprep.subr.mxu0 0.0
    %8819 = vmatpush1.msra.mxu0 0.0
    %8820 = vmatprep.subr.mxu0 0.0
    %8821 = vmatpush1.msra.mxu0 0.0
    %8822 = vmatprep.subr.mxu0 0.0
    %8823 = vmatpush1.msra.mxu0 0.0
    %8824 = vmatprep.subr.mxu0 0.0
    %8825 = vmatpush1.msra.mxu0 0.0
    %8826 = vmatprep.subr.mxu0 0.0
    %8827 = vmatpush1.msra.mxu0 0.0
    %8828 = vmatprep.subr.mxu0 0.0
    %8829 = vmatpush1.msra.mxu0 0.0
    %8830 = vmatprep.subr.mxu0 0.0
    %8831 = vmatpush1.msra.mxu0 0.0
    %8832 = vmatprep.subr.mxu0 0.0
    %8833 = vmatpush1.msra.mxu0 0.0
    %8834 = vmatprep.subr.mxu0 0.0
    %8835 = vmatpush1.msra.mxu0 0.0
    %8836 = vmatprep.subr.mxu0 0.0
    %8837 = vmatpush1.msra.mxu0 0.0
    %8838 = vmatprep.subr.mxu0 0.0
    %8839 = vmatpush1.msra.mxu0 0.0
    %8840 = vmatprep.subr.mxu0 0.0
    %8841 = vmatpush1.msra.mxu0 0.0
    %8842 = vmatprep.subr.mxu0 0.0
    %8843 = vmatpush1.msra.mxu0 0.0
    %8844 = vmatprep.mubr.f32.mxu0 0.0
    %8845 = vmatmul.mubr.f32.gmra.mrb[0].mxu0 %v8769
    %v8846 = vpop.f32.mrb[0].mxu0
    %v8847 = vadd.f32 0.0, %v8846
    %v8848 = vpop.f32.mrb[0].mxu0
    %8849 = vmatprep.mubr.f32.mxu0 0.0
    %8850 = vmatmul.mubr.f32.gmra.mrb[0].mxu0 %v8772
    %v8851 = vpop.f32.mrb[0].mxu0
    %v8852 = vadd.f32 0.0, %v8851
    %v8853 = vpop.f32.mrb[0].mxu0
    %8854 = vmatprep.mubr.f32.mxu0 0.0
    %8855 = vmatmul.mubr.f32.gmra.mrb[0].mxu0 %v8775
    %v8856 = vpop.f32.mrb[0].mxu0
    %v8857 = vadd.f32 0.0, %v8856
    %v8858 = vpop.f32.mrb[0].mxu0
    %8859 = vmatprep.mubr.f32.mxu0 0.0
    %8860 = vmatmul.mubr.f32.gmra.mrb[0].mxu0 %v8778
    %v8861 = vpop.f32.mrb[0].mxu0
    %v8862 = vadd.f32 0.0, %v8861
    %v8863 = vpop.f32.mrb[0].mxu0
    %8864 = vdwg.mxu0
    %v8865 = vsub.f32 %v1828, %v8847
    %v8866 = vsub.f32 %v1829, %v8852
    %v8867 = vsub.f32 %v1830, %v8857
    %v8868 = vsub.f32 %v1831, %v8862
    %8869 = vmatprep.subr.mxu0 0.0
    %8870 = vmatpush1.msra.mxu0 %v8865
    %8871 = vmatprep.subr.mxu0 0.0
    %8872 = vmatpush1.msra.mxu0 %v8866
    %8873 = vmatprep.subr.mxu0 0.0
    %8874 = vmatpush1.msra.mxu0 %v8867
    %8875 = vmatprep.subr.mxu0 0.0
    %8876 = vmatpush1.msra.mxu0 %v8868
    %8877 = vmatprep.subr.mxu0 0.0
    %8878 = vmatpush1.msra.mxu0 0.0
    %8879 = vmatprep.subr.mxu0 0.0
    %8880 = vmatpush1.msra.mxu0 0.0
    %8881 = vmatprep.subr.mxu0 0.0
    %8882 = vmatpush1.msra.mxu0 0.0
    %8883 = vmatprep.subr.mxu0 0.0
    %8884 = vmatpush1.msra.mxu0 0.0
    %8885 = vmatprep.subr.mxu0 0.0
    %8886 = vmatpush1.msra.mxu0 0.0
    %8887 = vmatprep.subr.mxu0 0.0
    %8888 = vmatpush1.msra.mxu0 0.0
    %8889 = vmatprep.subr.mxu0 0.0
    %8890 = vmatpush1.msra.mxu0 0.0
    %8891 = vmatprep.subr.mxu0 0.0
    %8892 = vmatpush1.msra.mxu0 0.0
    %8893 = vmatprep.subr.mxu0 0.0
    %8894 = vmatpush1.msra.mxu0 0.0
    %8895 = vmatprep.subr.mxu0 0.0
    %8896 = vmatpush1.msra.mxu0 0.0
    %8897 = vmatprep.subr.mxu0 0.0
    %8898 = vmatpush1.msra.mxu0 0.0
    %8899 = vmatprep.subr.mxu0 0.0
    %8900 = vmatpush1.msra.mxu0 0.0
    %8901 = vmatprep.subr.mxu0 0.0
    %8902 = vmatpush1.msra.mxu0 0.0
    %8903 = vmatprep.subr.mxu0 0.0
    %8904 = vmatpush1.msra.mxu0 0.0
    %8905 = vmatprep.subr.mxu0 0.0
    %8906 = vmatpush1.msra.mxu0 0.0
    %8907 = vmatprep.subr.mxu0 0.0
    %8908 = vmatpush1.msra.mxu0 0.0
    %8909 = vmatprep.subr.mxu0 0.0
    %8910 = vmatpush1.msra.mxu0 0.0
    %8911 = vmatprep.subr.mxu0 0.0
    %8912 = vmatpush1.msra.mxu0 0.0
    %8913 = vmatprep.subr.mxu0 0.0
    %8914 = vmatpush1.msra.mxu0 0.0
    %8915 = vmatprep.subr.mxu0 0.0
    %8916 = vmatpush1.msra.mxu0 0.0
    %8917 = vmatprep.subr.mxu0 0.0
    %8918 = vmatpush1.msra.mxu0 0.0
    %8919 = vmatprep.subr.mxu0 0.0
    %8920 = vmatpush1.msra.mxu0 0.0
    %8921 = vmatprep.subr.mxu0 0.0
    %8922 = vmatpush1.msra.mxu0 0.0
    %8923 = vmatprep.subr.mxu0 0.0
    %8924 = vmatpush1.msra.mxu0 0.0
    %8925 = vmatprep.subr.mxu0 0.0
    %8926 = vmatpush1.msra.mxu0 0.0
    %8927 = vmatprep.subr.mxu0 0.0
    %8928 = vmatpush1.msra.mxu0 0.0
    %8929 = vmatprep.subr.mxu0 0.0
    %8930 = vmatpush1.msra.mxu0 0.0
    %8931 = vmatprep.subr.mxu0 0.0
    %8932 = vmatpush1.msra.mxu0 0.0
    %8933 = vmatprep.mubr.f32.mxu0 0.0
    %8934 = vmatmul.mubr.f32.gmra.mrb[0].mxu0 %v8769
    %v8935 = vpop.f32.mrb[0].mxu0
    %v8936 = vadd.f32 0.0, %v8935
    %v8937 = vpop.f32.mrb[0].mxu0
    %8938 = vmatprep.mubr.f32.mxu0 0.0
    %8939 = vmatmul.mubr.f32.gmra.mrb[0].mxu0 %v8772
    %v8940 = vpop.f32.mrb[0].mxu0
    %v8941 = vadd.f32 0.0, %v8940
    %v8942 = vpop.f32.mrb[0].mxu0
    %8943 = vmatprep.mubr.f32.mxu0 0.0
    %8944 = vmatmul.mubr.f32.gmra.mrb[0].mxu0 %v8775
    %v8945 = vpop.f32.mrb[0].mxu0
    %v8946 = vadd.f32 0.0, %v8945
    %v8947 = vpop.f32.mrb[0].mxu0
    %8948 = vmatprep.mubr.f32.mxu0 0.0
    %8949 = vmatmul.mubr.f32.gmra.mrb[0].mxu0 %v8778
    %v8950 = vpop.f32.mrb[0].mxu0
    %v8951 = vadd.f32 0.0, %v8950
    %v8952 = vpop.f32.mrb[0].mxu0
    %8953 = vdwg.mxu0
    %v8954 = vsub.f32 %v1933, %v8936
    %v8955 = vsub.f32 %v1934, %v8941
    %v8956 = vsub.f32 %v1935, %v8946
    %v8957 = vsub.f32 %v1936, %v8951
    %v8959 = vsel %vm86, %v8675, 0
    %v8962 = vsel %vm86, %v8676, 0
    %v8965 = vsel %vm86, %v8677, 0
    %v8968 = vsel %vm86, %v8678, 0
    %8970 = vmatprep.subr.mxu0 0.0
    %8971 = vmatpush1.msra.mxu0 %v8954
    %8972 = vmatprep.subr.mxu0 0.0
    %8973 = vmatpush1.msra.mxu0 %v8955
    %8974 = vmatprep.subr.mxu0 0.0
    %8975 = vmatpush1.msra.mxu0 %v8956
    %8976 = vmatprep.subr.mxu0 0.0
    %8977 = vmatpush1.msra.mxu0 %v8957
    %8978 = vmatprep.subr.mxu0 0.0
    %8979 = vmatpush1.msra.mxu0 0.0
    %8980 = vmatprep.subr.mxu0 0.0
    %8981 = vmatpush1.msra.mxu0 0.0
    %8982 = vmatprep.subr.mxu0 0.0
    %8983 = vmatpush1.msra.mxu0 0.0
    %8984 = vmatprep.subr.mxu0 0.0
    %8985 = vmatpush1.msra.mxu0 0.0
    %8986 = vmatprep.subr.mxu0 0.0
    %8987 = vmatpush1.msra.mxu0 0.0
    %8988 = vmatprep.subr.mxu0 0.0
    %8989 = vmatpush1.msra.mxu0 0.0
    %8990 = vmatprep.subr.mxu0 0.0
    %8991 = vmatpush1.msra.mxu0 0.0
    %8992 = vmatprep.subr.mxu0 0.0
    %8993 = vmatpush1.msra.mxu0 0.0
    %8994 = vmatprep.subr.mxu0 0.0
    %8995 = vmatpush1.msra.mxu0 0.0
    %8996 = vmatprep.subr.mxu0 0.0
    %8997 = vmatpush1.msra.mxu0 0.0
    %8998 = vmatprep.subr.mxu0 0.0
    %8999 = vmatpush1.msra.mxu0 0.0
    %9000 = vmatprep.subr.mxu0 0.0
    %9001 = vmatpush1.msra.mxu0 0.0
    %9002 = vmatprep.subr.mxu0 0.0
    %9003 = vmatpush1.msra.mxu0 0.0
    %9004 = vmatprep.subr.mxu0 0.0
    %9005 = vmatpush1.msra.mxu0 0.0
    %9006 = vmatprep.subr.mxu0 0.0
    %9007 = vmatpush1.msra.mxu0 0.0
    %9008 = vmatprep.subr.mxu0 0.0
    %9009 = vmatpush1.msra.mxu0 0.0
    %9010 = vmatprep.subr.mxu0 0.0
    %9011 = vmatpush1.msra.mxu0 0.0
    %9012 = vmatprep.subr.mxu0 0.0
    %9013 = vmatpush1.msra.mxu0 0.0
    %9014 = vmatprep.subr.mxu0 0.0
    %9015 = vmatpush1.msra.mxu0 0.0
    %9016 = vmatprep.subr.mxu0 0.0
    %9017 = vmatpush1.msra.mxu0 0.0
    %9018 = vmatprep.subr.mxu0 0.0
    %9019 = vmatpush1.msra.mxu0 0.0
    %9020 = vmatprep.subr.mxu0 0.0
    %9021 = vmatpush1.msra.mxu0 0.0
    %9022 = vmatprep.subr.mxu0 0.0
    %9023 = vmatpush1.msra.mxu0 0.0
    %9024 = vmatprep.subr.mxu0 0.0
    %9025 = vmatpush1.msra.mxu0 0.0
    %9026 = vmatprep.subr.mxu0 0.0
    %9027 = vmatpush1.msra.mxu0 0.0
    %9028 = vmatprep.subr.mxu0 0.0
    %9029 = vmatpush1.msra.mxu0 0.0
    %9030 = vmatprep.subr.mxu0 0.0
    %9031 = vmatpush1.msra.mxu0 0.0
    %9032 = vmatprep.subr.mxu0 0.0
    %9033 = vmatpush1.msra.mxu0 0.0
    %9034 = vmatprep.mubr.f32.mxu0 0.0
    %9035 = vmatmul.mubr.f32.gmra.mrb[0].mxu0 %v8959
    %v9036 = vpop.f32.mrb[0].mxu0
    %v9037 = vadd.f32 0.0, %v9036
    %v9038 = vpop.f32.mrb[0].mxu0
    %9039 = vmatprep.mubr.f32.mxu0 0.0
    %9040 = vmatmul.mubr.f32.gmra.mrb[0].mxu0 %v8962
    %v9041 = vpop.f32.mrb[0].mxu0
    %v9042 = vadd.f32 0.0, %v9041
    %v9043 = vpop.f32.mrb[0].mxu0
    %9044 = vmatprep.mubr.f32.mxu0 0.0
    %9045 = vmatmul.mubr.f32.gmra.mrb[0].mxu0 %v8965
    %v9046 = vpop.f32.mrb[0].mxu0
    %v9047 = vadd.f32 0.0, %v9046
    %v9048 = vpop.f32.mrb[0].mxu0
    %9049 = vmatprep.mubr.f32.mxu0 0.0
    %9050 = vmatmul.mubr.f32.gmra.mrb[0].mxu0 %v8968
    %v9051 = vpop.f32.mrb[0].mxu0
    %v9052 = vadd.f32 0.0, %v9051
    %v9053 = vpop.f32.mrb[0].mxu0
    %9054 = vdwg.mxu0
    %v9055 = vmul.f32 %v9037, 0.25
    %v9056 = vmul.f32 %v9042, 0.25
    %v9057 = vmul.f32 %v9047, 0.25
    %v9058 = vmul.f32 %v9052, 0.25
    %s9059 = scalar_lea.vmem %s12, 4
    %v9060 = vld [vmem:[%s9059] sm:$0x7]
    %9061 = vrot.lane.b32.xlu0 %v5298, 64
    %v9062 = vpop.permute.xlu0 %9061
    %9063 = vrot.lane.b32.xlu0 %v5303, 64
    %v9064 = vpop.permute.xlu0 %9063
    %v9068 = vsel %vm265, %v5919, 0
    %v9071 = vsel %vm265, %v5921, 0
    %9073 = vmatprep.subr.mxu0 0.0
    %9074 = vmatpush1.msra.mxu0 %v9062
    %9075 = vmatprep.subr.mxu0 0.0
    %9076 = vmatpush1.msra.mxu0 %v9064
    %9077 = vmatprep.subr.mxu0 0.0
    %9078 = vmatpush1.msra.mxu0 0.0
    %9079 = vmatprep.subr.mxu0 0.0
    %9080 = vmatpush1.msra.mxu0 0.0
    %9081 = vmatprep.subr.mxu0 0.0
    %9082 = vmatpush1.msra.mxu0 0.0
    %9083 = vmatprep.subr.mxu0 0.0
    %9084 = vmatpush1.msra.mxu0 0.0
    %9085 = vmatprep.subr.mxu0 0.0
    %9086 = vmatpush1.msra.mxu0 0.0
    %9087 = vmatprep.subr.mxu0 0.0
    %9088 = vmatpush1.msra.mxu0 0.0
    %9089 = vmatprep.subr.mxu0 0.0
    %9090 = vmatpush1.msra.mxu0 0.0
    %9091 = vmatprep.subr.mxu0 0.0
    %9092 = vmatpush1.msra.mxu0 0.0
    %9093 = vmatprep.subr.mxu0 0.0
    %9094 = vmatpush1.msra.mxu0 0.0
    %9095 = vmatprep.subr.mxu0 0.0
    %9096 = vmatpush1.msra.mxu0 0.0
    %9097 = vmatprep.subr.mxu0 0.0
    %9098 = vmatpush1.msra.mxu0 0.0
    %9099 = vmatprep.subr.mxu0 0.0
    %9100 = vmatpush1.msra.mxu0 0.0
    %9101 = vmatprep.subr.mxu0 0.0
    %9102 = vmatpush1.msra.mxu0 0.0
    %9103 = vmatprep.subr.mxu0 0.0
    %9104 = vmatpush1.msra.mxu0 0.0
    %9105 = vmatprep.subr.mxu0 0.0
    %9106 = vmatpush1.msra.mxu0 0.0
    %9107 = vmatprep.subr.mxu0 0.0
    %9108 = vmatpush1.msra.mxu0 0.0
    %9109 = vmatprep.subr.mxu0 0.0
    %9110 = vmatpush1.msra.mxu0 0.0
    %9111 = vmatprep.subr.mxu0 0.0
    %9112 = vmatpush1.msra.mxu0 0.0
    %9113 = vmatprep.subr.mxu0 0.0
    %9114 = vmatpush1.msra.mxu0 0.0
    %9115 = vmatprep.subr.mxu0 0.0
    %9116 = vmatpush1.msra.mxu0 0.0
    %9117 = vmatprep.subr.mxu0 0.0
    %9118 = vmatpush1.msra.mxu0 0.0
    %9119 = vmatprep.subr.mxu0 0.0
    %9120 = vmatpush1.msra.mxu0 0.0
    %9121 = vmatprep.subr.mxu0 0.0
    %9122 = vmatpush1.msra.mxu0 0.0
    %9123 = vmatprep.subr.mxu0 0.0
    %9124 = vmatpush1.msra.mxu0 0.0
    %9125 = vmatprep.subr.mxu0 0.0
    %9126 = vmatpush1.msra.mxu0 0.0
    %9127 = vmatprep.subr.mxu0 0.0
    %9128 = vmatpush1.msra.mxu0 0.0
    %9129 = vmatprep.subr.mxu0 0.0
    %9130 = vmatpush1.msra.mxu0 0.0
    %9131 = vmatprep.subr.mxu0 0.0
    %9132 = vmatpush1.msra.mxu0 0.0
    %9133 = vmatprep.subr.mxu0 0.0
    %9134 = vmatpush1.msra.mxu0 0.0
    %9135 = vmatprep.subr.mxu0 0.0
    %9136 = vmatpush1.msra.mxu0 0.0
    %9137 = vmatprep.mubr.f32.mxu0 0.0
    %9138 = vmatmul.mubr.f32.gmra.mrb[0].mxu0 %v9068
    %v9139 = vpop.f32.mrb[0].mxu0
    %v9140 = vadd.f32 0.0, %v9139
    %v9141 = vpop.f32.mrb[0].mxu0
    %9142 = vmatprep.mubr.f32.mxu0 0.0
    %9143 = vmatmul.mubr.f32.gmra.mrb[0].mxu0 %v9071
    %v9144 = vpop.f32.mrb[0].mxu0
    %v9145 = vadd.f32 0.0, %v9144
    %v9146 = vpop.f32.mrb[0].mxu0
    %9147 = vdwg.mxu0
    %v9148 = vmul.f32 %v9140, %v72
    %v9149 = vmul.f32 %v9145, %v73
    %v9151 = vsel %vm265, %v9055, 0
    %v9154 = vsel %vm265, %v9056, 0
    %9156 = vmatprep.subr.mxu0 0.0
    %9157 = vmatpush1.msra.mxu0 %v9148
    %9158 = vmatprep.subr.mxu0 0.0
    %9159 = vmatpush1.msra.mxu0 %v9149
    %9160 = vmatprep.subr.mxu0 0.0
    %9161 = vmatpush1.msra.mxu0 0.0
    %9162 = vmatprep.subr.mxu0 0.0
    %9163 = vmatpush1.msra.mxu0 0.0
    %9164 = vmatprep.subr.mxu0 0.0
    %9165 = vmatpush1.msra.mxu0 0.0
    %9166 = vmatprep.subr.mxu0 0.0
    %9167 = vmatpush1.msra.mxu0 0.0
    %9168 = vmatprep.subr.mxu0 0.0
    %9169 = vmatpush1.msra.mxu0 0.0
    %9170 = vmatprep.subr.mxu0 0.0
    %9171 = vmatpush1.msra.mxu0 0.0
    %9172 = vmatprep.subr.mxu0 0.0
    %9173 = vmatpush1.msra.mxu0 0.0
    %9174 = vmatprep.subr.mxu0 0.0
    %9175 = vmatpush1.msra.mxu0 0.0
    %9176 = vmatprep.subr.mxu0 0.0
    %9177 = vmatpush1.msra.mxu0 0.0
    %9178 = vmatprep.subr.mxu0 0.0
    %9179 = vmatpush1.msra.mxu0 0.0
    %9180 = vmatprep.subr.mxu0 0.0
    %9181 = vmatpush1.msra.mxu0 0.0
    %9182 = vmatprep.subr.mxu0 0.0
    %9183 = vmatpush1.msra.mxu0 0.0
    %9184 = vmatprep.subr.mxu0 0.0
    %9185 = vmatpush1.msra.mxu0 0.0
    %9186 = vmatprep.subr.mxu0 0.0
    %9187 = vmatpush1.msra.mxu0 0.0
    %9188 = vmatprep.subr.mxu0 0.0
    %9189 = vmatpush1.msra.mxu0 0.0
    %9190 = vmatprep.subr.mxu0 0.0
    %9191 = vmatpush1.msra.mxu0 0.0
    %9192 = vmatprep.subr.mxu0 0.0
    %9193 = vmatpush1.msra.mxu0 0.0
    %9194 = vmatprep.subr.mxu0 0.0
    %9195 = vmatpush1.msra.mxu0 0.0
    %9196 = vmatprep.subr.mxu0 0.0
    %9197 = vmatpush1.msra.mxu0 0.0
    %9198 = vmatprep.subr.mxu0 0.0
    %9199 = vmatpush1.msra.mxu0 0.0
    %9200 = vmatprep.subr.mxu0 0.0
    %9201 = vmatpush1.msra.mxu0 0.0
    %9202 = vmatprep.subr.mxu0 0.0
    %9203 = vmatpush1.msra.mxu0 0.0
    %9204 = vmatprep.subr.mxu0 0.0
    %9205 = vmatpush1.msra.mxu0 0.0
    %9206 = vmatprep.subr.mxu0 0.0
    %9207 = vmatpush1.msra.mxu0 0.0
    %9208 = vmatprep.subr.mxu0 0.0
    %9209 = vmatpush1.msra.mxu0 0.0
    %9210 = vmatprep.subr.mxu0 0.0
    %9211 = vmatpush1.msra.mxu0 0.0
    %9212 = vmatprep.subr.mxu0 0.0
    %9213 = vmatpush1.msra.mxu0 0.0
    %9214 = vmatprep.subr.mxu0 0.0
    %9215 = vmatpush1.msra.mxu0 0.0
    %9216 = vmatprep.subr.mxu0 0.0
    %9217 = vmatpush1.msra.mxu0 0.0
    %9218 = vmatprep.subr.mxu0 0.0
    %9219 = vmatpush1.msra.mxu0 0.0
    %9220 = vmatprep.mubr.f32.mxu0 0.0
    %9221 = vmatmul.mubr.f32.gmra.mrb[0].mxu0 %v9151
    %v9222 = vpop.f32.mrb[0].mxu0
    %v9223 = vadd.f32 0.0, %v9222
    %v9224 = vpop.f32.mrb[0].mxu0
    %9225 = vmatprep.mubr.f32.mxu0 0.0
    %9226 = vmatmul.mubr.f32.gmra.mrb[0].mxu0 %v9154
    %v9227 = vpop.f32.mrb[0].mxu0
    %v9228 = vadd.f32 0.0, %v9227
    %v9229 = vpop.f32.mrb[0].mxu0
    %9230 = vdwg.mxu0
    %v9231 = vrot.slane %v5298, 7
    %v9232 = vrot.slane %v5303, 7
    %v9233 = vsel %vm4198, %v9231, %v9232
    %9234 = vrot.lane.b32.xlu0 %v9231, 64
    %v9235 = vpop.permute.xlu0 %9234
    %9236 = vrot.lane.b32.xlu0 %v9233, 64
    %v9237 = vpop.permute.xlu0 %9236
    %v9240 = vsel %vm4198, 0.0, %v9235
    %v9241 = vlaneseq
    %v9242 = vshrl.u32 %v9241, 7
    %v9243 = vsub.s32 0, %v9242
    %v9244 = vrot.slane %v9060, %v9243
    %v9245 = vmul.f32 %v9244, %v9240
    %v9246 = vmul.f32 %v9244, %v9237
    %v9247 = vadd.f32 %v9245, 0.0
    %v9248 = vadd.f32 %v9246, 0.0
    %v9249 = vlaneseq
    %v9250 = vshrl.u32 %v9249, 7
    %v9251 = vsub.s32 1, %v9250
    %v9252 = vrot.slane %v9060, %v9251
    %v9253 = vmul.f32 %v9252, %v9062
    %v9254 = vmul.f32 %v9252, %v9064
    %v9255 = vadd.f32 %v9247, %v9253
    %v9256 = vadd.f32 %v9248, %v9254
    %v9257 = vrot.slane %v5298, 1
    %v9258 = vrot.slane %v5303, 1
    %v9259 = vsel %vm4225, %v9257, %v9258
    %v9261 = vsel %vm4225, %v9258, 0.0
    %v9262 = vlaneseq
    %v9263 = vshrl.u32 %v9262, 7
    %v9264 = vsub.s32 2, %v9263
    %v9265 = vrot.slane %v9060, %v9264
    %9267 = vrot.lane.b32.xlu0 %v9259, 64
    %v9268 = vpop.permute.xlu0 %9267
    %9269 = vrot.lane.b32.xlu0 %v9261, 64
    %v9270 = vpop.permute.xlu0 %9269
    %v9273 = vmul.f32 %v9265, %v9268
    %v9274 = vmul.f32 %v9265, %v9270
    %v9275 = vadd.f32 %v9255, %v9273
    %v9276 = vadd.f32 %v9256, %v9274
    %v9278 = vsel %vm265, %v5897, 0
    %v9281 = vsel %vm265, %v5899, 0
    %9283 = vmatprep.subr.mxu0 0.0
    %9284 = vmatpush1.msra.mxu0 %v9223
    %9285 = vmatprep.subr.mxu0 0.0
    %9286 = vmatpush1.msra.mxu0 %v9228
    %9287 = vmatprep.subr.mxu0 0.0
    %9288 = vmatpush1.msra.mxu0 0.0
    %9289 = vmatprep.subr.mxu0 0.0
    %9290 = vmatpush1.msra.mxu0 0.0
    %9291 = vmatprep.subr.mxu0 0.0
    %9292 = vmatpush1.msra.mxu0 0.0
    %9293 = vmatprep.subr.mxu0 0.0
    %9294 = vmatpush1.msra.mxu0 0.0
    %9295 = vmatprep.subr.mxu0 0.0
    %9296 = vmatpush1.msra.mxu0 0.0
    %9297 = vmatprep.subr.mxu0 0.0
    %9298 = vmatpush1.msra.mxu0 0.0
    %9299 = vmatprep.subr.mxu0 0.0
    %9300 = vmatpush1.msra.mxu0 0.0
    %9301 = vmatprep.subr.mxu0 0.0
    %9302 = vmatpush1.msra.mxu0 0.0
    %9303 = vmatprep.subr.mxu0 0.0
    %9304 = vmatpush1.msra.mxu0 0.0
    %9305 = vmatprep.subr.mxu0 0.0
    %9306 = vmatpush1.msra.mxu0 0.0
    %9307 = vmatprep.subr.mxu0 0.0
    %9308 = vmatpush1.msra.mxu0 0.0
    %9309 = vmatprep.subr.mxu0 0.0
    %9310 = vmatpush1.msra.mxu0 0.0
    %9311 = vmatprep.subr.mxu0 0.0
    %9312 = vmatpush1.msra.mxu0 0.0
    %9313 = vmatprep.subr.mxu0 0.0
    %9314 = vmatpush1.msra.mxu0 0.0
    %9315 = vmatprep.subr.mxu0 0.0
    %9316 = vmatpush1.msra.mxu0 0.0
    %9317 = vmatprep.subr.mxu0 0.0
    %9318 = vmatpush1.msra.mxu0 0.0
    %9319 = vmatprep.subr.mxu0 0.0
    %9320 = vmatpush1.msra.mxu0 0.0
    %9321 = vmatprep.subr.mxu0 0.0
    %9322 = vmatpush1.msra.mxu0 0.0
    %9323 = vmatprep.subr.mxu0 0.0
    %9324 = vmatpush1.msra.mxu0 0.0
    %9325 = vmatprep.subr.mxu0 0.0
    %9326 = vmatpush1.msra.mxu0 0.0
    %9327 = vmatprep.subr.mxu0 0.0
    %9328 = vmatpush1.msra.mxu0 0.0
    %9329 = vmatprep.subr.mxu0 0.0
    %9330 = vmatpush1.msra.mxu0 0.0
    %9331 = vmatprep.subr.mxu0 0.0
    %9332 = vmatpush1.msra.mxu0 0.0
    %9333 = vmatprep.subr.mxu0 0.0
    %9334 = vmatpush1.msra.mxu0 0.0
    %9335 = vmatprep.subr.mxu0 0.0
    %9336 = vmatpush1.msra.mxu0 0.0
    %9337 = vmatprep.subr.mxu0 0.0
    %9338 = vmatpush1.msra.mxu0 0.0
    %9339 = vmatprep.subr.mxu0 0.0
    %9340 = vmatpush1.msra.mxu0 0.0
    %9341 = vmatprep.subr.mxu0 0.0
    %9342 = vmatpush1.msra.mxu0 0.0
    %9343 = vmatprep.subr.mxu0 0.0
    %9344 = vmatpush1.msra.mxu0 0.0
    %9345 = vmatprep.subr.mxu0 0.0
    %9346 = vmatpush1.msra.mxu0 0.0
    %9347 = vmatprep.mubr.f32.mxu0 0.0
    %9348 = vmatmul.mubr.f32.gmra.mrb[0].mxu0 %v9278
    %v9349 = vpop.f32.mrb[0].mxu0
    %v9350 = vadd.f32 %v9275, %v9349
    %v9351 = vpop.f32.mrb[0].mxu0
    %9352 = vmatprep.mubr.f32.mxu0 0.0
    %9353 = vmatmul.mubr.f32.gmra.mrb[0].mxu0 %v9281
    %v9354 = vpop.f32.mrb[0].mxu0
    %v9355 = vadd.f32 %v9276, %v9354
    %v9356 = vpop.f32.mrb[0].mxu0
    %9357 = vdwg.mxu0
    %9358 = vrot.lane.b32.xlu0 %v5308, 64
    %v9359 = vpop.permute.xlu0 %9358
    %9360 = vrot.lane.b32.xlu0 %v5313, 64
    %v9361 = vpop.permute.xlu0 %9360
    %v9365 = vsel %vm265, %v6521, 0
    %v9368 = vsel %vm265, %v6523, 0
    %9370 = vmatprep.subr.mxu0 0.0
    %9371 = vmatpush1.msra.mxu0 %v9359
    %9372 = vmatprep.subr.mxu0 0.0
    %9373 = vmatpush1.msra.mxu0 %v9361
    %9374 = vmatprep.subr.mxu0 0.0
    %9375 = vmatpush1.msra.mxu0 0.0
    %9376 = vmatprep.subr.mxu0 0.0
    %9377 = vmatpush1.msra.mxu0 0.0
    %9378 = vmatprep.subr.mxu0 0.0
    %9379 = vmatpush1.msra.mxu0 0.0
    %9380 = vmatprep.subr.mxu0 0.0
    %9381 = vmatpush1.msra.mxu0 0.0
    %9382 = vmatprep.subr.mxu0 0.0
    %9383 = vmatpush1.msra.mxu0 0.0
    %9384 = vmatprep.subr.mxu0 0.0
    %9385 = vmatpush1.msra.mxu0 0.0
    %9386 = vmatprep.subr.mxu0 0.0
    %9387 = vmatpush1.msra.mxu0 0.0
    %9388 = vmatprep.subr.mxu0 0.0
    %9389 = vmatpush1.msra.mxu0 0.0
    %9390 = vmatprep.subr.mxu0 0.0
    %9391 = vmatpush1.msra.mxu0 0.0
    %9392 = vmatprep.subr.mxu0 0.0
    %9393 = vmatpush1.msra.mxu0 0.0
    %9394 = vmatprep.subr.mxu0 0.0
    %9395 = vmatpush1.msra.mxu0 0.0
    %9396 = vmatprep.subr.mxu0 0.0
    %9397 = vmatpush1.msra.mxu0 0.0
    %9398 = vmatprep.subr.mxu0 0.0
    %9399 = vmatpush1.msra.mxu0 0.0
    %9400 = vmatprep.subr.mxu0 0.0
    %9401 = vmatpush1.msra.mxu0 0.0
    %9402 = vmatprep.subr.mxu0 0.0
    %9403 = vmatpush1.msra.mxu0 0.0
    %9404 = vmatprep.subr.mxu0 0.0
    %9405 = vmatpush1.msra.mxu0 0.0
    %9406 = vmatprep.subr.mxu0 0.0
    %9407 = vmatpush1.msra.mxu0 0.0
    %9408 = vmatprep.subr.mxu0 0.0
    %9409 = vmatpush1.msra.mxu0 0.0
    %9410 = vmatprep.subr.mxu0 0.0
    %9411 = vmatpush1.msra.mxu0 0.0
    %9412 = vmatprep.subr.mxu0 0.0
    %9413 = vmatpush1.msra.mxu0 0.0
    %9414 = vmatprep.subr.mxu0 0.0
    %9415 = vmatpush1.msra.mxu0 0.0
    %9416 = vmatprep.subr.mxu0 0.0
    %9417 = vmatpush1.msra.mxu0 0.0
    %9418 = vmatprep.subr.mxu0 0.0
    %9419 = vmatpush1.msra.mxu0 0.0
    %9420 = vmatprep.subr.mxu0 0.0
    %9421 = vmatpush1.msra.mxu0 0.0
    %9422 = vmatprep.subr.mxu0 0.0
    %9423 = vmatpush1.msra.mxu0 0.0
    %9424 = vmatprep.subr.mxu0 0.0
    %9425 = vmatpush1.msra.mxu0 0.0
    %9426 = vmatprep.subr.mxu0 0.0
    %9427 = vmatpush1.msra.mxu0 0.0
    %9428 = vmatprep.subr.mxu0 0.0
    %9429 = vmatpush1.msra.mxu0 0.0
    %9430 = vmatprep.subr.mxu0 0.0
    %9431 = vmatpush1.msra.mxu0 0.0
    %9432 = vmatprep.subr.mxu0 0.0
    %9433 = vmatpush1.msra.mxu0 0.0
    %9434 = vmatprep.mubr.f32.mxu0 0.0
    %9435 = vmatmul.mubr.f32.gmra.mrb[0].mxu0 %v9365
    %v9436 = vpop.f32.mrb[0].mxu0
    %v9437 = vadd.f32 0.0, %v9436
    %v9438 = vpop.f32.mrb[0].mxu0
    %9439 = vmatprep.mubr.f32.mxu0 0.0
    %9440 = vmatmul.mubr.f32.gmra.mrb[0].mxu0 %v9368
    %v9441 = vpop.f32.mrb[0].mxu0
    %v9442 = vadd.f32 0.0, %v9441
    %v9443 = vpop.f32.mrb[0].mxu0
    %9444 = vdwg.mxu0
    %v9445 = vmul.f32 %v9437, %v72
    %v9446 = vmul.f32 %v9442, %v73
    %9449 = vrot.lane.b32.xlu0 %v9057, 112
    %v9450 = vpop.permute.xlu0 %9449
    %9451 = vrot.lane.b32.xlu0 %v9058, 112
    %v9452 = vpop.permute.xlu0 %9451
    %v9453 = vsel %vm265, %v9450, 0
    %v9455 = vsel %vm265, %v9452, 0
    %9457 = vmatprep.subr.mxu0 0.0
    %9458 = vmatpush1.msra.mxu0 %v9445
    %9459 = vmatprep.subr.mxu0 0.0
    %9460 = vmatpush1.msra.mxu0 %v9446
    %9461 = vmatprep.subr.mxu0 0.0
    %9462 = vmatpush1.msra.mxu0 0.0
    %9463 = vmatprep.subr.mxu0 0.0
    %9464 = vmatpush1.msra.mxu0 0.0
    %9465 = vmatprep.subr.mxu0 0.0
    %9466 = vmatpush1.msra.mxu0 0.0
    %9467 = vmatprep.subr.mxu0 0.0
    %9468 = vmatpush1.msra.mxu0 0.0
    %9469 = vmatprep.subr.mxu0 0.0
    %9470 = vmatpush1.msra.mxu0 0.0
    %9471 = vmatprep.subr.mxu0 0.0
    %9472 = vmatpush1.msra.mxu0 0.0
    %9473 = vmatprep.subr.mxu0 0.0
    %9474 = vmatpush1.msra.mxu0 0.0
    %9475 = vmatprep.subr.mxu0 0.0
    %9476 = vmatpush1.msra.mxu0 0.0
    %9477 = vmatprep.subr.mxu0 0.0
    %9478 = vmatpush1.msra.mxu0 0.0
    %9479 = vmatprep.subr.mxu0 0.0
    %9480 = vmatpush1.msra.mxu0 0.0
    %9481 = vmatprep.subr.mxu0 0.0
    %9482 = vmatpush1.msra.mxu0 0.0
    %9483 = vmatprep.subr.mxu0 0.0
    %9484 = vmatpush1.msra.mxu0 0.0
    %9485 = vmatprep.subr.mxu0 0.0
    %9486 = vmatpush1.msra.mxu0 0.0
    %9487 = vmatprep.subr.mxu0 0.0
    %9488 = vmatpush1.msra.mxu0 0.0
    %9489 = vmatprep.subr.mxu0 0.0
    %9490 = vmatpush1.msra.mxu0 0.0
    %9491 = vmatprep.subr.mxu0 0.0
    %9492 = vmatpush1.msra.mxu0 0.0
    %9493 = vmatprep.subr.mxu0 0.0
    %9494 = vmatpush1.msra.mxu0 0.0
    %9495 = vmatprep.subr.mxu0 0.0
    %9496 = vmatpush1.msra.mxu0 0.0
    %9497 = vmatprep.subr.mxu0 0.0
    %9498 = vmatpush1.msra.mxu0 0.0
    %9499 = vmatprep.subr.mxu0 0.0
    %9500 = vmatpush1.msra.mxu0 0.0
    %9501 = vmatprep.subr.mxu0 0.0
    %9502 = vmatpush1.msra.mxu0 0.0
    %9503 = vmatprep.subr.mxu0 0.0
    %9504 = vmatpush1.msra.mxu0 0.0
    %9505 = vmatprep.subr.mxu0 0.0
    %9506 = vmatpush1.msra.mxu0 0.0
    %9507 = vmatprep.subr.mxu0 0.0
    %9508 = vmatpush1.msra.mxu0 0.0
    %9509 = vmatprep.subr.mxu0 0.0
    %9510 = vmatpush1.msra.mxu0 0.0
    %9511 = vmatprep.subr.mxu0 0.0
    %9512 = vmatpush1.msra.mxu0 0.0
    %9513 = vmatprep.subr.mxu0 0.0
    %9514 = vmatpush1.msra.mxu0 0.0
    %9515 = vmatprep.subr.mxu0 0.0
    %9516 = vmatpush1.msra.mxu0 0.0
    %9517 = vmatprep.subr.mxu0 0.0
    %9518 = vmatpush1.msra.mxu0 0.0
    %9519 = vmatprep.subr.mxu0 0.0
    %9520 = vmatpush1.msra.mxu0 0.0
    %9521 = vmatprep.mubr.f32.mxu0 0.0
    %9522 = vmatmul.mubr.f32.gmra.mrb[0].mxu0 %v9453
    %v9523 = vpop.f32.mrb[0].mxu0
    %v9524 = vadd.f32 0.0, %v9523
    %v9525 = vpop.f32.mrb[0].mxu0
    %9526 = vmatprep.mubr.f32.mxu0 0.0
    %9527 = vmatmul.mubr.f32.gmra.mrb[0].mxu0 %v9455
    %v9528 = vpop.f32.mrb[0].mxu0
    %v9529 = vadd.f32 0.0, %v9528
    %v9530 = vpop.f32.mrb[0].mxu0
    %9531 = vdwg.mxu0
    %v9532 = vrot.slane %v5308, 7
    %v9533 = vrot.slane %v5313, 7
    %v9534 = vsel %vm4198, %v9532, %v9533
    %9535 = vrot.lane.b32.xlu0 %v9532, 64
    %v9536 = vpop.permute.xlu0 %9535
    %9537 = vrot.lane.b32.xlu0 %v9534, 64
    %v9538 = vpop.permute.xlu0 %9537
    %v9541 = vsel %vm4198, 0.0, %v9536
    %v9542 = vmul.f32 %v9244, %v9541
    %v9543 = vmul.f32 %v9244, %v9538
    %v9544 = vadd.f32 %v9542, 0.0
    %v9545 = vadd.f32 %v9543, 0.0
    %v9546 = vmul.f32 %v9252, %v9359
    %v9547 = vmul.f32 %v9252, %v9361
    %v9548 = vadd.f32 %v9544, %v9546
    %v9549 = vadd.f32 %v9545, %v9547
    %v9550 = vrot.slane %v5308, 1
    %v9551 = vrot.slane %v5313, 1
    %v9552 = vsel %vm4225, %v9550, %v9551
    %v9554 = vsel %vm4225, %v9551, 0.0
    %9556 = vrot.lane.b32.xlu0 %v9552, 64
    %v9557 = vpop.permute.xlu0 %9556
    %9558 = vrot.lane.b32.xlu0 %v9554, 64
    %v9559 = vpop.permute.xlu0 %9558
    %v9562 = vmul.f32 %v9265, %v9557
    %v9563 = vmul.f32 %v9265, %v9559
    %v9564 = vadd.f32 %v9548, %v9562
    %v9565 = vadd.f32 %v9549, %v9563
    %v9567 = vsel %vm265, %v6499, 0
    %v9570 = vsel %vm265, %v6501, 0
    %9572 = vmatprep.subr.mxu0 0.0
    %9573 = vmatpush1.msra.mxu0 %v9524
    %9574 = vmatprep.subr.mxu0 0.0
    %9575 = vmatpush1.msra.mxu0 %v9529
    %9576 = vmatprep.subr.mxu0 0.0
    %9577 = vmatpush1.msra.mxu0 0.0
    %9578 = vmatprep.subr.mxu0 0.0
    %9579 = vmatpush1.msra.mxu0 0.0
    %9580 = vmatprep.subr.mxu0 0.0
    %9581 = vmatpush1.msra.mxu0 0.0
    %9582 = vmatprep.subr.mxu0 0.0
    %9583 = vmatpush1.msra.mxu0 0.0
    %9584 = vmatprep.subr.mxu0 0.0
    %9585 = vmatpush1.msra.mxu0 0.0
    %9586 = vmatprep.subr.mxu0 0.0
    %9587 = vmatpush1.msra.mxu0 0.0
    %9588 = vmatprep.subr.mxu0 0.0
    %9589 = vmatpush1.msra.mxu0 0.0
    %9590 = vmatprep.subr.mxu0 0.0
    %9591 = vmatpush1.msra.mxu0 0.0
    %9592 = vmatprep.subr.mxu0 0.0
    %9593 = vmatpush1.msra.mxu0 0.0
    %9594 = vmatprep.subr.mxu0 0.0
    %9595 = vmatpush1.msra.mxu0 0.0
    %9596 = vmatprep.subr.mxu0 0.0
    %9597 = vmatpush1.msra.mxu0 0.0
    %9598 = vmatprep.subr.mxu0 0.0
    %9599 = vmatpush1.msra.mxu0 0.0
    %9600 = vmatprep.subr.mxu0 0.0
    %9601 = vmatpush1.msra.mxu0 0.0
    %9602 = vmatprep.subr.mxu0 0.0
    %9603 = vmatpush1.msra.mxu0 0.0
    %9604 = vmatprep.subr.mxu0 0.0
    %9605 = vmatpush1.msra.mxu0 0.0
    %9606 = vmatprep.subr.mxu0 0.0
    %9607 = vmatpush1.msra.mxu0 0.0
    %9608 = vmatprep.subr.mxu0 0.0
    %9609 = vmatpush1.msra.mxu0 0.0
    %9610 = vmatprep.subr.mxu0 0.0
    %9611 = vmatpush1.msra.mxu0 0.0
    %9612 = vmatprep.subr.mxu0 0.0
    %9613 = vmatpush1.msra.mxu0 0.0
    %9614 = vmatprep.subr.mxu0 0.0
    %9615 = vmatpush1.msra.mxu0 0.0
    %9616 = vmatprep.subr.mxu0 0.0
    %9617 = vmatpush1.msra.mxu0 0.0
    %9618 = vmatprep.subr.mxu0 0.0
    %9619 = vmatpush1.msra.mxu0 0.0
    %9620 = vmatprep.subr.mxu0 0.0
    %9621 = vmatpush1.msra.mxu0 0.0
    %9622 = vmatprep.subr.mxu0 0.0
    %9623 = vmatpush1.msra.mxu0 0.0
    %9624 = vmatprep.subr.mxu0 0.0
    %9625 = vmatpush1.msra.mxu0 0.0
    %9626 = vmatprep.subr.mxu0 0.0
    %9627 = vmatpush1.msra.mxu0 0.0
    %9628 = vmatprep.subr.mxu0 0.0
    %9629 = vmatpush1.msra.mxu0 0.0
    %9630 = vmatprep.subr.mxu0 0.0
    %9631 = vmatpush1.msra.mxu0 0.0
    %9632 = vmatprep.subr.mxu0 0.0
    %9633 = vmatpush1.msra.mxu0 0.0
    %9634 = vmatprep.subr.mxu0 0.0
    %9635 = vmatpush1.msra.mxu0 0.0
    %9636 = vmatprep.mubr.f32.mxu0 0.0
    %9637 = vmatmul.mubr.f32.gmra.mrb[0].mxu0 %v9567
    %v9638 = vpop.f32.mrb[0].mxu0
    %v9639 = vadd.f32 %v9564, %v9638
    %v9640 = vpop.f32.mrb[0].mxu0
    %9641 = vmatprep.mubr.f32.mxu0 0.0
    %9642 = vmatmul.mubr.f32.gmra.mrb[0].mxu0 %v9570
    %v9643 = vpop.f32.mrb[0].mxu0
    %v9644 = vadd.f32 %v9565, %v9643
    %v9645 = vpop.f32.mrb[0].mxu0
    %9646 = vdwg.mxu0
    %s9647 = scalar_lea.vmem %s10, 32
    %v9648 = vld [vmem:[%s9647] sm:$0xff]
    %v9649 = vld [vmem:[%s9647 + $0x8] sm:$0xff]
    %v9650 = vld [vmem:[%s9647 + $0x10] sm:$0xff]
    %v9651 = vld [vmem:[%s9647 + $0x18] sm:$0xff]
    %v9653 = vsel %vm86, %v9350, 0
    %v9656 = vsel %vm86, %v9355, 0
    %v9659 = vsel %vm86, %v9639, 0
    %v9662 = vsel %vm86, %v9644, 0
    %9664 = vmatprep.subr.mxu0 0.0
    %9665 = vmatpush1.msra.mxu0 %v9648
    %9666 = vmatprep.subr.mxu0 0.0
    %9667 = vmatpush1.msra.mxu0 %v9649
    %9668 = vmatprep.subr.mxu0 0.0
    %9669 = vmatpush1.msra.mxu0 %v9650
    %9670 = vmatprep.subr.mxu0 0.0
    %9671 = vmatpush1.msra.mxu0 %v9651
    %9672 = vmatprep.subr.mxu0 0.0
    %9673 = vmatpush1.msra.mxu0 0.0
    %9674 = vmatprep.subr.mxu0 0.0
    %9675 = vmatpush1.msra.mxu0 0.0
    %9676 = vmatprep.subr.mxu0 0.0
    %9677 = vmatpush1.msra.mxu0 0.0
    %9678 = vmatprep.subr.mxu0 0.0
    %9679 = vmatpush1.msra.mxu0 0.0
    %9680 = vmatprep.subr.mxu0 0.0
    %9681 = vmatpush1.msra.mxu0 0.0
    %9682 = vmatprep.subr.mxu0 0.0
    %9683 = vmatpush1.msra.mxu0 0.0
    %9684 = vmatprep.subr.mxu0 0.0
    %9685 = vmatpush1.msra.mxu0 0.0
    %9686 = vmatprep.subr.mxu0 0.0
    %9687 = vmatpush1.msra.mxu0 0.0
    %9688 = vmatprep.subr.mxu0 0.0
    %9689 = vmatpush1.msra.mxu0 0.0
    %9690 = vmatprep.subr.mxu0 0.0
    %9691 = vmatpush1.msra.mxu0 0.0
    %9692 = vmatprep.subr.mxu0 0.0
    %9693 = vmatpush1.msra.mxu0 0.0
    %9694 = vmatprep.subr.mxu0 0.0
    %9695 = vmatpush1.msra.mxu0 0.0
    %9696 = vmatprep.subr.mxu0 0.0
    %9697 = vmatpush1.msra.mxu0 0.0
    %9698 = vmatprep.subr.mxu0 0.0
    %9699 = vmatpush1.msra.mxu0 0.0
    %9700 = vmatprep.subr.mxu0 0.0
    %9701 = vmatpush1.msra.mxu0 0.0
    %9702 = vmatprep.subr.mxu0 0.0
    %9703 = vmatpush1.msra.mxu0 0.0
    %9704 = vmatprep.subr.mxu0 0.0
    %9705 = vmatpush1.msra.mxu0 0.0
    %9706 = vmatprep.subr.mxu0 0.0
    %9707 = vmatpush1.msra.mxu0 0.0
    %9708 = vmatprep.subr.mxu0 0.0
    %9709 = vmatpush1.msra.mxu0 0.0
    %9710 = vmatprep.subr.mxu0 0.0
    %9711 = vmatpush1.msra.mxu0 0.0
    %9712 = vmatprep.subr.mxu0 0.0
    %9713 = vmatpush1.msra.mxu0 0.0
    %9714 = vmatprep.subr.mxu0 0.0
    %9715 = vmatpush1.msra.mxu0 0.0
    %9716 = vmatprep.subr.mxu0 0.0
    %9717 = vmatpush1.msra.mxu0 0.0
    %9718 = vmatprep.subr.mxu0 0.0
    %9719 = vmatpush1.msra.mxu0 0.0
    %9720 = vmatprep.subr.mxu0 0.0
    %9721 = vmatpush1.msra.mxu0 0.0
    %9722 = vmatprep.subr.mxu0 0.0
    %9723 = vmatpush1.msra.mxu0 0.0
    %9724 = vmatprep.subr.mxu0 0.0
    %9725 = vmatpush1.msra.mxu0 0.0
    %9726 = vmatprep.subr.mxu0 0.0
    %9727 = vmatpush1.msra.mxu0 0.0
    %9728 = vmatprep.mubr.f32.mxu0 0.0
    %9729 = vmatmul.mubr.f32.gmra.mrb[0].mxu0 %v9653
    %v9730 = vpop.f32.mrb[0].mxu0
    %v9731 = vadd.f32 0.0, %v9730
    %v9732 = vpop.f32.mrb[0].mxu0
    %9733 = vmatprep.mubr.f32.mxu0 0.0
    %9734 = vmatmul.mubr.f32.gmra.mrb[0].mxu0 %v9656
    %v9735 = vpop.f32.mrb[0].mxu0
    %v9736 = vadd.f32 0.0, %v9735
    %v9737 = vpop.f32.mrb[0].mxu0
    %9738 = vmatprep.mubr.f32.mxu0 0.0
    %9739 = vmatmul.mubr.f32.gmra.mrb[0].mxu0 %v9659
    %v9740 = vpop.f32.mrb[0].mxu0
    %v9741 = vadd.f32 0.0, %v9740
    %v9742 = vpop.f32.mrb[0].mxu0
    %9743 = vmatprep.mubr.f32.mxu0 0.0
    %9744 = vmatmul.mubr.f32.gmra.mrb[0].mxu0 %v9662
    %v9745 = vpop.f32.mrb[0].mxu0
    %v9746 = vadd.f32 0.0, %v9745
    %v9747 = vpop.f32.mrb[0].mxu0
    %9748 = vdwg.mxu0
    %v9749 = vadd.f32 %v5134, %v9731
    %v9750 = vadd.f32 %v5135, %v9736
    %v9751 = vadd.f32 %v5136, %v9741
    %v9752 = vadd.f32 %v5137, %v9746
    %s9753 = scalar_lea.vmem %s11, 1
    %v9754 = vld [vmem:[%s9753] sm:$0x1]
    %v9756 = vlaneseq
    %v9757 = vshrl.u32 %v9756, 7
    %v9758 = vsub.s32 0, %v9757
    %v9759 = vrot.slane %v9754, %v9758
    %v9761 = vadd.f32 %v9749, %v9759
    %v9762 = vadd.f32 %v9750, %v9759
    %v9763 = vadd.f32 %v9751, %v9759
    %v9764 = vadd.f32 %v9752, %v9759
    %s9765 = scalar_lea.vmem %s13, 1
    %v9766 = vld [vmem:[%s9765] sm:$0x1]
    %s9767 = scalar_lea.vmem %s14, 1
    %v9768 = vld [vmem:[%s9767] sm:$0x1]
    %v9769 = vsel %vm86, %v9761, 0.0
    %9770 = vadd.xlane.f32.xlu0 %v9769
    %v9771 = vpop.xlane.xlu0 %9770
    %v9772 = vsel %vm86, %v9762, 0.0
    %9773 = vadd.xlane.f32.xlu0 %v9772
    %v9774 = vpop.xlane.xlu0 %9773
    %v9775 = vsel %vm86, %v9763, 0.0
    %9776 = vadd.xlane.f32.xlu0 %v9775
    %v9777 = vpop.xlane.xlu0 %9776
    %v9778 = vsel %vm86, %v9764, 0.0
    %9779 = vadd.xlane.f32.xlu0 %v9778
    %v9780 = vpop.xlane.xlu0 %9779
    %v9781 = vmul.f32 %v9771, %v99
    %v9782 = vmul.f32 %v9774, %v99
    %v9783 = vmul.f32 %v9777, %v99
    %v9784 = vmul.f32 %v9780, %v99
    %v9785 = vsub.f32 %v9761, %v9781
    %v9786 = vsub.f32 %v9762, %v9782
    %v9787 = vsub.f32 %v9763, %v9783
    %v9788 = vsub.f32 %v9764, %v9784
    %v9789 = vmul.f32 %v9785, %v9785
    %v9790 = vmul.f32 %v9786, %v9786
    %v9791 = vmul.f32 %v9787, %v9787
    %v9792 = vmul.f32 %v9788, %v9788
    %v9793 = vsel %vm86, %v9789, 0.0
    %9794 = vadd.xlane.f32.xlu0 %v9793
    %v9795 = vpop.xlane.xlu0 %9794
    %v9796 = vsel %vm86, %v9790, 0.0
    %9797 = vadd.xlane.f32.xlu0 %v9796
    %v9798 = vpop.xlane.xlu0 %9797
    %v9799 = vsel %vm86, %v9791, 0.0
    %9800 = vadd.xlane.f32.xlu0 %v9799
    %v9801 = vpop.xlane.xlu0 %9800
    %v9802 = vsel %vm86, %v9792, 0.0
    %9803 = vadd.xlane.f32.xlu0 %v9802
    %v9804 = vpop.xlane.xlu0 %9803
    %v9805 = vmul.f32 %v9795, %v99
    %v9806 = vmul.f32 %v9798, %v99
    %v9807 = vmul.f32 %v9801, %v99
    %v9808 = vmul.f32 %v9804, %v99
    %v9809 = vadd.f32 %v9805, 1e-05
    %v9810 = vadd.f32 %v9806, 1e-05
    %v9811 = vadd.f32 %v9807, 1e-05
    %v9812 = vadd.f32 %v9808, 1e-05
    %v9813 = vrsqrt.pop %v9809
    %v9814 = vrsqrt.pop %v9810
    %v9815 = vrsqrt.pop %v9811
    %v9816 = vrsqrt.pop %v9812
    %v9817 = vmul.f32 %v9785, %v9813
    %v9818 = vmul.f32 %v9786, %v9814
    %v9819 = vmul.f32 %v9787, %v9815
    %v9820 = vmul.f32 %v9788, %v9816
    %v9822 = vlaneseq
    %v9823 = vshrl.u32 %v9822, 7
    %v9824 = vsub.s32 0, %v9823
    %v9825 = vrot.slane %v9766, %v9824
    %v9827 = vmul.f32 %v9817, %v9825
    %v9828 = vmul.f32 %v9818, %v9825
    %v9829 = vmul.f32 %v9819, %v9825
    %v9830 = vmul.f32 %v9820, %v9825
    %v9832 = vlaneseq
    %v9833 = vshrl.u32 %v9832, 7
    %v9834 = vsub.s32 0, %v9833
    %v9835 = vrot.slane %v9768, %v9834
    %v9837 = vadd.f32 %v9827, %v9835
    %v9838 = vadd.f32 %v9828, %v9835
    %v9839 = vadd.f32 %v9829, %v9835
    %v9840 = vadd.f32 %v9830, %v9835
    %s9841 = scalar_lea.vmem %s15, 32
    %v9842 = vld [vmem:[%s9841] sm:$0xff]
    %v9843 = vld [vmem:[%s9841 + $0x8] sm:$0xff]
    %v9844 = vld [vmem:[%s9841 + $0x10] sm:$0xff]
    %v9845 = vld [vmem:[%s9841 + $0x18] sm:$0xff]
    %s9846 = scalar_lea.vmem %s16, 1
    %v9847 = vld [vmem:[%s9846] sm:$0x1]
    %v9849 = vlaneseq
    %v9850 = vshrl.u32 %v9849, 7
    %v9851 = vsub.s32 0, %v9850
    %v9852 = vrot.slane %v9847, %v9851
    %v9855 = vsel %vm86, %v9837, 0
    %v9858 = vsel %vm86, %v9838, 0
    %v9861 = vsel %vm86, %v9839, 0
    %v9864 = vsel %vm86, %v9840, 0
    %9866 = vmatprep.subr.mxu0 0.0
    %9867 = vmatpush1.msra.mxu0 %v9842
    %9868 = vmatprep.subr.mxu0 0.0
    %9869 = vmatpush1.msra.mxu0 %v9843
    %9870 = vmatprep.subr.mxu0 0.0
    %9871 = vmatpush1.msra.mxu0 %v9844
    %9872 = vmatprep.subr.mxu0 0.0
    %9873 = vmatpush1.msra.mxu0 %v9845
    %9874 = vmatprep.subr.mxu0 0.0
    %9875 = vmatpush1.msra.mxu0 0.0
    %9876 = vmatprep.subr.mxu0 0.0
    %9877 = vmatpush1.msra.mxu0 0.0
    %9878 = vmatprep.subr.mxu0 0.0
    %9879 = vmatpush1.msra.mxu0 0.0
    %9880 = vmatprep.subr.mxu0 0.0
    %9881 = vmatpush1.msra.mxu0 0.0
    %9882 = vmatprep.subr.mxu0 0.0
    %9883 = vmatpush1.msra.mxu0 0.0
    %9884 = vmatprep.subr.mxu0 0.0
    %9885 = vmatpush1.msra.mxu0 0.0
    %9886 = vmatprep.subr.mxu0 0.0
    %9887 = vmatpush1.msra.mxu0 0.0
    %9888 = vmatprep.subr.mxu0 0.0
    %9889 = vmatpush1.msra.mxu0 0.0
    %9890 = vmatprep.subr.mxu0 0.0
    %9891 = vmatpush1.msra.mxu0 0.0
    %9892 = vmatprep.subr.mxu0 0.0
    %9893 = vmatpush1.msra.mxu0 0.0
    %9894 = vmatprep.subr.mxu0 0.0
    %9895 = vmatpush1.msra.mxu0 0.0
    %9896 = vmatprep.subr.mxu0 0.0
    %9897 = vmatpush1.msra.mxu0 0.0
    %9898 = vmatprep.subr.mxu0 0.0
    %9899 = vmatpush1.msra.mxu0 0.0
    %9900 = vmatprep.subr.mxu0 0.0
    %9901 = vmatpush1.msra.mxu0 0.0
    %9902 = vmatprep.subr.mxu0 0.0
    %9903 = vmatpush1.msra.mxu0 0.0
    %9904 = vmatprep.subr.mxu0 0.0
    %9905 = vmatpush1.msra.mxu0 0.0
    %9906 = vmatprep.subr.mxu0 0.0
    %9907 = vmatpush1.msra.mxu0 0.0
    %9908 = vmatprep.subr.mxu0 0.0
    %9909 = vmatpush1.msra.mxu0 0.0
    %9910 = vmatprep.subr.mxu0 0.0
    %9911 = vmatpush1.msra.mxu0 0.0
    %9912 = vmatprep.subr.mxu0 0.0
    %9913 = vmatpush1.msra.mxu0 0.0
    %9914 = vmatprep.subr.mxu0 0.0
    %9915 = vmatpush1.msra.mxu0 0.0
    %9916 = vmatprep.subr.mxu0 0.0
    %9917 = vmatpush1.msra.mxu0 0.0
    %9918 = vmatprep.subr.mxu0 0.0
    %9919 = vmatpush1.msra.mxu0 0.0
    %9920 = vmatprep.subr.mxu0 0.0
    %9921 = vmatpush1.msra.mxu0 0.0
    %9922 = vmatprep.subr.mxu0 0.0
    %9923 = vmatpush1.msra.mxu0 0.0
    %9924 = vmatprep.subr.mxu0 0.0
    %9925 = vmatpush1.msra.mxu0 0.0
    %9926 = vmatprep.subr.mxu0 0.0
    %9927 = vmatpush1.msra.mxu0 0.0
    %9928 = vmatprep.subr.mxu0 0.0
    %9929 = vmatpush1.msra.mxu0 0.0
    %9930 = vmatprep.mubr.f32.mxu0 0.0
    %9931 = vmatmul.mubr.f32.gmra.mrb[0].mxu0 %v9855
    %v9932 = vpop.f32.mrb[0].mxu0
    %v9933 = vadd.f32 %v9852, %v9932
    %v9934 = vpop.f32.mrb[0].mxu0
    %9935 = vmatprep.mubr.f32.mxu0 0.0
    %9936 = vmatmul.mubr.f32.gmra.mrb[0].mxu0 %v9858
    %v9937 = vpop.f32.mrb[0].mxu0
    %v9938 = vadd.f32 %v9852, %v9937
    %v9939 = vpop.f32.mrb[0].mxu0
    %9940 = vmatprep.mubr.f32.mxu0 0.0
    %9941 = vmatmul.mubr.f32.gmra.mrb[0].mxu0 %v9861
    %v9942 = vpop.f32.mrb[0].mxu0
    %v9943 = vadd.f32 %v9852, %v9942
    %v9944 = vpop.f32.mrb[0].mxu0
    %9945 = vmatprep.mubr.f32.mxu0 0.0
    %9946 = vmatmul.mubr.f32.gmra.mrb[0].mxu0 %v9864
    %v9947 = vpop.f32.mrb[0].mxu0
    %v9948 = vadd.f32 %v9852, %v9947
    %v9949 = vpop.f32.mrb[0].mxu0
    %9950 = vdwg.mxu0
    %v9951 = vmul.f32 %v9933, 0.5
    %v9952 = vmul.f32 %v9938, 0.5
    %v9953 = vmul.f32 %v9943, 0.5
    %v9954 = vmul.f32 %v9948, 0.5
    %v9955 = vmul.f32 %v9933, 0.70710677
    %v9956 = vmul.f32 %v9938, 0.70710677
    %v9957 = vmul.f32 %v9943, 0.70710677
    %v9958 = vmul.f32 %v9948, 0.70710677
    %vm9959 = vcmp.ge.f32.partialorder %v9955, 0.0
    %vm9960 = vcmp.ge.f32.partialorder %v9956, 0.0
    %vm9961 = vcmp.ge.f32.partialorder %v9957, 0.0
    %vm9962 = vcmp.ge.f32.partialorder %v9958, 0.0
    %v9963 = vsel %vm9959, 1.0, -1.0
    %v9964 = vsel %vm9960, 1.0, -1.0
    %v9965 = vsel %vm9961, 1.0, -1.0
    %v9966 = vsel %vm9962, 1.0, -1.0
    %v9967 = vand.u32 2147483647, %v9955
    %v9968 = vand.u32 2147483647, %v9956
    %v9969 = vand.u32 2147483647, %v9957
    %v9970 = vand.u32 2147483647, %v9958
    %v9971 = vmul.f32 %v9967, 0.3275911
    %v9972 = vmul.f32 %v9968, 0.3275911
    %v9973 = vmul.f32 %v9969, 0.3275911
    %v9974 = vmul.f32 %v9970, 0.3275911
    %v9975 = vadd.f32 %v9971, 1.0
    %v9976 = vadd.f32 %v9972, 1.0
    %v9977 = vadd.f32 %v9973, 1.0
    %v9978 = vadd.f32 %v9974, 1.0
    %v9979 = vrcp.pop %v9975
    %v9980 = vmul.f32 1.0, %v9979
    %v9981 = vrcp.pop %v9976
    %v9982 = vmul.f32 1.0, %v9981
    %v9983 = vrcp.pop %v9977
    %v9984 = vmul.f32 1.0, %v9983
    %v9985 = vrcp.pop %v9978
    %v9986 = vmul.f32 1.0, %v9985
    %v9987 = vmul.f32 %v9980, 1.0614054
    %v9988 = vmul.f32 %v9982, 1.0614054
    %v9989 = vmul.f32 %v9984, 1.0614054
    %v9990 = vmul.f32 %v9986, 1.0614054
    %v9991 = vadd.f32 %v9987, -1.4531521
    %v9992 = vadd.f32 %v9988, -1.4531521
    %v9993 = vadd.f32 %v9989, -1.4531521
    %v9994 = vadd.f32 %v9990, -1.4531521
    %v9995 = vmul.f32 %v9991, %v9980
    %v9996 = vmul.f32 %v9992, %v9982
    %v9997 = vmul.f32 %v9993, %v9984
    %v9998 = vmul.f32 %v9994, %v9986
    %v9999 = vadd.f32 %v9995, 1.4214138
    %v10000 = vadd.f32 %v9996, 1.4214138
    %v10001 = vadd.f32 %v9997, 1.4214138
    %v10002 = vadd.f32 %v9998, 1.4214138
    %v10003 = vmul.f32 %v9999, %v9980
    %v10004 = vmul.f32 %v10000, %v9982
    %v10005 = vmul.f32 %v10001, %v9984
    %v10006 = vmul.f32 %v10002, %v9986
    %v10007 = vadd.f32 %v10003, -0.28449672
    %v10008 = vadd.f32 %v10004, -0.28449672
    %v10009 = vadd.f32 %v10005, -0.28449672
    %v10010 = vadd.f32 %v10006, -0.28449672
    %v10011 = vmul.f32 %v10007, %v9980
    %v10012 = vmul.f32 %v10008, %v9982
    %v10013 = vmul.f32 %v10009, %v9984
    %v10014 = vmul.f32 %v10010, %v9986
    %v10015 = vadd.f32 %v10011, 0.2548296
    %v10016 = vadd.f32 %v10012, 0.2548296
    %v10017 = vadd.f32 %v10013, 0.2548296
    %v10018 = vadd.f32 %v10014, 0.2548296
    %v10019 = vmul.f32 %v10015, %v9980
    %v10020 = vmul.f32 %v10016, %v9982
    %v10021 = vmul.f32 %v10017, %v9984
    %v10022 = vmul.f32 %v10018, %v9986
    %v10023 = vsub.f32 0.0, %v9967
    %v10024 = vsub.f32 0.0, %v9968
    %v10025 = vsub.f32 0.0, %v9969
    %v10026 = vsub.f32 0.0, %v9970
    %v10027 = vmul.f32 %v10023, %v9967
    %v10028 = vmul.f32 %v10024, %v9968
    %v10029 = vmul.f32 %v10025, %v9969
    %v10030 = vmul.f32 %v10026, %v9970
    %v10031 = vmul.f32 %v10027, 1.442695
    %v10032 = vpow.pop %v10031
    %v10033 = vmul.f32 %v10028, 1.442695
    %v10034 = vpow.pop %v10033
    %v10035 = vmul.f32 %v10029, 1.442695
    %v10036 = vpow.pop %v10035
    %v10037 = vmul.f32 %v10030, 1.442695
    %v10038 = vpow.pop %v10037
    %v10039 = vmul.f32 %v10019, %v10032
    %v10040 = vmul.f32 %v10020, %v10034
    %v10041 = vmul.f32 %v10021, %v10036
    %v10042 = vmul.f32 %v10022, %v10038
    %v10043 = vsub.f32 1.0, %v10039
    %v10044 = vsub.f32 1.0, %v10040
    %v10045 = vsub.f32 1.0, %v10041
    %v10046 = vsub.f32 1.0, %v10042
    %v10047 = vmul.f32 %v9963, %v10043
    %v10048 = vmul.f32 %v9964, %v10044
    %v10049 = vmul.f32 %v9965, %v10045
    %v10050 = vmul.f32 %v9966, %v10046
    %v10051 = vadd.f32 %v10047, 1.0
    %v10052 = vadd.f32 %v10048, 1.0
    %v10053 = vadd.f32 %v10049, 1.0
    %v10054 = vadd.f32 %v10050, 1.0
    %v10055 = vmul.f32 %v9951, %v10051
    %v10056 = vmul.f32 %v9952, %v10052
    %v10057 = vmul.f32 %v9953, %v10053
    %v10058 = vmul.f32 %v9954, %v10054
    %s10059 = scalar_lea.vmem %s17, 128
    %v10060 = vld [vmem:[%s10059] sm:$0xff]
    %v10061 = vld [vmem:[%s10059 + $0x8] sm:$0xff]
    %v10062 = vld [vmem:[%s10059 + $0x10] sm:$0xff]
    %v10063 = vld [vmem:[%s10059 + $0x18] sm:$0xff]
    %v10064 = vld [vmem:[%s10059 + $0x20] sm:$0xff]
    %v10065 = vld [vmem:[%s10059 + $0x28] sm:$0xff]
    %v10066 = vld [vmem:[%s10059 + $0x30] sm:$0xff]
    %v10067 = vld [vmem:[%s10059 + $0x38] sm:$0xff]
    %v10068 = vld [vmem:[%s10059 + $0x40] sm:$0xff]
    %v10069 = vld [vmem:[%s10059 + $0x48] sm:$0xff]
    %v10070 = vld [vmem:[%s10059 + $0x50] sm:$0xff]
    %v10071 = vld [vmem:[%s10059 + $0x58] sm:$0xff]
    %v10072 = vld [vmem:[%s10059 + $0x60] sm:$0xff]
    %v10073 = vld [vmem:[%s10059 + $0x68] sm:$0xff]
    %v10074 = vld [vmem:[%s10059 + $0x70] sm:$0xff]
    %v10075 = vld [vmem:[%s10059 + $0x78] sm:$0xff]
    %10076 = vmatprep.subr.mxu0 0.0
    %10077 = vmatpush1.msra.mxu0 %v10060
    %10078 = vmatprep.subr.mxu0 0.0
    %10079 = vmatpush1.msra.mxu0 %v10061
    %10080 = vmatprep.subr.mxu0 0.0
    %10081 = vmatpush1.msra.mxu0 %v10062
    %10082 = vmatprep.subr.mxu0 0.0
    %10083 = vmatpush1.msra.mxu0 %v10063
    %10084 = vmatprep.subr.mxu0 0.0
    %10085 = vmatpush1.msra.mxu0 %v10064
    %10086 = vmatprep.subr.mxu0 0.0
    %10087 = vmatpush1.msra.mxu0 %v10065
    %10088 = vmatprep.subr.mxu0 0.0
    %10089 = vmatpush1.msra.mxu0 %v10066
    %10090 = vmatprep.subr.mxu0 0.0
    %10091 = vmatpush1.msra.mxu0 %v10067
    %10092 = vmatprep.subr.mxu0 0.0
    %10093 = vmatpush1.msra.mxu0 %v10068
    %10094 = vmatprep.subr.mxu0 0.0
    %10095 = vmatpush1.msra.mxu0 %v10069
    %10096 = vmatprep.subr.mxu0 0.0
    %10097 = vmatpush1.msra.mxu0 %v10070
    %10098 = vmatprep.subr.mxu0 0.0
    %10099 = vmatpush1.msra.mxu0 %v10071
    %10100 = vmatprep.subr.mxu0 0.0
    %10101 = vmatpush1.msra.mxu0 %v10072
    %10102 = vmatprep.subr.mxu0 0.0
    %10103 = vmatpush1.msra.mxu0 %v10073
    %10104 = vmatprep.subr.mxu0 0.0
    %10105 = vmatpush1.msra.mxu0 %v10074
    %10106 = vmatprep.subr.mxu0 0.0
    %10107 = vmatpush1.msra.mxu0 %v10075
    %10108 = vmatprep.subr.mxu0 0.0
    %10109 = vmatpush1.msra.mxu0 0.0
    %10110 = vmatprep.subr.mxu0 0.0
    %10111 = vmatpush1.msra.mxu0 0.0
    %10112 = vmatprep.subr.mxu0 0.0
    %10113 = vmatpush1.msra.mxu0 0.0
    %10114 = vmatprep.subr.mxu0 0.0
    %10115 = vmatpush1.msra.mxu0 0.0
    %10116 = vmatprep.subr.mxu0 0.0
    %10117 = vmatpush1.msra.mxu0 0.0
    %10118 = vmatprep.subr.mxu0 0.0
    %10119 = vmatpush1.msra.mxu0 0.0
    %10120 = vmatprep.subr.mxu0 0.0
    %10121 = vmatpush1.msra.mxu0 0.0
    %10122 = vmatprep.subr.mxu0 0.0
    %10123 = vmatpush1.msra.mxu0 0.0
    %10124 = vmatprep.subr.mxu0 0.0
    %10125 = vmatpush1.msra.mxu0 0.0
    %10126 = vmatprep.subr.mxu0 0.0
    %10127 = vmatpush1.msra.mxu0 0.0
    %10128 = vmatprep.subr.mxu0 0.0
    %10129 = vmatpush1.msra.mxu0 0.0
    %10130 = vmatprep.subr.mxu0 0.0
    %10131 = vmatpush1.msra.mxu0 0.0
    %10132 = vmatprep.subr.mxu0 0.0
    %10133 = vmatpush1.msra.mxu0 0.0
    %10134 = vmatprep.subr.mxu0 0.0
    %10135 = vmatpush1.msra.mxu0 0.0
    %10136 = vmatprep.subr.mxu0 0.0
    %10137 = vmatpush1.msra.mxu0 0.0
    %10138 = vmatprep.subr.mxu0 0.0
    %10139 = vmatpush1.msra.mxu0 0.0
    %10140 = vmatprep.mubr.f32.mxu0 0.0
    %10141 = vmatmul.mubr.f32.gmra.mrb[0].mxu0 %v10055
    %v10142 = vpop.f32.mrb[0].mxu0
    %v10143 = vadd.f32 0.0, %v10142
    %v10144 = vpop.f32.mrb[0].mxu0
    %10145 = vmatprep.mubr.f32.mxu0 0.0
    %10146 = vmatmul.mubr.f32.gmra.mrb[0].mxu0 %v10056
    %v10147 = vpop.f32.mrb[0].mxu0
    %v10148 = vadd.f32 0.0, %v10147
    %v10149 = vpop.f32.mrb[0].mxu0
    %10150 = vmatprep.mubr.f32.mxu0 0.0
    %10151 = vmatmul.mubr.f32.gmra.mrb[0].mxu0 %v10057
    %v10152 = vpop.f32.mrb[0].mxu0
    %v10153 = vadd.f32 0.0, %v10152
    %v10154 = vpop.f32.mrb[0].mxu0
    %10155 = vmatprep.mubr.f32.mxu0 0.0
    %10156 = vmatmul.mubr.f32.gmra.mrb[0].mxu0 %v10058
    %v10157 = vpop.f32.mrb[0].mxu0
    %v10158 = vadd.f32 0.0, %v10157
    %v10159 = vpop.f32.mrb[0].mxu0
    %10160 = vdwg.mxu0
    %v10161 = vadd.f32 %v9761, %v10143
    %v10162 = vadd.f32 %v9762, %v10148
    %v10163 = vadd.f32 %v9763, %v10153
    %v10164 = vadd.f32 %v9764, %v10158
    %s10165 = scalar_lea.vmem %s18, 1
    %v10166 = vld [vmem:[%s10165] sm:$0x1]
    %v10168 = vlaneseq
    %v10169 = vshrl.u32 %v10168, 7
    %v10170 = vsub.s32 0, %v10169
    %v10171 = vrot.slane %v10166, %v10170
    %v10173 = vadd.f32 %v10161, %v10171
    %v10174 = vadd.f32 %v10162, %v10171
    %v10175 = vadd.f32 %v10163, %v10171
    %v10176 = vadd.f32 %v10164, %v10171
    %10177 = vst.msk [vmem:[#allocation2] sm:$0xff] %vm86, %v10173
    %10178 = vst.msk [vmem:[#allocation2 + $0x8] sm:$0xff] %vm86, %v10174
    %10179 = vst.msk [vmem:[#allocation2 + $0x10] sm:$0xff] %vm86, %v10175
    %10180 = vst.msk [vmem:[#allocation2 + $0x18] sm:$0xff] %vm86, %v10176
    // Predicated region
    $region78: #{nystromformer_forward.1} parent=1 // pred_check
      _
    $region79: #{nystromformer_forward.1} parent=1 // pred_check_branch
      %10182 = sbr.rel (0) target = $region81
    $region80: #{nystromformer_forward.1} parent=1 // pred_region
      %s10184 = ssub.s32 512, 512
      %10185 = vsyncadd [#allocation3], %s10184
      %s10186 = sshll.u32 [#allocation2], 4
      %s10187 = int_to_ptr.vmem [resolvable:$true] %s10186
      %10192 = dma.vmem_to_hbm [thread:$0]  %s10187, 512, %s19, [#allocation3], 128, 128, 8
    $region81: #{nystromformer_forward.1} parent=1 // pred_fallthru
      _
    // Predicated region
    $region82: #{nystromformer_forward.1} parent=1 // pred_check
      _
    $region83: #{nystromformer_forward.1} parent=1 // pred_check_branch
      %10194 = sbr.rel (0) target = $region85
    $region84: #{nystromformer_forward.1} parent=1 // pred_region
      %10195 = dma.done [#allocation3], 512
    $region85: #{nystromformer_forward.1} parent=1 // pred_fallthru
      _
    %10196 = vsyncpa [#allocation3], 1

</llo_original>
